<compile_context>
chip_gen: v6e
topology: v6e:2x2x1
jax: 0.10.0
libtpu: 0.0.40
codegen_flags: <defaults>
</compile_context>

<pallas_src>
import functools

import jax
import jax.numpy as jnp
from jax.experimental import pallas as pl
from jax.experimental.pallas import tpu as pltpu

ACT_DTYPE = jnp.bfloat16   # chain activations / conv feature maps
W_DTYPE = jnp.bfloat16     # matmul operand dtype (f32 accumulation)

# f32 accumulator budget per conv row-chunk: 16 vregs (64 KiB).
ACC_BUDGET_ELEMS = 16 * 1024

VGG19_CFG = [64, 64, 'M', 128, 128, 'M', 256, 256, 256, 256, 'M',
             512, 512, 512, 512, 'M', 512, 512, 512, 512, 'M']


def _vmem_limit_bytes():
    """Per-generation VMEM limit: ~3/4 of physical (96 MiB v5e/v6e, 48 MiB v7x)."""
    try:
        cap = int(pltpu.get_tpu_info().vmem_capacity_bytes)
    except Exception:
        cap = 64 * 1024 * 1024
    return max(32 * 1024 * 1024, min(cap * 3 // 4, 100 * 1024 * 1024))


VMEM_LIMIT = _vmem_limit_bytes()


def _cparams(sem):
    return pltpu.CompilerParams(dimension_semantics=sem, vmem_limit_bytes=VMEM_LIMIT)


# --------------------------- conv (+ReLU, +maxpool) ------------------------- #

def _row_chunk(h, w, cout_tile, fuse_pool):
    """Largest row-chunk (divisor of h, even if pooling) whose f32 accumulator stays
    within ACC_BUDGET_ELEMS.  Always returns a valid chunk (2 / 1 fallback)."""
    cap = max(1, ACC_BUDGET_ELEMS // (w * cout_tile))
    best = 2 if fuse_pool else 1
    for rc in range(1, h + 1):
        if h % rc:
            continue
        if fuse_pool and (rc % 2):
            continue
        if rc <= cap:
            best = rc
    return best


def _make_conv_kernel(H, W, CIN, CT, RC, KGROUPS,
                      fuse_pool, emit_fpre, emit_fpost, emit_fpool):
    """3x3 conv (stride 1, pad 1) + ReLU (+2x2 maxpool) for one (image, cout-tile).

    Ref order: x, w, b, chain, [fpre], [fpost], [fpool], xp_scratch
      x     : (1, H, W, CIN)                      bf16
      w     : (KGROUPS, (9/KGROUPS)*CIN, CT)      bf16  (taps grouped by dh, inner (dw, cin))
      b     : (1, CT)                             f32
      chain : (1, H, W, CT) or (1, H/2, W/2, CT)  bf16 NHWC (next layer's input)
      fpre  : (1, H*W, CT)                        f32 (requested pre-ReLU feature)
      fpost : (1, H*W, CT)                        f32 (requested post-ReLU feature)
      fpool : (1, (H/2)*(W/2), CT)                f32 (requested pooled feature)
      xp    : VMEM scratch (H+2, W+2, CIN)        bf16
    """
    n_feats = int(emit_fpre) + int(emit_fpost) + int(emit_fpool)
    dh_per_group = 3 // KGROUPS          # 3 (all taps merged) or 1 (per-dh groups)
    kg = (9 // KGROUPS) * CIN            # K of each merged matmul
    n_chunks = H // RC

    def kernel(x_ref, w_ref, b_ref, *refs):
        chain_ref = refs[0]
        feat_refs = refs[1:1 + n_feats]
        xp_ref = refs[1 + n_feats]

        k = 0
        fpre_ref = fpost_ref = fpool_ref = None
        if emit_fpre:
            fpre_ref = feat_refs[k]; k += 1
        if emit_fpost:
            fpost_ref = feat_refs[k]; k += 1
        if emit_fpool:
            fpool_ref = feat_refs[k]; k += 1

        # Zero only the 1-pixel halo strips (NOT the whole padded tile); the interior
        # is fully overwritten right after, every grid step (no cross-step state).
        xp_ref[0:1, :, :] = jnp.zeros((1, W + 2, CIN), ACT_DTYPE)
        xp_ref[H + 1:H + 2, :, :] = jnp.zeros((1, W + 2, CIN), ACT_DTYPE)
        xp_ref[:, 0:1, :] = jnp.zeros((H + 2, 1, CIN), ACT_DTYPE)
        xp_ref[:, W + 1:W + 2, :] = jnp.zeros((H + 2, 1, CIN), ACT_DTYPE)
        xp_ref[1:H + 1, 1:W + 1, :] = x_ref[0].astype(ACT_DTYPE)

        bias = b_ref[...]                                    # (1, CT) f32

        def chunk(c):
            r0 = c * RC
            # Merged-tap matmuls: 1 (or 3) fat dot(s) with K = (9/KGROUPS)*CIN instead
            # of nine K=CIN dots -> far fewer MXU pushes and patch materializations.
            acc = jnp.zeros((RC * W, CT), jnp.float32)
            for g in range(KGROUPS):
                parts = []
                for dh_local in range(dh_per_group):
                    dh = g * dh_per_group + dh_local
                    band = xp_ref[pl.ds(r0 + dh, RC), :, :]   # (RC, W+2, CIN), aligned read
                    for dw in range(3):
                        parts.append(band[:, dw:dw + W, :])
                patch = jnp.concatenate(parts, axis=-1)       # (RC, W, kg)
                patch = patch.reshape(RC * W, kg)
                acc = acc + jnp.dot(patch, w_ref[g],
                                    preferred_element_type=jnp.float32)

            pre = acc + bias                                  # (RC*W, CT) f32
            post = jnp.maximum(pre, 0.0)

            # Requested torch features are stored in f32 straight from the accumulator
            # (fused cast; spatial-major layout == the matmul output, no relayout).
            if emit_fpre:
                fpre_ref[0, pl.ds(r0 * W, RC * W), :] = pre
            if emit_fpost:
                fpost_ref[0, pl.ds(r0 * W, RC * W), :] = post

            if fuse_pool:
                # Fused 2x2 max-pool epilogue (stride 2), no extra HBM round-trip.
                q = post.reshape(RC // 2, 2, W, CT)
                rows = jnp.maximum(q[:, 0], q[:, 1])          # (RC//2, W, CT)
                rows = rows.reshape(RC // 2, W // 2, 2, CT)
                pooled = jnp.maximum(rows[:, :, 0], rows[:, :, 1])   # (RC//2, W//2, CT) f32
                chain_ref[0, pl.ds(c * (RC // 2), RC // 2), :, :] = (
                    pooled.astype(chain_ref.dtype))
                if emit_fpool:
                    m = (RC // 2) * (W // 2)
                    fpool_ref[0, pl.ds(c * m, m), :] = pooled.reshape(m, CT)
            else:
                chain_ref[0, pl.ds(r0, RC), :, :] = (
                    post.reshape(RC, W, CT).astype(chain_ref.dtype))

        if n_chunks <= 8:
            # Fully unrolled static loop -> full LLO scheduling visibility at the
            # small trip counts these shapes produce.
            for c in range(n_chunks):
                chunk(c)
        else:
            def body(c, carry):
                chunk(c)
                return carry
            jax.lax.fori_loop(0, n_chunks, body, 0)

    return kernel


def conv3x3_block(x, wg, b, *, fuse_pool, emit_fpre, emit_fpost, emit_fpool):
    """3x3 conv + fused ReLU (+ fused 2x2 maxpool) with optional f32 feature taps.

    x:  (N, H, W, Cin)                      bf16 NHWC
    wg: (G, (9/G)*Cin, Cout)                bf16, taps grouped by dh, inner (dw, cin)
    b:  (Cout,)                             f32
    Returns dict with 'chain' (bf16 NHWC) and any of {'fpre','fpost','fpool'} (f32,
    spatial-major (N, H*W, Cout) / (N, (H/2)*(W/2), Cout)).
    """
    n, h, w, cin = x.shape
    kgroups, kg, cout = wg.shape
    assert kg == (9 // kgroups) * cin
    if fuse_pool:
        assert h % 2 == 0 and w % 2 == 0

    # Tile COUT for the 512-channel stages: smaller accumulators, MXU-width output
    # tiles, and extra parallel grid work (v7x megacore).
    cout_t = 256 if (cout > 256 and cout % 256 == 0) else cout
    n_ct = cout // cout_t
    rc = _row_chunk(h, w, cout_t, fuse_pool)
    ph, pw = h // 2, w // 2

    names, shapes, specs = [], [], []

    def add(name, shape, spec):
        names.append(name); shapes.append(shape); specs.append(spec)

    if fuse_pool:
        add('chain', jax.ShapeDtypeStruct((n, ph, pw, cout), ACT_DTYPE),
            pl.BlockSpec((1, ph, pw, cout_t), lambda i, j: (i, 0, 0, j)))
    else:
        add('chain', jax.ShapeDtypeStruct((n, h, w, cout), ACT_DTYPE),
            pl.BlockSpec((1, h, w, cout_t), lambda i, j: (i, 0, 0, j)))
    if emit_fpre:
        add('fpre', jax.ShapeDtypeStruct((n, h * w, cout), jnp.float32),
            pl.BlockSpec((1, h * w, cout_t), lambda i, j: (i, 0, j)))
    if emit_fpost:
        add('fpost', jax.ShapeDtypeStruct((n, h * w, cout), jnp.float32),
            pl.BlockSpec((1, h * w, cout_t), lambda i, j: (i, 0, j)))
    if emit_fpool:
        add('fpool', jax.ShapeDtypeStruct((n, ph * pw, cout), jnp.float32),
            pl.BlockSpec((1, ph * pw, cout_t), lambda i, j: (i, 0, j)))

    kern = _make_conv_kernel(h, w, cin, cout_t, rc, kgroups,
                             fuse_pool, emit_fpre, emit_fpost, emit_fpool)
    outs = pl.pallas_call(
        kern,
        out_shape=tuple(shapes),
        grid=(n, n_ct),
        in_specs=[
            pl.BlockSpec((1, h, w, cin), lambda i, j: (i, 0, 0, 0)),
            pl.BlockSpec((kgroups, kg, cout_t), lambda i, j: (0, 0, j)),
            pl.BlockSpec((1, cout_t), lambda i, j: (0, j)),
        ],
        out_specs=tuple(specs),
        scratch_shapes=[pltpu.VMEM((h + 2, w + 2, cin), ACT_DTYPE)],
        # No cross-step state (halo+interior rewritten every step) -> both axes
        # can be "parallel" (megacore on v7x).
        compiler_params=_cparams(("parallel", "parallel")),
    )(x, wg, b.reshape(1, cout))
    return dict(zip(names, outs))


# ------------------------------- linear (FC) -------------------------------- #

def _linear_kernel(x_ref, w_ref, b_ref, o_ref, acc_ref, *, relu):
    @pl.when(pl.program_id(1) == 0)
    def _():
        acc_ref[...] = jnp.zeros_like(acc_ref)

    acc_ref[...] += jnp.dot(x_ref[...].astype(jnp.bfloat16), w_ref[...],
                            preferred_element_type=jnp.float32)

    @pl.when(pl.program_id(1) == pl.num_programs(1) - 1)
    def _():
        y = acc_ref[...] + b_ref[...]
        if relu:
            y = jnp.maximum(y, 0.0)
        o_ref[...] = y.astype(o_ref.dtype)


def _fc_tile(dim, pref):
    """Largest lane-friendly tile (multiple of 128) <= pref dividing dim, else full dim."""
    if dim % 128 == 0:
        t = min(pref, dim)
        while dim % t != 0:
            t -= 128
        return t
    return dim


def linear(x, wt, b, *, relu):
    """y = x @ wt + b (optional ReLU).  wt is pre-transposed (in, out) bf16."""
    n, f = x.shape
    fin, o = wt.shape
    assert fin == f
    # FC is purely weight-bandwidth bound at tiny N: large blocks (tf=4096, to=1024 ->
    # 8 MiB weight tiles, 16 MiB double-buffered) minimize per-step overhead while
    # staying well under the 48 MiB v7x budget.
    tf = _fc_tile(f, 4096)
    to = _fc_tile(o, 1024)
    kern = functools.partial(_linear_kernel, relu=relu)
    return pl.pallas_call(
        kern,
        out_shape=jax.ShapeDtypeStruct((n, o), jnp.float32),
        grid=(o // to, f // tf),                      # reduction (f) axis last
        in_specs=[
            pl.BlockSpec((n, tf), lambda oi, fi: (0, fi)),
            pl.BlockSpec((tf, to), lambda oi, fi: (fi, oi)),
            pl.BlockSpec((1, to), lambda oi, fi: (0, oi)),
        ],
        out_specs=pl.BlockSpec((n, to), lambda oi, fi: (0, oi)),
        scratch_shapes=[pltpu.VMEM((n, to), jnp.float32)],
        compiler_params=_cparams(("parallel", "arbitrary")),
    )(x, wt, b.reshape(1, o))


# --------------------------- parameters (synthetic) ------------------------- #

def init_params(key, flatten_dim):
    mean = jnp.array([0.485, 0.456, 0.406], jnp.float32)
    std = jnp.array([0.229, 0.224, 0.225], jnp.float32)
    params = {'conv': [], 'fc': []}
    cin = 3
    idx = 0
    for v in VGG19_CFG:
        if v == 'M':
            continue
        kw = jax.random.fold_in(key, idx)
        fan_in = 9 * cin
        w = jax.random.normal(kw, (3, 3, cin, v), jnp.float32) * jnp.sqrt(2.0 / fan_in)
        b = jnp.zeros((v,), jnp.float32)
        if idx == 0:
            # Fold input standardization into conv1:  conv((x-m)/s) == conv'(x)
            #   w' = w / s  (per input channel),  b' = b - sum_{kh,kw,c} w * m/s
            b = b - jnp.einsum('hwco,c->o', w, mean / std)
            w = w / std.reshape(1, 1, 3, 1)
        # Merged-tap layout: all 9 taps in one K-group for small CIN, else 3 groups
        # (one per dh) with K = 3*CIN each.  Inner tap order is (dw, cin), matching
        # the in-kernel patch concatenation order.
        kgroups = 1 if cin <= 64 else 3
        wg = w.reshape(kgroups, (9 // kgroups) * cin, v).astype(W_DTYPE)
        params['conv'].append((wg, b))
        cin = v
        idx += 1

    # TODO(synk): real VGG19_face classifier_0 has in_features=25088 (224x224 input);
    # adapted to the actual flatten dim of the small synthetic shapes.
    fc_shapes = [(flatten_dim, 4096), (4096, 4096), (4096, 1000)]
    for j, (fi_, fo) in enumerate(fc_shapes):
        kw = jax.random.fold_in(key, 1000 + j)
        # Stored pre-transposed (in, out): no per-forward HBM transpose.
        w = jax.random.normal(kw, (fi_, fo), jnp.float32) * jnp.sqrt(2.0 / fi_)
        b = jnp.zeros((fo,), jnp.float32)
        params['fc'].append((w.astype(W_DTYPE), b))
    return params


# -------------------------------- forward ---------------------------------- #

def vgg19_face_forward(x_nchw, params, layers, layer_postprocess, return_logits=False):
    assert x_nchw.ndim == 4, 'Input should have 4 dimensions.'
    n = x_nchw.shape[0]
    needed = {int(i) for i in layers}

    # NCHW -> NHWC; channel standardization is folded into conv1's weights/bias.
    x = jnp.transpose(x_nchw, (0, 2, 3, 1)).astype(ACT_DTYPE)

    feats = {}   # torch feature index -> (f32 (N, H*W, C) array, (C, H, W))
    ci = 0       # conv param index
    fi = 0       # torch features_<fi> index
    i = 0
    while i < len(VGG19_CFG):
        wg, b = params['conv'][ci]
        ci += 1
        fuse_pool = (i + 1 < len(VGG19_CFG)) and (VGG19_CFG[i + 1] == 'M')
        emit_fpre = fi in needed
        emit_fpost = (fi + 1) in needed
        emit_fpool = fuse_pool and ((fi + 2) in needed)
        outs = conv3x3_block(x, wg, b, fuse_pool=fuse_pool, emit_fpre=emit_fpre,
                             emit_fpost=emit_fpost, emit_fpool=emit_fpool)
        h_, w_ = x.shape[1], x.shape[2]
        cout = wg.shape[-1]
        if emit_fpre:
            feats[fi] = (outs['fpre'], (cout, h_, w_))
        if emit_fpost:
            feats[fi + 1] = (outs['fpost'], (cout, h_, w_))
        if emit_fpool:
            feats[fi + 2] = (outs['fpool'], (cout, h_ // 2, w_ // 2))
        x = outs['chain']
        fi += 2
        if fuse_pool:
            fi += 1
            i += 2
        else:
            i += 1

    # Requested layer outputs: already f32 from the kernel; small XLA transpose to
    # NCHW so the flatten matches torch's `.view(N, -1)` element order.
    selected = []
    for li in layers:
        arr, (c, hh, ww) = feats[int(li)]
        t = jnp.transpose(arr.reshape(n, hh, ww, c), (0, 3, 1, 2))
        t = layer_postprocess(t)
        selected.append(t.reshape(n, -1))
    features = jnp.concatenate(selected, axis=1)

    # Classifier branch (the reference computes it; its result is discarded by the caller).
    flat = jnp.transpose(x, (0, 3, 1, 2)).reshape(n, -1)
    (w0, b0), (w3, b3), (w6, b6) = params['fc']
    h = linear(flat, w0, b0, relu=True)
    # TODO(synk): Dropout (classifier_2 / classifier_5) is identity here (eval semantics).
    h = linear(h, w3, b3, relu=True)
    logits = linear(h, w6, b6, relu=False)

    if return_logits:
        # Returned explicitly so the FC chain is not dead-code-eliminated.
        return features, logits
    return features


# ---------------------------------- main ------------------------------------ #

if __name__ == "__main__":
    key = jax.random.PRNGKey(0)
    k_x, k_p = jax.random.split(key)

    N, C, H, W = 2, 3, 32, 32          # small shapes; 5 maxpools -> 1x1 final map
    x = jax.random.uniform(k_x, (N, C, H, W), dtype=jnp.float32)   # pixels in [0, 1]
    assert float(jnp.min(x)) >= 0.0 and float(jnp.max(x)) <= 1.0   # pixel_values_check

    flatten_dim = 512 * (H // 32) * (W // 32)
    params = init_params(k_p, flatten_dim)

    layers = (4, 9)                    # extract features_4 and features_9
    identity = lambda t: t             # layer_postprocess

    out, logits = vgg19_face_forward(x, params, layers, identity, return_logits=True)
    out = jax.block_until_ready(out)
    logits = jax.block_until_ready(logits)

    expected_cols = 64 * 16 * 16 + 128 * 8 * 8
    assert out.shape == (N, expected_cols), out.shape
    assert logits.shape == (N, 1000), logits.shape
    assert bool(jnp.all(jnp.isfinite(out)))
    assert bool(jnp.all(jnp.isfinite(logits)))
    print("KERNEL_OK")
</pallas_src>

<mosaic_0001>
module attributes {stable_mosaic.version = 11 : i64} {
  func.func @kernel(%arg0: i32, %arg1: i32, %arg2: memref<1x32x32x3xbf16, #tpu.memory_space<vmem>>, %arg3: memref<1x27x64xbf16, #tpu.memory_space<vmem>>, %arg4: memref<1x64xf32, #tpu.memory_space<vmem>>, %arg5: memref<1x32x32x64xbf16, #tpu.memory_space<vmem>>, %arg6: memref<34x34x3xbf16, #tpu.memory_space<vmem>>) attributes {dimension_semantics = [#tpu.dimension_semantics<parallel>, #tpu.dimension_semantics<parallel>], iteration_bounds = array<i64: 2, 1>, scalar_prefetch = 0 : i64, scratch_operands = 1 : i64, tpu.core_type = #tpu.core_type<tc>, window_params = [{transform_indices = @transform_0, window_bounds = array<i64: 1, 32, 32, 3>}, {transform_indices = @transform_1, window_bounds = array<i64: 1, 27, 64>}, {transform_indices = @transform_2, window_bounds = array<i64: 1, 64>}, {transform_indices = @transform_3, window_bounds = array<i64: 1, 32, 32, 64>}]} {
    %cst = arith.constant 0.000000e+00 : bf16
    %0 = vector.broadcast %cst : bf16 to vector<1x34x3xbf16>
    %c0 = arith.constant 0 : index
    %c0_0 = arith.constant 0 : index
    %c0_1 = arith.constant 0 : index
    %1 = vector.load %arg6[%c0, %c0_0, %c0_1] : memref<34x34x3xbf16, #tpu.memory_space<vmem>>, vector<1x34x3xbf16>
    tpu.vector_store %arg6[%c0, %c0_0, %c0_1], %0 {strides = array<i32>} : memref<34x34x3xbf16, #tpu.memory_space<vmem>>, vector<1x34x3xbf16>,
    %cst_2 = arith.constant 0.000000e+00 : bf16
    %2 = vector.broadcast %cst_2 : bf16 to vector<1x34x3xbf16>
    %c33 = arith.constant 33 : index
    %c0_3 = arith.constant 0 : index
    %c0_4 = arith.constant 0 : index
    %3 = vector.load %arg6[%c33, %c0_3, %c0_4] : memref<34x34x3xbf16, #tpu.memory_space<vmem>>, vector<1x34x3xbf16>
    tpu.vector_store %arg6[%c33, %c0_3, %c0_4], %2 {strides = array<i32>} : memref<34x34x3xbf16, #tpu.memory_space<vmem>>, vector<1x34x3xbf16>,
    %cst_5 = arith.constant 0.000000e+00 : bf16
    %4 = vector.broadcast %cst_5 : bf16 to vector<34x1x3xbf16>
    %c0_6 = arith.constant 0 : index
    %c0_7 = arith.constant 0 : index
    %c0_8 = arith.constant 0 : index
    %5 = vector.load %arg6[%c0_6, %c0_7, %c0_8] : memref<34x34x3xbf16, #tpu.memory_space<vmem>>, vector<34x1x3xbf16>
    tpu.vector_store %arg6[%c0_6, %c0_7, %c0_8], %4 {strides = array<i32>} : memref<34x34x3xbf16, #tpu.memory_space<vmem>>, vector<34x1x3xbf16>,
    %cst_9 = arith.constant 0.000000e+00 : bf16
    %6 = vector.broadcast %cst_9 : bf16 to vector<34x1x3xbf16>
    %c0_10 = arith.constant 0 : index
    %c33_11 = arith.constant 33 : index
    %c0_12 = arith.constant 0 : index
    %7 = vector.load %arg6[%c0_10, %c33_11, %c0_12] : memref<34x34x3xbf16, #tpu.memory_space<vmem>>, vector<34x1x3xbf16>
    tpu.vector_store %arg6[%c0_10, %c33_11, %c0_12], %6 {strides = array<i32>} : memref<34x34x3xbf16, #tpu.memory_space<vmem>>, vector<34x1x3xbf16>,
    %c0_13 = arith.constant 0 : index
    %c0_14 = arith.constant 0 : index
    %c0_15 = arith.constant 0 : index
    %c0_16 = arith.constant 0 : index
    %8 = vector.load %arg2[%c0_13, %c0_14, %c0_15, %c0_16] : memref<1x32x32x3xbf16, #tpu.memory_space<vmem>>, vector<1x32x32x3xbf16>
    %9 = vector.shape_cast %8 : vector<1x32x32x3xbf16> to vector<32x32x3xbf16>
    %c1 = arith.constant 1 : index
    %c1_17 = arith.constant 1 : index
    %c0_18 = arith.constant 0 : index
    %10 = vector.load %arg6[%c1, %c1_17, %c0_18] : memref<34x34x3xbf16, #tpu.memory_space<vmem>>, vector<32x32x3xbf16>
    tpu.vector_store %arg6[%c1, %c1_17, %c0_18], %9 {strides = array<i32>} : memref<34x34x3xbf16, #tpu.memory_space<vmem>>, vector<32x32x3xbf16>,
    %c0_19 = arith.constant 0 : index
    %c0_20 = arith.constant 0 : index
    %11 = vector.load %arg4[%c0_19, %c0_20] : memref<1x64xf32, #tpu.memory_space<vmem>>, vector<1x64xf32>
    %cst_21 = arith.constant 0.000000e+00 : f32
    %12 = vector.broadcast %cst_21 : f32 to vector<256x64xf32>
    %c0_22 = arith.constant 0 : index
    %c0_23 = arith.constant 0 : index
    %c0_24 = arith.constant 0 : index
    %13 = vector.load %arg6[%c0_22, %c0_23, %c0_24] : memref<34x34x3xbf16, #tpu.memory_space<vmem>>, vector<8x34x3xbf16>
    %14 = vector.extract_strided_slice %13 {offsets = [0, 0, 0], sizes = [8, 32, 3], strides = [1, 1, 1]} : vector<8x34x3xbf16> to vector<8x32x3xbf16>
    %15 = vector.extract_strided_slice %13 {offsets = [0, 1, 0], sizes = [8, 32, 3], strides = [1, 1, 1]} : vector<8x34x3xbf16> to vector<8x32x3xbf16>
    %16 = vector.extract_strided_slice %13 {offsets = [0, 2, 0], sizes = [8, 32, 3], strides = [1, 1, 1]} : vector<8x34x3xbf16> to vector<8x32x3xbf16>
    %c1_25 = arith.constant 1 : index
    %c0_26 = arith.constant 0 : index
    %c0_27 = arith.constant 0 : index
    %17 = vector.load %arg6[%c1_25, %c0_26, %c0_27] : memref<34x34x3xbf16, #tpu.memory_space<vmem>>, vector<8x34x3xbf16>
    %18 = vector.extract_strided_slice %17 {offsets = [0, 0, 0], sizes = [8, 32, 3], strides = [1, 1, 1]} : vector<8x34x3xbf16> to vector<8x32x3xbf16>
    %19 = vector.extract_strided_slice %17 {offsets = [0, 1, 0], sizes = [8, 32, 3], strides = [1, 1, 1]} : vector<8x34x3xbf16> to vector<8x32x3xbf16>
    %20 = vector.extract_strided_slice %17 {offsets = [0, 2, 0], sizes = [8, 32, 3], strides = [1, 1, 1]} : vector<8x34x3xbf16> to vector<8x32x3xbf16>
    %c2 = arith.constant 2 : index
    %c0_28 = arith.constant 0 : index
    %c0_29 = arith.constant 0 : index
    %21 = vector.load %arg6[%c2, %c0_28, %c0_29] : memref<34x34x3xbf16, #tpu.memory_space<vmem>>, vector<8x34x3xbf16>
    %22 = vector.extract_strided_slice %21 {offsets = [0, 0, 0], sizes = [8, 32, 3], strides = [1, 1, 1]} : vector<8x34x3xbf16> to vector<8x32x3xbf16>
    %23 = vector.extract_strided_slice %21 {offsets = [0, 1, 0], sizes = [8, 32, 3], strides = [1, 1, 1]} : vector<8x34x3xbf16> to vector<8x32x3xbf16>
    %24 = vector.extract_strided_slice %21 {offsets = [0, 2, 0], sizes = [8, 32, 3], strides = [1, 1, 1]} : vector<8x34x3xbf16> to vector<8x32x3xbf16>
    %25 = tpu.concatenate %14, %15, %16, %18, %19, %20, %22, %23, %24 in 2 : vector<8x32x3xbf16>, vector<8x32x3xbf16>, vector<8x32x3xbf16>, vector<8x32x3xbf16>, vector<8x32x3xbf16>, vector<8x32x3xbf16>, vector<8x32x3xbf16>, vector<8x32x3xbf16>, vector<8x32x3xbf16> -> vector<8x32x27xbf16>
    %26 = vector.shape_cast %25 : vector<8x32x27xbf16> to vector<256x27xbf16>
    %c0_30 = arith.constant 0 : index
    %c0_31 = arith.constant 0 : index
    %c0_32 = arith.constant 0 : index
    %27 = vector.load %arg3[%c0_30, %c0_31, %c0_32] : memref<1x27x64xbf16, #tpu.memory_space<vmem>>, vector<1x27x64xbf16>
    %28 = vector.shape_cast %27 : vector<1x27x64xbf16> to vector<27x64xbf16>
    %cst_33 = arith.constant dense<0.000000e+00> : vector<256x64xf32>
    %29 = tpu.matmul %26, %28, %cst_33 {dimension_numbers = #tpu.dot_dimension_numbers<[1], [0], [0], [1], [0, 0, 1, 1], [], []>} : vector<256x27xbf16>, vector<27x64xbf16>, vector<256x64xf32> -> vector<256x64xf32>
    %30 = arith.addf %12, %29 : vector<256x64xf32>
    %31 = vector.broadcast %11 : vector<1x64xf32> to vector<256x64xf32>
    %32 = arith.addf %30, %31 : vector<256x64xf32>
    %cst_34 = arith.constant 0.000000e+00 : f32
    %33 = vector.broadcast %cst_34 : f32 to vector<256x64xf32>
    %34 = arith.maximumf %32, %33 : vector<256x64xf32>
    %35 = vector.shape_cast %34 : vector<256x64xf32> to vector<8x32x64xf32>
    %36 = arith.truncf %35 : vector<8x32x64xf32> to vector<8x32x64xbf16>
    %c0_35 = arith.constant 0 : index
    %c0_36 = arith.constant 0 : index
    %c0_37 = arith.constant 0 : index
    %c0_38 = arith.constant 0 : index
    %37 = vector.load %arg5[%c0_35, %c0_36, %c0_37, %c0_38] : memref<1x32x32x64xbf16, #tpu.memory_space<vmem>>, vector<1x8x32x64xbf16>
    %38 = vector.shape_cast %37 : vector<1x8x32x64xbf16> to vector<8x32x64xbf16>
    %39 = vector.shape_cast %36 : vector<8x32x64xbf16> to vector<1x8x32x64xbf16>
    tpu.vector_store %arg5[%c0_35, %c0_36, %c0_37, %c0_38], %39 {strides = array<i32>} : memref<1x32x32x64xbf16, #tpu.memory_space<vmem>>, vector<1x8x32x64xbf16>,
    %cst_39 = arith.constant 0.000000e+00 : f32
    %40 = vector.broadcast %cst_39 : f32 to vector<256x64xf32>
    %c8 = arith.constant 8 : index
    %c0_40 = arith.constant 0 : index
    %c0_41 = arith.constant 0 : index
    %41 = vector.load %arg6[%c8, %c0_40, %c0_41] : memref<34x34x3xbf16, #tpu.memory_space<vmem>>, vector<8x34x3xbf16>
    %42 = vector.extract_strided_slice %41 {offsets = [0, 0, 0], sizes = [8, 32, 3], strides = [1, 1, 1]} : vector<8x34x3xbf16> to vector<8x32x3xbf16>
    %43 = vector.extract_strided_slice %41 {offsets = [0, 1, 0], sizes = [8, 32, 3], strides = [1, 1, 1]} : vector<8x34x3xbf16> to vector<8x32x3xbf16>
    %44 = vector.extract_strided_slice %41 {offsets = [0, 2, 0], sizes = [8, 32, 3], strides = [1, 1, 1]} : vector<8x34x3xbf16> to vector<8x32x3xbf16>
    %c9 = arith.constant 9 : index
    %c0_42 = arith.constant 0 : index
    %c0_43 = arith.constant 0 : index
    %45 = vector.load %arg6[%c9, %c0_42, %c0_43] : memref<34x34x3xbf16, #tpu.memory_space<vmem>>, vector<8x34x3xbf16>
    %46 = vector.extract_strided_slice %45 {offsets = [0, 0, 0], sizes = [8, 32, 3], strides = [1, 1, 1]} : vector<8x34x3xbf16> to vector<8x32x3xbf16>
    %47 = vector.extract_strided_slice %45 {offsets = [0, 1, 0], sizes = [8, 32, 3], strides = [1, 1, 1]} : vector<8x34x3xbf16> to vector<8x32x3xbf16>
    %48 = vector.extract_strided_slice %45 {offsets = [0, 2, 0], sizes = [8, 32, 3], strides = [1, 1, 1]} : vector<8x34x3xbf16> to vector<8x32x3xbf16>
    %c10 = arith.constant 10 : index
    %c0_44 = arith.constant 0 : index
    %c0_45 = arith.constant 0 : index
    %49 = vector.load %arg6[%c10, %c0_44, %c0_45] : memref<34x34x3xbf16, #tpu.memory_space<vmem>>, vector<8x34x3xbf16>
    %50 = vector.extract_strided_slice %49 {offsets = [0, 0, 0], sizes = [8, 32, 3], strides = [1, 1, 1]} : vector<8x34x3xbf16> to vector<8x32x3xbf16>
    %51 = vector.extract_strided_slice %49 {offsets = [0, 1, 0], sizes = [8, 32, 3], strides = [1, 1, 1]} : vector<8x34x3xbf16> to vector<8x32x3xbf16>
    %52 = vector.extract_strided_slice %49 {offsets = [0, 2, 0], sizes = [8, 32, 3], strides = [1, 1, 1]} : vector<8x34x3xbf16> to vector<8x32x3xbf16>
    %53 = tpu.concatenate %42, %43, %44, %46, %47, %48, %50, %51, %52 in 2 : vector<8x32x3xbf16>, vector<8x32x3xbf16>, vector<8x32x3xbf16>, vector<8x32x3xbf16>, vector<8x32x3xbf16>, vector<8x32x3xbf16>, vector<8x32x3xbf16>, vector<8x32x3xbf16>, vector<8x32x3xbf16> -> vector<8x32x27xbf16>
    %54 = vector.shape_cast %53 : vector<8x32x27xbf16> to vector<256x27xbf16>
    %c0_46 = arith.constant 0 : index
    %c0_47 = arith.constant 0 : index
    %c0_48 = arith.constant 0 : index
    %55 = vector.load %arg3[%c0_46, %c0_47, %c0_48] : memref<1x27x64xbf16, #tpu.memory_space<vmem>>, vector<1x27x64xbf16>
    %56 = vector.shape_cast %55 : vector<1x27x64xbf16> to vector<27x64xbf16>
    %cst_49 = arith.constant dense<0.000000e+00> : vector<256x64xf32>
    %57 = tpu.matmul %54, %56, %cst_49 {dimension_numbers = #tpu.dot_dimension_numbers<[1], [0], [0], [1], [0, 0, 1, 1], [], []>} : vector<256x27xbf16>, vector<27x64xbf16>, vector<256x64xf32> -> vector<256x64xf32>
    %58 = arith.addf %40, %57 : vector<256x64xf32>
    %59 = vector.broadcast %11 : vector<1x64xf32> to vector<256x64xf32>
    %60 = arith.addf %58, %59 : vector<256x64xf32>
    %cst_50 = arith.constant 0.000000e+00 : f32
    %61 = vector.broadcast %cst_50 : f32 to vector<256x64xf32>
    %62 = arith.maximumf %60, %61 : vector<256x64xf32>
    %63 = vector.shape_cast %62 : vector<256x64xf32> to vector<8x32x64xf32>
    %64 = arith.truncf %63 : vector<8x32x64xf32> to vector<8x32x64xbf16>
    %c0_51 = arith.constant 0 : index
    %c8_52 = arith.constant 8 : index
    %c0_53 = arith.constant 0 : index
    %c0_54 = arith.constant 0 : index
    %65 = vector.load %arg5[%c0_51, %c8_52, %c0_53, %c0_54] : memref<1x32x32x64xbf16, #tpu.memory_space<vmem>>, vector<1x8x32x64xbf16>
    %66 = vector.shape_cast %65 : vector<1x8x32x64xbf16> to vector<8x32x64xbf16>
    %67 = vector.shape_cast %64 : vector<8x32x64xbf16> to vector<1x8x32x64xbf16>
    tpu.vector_store %arg5[%c0_51, %c8_52, %c0_53, %c0_54], %67 {strides = array<i32>} : memref<1x32x32x64xbf16, #tpu.memory_space<vmem>>, vector<1x8x32x64xbf16>,
    %cst_55 = arith.constant 0.000000e+00 : f32
    %68 = vector.broadcast %cst_55 : f32 to vector<256x64xf32>
    %c16 = arith.constant 16 : index
    %c0_56 = arith.constant 0 : index
    %c0_57 = arith.constant 0 : index
    %69 = vector.load %arg6[%c16, %c0_56, %c0_57] : memref<34x34x3xbf16, #tpu.memory_space<vmem>>, vector<8x34x3xbf16>
    %70 = vector.extract_strided_slice %69 {offsets = [0, 0, 0], sizes = [8, 32, 3], strides = [1, 1, 1]} : vector<8x34x3xbf16> to vector<8x32x3xbf16>
    %71 = vector.extract_strided_slice %69 {offsets = [0, 1, 0], sizes = [8, 32, 3], strides = [1, 1, 1]} : vector<8x34x3xbf16> to vector<8x32x3xbf16>
    %72 = vector.extract_strided_slice %69 {offsets = [0, 2, 0], sizes = [8, 32, 3], strides = [1, 1, 1]} : vector<8x34x3xbf16> to vector<8x32x3xbf16>
    %c17 = arith.constant 17 : index
    %c0_58 = arith.constant 0 : index
    %c0_59 = arith.constant 0 : index
    %73 = vector.load %arg6[%c17, %c0_58, %c0_59] : memref<34x34x3xbf16, #tpu.memory_space<vmem>>, vector<8x34x3xbf16>
    %74 = vector.extract_strided_slice %73 {offsets = [0, 0, 0], sizes = [8, 32, 3], strides = [1, 1, 1]} : vector<8x34x3xbf16> to vector<8x32x3xbf16>
    %75 = vector.extract_strided_slice %73 {offsets = [0, 1, 0], sizes = [8, 32, 3], strides = [1, 1, 1]} : vector<8x34x3xbf16> to vector<8x32x3xbf16>
    %76 = vector.extract_strided_slice %73 {offsets = [0, 2, 0], sizes = [8, 32, 3], strides = [1, 1, 1]} : vector<8x34x3xbf16> to vector<8x32x3xbf16>
    %c18 = arith.constant 18 : index
    %c0_60 = arith.constant 0 : index
    %c0_61 = arith.constant 0 : index
    %77 = vector.load %arg6[%c18, %c0_60, %c0_61] : memref<34x34x3xbf16, #tpu.memory_space<vmem>>, vector<8x34x3xbf16>
    %78 = vector.extract_strided_slice %77 {offsets = [0, 0, 0], sizes = [8, 32, 3], strides = [1, 1, 1]} : vector<8x34x3xbf16> to vector<8x32x3xbf16>
    %79 = vector.extract_strided_slice %77 {offsets = [0, 1, 0], sizes = [8, 32, 3], strides = [1, 1, 1]} : vector<8x34x3xbf16> to vector<8x32x3xbf16>
    %80 = vector.extract_strided_slice %77 {offsets = [0, 2, 0], sizes = [8, 32, 3], strides = [1, 1, 1]} : vector<8x34x3xbf16> to vector<8x32x3xbf16>
    %81 = tpu.concatenate %70, %71, %72, %74, %75, %76, %78, %79, %80 in 2 : vector<8x32x3xbf16>, vector<8x32x3xbf16>, vector<8x32x3xbf16>, vector<8x32x3xbf16>, vector<8x32x3xbf16>, vector<8x32x3xbf16>, vector<8x32x3xbf16>, vector<8x32x3xbf16>, vector<8x32x3xbf16> -> vector<8x32x27xbf16>
    %82 = vector.shape_cast %81 : vector<8x32x27xbf16> to vector<256x27xbf16>
    %c0_62 = arith.constant 0 : index
    %c0_63 = arith.constant 0 : index
    %c0_64 = arith.constant 0 : index
    %83 = vector.load %arg3[%c0_62, %c0_63, %c0_64] : memref<1x27x64xbf16, #tpu.memory_space<vmem>>, vector<1x27x64xbf16>
    %84 = vector.shape_cast %83 : vector<1x27x64xbf16> to vector<27x64xbf16>
    %cst_65 = arith.constant dense<0.000000e+00> : vector<256x64xf32>
    %85 = tpu.matmul %82, %84, %cst_65 {dimension_numbers = #tpu.dot_dimension_numbers<[1], [0], [0], [1], [0, 0, 1, 1], [], []>} : vector<256x27xbf16>, vector<27x64xbf16>, vector<256x64xf32> -> vector<256x64xf32>
    %86 = arith.addf %68, %85 : vector<256x64xf32>
    %87 = vector.broadcast %11 : vector<1x64xf32> to vector<256x64xf32>
    %88 = arith.addf %86, %87 : vector<256x64xf32>
    %cst_66 = arith.constant 0.000000e+00 : f32
    %89 = vector.broadcast %cst_66 : f32 to vector<256x64xf32>
    %90 = arith.maximumf %88, %89 : vector<256x64xf32>
    %91 = vector.shape_cast %90 : vector<256x64xf32> to vector<8x32x64xf32>
    %92 = arith.truncf %91 : vector<8x32x64xf32> to vector<8x32x64xbf16>
    %c0_67 = arith.constant 0 : index
    %c16_68 = arith.constant 16 : index
    %c0_69 = arith.constant 0 : index
    %c0_70 = arith.constant 0 : index
    %93 = vector.load %arg5[%c0_67, %c16_68, %c0_69, %c0_70] : memref<1x32x32x64xbf16, #tpu.memory_space<vmem>>, vector<1x8x32x64xbf16>
    %94 = vector.shape_cast %93 : vector<1x8x32x64xbf16> to vector<8x32x64xbf16>
    %95 = vector.shape_cast %92 : vector<8x32x64xbf16> to vector<1x8x32x64xbf16>
    tpu.vector_store %arg5[%c0_67, %c16_68, %c0_69, %c0_70], %95 {strides = array<i32>} : memref<1x32x32x64xbf16, #tpu.memory_space<vmem>>, vector<1x8x32x64xbf16>,
    %cst_71 = arith.constant 0.000000e+00 : f32
    %96 = vector.broadcast %cst_71 : f32 to vector<256x64xf32>
    %c24 = arith.constant 24 : index
    %c0_72 = arith.constant 0 : index
    %c0_73 = arith.constant 0 : index
    %97 = vector.load %arg6[%c24, %c0_72, %c0_73] : memref<34x34x3xbf16, #tpu.memory_space<vmem>>, vector<8x34x3xbf16>
    %98 = vector.extract_strided_slice %97 {offsets = [0, 0, 0], sizes = [8, 32, 3], strides = [1, 1, 1]} : vector<8x34x3xbf16> to vector<8x32x3xbf16>
    %99 = vector.extract_strided_slice %97 {offsets = [0, 1, 0], sizes = [8, 32, 3], strides = [1, 1, 1]} : vector<8x34x3xbf16> to vector<8x32x3xbf16>
    %100 = vector.extract_strided_slice %97 {offsets = [0, 2, 0], sizes = [8, 32, 3], strides = [1, 1, 1]} : vector<8x34x3xbf16> to vector<8x32x3xbf16>
    %c25 = arith.constant 25 : index
    %c0_74 = arith.constant 0 : index
    %c0_75 = arith.constant 0 : index
    %101 = vector.load %arg6[%c25, %c0_74, %c0_75] : memref<34x34x3xbf16, #tpu.memory_space<vmem>>, vector<8x34x3xbf16>
    %102 = vector.extract_strided_slice %101 {offsets = [0, 0, 0], sizes = [8, 32, 3], strides = [1, 1, 1]} : vector<8x34x3xbf16> to vector<8x32x3xbf16>
    %103 = vector.extract_strided_slice %101 {offsets = [0, 1, 0], sizes = [8, 32, 3], strides = [1, 1, 1]} : vector<8x34x3xbf16> to vector<8x32x3xbf16>
    %104 = vector.extract_strided_slice %101 {offsets = [0, 2, 0], sizes = [8, 32, 3], strides = [1, 1, 1]} : vector<8x34x3xbf16> to vector<8x32x3xbf16>
    %c26 = arith.constant 26 : index
    %c0_76 = arith.constant 0 : index
    %c0_77 = arith.constant 0 : index
    %105 = vector.load %arg6[%c26, %c0_76, %c0_77] : memref<34x34x3xbf16, #tpu.memory_space<vmem>>, vector<8x34x3xbf16>
    %106 = vector.extract_strided_slice %105 {offsets = [0, 0, 0], sizes = [8, 32, 3], strides = [1, 1, 1]} : vector<8x34x3xbf16> to vector<8x32x3xbf16>
    %107 = vector.extract_strided_slice %105 {offsets = [0, 1, 0], sizes = [8, 32, 3], strides = [1, 1, 1]} : vector<8x34x3xbf16> to vector<8x32x3xbf16>
    %108 = vector.extract_strided_slice %105 {offsets = [0, 2, 0], sizes = [8, 32, 3], strides = [1, 1, 1]} : vector<8x34x3xbf16> to vector<8x32x3xbf16>
    %109 = tpu.concatenate %98, %99, %100, %102, %103, %104, %106, %107, %108 in 2 : vector<8x32x3xbf16>, vector<8x32x3xbf16>, vector<8x32x3xbf16>, vector<8x32x3xbf16>, vector<8x32x3xbf16>, vector<8x32x3xbf16>, vector<8x32x3xbf16>, vector<8x32x3xbf16>, vector<8x32x3xbf16> -> vector<8x32x27xbf16>
    %110 = vector.shape_cast %109 : vector<8x32x27xbf16> to vector<256x27xbf16>
    %c0_78 = arith.constant 0 : index
    %c0_79 = arith.constant 0 : index
    %c0_80 = arith.constant 0 : index
    %111 = vector.load %arg3[%c0_78, %c0_79, %c0_80] : memref<1x27x64xbf16, #tpu.memory_space<vmem>>, vector<1x27x64xbf16>
    %112 = vector.shape_cast %111 : vector<1x27x64xbf16> to vector<27x64xbf16>
    %cst_81 = arith.constant dense<0.000000e+00> : vector<256x64xf32>
    %113 = tpu.matmul %110, %112, %cst_81 {dimension_numbers = #tpu.dot_dimension_numbers<[1], [0], [0], [1], [0, 0, 1, 1], [], []>} : vector<256x27xbf16>, vector<27x64xbf16>, vector<256x64xf32> -> vector<256x64xf32>
    %114 = arith.addf %96, %113 : vector<256x64xf32>
    %115 = vector.broadcast %11 : vector<1x64xf32> to vector<256x64xf32>
    %116 = arith.addf %114, %115 : vector<256x64xf32>
    %cst_82 = arith.constant 0.000000e+00 : f32
    %117 = vector.broadcast %cst_82 : f32 to vector<256x64xf32>
    %118 = arith.maximumf %116, %117 : vector<256x64xf32>
    %119 = vector.shape_cast %118 : vector<256x64xf32> to vector<8x32x64xf32>
    %120 = arith.truncf %119 : vector<8x32x64xf32> to vector<8x32x64xbf16>
    %c0_83 = arith.constant 0 : index
    %c24_84 = arith.constant 24 : index
    %c0_85 = arith.constant 0 : index
    %c0_86 = arith.constant 0 : index
    %121 = vector.load %arg5[%c0_83, %c24_84, %c0_85, %c0_86] : memref<1x32x32x64xbf16, #tpu.memory_space<vmem>>, vector<1x8x32x64xbf16>
    %122 = vector.shape_cast %121 : vector<1x8x32x64xbf16> to vector<8x32x64xbf16>
    %123 = vector.shape_cast %120 : vector<8x32x64xbf16> to vector<1x8x32x64xbf16>
    tpu.vector_store %arg5[%c0_83, %c24_84, %c0_85, %c0_86], %123 {strides = array<i32>} : memref<1x32x32x64xbf16, #tpu.memory_space<vmem>>, vector<1x8x32x64xbf16>,
    return
  }
  func.func @transform_0(%arg0: i32, %arg1: i32) -> (i32, i32, i32, i32) {
    %c0_i32 = arith.constant 0 : i32
    %c0_i32_0 = arith.constant 0 : i32
    %c0_i32_1 = arith.constant 0 : i32
    %c0_i32_2 = arith.constant 0 : i32
    return %arg0, %c0_i32, %c0_i32_0, %c0_i32_1 : i32, i32, i32, i32
  }
  func.func @transform_1(%arg0: i32, %arg1: i32) -> (i32, i32, i32) {
    %c0_i32 = arith.constant 0 : i32
    %c0_i32_0 = arith.constant 0 : i32
    %c0_i32_1 = arith.constant 0 : i32
    return %c0_i32, %c0_i32_0, %arg1 : i32, i32, i32
  }
  func.func @transform_2(%arg0: i32, %arg1: i32) -> (i32, i32) {
    %c0_i32 = arith.constant 0 : i32
    %c0_i32_0 = arith.constant 0 : i32
    return %c0_i32, %arg1 : i32, i32
  }
  func.func @transform_3(%arg0: i32, %arg1: i32) -> (i32, i32, i32, i32) {
    %c0_i32 = arith.constant 0 : i32
    %c0_i32_0 = arith.constant 0 : i32
    %c0_i32_1 = arith.constant 0 : i32
    return %arg0, %c0_i32, %c0_i32_0, %arg1 : i32, i32, i32, i32
  }
}

</mosaic_0001>

<llo_original>
// kernel: tpu_custom_call.1
$region0: #{tpu_custom_call.1}
  #allocation0 [shape = 'u32[]', space=smem, size = 0x4, offset = 0x4, fixed_abs, tag = 'smem constant byte address 0x4 - core index']
  #allocation1 [shape = 'u32[144,128]{1,0:T(1,128)}', space=vmem, size = 0x12000, scoped, tag = 'internal scratch']
  #allocation2 [shape = 'bf16[34,34,3]{2,1,0:T(8,128)(2,1)}', space=vmem, size = 0x55000, scoped, tag = 'scratch operand']
  %s0 = inlined_call_operand.vmem [shape: bf16[2,32,32,3], index: 0, kind: input, shape index: {}]
  %s1 = inlined_call_operand.vmem [shape: bf16[1,27,64], index: 1, kind: input, shape index: {}]
  %s2 = inlined_call_operand.vmem [shape: f32[1,64], index: 2, kind: input, shape index: {}]
  %s3 = inlined_call_operand.hbm [shape: bf16[2,32,32,64], index: 3, kind: output, shape index: {}]
  %s4 = sld [smem:[#allocation0]]
  $region45: #{tpu_custom_call.1} parent=0
    _
  %s6 = ssub.s32 1, %s4
  %s7 = scalar_select 0, %s6, %s4
  $region1: #{tpu_custom_call.1} parent=0
    #allocation3 [shape = 'u8[524288]{0}', space=vmem, size = 0x80000, scoped, tag = 'output window, operand 0']
    #allocation4 [shape = 's32[2]{0}', space=sflag, size = 0x8, scoped, tag = 'scoped memory for tpu_custom_call.1']
    %8 = vsyncpa [#allocation4], 0
    %s9 = scalar_lea.sflag [#allocation4], 1
    %10 = vsyncpa %s9, 0
    loop: start=0, step=1, limit=4
    $region2: #{tpu_custom_call.1} parent=1 // loop_pre_header
      _
    $region3: #{tpu_custom_call.1} parent=1 // loop_header
      %s12 = sphi 0, %s16
      %p13 = scmp.ge.s32.totalorder %s12, 4
      %s19 = sphi 0, %s31
      %s20 = sphi 0, %s27
      %s21 = sphi 0, %s19
      %s22 = sphi 0, %s20
      %s23 = sphi 0, %s21
      %s24 = sphi 0, %s22
      %s34 = sphi 0, %s36
      %s37 = sphi 0, %s34
      %s38 = sphi 0, %s37
      %s54 = sphi 0, %s38
      %s60 = sphi 0, %s62
      %s63 = sphi 0, %s60
      %s64 = sphi 0, %s63
      %s80 = sphi 0, %s64
      %s86 = sphi 0, %s88
      %s89 = sphi 0, %s86
      %s90 = sphi 0, %s89
      %s106 = sphi 0, %s90
      %s114 = sphi 0, %s116
      %s117 = sphi 0, %s114
      %s118 = sphi 0, %s117
      %s134 = sphi 0, %s118
    $region4: #{tpu_custom_call.1} parent=1 // loop_header_branch
      %15 = sbr.rel (%p13) target = $region8
    $region5: #{tpu_custom_call.1} parent=1 // loop_body
      %s17 = ssub.s32 %s12, 1
      %s18 = ssub.s32 %s12, 2
      %s25 = sadd.s32 1, %s20
      %p26 = scmp.ge.s32.totalorder %s25, 1
      %s27 = scalar_select %p26, 0, %s25
      %s28 = sadd.s32 1, %s19
      %s29 = scalar_select %p26, %s28, %s19
      %p30 = scmp.ge.s32.totalorder %s29, 2
      %s31 = scalar_select %p30, 0, %s29
      %s32 = ssub.s32 %s19, %s31
      %p33 = scmp.eq.s32.totalorder %s32, 0
      %s35 = sadd.s32 %s34, 1
      %s36 = scalar_select %p33, %s34, %s35
      %p39 = pneg %p33
      %p40 = scmp.eq.s32.totalorder %s12, 1
      %p41 = por %p39, %p40
      %p42 = scmp.ne.s32.totalorder %s34, %s37
      %p43 = scmp.eq.s32.totalorder %s12, 0
      %p44 = por %p42, %p43
      %p45 = scmp.ne.s32.totalorder %s34, %s37
      %p46 = scmp.eq.s32.totalorder %s17, 1
      %p47 = por %p45, %p46
      %p48 = scmp.ne.s32.totalorder %s37, %s38
      %p49 = scmp.eq.s32.totalorder %s17, 0
      %p50 = por %p48, %p49
      %p51 = scmp.ne.s32.totalorder %s37, %s38
      %p52 = scmp.eq.s32.totalorder %s18, 1
      %p53 = por %p51, %p52
      %p55 = scmp.ne.s32.totalorder %s38, %s54
      %p56 = scmp.eq.s32.totalorder %s18, 0
      %p57 = por %p55, %p56
      %s58 = ssub.s32 %s20, %s27
      %p59 = scmp.eq.s32.totalorder %s58, 0
      %s61 = sadd.s32 %s60, 1
      %s62 = scalar_select %p59, %s60, %s61
      %p65 = pneg %p59
      %p66 = scmp.eq.s32.totalorder %s12, 1
      %p67 = por %p65, %p66
      %p68 = scmp.ne.s32.totalorder %s60, %s63
      %p69 = scmp.eq.s32.totalorder %s12, 0
      %p70 = por %p68, %p69
      %p71 = scmp.ne.s32.totalorder %s60, %s63
      %p72 = scmp.eq.s32.totalorder %s17, 1
      %p73 = por %p71, %p72
      %p74 = scmp.ne.s32.totalorder %s63, %s64
      %p75 = scmp.eq.s32.totalorder %s17, 0
      %p76 = por %p74, %p75
      %p77 = scmp.ne.s32.totalorder %s63, %s64
      %p78 = scmp.eq.s32.totalorder %s18, 1
      %p79 = por %p77, %p78
      %p81 = scmp.ne.s32.totalorder %s64, %s80
      %p82 = scmp.eq.s32.totalorder %s18, 0
      %p83 = por %p81, %p82
      %s84 = ssub.s32 %s20, %s27
      %p85 = scmp.eq.s32.totalorder %s84, 0
      %s87 = sadd.s32 %s86, 1
      %s88 = scalar_select %p85, %s86, %s87
      %p91 = pneg %p85
      %p92 = scmp.eq.s32.totalorder %s12, 1
      %p93 = por %p91, %p92
      %p94 = scmp.ne.s32.totalorder %s86, %s89
      %p95 = scmp.eq.s32.totalorder %s12, 0
      %p96 = por %p94, %p95
      %p97 = scmp.ne.s32.totalorder %s86, %s89
      %p98 = scmp.eq.s32.totalorder %s17, 1
      %p99 = por %p97, %p98
      %p100 = scmp.ne.s32.totalorder %s89, %s90
      %p101 = scmp.eq.s32.totalorder %s17, 0
      %p102 = por %p100, %p101
      %p103 = scmp.ne.s32.totalorder %s89, %s90
      %p104 = scmp.eq.s32.totalorder %s18, 1
      %p105 = por %p103, %p104
      %p107 = scmp.ne.s32.totalorder %s90, %s106
      %p108 = scmp.eq.s32.totalorder %s18, 0
      %p109 = por %p107, %p108
      %s110 = ssub.s32 %s19, %s31
      %s111 = ssub.s32 %s20, %s27
      %s112 = sor.u32 %s110, %s111
      %p113 = scmp.eq.s32.totalorder %s112, 0
      %s115 = sadd.s32 %s114, 1
      %s116 = scalar_select %p113, %s114, %s115
      %p119 = pneg %p113
      %p120 = scmp.eq.s32.totalorder %s12, 1
      %p121 = por %p119, %p120
      %p122 = scmp.ne.s32.totalorder %s114, %s117
      %p123 = scmp.eq.s32.totalorder %s12, 0
      %p124 = por %p122, %p123
      %p125 = scmp.ne.s32.totalorder %s114, %s117
      %p126 = scmp.eq.s32.totalorder %s17, 1
      %p127 = por %p125, %p126
      %p128 = scmp.ne.s32.totalorder %s117, %s118
      %p129 = scmp.eq.s32.totalorder %s17, 0
      %p130 = por %p128, %p129
      %p131 = scmp.ne.s32.totalorder %s117, %s118
      %p132 = scmp.eq.s32.totalorder %s18, 1
      %p133 = por %p131, %p132
      %p135 = scmp.ne.s32.totalorder %s118, %s134
      %p136 = scmp.eq.s32.totalorder %s18, 0
      %p137 = por %p135, %p136
      %p138 = scmp.le.s32.totalorder 1, %s12
      %p139 = scmp.lt.s32.totalorder %s12, 3
      %p140 = pnand %p138, %p139
      %p141 = pneg %p140
      // Predicated region
      $region9: #{tpu_custom_call.1} parent=5 // pred_check
        _
      $region10: #{tpu_custom_call.1} parent=5 // pred_check_branch
        %143 = sbr.rel (%p140) target = $region12
      $region11: #{tpu_custom_call.1} parent=5 // pred_region
        %s144 = ssub.s32 %s12, 1
        // Predicated region
        $region13: #{tpu_custom_call.1} parent=11 // pred_check
          %p145 = pneg %p76
        $region14: #{tpu_custom_call.1} parent=11 // pred_check_branch
          %147 = sbr.rel (%p145) target = $region16
        $region15: #{tpu_custom_call.1} parent=11 // pred_region
          %p148 = scmp.lt.s32.totalorder %s22, 0
          %s149 = scalar_select %p148, %s22, 0
          %s150 = smul.addr %s149, 4
          %s151 = scalar_lea.vmem %s1, %s150
        $region16: #{tpu_custom_call.1} parent=11 // pred_fallthru
          _
        // Predicated region
        $region17: #{tpu_custom_call.1} parent=11 // pred_check
          %p152 = pneg %p102
        $region18: #{tpu_custom_call.1} parent=11 // pred_check_branch
          %154 = sbr.rel (%p152) target = $region20
        $region19: #{tpu_custom_call.1} parent=11 // pred_region
          %p155 = scmp.lt.s32.totalorder %s22, 0
          %s156 = scalar_select %p155, %s22, 0
          %s157 = scalar_lea.vmem %s2, %s156
        $region20: #{tpu_custom_call.1} parent=11 // pred_fallthru
          _
      $region12: #{tpu_custom_call.1} parent=5 // pred_fallthru
        _
      %p158 = scmp.lt.s32.totalorder %s12, 2
      // Predicated region
      $region21: #{tpu_custom_call.1} parent=5 // pred_check
        %p159 = pneg %p158
      $region22: #{tpu_custom_call.1} parent=5 // pred_check_branch
        %161 = sbr.rel (%p159) target = $region24
      $region23: #{tpu_custom_call.1} parent=5 // pred_region
        // Predicated region
        $region25: #{tpu_custom_call.1} parent=23 // pred_check
          %p162 = pneg %p44
        $region26: #{tpu_custom_call.1} parent=23 // pred_check_branch
          %164 = sbr.rel (%p162) target = $region28
        $region27: #{tpu_custom_call.1} parent=23 // pred_region
          %p165 = scmp.lt.s32.totalorder %s19, 1
          %s166 = scalar_select %p165, %s19, 1
          %s167 = smul.addr %s166, 128
          %s168 = smul.addr %s167, 4
          %s169 = scalar_lea.vmem %s0, %s168
        $region28: #{tpu_custom_call.1} parent=23 // pred_fallthru
          _
      $region24: #{tpu_custom_call.1} parent=5 // pred_fallthru
        _
      %p170 = scmp.le.s32.totalorder 1, %s12
      %p171 = scmp.lt.s32.totalorder %s12, 3
      %p172 = pnand %p170, %p171
      %p173 = pneg %p172
      // Predicated region
      $region29: #{tpu_custom_call.1} parent=5 // pred_check
        _
      $region30: #{tpu_custom_call.1} parent=5 // pred_check_branch
        %175 = sbr.rel (%p172) target = $region32
      $region31: #{tpu_custom_call.1} parent=5 // pred_region
        %s176 = ssub.s32 %s12, 1
        %p177 = scmp.lt.s32.totalorder %s21, 1
        %s178 = scalar_select %p177, %s21, 1
        %s179 = smul.addr %s178, 128
        %s180 = smul.addr %s179, 4
        %s181 = scalar_lea.vmem %s0, %s180
        %p182 = pneg %p50
        %p183 = pneg %p47
        %p184 = scmp.lt.s32.totalorder %s22, 0
        %s185 = scalar_select %p184, %s22, 0
        %s186 = smul.addr %s185, 4
        %s187 = scalar_lea.vmem %s1, %s186
        %p188 = pneg %p76
        %p189 = pneg %p73
        %p190 = scmp.lt.s32.totalorder %s22, 0
        %s191 = scalar_select %p190, %s22, 0
        %s192 = scalar_lea.vmem %s2, %s191
        %p193 = pneg %p102
        %p194 = pneg %p99
        %p195 = pneg %p130
        %p196 = pneg %p127
        %s197 = sand.u32 %s117, 1
        %s198 = scalar_lea.sflag [#allocation4], %s197
        %s199 = sand.u32 %s117, 1
        %s200 = smul.addr %s199, 512
        %s201 = scalar_lea.vmem [#allocation3], %s200
        %p202 = scmp.lt.s32.totalorder %s21, 1
        %s203 = scalar_select %p202, %s21, 1
        %s204 = smul.addr %s203, 128
        %s205 = smul.addr %s204, 4
        %s206 = scalar_lea.vmem %s0, %s205
        %p207 = scmp.lt.s32.totalorder %s22, 0
        %s208 = scalar_select %p207, %s22, 0
        %s209 = smul.addr %s208, 4
        %s210 = scalar_lea.vmem %s1, %s209
        %p211 = scmp.lt.s32.totalorder %s22, 0
        %s212 = scalar_select %p211, %s22, 0
        %s213 = scalar_lea.vmem %s2, %s212
        %vm215 = vcmask 19456
        %216 = vst.msk [vmem:[#allocation2] sm:$0xf] %vm215, 0
        %217 = vst.msk [vmem:[#allocation2 + $0x4] sm:$0xf] %vm215, 0
        %218 = vst.msk [vmem:[#allocation2 + $0x8] sm:$0xf] %vm215, 0
        %219 = vst.msk [vmem:[#allocation2 + $0xc] sm:$0xf] %vm215, 0
        %vm220 = vcmask 16384
        %221 = vst.msk [vmem:[#allocation2 + $0x10] sm:$0x1] %vm220, 0
        %s222 = scalar_lea.vmem [#allocation2], 660
        %223 = vst.msk [vmem:[%s222] sm:$0xf] %vm215, 0
        %224 = vst.msk [vmem:[%s222 + $0x4] sm:$0xf] %vm215, 0
        %225 = vst.msk [vmem:[%s222 + $0x8] sm:$0xf] %vm215, 0
        %226 = vst.msk [vmem:[%s222 + $0xc] sm:$0xf] %vm215, 0
        %227 = vst.msk [vmem:[%s222 + $0x10] sm:$0x1] %vm220, 0
        %vm228 = vcmask 16384
        %vm229 = vsmask.f32 256
        %vm230 = vmand %vm228, %vm229
        %v231 = vld [vmem:[#allocation2] sm:$0x1]
        %v232 = vsel %vm230, 0, %v231
        %233 = vst [vmem:[#allocation2] sm:$0x1] %v232
        %v234 = vld [vmem:[#allocation2 + $0x14] sm:$0x1]
        %v235 = vsel %vm230, 0, %v234
        %236 = vst [vmem:[#allocation2 + $0x14] sm:$0x1] %v235
        %v237 = vld [vmem:[#allocation2 + $0x28] sm:$0x1]
        %v238 = vsel %vm230, 0, %v237
        %239 = vst [vmem:[#allocation2 + $0x28] sm:$0x1] %v238
        %v240 = vld [vmem:[#allocation2 + $0x3c] sm:$0x1]
        %v241 = vsel %vm230, 0, %v240
        %242 = vst [vmem:[#allocation2 + $0x3c] sm:$0x1] %v241
        %v243 = vld [vmem:[#allocation2 + $0x50] sm:$0x1]
        %v244 = vsel %vm230, 0, %v243
        %245 = vst [vmem:[#allocation2 + $0x50] sm:$0x1] %v244
        %v246 = vld [vmem:[#allocation2 + $0x64] sm:$0x1]
        %v247 = vsel %vm230, 0, %v246
        %248 = vst [vmem:[#allocation2 + $0x64] sm:$0x1] %v247
        %v249 = vld [vmem:[#allocation2 + $0x78] sm:$0x1]
        %v250 = vsel %vm230, 0, %v249
        %251 = vst [vmem:[#allocation2 + $0x78] sm:$0x1] %v250
        %v252 = vld [vmem:[#allocation2 + $0x8c] sm:$0x1]
        %v253 = vsel %vm230, 0, %v252
        %254 = vst [vmem:[#allocation2 + $0x8c] sm:$0x1] %v253
        %v255 = vld [vmem:[#allocation2 + $0xa0] sm:$0x1]
        %v256 = vsel %vm230, 0, %v255
        %257 = vst [vmem:[#allocation2 + $0xa0] sm:$0x1] %v256
        %v258 = vld [vmem:[#allocation2 + $0xb4] sm:$0x1]
        %v259 = vsel %vm230, 0, %v258
        %260 = vst [vmem:[#allocation2 + $0xb4] sm:$0x1] %v259
        %v261 = vld [vmem:[#allocation2 + $0xc8] sm:$0x1]
        %v262 = vsel %vm230, 0, %v261
        %263 = vst [vmem:[#allocation2 + $0xc8] sm:$0x1] %v262
        %v264 = vld [vmem:[#allocation2 + $0xdc] sm:$0x1]
        %v265 = vsel %vm230, 0, %v264
        %266 = vst [vmem:[#allocation2 + $0xdc] sm:$0x1] %v265
        %v267 = vld [vmem:[#allocation2 + $0xf0] sm:$0x1]
        %v268 = vsel %vm230, 0, %v267
        %269 = vst [vmem:[#allocation2 + $0xf0] sm:$0x1] %v268
        %v270 = vld [vmem:[#allocation2 + $0x104] sm:$0x1]
        %v271 = vsel %vm230, 0, %v270
        %272 = vst [vmem:[#allocation2 + $0x104] sm:$0x1] %v271
        %v273 = vld [vmem:[#allocation2 + $0x118] sm:$0x1]
        %v274 = vsel %vm230, 0, %v273
        %275 = vst [vmem:[#allocation2 + $0x118] sm:$0x1] %v274
        %v276 = vld [vmem:[#allocation2 + $0x12c] sm:$0x1]
        %v277 = vsel %vm230, 0, %v276
        %278 = vst [vmem:[#allocation2 + $0x12c] sm:$0x1] %v277
        %v279 = vld [vmem:[#allocation2 + $0x140] sm:$0x1]
        %v280 = vsel %vm230, 0, %v279
        %281 = vst [vmem:[#allocation2 + $0x140] sm:$0x1] %v280
        %v282 = vld [vmem:[#allocation2 + $0x154] sm:$0x1]
        %v283 = vsel %vm230, 0, %v282
        %284 = vst [vmem:[#allocation2 + $0x154] sm:$0x1] %v283
        %v285 = vld [vmem:[#allocation2 + $0x168] sm:$0x1]
        %v286 = vsel %vm230, 0, %v285
        %287 = vst [vmem:[#allocation2 + $0x168] sm:$0x1] %v286
        %v288 = vld [vmem:[#allocation2 + $0x17c] sm:$0x1]
        %v289 = vsel %vm230, 0, %v288
        %290 = vst [vmem:[#allocation2 + $0x17c] sm:$0x1] %v289
        %v291 = vld [vmem:[#allocation2 + $0x190] sm:$0x1]
        %v292 = vsel %vm230, 0, %v291
        %293 = vst [vmem:[#allocation2 + $0x190] sm:$0x1] %v292
        %v294 = vld [vmem:[#allocation2 + $0x1a4] sm:$0x1]
        %v295 = vsel %vm230, 0, %v294
        %296 = vst [vmem:[#allocation2 + $0x1a4] sm:$0x1] %v295
        %v297 = vld [vmem:[#allocation2 + $0x1b8] sm:$0x1]
        %v298 = vsel %vm230, 0, %v297
        %299 = vst [vmem:[#allocation2 + $0x1b8] sm:$0x1] %v298
        %v300 = vld [vmem:[#allocation2 + $0x1cc] sm:$0x1]
        %v301 = vsel %vm230, 0, %v300
        %302 = vst [vmem:[#allocation2 + $0x1cc] sm:$0x1] %v301
        %v303 = vld [vmem:[#allocation2 + $0x1e0] sm:$0x1]
        %v304 = vsel %vm230, 0, %v303
        %305 = vst [vmem:[#allocation2 + $0x1e0] sm:$0x1] %v304
        %v306 = vld [vmem:[#allocation2 + $0x1f4] sm:$0x1]
        %v307 = vsel %vm230, 0, %v306
        %308 = vst [vmem:[#allocation2 + $0x1f4] sm:$0x1] %v307
        %v309 = vld [vmem:[#allocation2 + $0x208] sm:$0x1]
        %v310 = vsel %vm230, 0, %v309
        %311 = vst [vmem:[#allocation2 + $0x208] sm:$0x1] %v310
        %v312 = vld [vmem:[#allocation2 + $0x21c] sm:$0x1]
        %v313 = vsel %vm230, 0, %v312
        %314 = vst [vmem:[#allocation2 + $0x21c] sm:$0x1] %v313
        %v315 = vld [vmem:[#allocation2 + $0x230] sm:$0x1]
        %v316 = vsel %vm230, 0, %v315
        %317 = vst [vmem:[#allocation2 + $0x230] sm:$0x1] %v316
        %v318 = vld [vmem:[#allocation2 + $0x244] sm:$0x1]
        %v319 = vsel %vm230, 0, %v318
        %320 = vst [vmem:[#allocation2 + $0x244] sm:$0x1] %v319
        %v321 = vld [vmem:[#allocation2 + $0x258] sm:$0x1]
        %v322 = vsel %vm230, 0, %v321
        %323 = vst [vmem:[#allocation2 + $0x258] sm:$0x1] %v322
        %v324 = vld [vmem:[#allocation2 + $0x26c] sm:$0x1]
        %v325 = vsel %vm230, 0, %v324
        %326 = vst [vmem:[#allocation2 + $0x26c] sm:$0x1] %v325
        %v327 = vld [vmem:[#allocation2 + $0x280] sm:$0x1]
        %v328 = vsel %vm230, 0, %v327
        %329 = vst [vmem:[#allocation2 + $0x280] sm:$0x1] %v328
        %v330 = vld [vmem:[#allocation2 + $0x294] sm:$0x1]
        %v331 = vsel %vm230, 0, %v330
        %332 = vst [vmem:[#allocation2 + $0x294] sm:$0x1] %v331
        %vm333 = vsmask.f32 7938
        %vm334 = vmand %vm228, %vm333
        %v335 = vld [vmem:[#allocation2 + $0x10] sm:$0x1]
        %v336 = vsel %vm334, 0, %v335
        %337 = vst [vmem:[#allocation2 + $0x10] sm:$0x1] %v336
        %v338 = vld [vmem:[#allocation2 + $0x24] sm:$0x1]
        %v339 = vsel %vm334, 0, %v338
        %340 = vst [vmem:[#allocation2 + $0x24] sm:$0x1] %v339
        %v341 = vld [vmem:[#allocation2 + $0x38] sm:$0x1]
        %v342 = vsel %vm334, 0, %v341
        %343 = vst [vmem:[#allocation2 + $0x38] sm:$0x1] %v342
        %v344 = vld [vmem:[#allocation2 + $0x4c] sm:$0x1]
        %v345 = vsel %vm334, 0, %v344
        %346 = vst [vmem:[#allocation2 + $0x4c] sm:$0x1] %v345
        %v347 = vld [vmem:[#allocation2 + $0x60] sm:$0x1]
        %v348 = vsel %vm334, 0, %v347
        %349 = vst [vmem:[#allocation2 + $0x60] sm:$0x1] %v348
        %v350 = vld [vmem:[#allocation2 + $0x74] sm:$0x1]
        %v351 = vsel %vm334, 0, %v350
        %352 = vst [vmem:[#allocation2 + $0x74] sm:$0x1] %v351
        %v353 = vld [vmem:[#allocation2 + $0x88] sm:$0x1]
        %v354 = vsel %vm334, 0, %v353
        %355 = vst [vmem:[#allocation2 + $0x88] sm:$0x1] %v354
        %v356 = vld [vmem:[#allocation2 + $0x9c] sm:$0x1]
        %v357 = vsel %vm334, 0, %v356
        %358 = vst [vmem:[#allocation2 + $0x9c] sm:$0x1] %v357
        %v359 = vld [vmem:[#allocation2 + $0xb0] sm:$0x1]
        %v360 = vsel %vm334, 0, %v359
        %361 = vst [vmem:[#allocation2 + $0xb0] sm:$0x1] %v360
        %v362 = vld [vmem:[#allocation2 + $0xc4] sm:$0x1]
        %v363 = vsel %vm334, 0, %v362
        %364 = vst [vmem:[#allocation2 + $0xc4] sm:$0x1] %v363
        %v365 = vld [vmem:[#allocation2 + $0xd8] sm:$0x1]
        %v366 = vsel %vm334, 0, %v365
        %367 = vst [vmem:[#allocation2 + $0xd8] sm:$0x1] %v366
        %v368 = vld [vmem:[#allocation2 + $0xec] sm:$0x1]
        %v369 = vsel %vm334, 0, %v368
        %370 = vst [vmem:[#allocation2 + $0xec] sm:$0x1] %v369
        %v371 = vld [vmem:[#allocation2 + $0x100] sm:$0x1]
        %v372 = vsel %vm334, 0, %v371
        %373 = vst [vmem:[#allocation2 + $0x100] sm:$0x1] %v372
        %v374 = vld [vmem:[#allocation2 + $0x114] sm:$0x1]
        %v375 = vsel %vm334, 0, %v374
        %376 = vst [vmem:[#allocation2 + $0x114] sm:$0x1] %v375
        %v377 = vld [vmem:[#allocation2 + $0x128] sm:$0x1]
        %v378 = vsel %vm334, 0, %v377
        %379 = vst [vmem:[#allocation2 + $0x128] sm:$0x1] %v378
        %v380 = vld [vmem:[#allocation2 + $0x13c] sm:$0x1]
        %v381 = vsel %vm334, 0, %v380
        %382 = vst [vmem:[#allocation2 + $0x13c] sm:$0x1] %v381
        %v383 = vld [vmem:[#allocation2 + $0x150] sm:$0x1]
        %v384 = vsel %vm334, 0, %v383
        %385 = vst [vmem:[#allocation2 + $0x150] sm:$0x1] %v384
        %v386 = vld [vmem:[#allocation2 + $0x164] sm:$0x1]
        %v387 = vsel %vm334, 0, %v386
        %388 = vst [vmem:[#allocation2 + $0x164] sm:$0x1] %v387
        %v389 = vld [vmem:[#allocation2 + $0x178] sm:$0x1]
        %v390 = vsel %vm334, 0, %v389
        %391 = vst [vmem:[#allocation2 + $0x178] sm:$0x1] %v390
        %v392 = vld [vmem:[#allocation2 + $0x18c] sm:$0x1]
        %v393 = vsel %vm334, 0, %v392
        %394 = vst [vmem:[#allocation2 + $0x18c] sm:$0x1] %v393
        %v395 = vld [vmem:[#allocation2 + $0x1a0] sm:$0x1]
        %v396 = vsel %vm334, 0, %v395
        %397 = vst [vmem:[#allocation2 + $0x1a0] sm:$0x1] %v396
        %v398 = vld [vmem:[#allocation2 + $0x1b4] sm:$0x1]
        %v399 = vsel %vm334, 0, %v398
        %400 = vst [vmem:[#allocation2 + $0x1b4] sm:$0x1] %v399
        %v401 = vld [vmem:[#allocation2 + $0x1c8] sm:$0x1]
        %v402 = vsel %vm334, 0, %v401
        %403 = vst [vmem:[#allocation2 + $0x1c8] sm:$0x1] %v402
        %v404 = vld [vmem:[#allocation2 + $0x1dc] sm:$0x1]
        %v405 = vsel %vm334, 0, %v404
        %406 = vst [vmem:[#allocation2 + $0x1dc] sm:$0x1] %v405
        %v407 = vld [vmem:[#allocation2 + $0x1f0] sm:$0x1]
        %v408 = vsel %vm334, 0, %v407
        %409 = vst [vmem:[#allocation2 + $0x1f0] sm:$0x1] %v408
        %v410 = vld [vmem:[#allocation2 + $0x204] sm:$0x1]
        %v411 = vsel %vm334, 0, %v410
        %412 = vst [vmem:[#allocation2 + $0x204] sm:$0x1] %v411
        %v413 = vld [vmem:[#allocation2 + $0x218] sm:$0x1]
        %v414 = vsel %vm334, 0, %v413
        %415 = vst [vmem:[#allocation2 + $0x218] sm:$0x1] %v414
        %v416 = vld [vmem:[#allocation2 + $0x22c] sm:$0x1]
        %v417 = vsel %vm334, 0, %v416
        %418 = vst [vmem:[#allocation2 + $0x22c] sm:$0x1] %v417
        %v419 = vld [vmem:[#allocation2 + $0x240] sm:$0x1]
        %v420 = vsel %vm334, 0, %v419
        %421 = vst [vmem:[#allocation2 + $0x240] sm:$0x1] %v420
        %v422 = vld [vmem:[#allocation2 + $0x254] sm:$0x1]
        %v423 = vsel %vm334, 0, %v422
        %424 = vst [vmem:[#allocation2 + $0x254] sm:$0x1] %v423
        %v425 = vld [vmem:[#allocation2 + $0x268] sm:$0x1]
        %v426 = vsel %vm334, 0, %v425
        %427 = vst [vmem:[#allocation2 + $0x268] sm:$0x1] %v426
        %v428 = vld [vmem:[#allocation2 + $0x27c] sm:$0x1]
        %v429 = vsel %vm334, 0, %v428
        %430 = vst [vmem:[#allocation2 + $0x27c] sm:$0x1] %v429
        %v431 = vld [vmem:[#allocation2 + $0x290] sm:$0x1]
        %v432 = vsel %vm334, 0, %v431
        %433 = vst [vmem:[#allocation2 + $0x290] sm:$0x1] %v432
        %v434 = vld [vmem:[#allocation2 + $0x2a4] sm:$0x1]
        %v435 = vsel %vm334, 0, %v434
        %436 = vst [vmem:[#allocation2 + $0x2a4] sm:$0x1] %v435
        %v437 = vld [vmem:[%s206] sm:$0xf]
        %v438 = vld [vmem:[%s206 + $0x4] sm:$0xf]
        %v439 = vld [vmem:[%s206 + $0x8] sm:$0xf]
        %v440 = vld [vmem:[%s206 + $0xc] sm:$0xf]
        %v441 = vld [vmem:[%s206 + $0x10] sm:$0xf]
        %v442 = vld [vmem:[%s206 + $0x14] sm:$0xf]
        %v443 = vld [vmem:[%s206 + $0x18] sm:$0xf]
        %v444 = vld [vmem:[%s206 + $0x1c] sm:$0xf]
        %v445 = vld [vmem:[%s206 + $0x20] sm:$0xf]
        %v446 = vld [vmem:[%s206 + $0x24] sm:$0xf]
        %v447 = vld [vmem:[%s206 + $0x28] sm:$0xf]
        %v448 = vld [vmem:[%s206 + $0x2c] sm:$0xf]
        %v449 = vld [vmem:[%s206 + $0x30] sm:$0xf]
        %v450 = vld [vmem:[%s206 + $0x34] sm:$0xf]
        %v451 = vld [vmem:[%s206 + $0x38] sm:$0xf]
        %v452 = vld [vmem:[%s206 + $0x3c] sm:$0xf]
        %v453 = vld [vmem:[%s206 + $0x40] sm:$0xf]
        %v454 = vld [vmem:[%s206 + $0x44] sm:$0xf]
        %v455 = vld [vmem:[%s206 + $0x48] sm:$0xf]
        %v456 = vld [vmem:[%s206 + $0x4c] sm:$0xf]
        %v457 = vld [vmem:[%s206 + $0x50] sm:$0xf]
        %v458 = vld [vmem:[%s206 + $0x54] sm:$0xf]
        %v459 = vld [vmem:[%s206 + $0x58] sm:$0xf]
        %v460 = vld [vmem:[%s206 + $0x5c] sm:$0xf]
        %v461 = vld [vmem:[%s206 + $0x60] sm:$0xf]
        %v462 = vld [vmem:[%s206 + $0x64] sm:$0xf]
        %v463 = vld [vmem:[%s206 + $0x68] sm:$0xf]
        %v464 = vld [vmem:[%s206 + $0x6c] sm:$0xf]
        %v465 = vld [vmem:[%s206 + $0x70] sm:$0xf]
        %v466 = vld [vmem:[%s206 + $0x74] sm:$0xf]
        %v467 = vld [vmem:[%s206 + $0x78] sm:$0xf]
        %v468 = vld [vmem:[%s206 + $0x7c] sm:$0xf]
        %v469 = vld [vmem:[%s206 + $0x80] sm:$0xf]
        %v470 = vld [vmem:[%s206 + $0x84] sm:$0xf]
        %v471 = vld [vmem:[%s206 + $0x88] sm:$0xf]
        %v472 = vld [vmem:[%s206 + $0x8c] sm:$0xf]
        %v473 = vld [vmem:[%s206 + $0x90] sm:$0xf]
        %v474 = vld [vmem:[%s206 + $0x94] sm:$0xf]
        %v475 = vld [vmem:[%s206 + $0x98] sm:$0xf]
        %v476 = vld [vmem:[%s206 + $0x9c] sm:$0xf]
        %v477 = vld [vmem:[%s206 + $0xa0] sm:$0xf]
        %v478 = vld [vmem:[%s206 + $0xa4] sm:$0xf]
        %v479 = vld [vmem:[%s206 + $0xa8] sm:$0xf]
        %v480 = vld [vmem:[%s206 + $0xac] sm:$0xf]
        %v481 = vld [vmem:[%s206 + $0xb0] sm:$0xf]
        %v482 = vld [vmem:[%s206 + $0xb4] sm:$0xf]
        %v483 = vld [vmem:[%s206 + $0xb8] sm:$0xf]
        %v484 = vld [vmem:[%s206 + $0xbc] sm:$0xf]
        %v485 = vld [vmem:[%s206 + $0xc0] sm:$0xf]
        %v486 = vld [vmem:[%s206 + $0xc4] sm:$0xf]
        %v487 = vld [vmem:[%s206 + $0xc8] sm:$0xf]
        %v488 = vld [vmem:[%s206 + $0xcc] sm:$0xf]
        %v489 = vld [vmem:[%s206 + $0xd0] sm:$0xf]
        %v490 = vld [vmem:[%s206 + $0xd4] sm:$0xf]
        %v491 = vld [vmem:[%s206 + $0xd8] sm:$0xf]
        %v492 = vld [vmem:[%s206 + $0xdc] sm:$0xf]
        %v493 = vld [vmem:[%s206 + $0xe0] sm:$0xf]
        %v494 = vld [vmem:[%s206 + $0xe4] sm:$0xf]
        %v495 = vld [vmem:[%s206 + $0xe8] sm:$0xf]
        %v496 = vld [vmem:[%s206 + $0xec] sm:$0xf]
        %v497 = vld [vmem:[%s206 + $0xf0] sm:$0xf]
        %v498 = vld [vmem:[%s206 + $0xf4] sm:$0xf]
        %v499 = vld [vmem:[%s206 + $0xf8] sm:$0xf]
        %v500 = vld [vmem:[%s206 + $0xfc] sm:$0xf]
        %v501 = vld [vmem:[%s206 + $0x100] sm:$0xf]
        %v502 = vld [vmem:[%s206 + $0x104] sm:$0xf]
        %v503 = vld [vmem:[%s206 + $0x108] sm:$0xf]
        %v504 = vld [vmem:[%s206 + $0x10c] sm:$0xf]
        %v505 = vld [vmem:[%s206 + $0x110] sm:$0xf]
        %v506 = vld [vmem:[%s206 + $0x114] sm:$0xf]
        %v507 = vld [vmem:[%s206 + $0x118] sm:$0xf]
        %v508 = vld [vmem:[%s206 + $0x11c] sm:$0xf]
        %v509 = vld [vmem:[%s206 + $0x120] sm:$0xf]
        %v510 = vld [vmem:[%s206 + $0x124] sm:$0xf]
        %v511 = vld [vmem:[%s206 + $0x128] sm:$0xf]
        %v512 = vld [vmem:[%s206 + $0x12c] sm:$0xf]
        %v513 = vld [vmem:[%s206 + $0x130] sm:$0xf]
        %v514 = vld [vmem:[%s206 + $0x134] sm:$0xf]
        %v515 = vld [vmem:[%s206 + $0x138] sm:$0xf]
        %v516 = vld [vmem:[%s206 + $0x13c] sm:$0xf]
        %v517 = vld [vmem:[%s206 + $0x140] sm:$0xf]
        %v518 = vld [vmem:[%s206 + $0x144] sm:$0xf]
        %v519 = vld [vmem:[%s206 + $0x148] sm:$0xf]
        %v520 = vld [vmem:[%s206 + $0x14c] sm:$0xf]
        %v521 = vld [vmem:[%s206 + $0x150] sm:$0xf]
        %v522 = vld [vmem:[%s206 + $0x154] sm:$0xf]
        %v523 = vld [vmem:[%s206 + $0x158] sm:$0xf]
        %v524 = vld [vmem:[%s206 + $0x15c] sm:$0xf]
        %v525 = vld [vmem:[%s206 + $0x160] sm:$0xf]
        %v526 = vld [vmem:[%s206 + $0x164] sm:$0xf]
        %v527 = vld [vmem:[%s206 + $0x168] sm:$0xf]
        %v528 = vld [vmem:[%s206 + $0x16c] sm:$0xf]
        %v529 = vld [vmem:[%s206 + $0x170] sm:$0xf]
        %v530 = vld [vmem:[%s206 + $0x174] sm:$0xf]
        %v531 = vld [vmem:[%s206 + $0x178] sm:$0xf]
        %v532 = vld [vmem:[%s206 + $0x17c] sm:$0xf]
        %v533 = vld [vmem:[%s206 + $0x180] sm:$0xf]
        %v534 = vld [vmem:[%s206 + $0x184] sm:$0xf]
        %v535 = vld [vmem:[%s206 + $0x188] sm:$0xf]
        %v536 = vld [vmem:[%s206 + $0x18c] sm:$0xf]
        %v537 = vld [vmem:[%s206 + $0x190] sm:$0xf]
        %v538 = vld [vmem:[%s206 + $0x194] sm:$0xf]
        %v539 = vld [vmem:[%s206 + $0x198] sm:$0xf]
        %v540 = vld [vmem:[%s206 + $0x19c] sm:$0xf]
        %v541 = vld [vmem:[%s206 + $0x1a0] sm:$0xf]
        %v542 = vld [vmem:[%s206 + $0x1a4] sm:$0xf]
        %v543 = vld [vmem:[%s206 + $0x1a8] sm:$0xf]
        %v544 = vld [vmem:[%s206 + $0x1ac] sm:$0xf]
        %v545 = vld [vmem:[%s206 + $0x1b0] sm:$0xf]
        %v546 = vld [vmem:[%s206 + $0x1b4] sm:$0xf]
        %v547 = vld [vmem:[%s206 + $0x1b8] sm:$0xf]
        %v548 = vld [vmem:[%s206 + $0x1bc] sm:$0xf]
        %v549 = vld [vmem:[%s206 + $0x1c0] sm:$0xf]
        %v550 = vld [vmem:[%s206 + $0x1c4] sm:$0xf]
        %v551 = vld [vmem:[%s206 + $0x1c8] sm:$0xf]
        %v552 = vld [vmem:[%s206 + $0x1cc] sm:$0xf]
        %v553 = vld [vmem:[%s206 + $0x1d0] sm:$0xf]
        %v554 = vld [vmem:[%s206 + $0x1d4] sm:$0xf]
        %v555 = vld [vmem:[%s206 + $0x1d8] sm:$0xf]
        %v556 = vld [vmem:[%s206 + $0x1dc] sm:$0xf]
        %v557 = vld [vmem:[%s206 + $0x1e0] sm:$0xf]
        %v558 = vld [vmem:[%s206 + $0x1e4] sm:$0xf]
        %v559 = vld [vmem:[%s206 + $0x1e8] sm:$0xf]
        %v560 = vld [vmem:[%s206 + $0x1ec] sm:$0xf]
        %v561 = vld [vmem:[%s206 + $0x1f0] sm:$0xf]
        %v562 = vld [vmem:[%s206 + $0x1f4] sm:$0xf]
        %v563 = vld [vmem:[%s206 + $0x1f8] sm:$0xf]
        %v564 = vld [vmem:[%s206 + $0x1fc] sm:$0xf]
        %vm565 = vsmask.f32 4368
        %vm566 = vmor %vm229, %vm565
        %v568 = vshrl.u32 %v437, 16
        %v570 = vrot.slane %v568, 7
        %v571 = vshll.u32 %v437, 16
        %v573 = vor.u32 %v570, %v571
        %v574 = vrot.slane %v570, 4
        %v576 = vshrl.u32 %v438, 16
        %v578 = vrot.slane %v576, 7
        %v579 = vshll.u32 %v438, 16
        %v581 = vor.u32 %v578, %v579
        %v582 = vsel %vm566, %v574, %v581
        %v583 = vrot.slane %v578, 4
        %v585 = vshrl.u32 %v439, 16
        %v587 = vrot.slane %v585, 7
        %v588 = vshll.u32 %v439, 16
        %v590 = vor.u32 %v587, %v588
        %v591 = vsel %vm566, %v583, %v590
        %v592 = vrot.slane %v587, 4
        %v594 = vshrl.u32 %v440, 16
        %v596 = vrot.slane %v594, 7
        %v597 = vshll.u32 %v440, 16
        %v599 = vor.u32 %v596, %v597
        %v600 = vsel %vm566, %v592, %v599
        %v601 = vrot.slane %v596, 4
        %v603 = vshrl.u32 %v441, 16
        %v605 = vrot.slane %v603, 7
        %v606 = vshll.u32 %v441, 16
        %v608 = vor.u32 %v605, %v606
        %v609 = vrot.slane %v605, 4
        %v611 = vshrl.u32 %v442, 16
        %v613 = vrot.slane %v611, 7
        %v614 = vshll.u32 %v442, 16
        %v616 = vor.u32 %v613, %v614
        %v617 = vsel %vm566, %v609, %v616
        %v618 = vrot.slane %v613, 4
        %v620 = vshrl.u32 %v443, 16
        %v622 = vrot.slane %v620, 7
        %v623 = vshll.u32 %v443, 16
        %v625 = vor.u32 %v622, %v623
        %v626 = vsel %vm566, %v618, %v625
        %v627 = vrot.slane %v622, 4
        %v629 = vshrl.u32 %v444, 16
        %v631 = vrot.slane %v629, 7
        %v632 = vshll.u32 %v444, 16
        %v634 = vor.u32 %v631, %v632
        %v635 = vsel %vm566, %v627, %v634
        %v636 = vrot.slane %v631, 4
        %v638 = vshrl.u32 %v445, 16
        %v640 = vrot.slane %v638, 7
        %v641 = vshll.u32 %v445, 16
        %v643 = vor.u32 %v640, %v641
        %v644 = vrot.slane %v640, 4
        %v646 = vshrl.u32 %v446, 16
        %v648 = vrot.slane %v646, 7
        %v649 = vshll.u32 %v446, 16
        %v651 = vor.u32 %v648, %v649
        %v652 = vsel %vm566, %v644, %v651
        %v653 = vrot.slane %v648, 4
        %v655 = vshrl.u32 %v447, 16
        %v657 = vrot.slane %v655, 7
        %v658 = vshll.u32 %v447, 16
        %v660 = vor.u32 %v657, %v658
        %v661 = vsel %vm566, %v653, %v660
        %v662 = vrot.slane %v657, 4
        %v664 = vshrl.u32 %v448, 16
        %v666 = vrot.slane %v664, 7
        %v667 = vshll.u32 %v448, 16
        %v669 = vor.u32 %v666, %v667
        %v670 = vsel %vm566, %v662, %v669
        %v671 = vrot.slane %v666, 4
        %v673 = vshrl.u32 %v449, 16
        %v675 = vrot.slane %v673, 7
        %v676 = vshll.u32 %v449, 16
        %v678 = vor.u32 %v675, %v676
        %v679 = vrot.slane %v675, 4
        %v681 = vshrl.u32 %v450, 16
        %v683 = vrot.slane %v681, 7
        %v684 = vshll.u32 %v450, 16
        %v686 = vor.u32 %v683, %v684
        %v687 = vsel %vm566, %v679, %v686
        %v688 = vrot.slane %v683, 4
        %v690 = vshrl.u32 %v451, 16
        %v692 = vrot.slane %v690, 7
        %v693 = vshll.u32 %v451, 16
        %v695 = vor.u32 %v692, %v693
        %v696 = vsel %vm566, %v688, %v695
        %v697 = vrot.slane %v692, 4
        %v699 = vshrl.u32 %v452, 16
        %v701 = vrot.slane %v699, 7
        %v702 = vshll.u32 %v452, 16
        %v704 = vor.u32 %v701, %v702
        %v705 = vsel %vm566, %v697, %v704
        %v706 = vrot.slane %v701, 4
        %v708 = vshrl.u32 %v453, 16
        %v710 = vrot.slane %v708, 7
        %v711 = vshll.u32 %v453, 16
        %v713 = vor.u32 %v710, %v711
        %v714 = vrot.slane %v710, 4
        %v716 = vshrl.u32 %v454, 16
        %v718 = vrot.slane %v716, 7
        %v719 = vshll.u32 %v454, 16
        %v721 = vor.u32 %v718, %v719
        %v722 = vsel %vm566, %v714, %v721
        %v723 = vrot.slane %v718, 4
        %v725 = vshrl.u32 %v455, 16
        %v727 = vrot.slane %v725, 7
        %v728 = vshll.u32 %v455, 16
        %v730 = vor.u32 %v727, %v728
        %v731 = vsel %vm566, %v723, %v730
        %v732 = vrot.slane %v727, 4
        %v734 = vshrl.u32 %v456, 16
        %v736 = vrot.slane %v734, 7
        %v737 = vshll.u32 %v456, 16
        %v739 = vor.u32 %v736, %v737
        %v740 = vsel %vm566, %v732, %v739
        %v741 = vrot.slane %v736, 4
        %v743 = vshrl.u32 %v457, 16
        %v745 = vrot.slane %v743, 7
        %v746 = vshll.u32 %v457, 16
        %v748 = vor.u32 %v745, %v746
        %v749 = vrot.slane %v745, 4
        %v751 = vshrl.u32 %v458, 16
        %v753 = vrot.slane %v751, 7
        %v754 = vshll.u32 %v458, 16
        %v756 = vor.u32 %v753, %v754
        %v757 = vsel %vm566, %v749, %v756
        %v758 = vrot.slane %v753, 4
        %v760 = vshrl.u32 %v459, 16
        %v762 = vrot.slane %v760, 7
        %v763 = vshll.u32 %v459, 16
        %v765 = vor.u32 %v762, %v763
        %v766 = vsel %vm566, %v758, %v765
        %v767 = vrot.slane %v762, 4
        %v769 = vshrl.u32 %v460, 16
        %v771 = vrot.slane %v769, 7
        %v772 = vshll.u32 %v460, 16
        %v774 = vor.u32 %v771, %v772
        %v775 = vsel %vm566, %v767, %v774
        %v776 = vrot.slane %v771, 4
        %v778 = vshrl.u32 %v461, 16
        %v780 = vrot.slane %v778, 7
        %v781 = vshll.u32 %v461, 16
        %v783 = vor.u32 %v780, %v781
        %v784 = vrot.slane %v780, 4
        %v786 = vshrl.u32 %v462, 16
        %v788 = vrot.slane %v786, 7
        %v789 = vshll.u32 %v462, 16
        %v791 = vor.u32 %v788, %v789
        %v792 = vsel %vm566, %v784, %v791
        %v793 = vrot.slane %v788, 4
        %v795 = vshrl.u32 %v463, 16
        %v797 = vrot.slane %v795, 7
        %v798 = vshll.u32 %v463, 16
        %v800 = vor.u32 %v797, %v798
        %v801 = vsel %vm566, %v793, %v800
        %v802 = vrot.slane %v797, 4
        %v804 = vshrl.u32 %v464, 16
        %v806 = vrot.slane %v804, 7
        %v807 = vshll.u32 %v464, 16
        %v809 = vor.u32 %v806, %v807
        %v810 = vsel %vm566, %v802, %v809
        %v811 = vrot.slane %v806, 4
        %v813 = vshrl.u32 %v465, 16
        %v815 = vrot.slane %v813, 7
        %v816 = vshll.u32 %v465, 16
        %v818 = vor.u32 %v815, %v816
        %v819 = vrot.slane %v815, 4
        %v821 = vshrl.u32 %v466, 16
        %v823 = vrot.slane %v821, 7
        %v824 = vshll.u32 %v466, 16
        %v826 = vor.u32 %v823, %v824
        %v827 = vsel %vm566, %v819, %v826
        %v828 = vrot.slane %v823, 4
        %v830 = vshrl.u32 %v467, 16
        %v832 = vrot.slane %v830, 7
        %v833 = vshll.u32 %v467, 16
        %v835 = vor.u32 %v832, %v833
        %v836 = vsel %vm566, %v828, %v835
        %v837 = vrot.slane %v832, 4
        %v839 = vshrl.u32 %v468, 16
        %v841 = vrot.slane %v839, 7
        %v842 = vshll.u32 %v468, 16
        %v844 = vor.u32 %v841, %v842
        %v845 = vsel %vm566, %v837, %v844
        %v846 = vrot.slane %v841, 4
        %v848 = vshrl.u32 %v469, 16
        %v850 = vrot.slane %v848, 7
        %v851 = vshll.u32 %v469, 16
        %v853 = vor.u32 %v850, %v851
        %v854 = vrot.slane %v850, 4
        %v856 = vshrl.u32 %v470, 16
        %v858 = vrot.slane %v856, 7
        %v859 = vshll.u32 %v470, 16
        %v861 = vor.u32 %v858, %v859
        %v862 = vsel %vm566, %v854, %v861
        %v863 = vrot.slane %v858, 4
        %v865 = vshrl.u32 %v471, 16
        %v867 = vrot.slane %v865, 7
        %v868 = vshll.u32 %v471, 16
        %v870 = vor.u32 %v867, %v868
        %v871 = vsel %vm566, %v863, %v870
        %v872 = vrot.slane %v867, 4
        %v874 = vshrl.u32 %v472, 16
        %v876 = vrot.slane %v874, 7
        %v877 = vshll.u32 %v472, 16
        %v879 = vor.u32 %v876, %v877
        %v880 = vsel %vm566, %v872, %v879
        %v881 = vrot.slane %v876, 4
        %v883 = vshrl.u32 %v473, 16
        %v885 = vrot.slane %v883, 7
        %v886 = vshll.u32 %v473, 16
        %v888 = vor.u32 %v885, %v886
        %v889 = vrot.slane %v885, 4
        %v891 = vshrl.u32 %v474, 16
        %v893 = vrot.slane %v891, 7
        %v894 = vshll.u32 %v474, 16
        %v896 = vor.u32 %v893, %v894
        %v897 = vsel %vm566, %v889, %v896
        %v898 = vrot.slane %v893, 4
        %v900 = vshrl.u32 %v475, 16
        %v902 = vrot.slane %v900, 7
        %v903 = vshll.u32 %v475, 16
        %v905 = vor.u32 %v902, %v903
        %v906 = vsel %vm566, %v898, %v905
        %v907 = vrot.slane %v902, 4
        %v909 = vshrl.u32 %v476, 16
        %v911 = vrot.slane %v909, 7
        %v912 = vshll.u32 %v476, 16
        %v914 = vor.u32 %v911, %v912
        %v915 = vsel %vm566, %v907, %v914
        %v916 = vrot.slane %v911, 4
        %v918 = vshrl.u32 %v477, 16
        %v920 = vrot.slane %v918, 7
        %v921 = vshll.u32 %v477, 16
        %v923 = vor.u32 %v920, %v921
        %v924 = vrot.slane %v920, 4
        %v926 = vshrl.u32 %v478, 16
        %v928 = vrot.slane %v926, 7
        %v929 = vshll.u32 %v478, 16
        %v931 = vor.u32 %v928, %v929
        %v932 = vsel %vm566, %v924, %v931
        %v933 = vrot.slane %v928, 4
        %v935 = vshrl.u32 %v479, 16
        %v937 = vrot.slane %v935, 7
        %v938 = vshll.u32 %v479, 16
        %v940 = vor.u32 %v937, %v938
        %v941 = vsel %vm566, %v933, %v940
        %v942 = vrot.slane %v937, 4
        %v944 = vshrl.u32 %v480, 16
        %v946 = vrot.slane %v944, 7
        %v947 = vshll.u32 %v480, 16
        %v949 = vor.u32 %v946, %v947
        %v950 = vsel %vm566, %v942, %v949
        %v951 = vrot.slane %v946, 4
        %v953 = vshrl.u32 %v481, 16
        %v955 = vrot.slane %v953, 7
        %v956 = vshll.u32 %v481, 16
        %v958 = vor.u32 %v955, %v956
        %v959 = vrot.slane %v955, 4
        %v961 = vshrl.u32 %v482, 16
        %v963 = vrot.slane %v961, 7
        %v964 = vshll.u32 %v482, 16
        %v966 = vor.u32 %v963, %v964
        %v967 = vsel %vm566, %v959, %v966
        %v968 = vrot.slane %v963, 4
        %v970 = vshrl.u32 %v483, 16
        %v972 = vrot.slane %v970, 7
        %v973 = vshll.u32 %v483, 16
        %v975 = vor.u32 %v972, %v973
        %v976 = vsel %vm566, %v968, %v975
        %v977 = vrot.slane %v972, 4
        %v979 = vshrl.u32 %v484, 16
        %v981 = vrot.slane %v979, 7
        %v982 = vshll.u32 %v484, 16
        %v984 = vor.u32 %v981, %v982
        %v985 = vsel %vm566, %v977, %v984
        %v986 = vrot.slane %v981, 4
        %v988 = vshrl.u32 %v485, 16
        %v990 = vrot.slane %v988, 7
        %v991 = vshll.u32 %v485, 16
        %v993 = vor.u32 %v990, %v991
        %v994 = vrot.slane %v990, 4
        %v996 = vshrl.u32 %v486, 16
        %v998 = vrot.slane %v996, 7
        %v999 = vshll.u32 %v486, 16
        %v1001 = vor.u32 %v998, %v999
        %v1002 = vsel %vm566, %v994, %v1001
        %v1003 = vrot.slane %v998, 4
        %v1005 = vshrl.u32 %v487, 16
        %v1007 = vrot.slane %v1005, 7
        %v1008 = vshll.u32 %v487, 16
        %v1010 = vor.u32 %v1007, %v1008
        %v1011 = vsel %vm566, %v1003, %v1010
        %v1012 = vrot.slane %v1007, 4
        %v1014 = vshrl.u32 %v488, 16
        %v1016 = vrot.slane %v1014, 7
        %v1017 = vshll.u32 %v488, 16
        %v1019 = vor.u32 %v1016, %v1017
        %v1020 = vsel %vm566, %v1012, %v1019
        %v1021 = vrot.slane %v1016, 4
        %v1023 = vshrl.u32 %v489, 16
        %v1025 = vrot.slane %v1023, 7
        %v1026 = vshll.u32 %v489, 16
        %v1028 = vor.u32 %v1025, %v1026
        %v1029 = vrot.slane %v1025, 4
        %v1031 = vshrl.u32 %v490, 16
        %v1033 = vrot.slane %v1031, 7
        %v1034 = vshll.u32 %v490, 16
        %v1036 = vor.u32 %v1033, %v1034
        %v1037 = vsel %vm566, %v1029, %v1036
        %v1038 = vrot.slane %v1033, 4
        %v1040 = vshrl.u32 %v491, 16
        %v1042 = vrot.slane %v1040, 7
        %v1043 = vshll.u32 %v491, 16
        %v1045 = vor.u32 %v1042, %v1043
        %v1046 = vsel %vm566, %v1038, %v1045
        %v1047 = vrot.slane %v1042, 4
        %v1049 = vshrl.u32 %v492, 16
        %v1051 = vrot.slane %v1049, 7
        %v1052 = vshll.u32 %v492, 16
        %v1054 = vor.u32 %v1051, %v1052
        %v1055 = vsel %vm566, %v1047, %v1054
        %v1056 = vrot.slane %v1051, 4
        %v1058 = vshrl.u32 %v493, 16
        %v1060 = vrot.slane %v1058, 7
        %v1061 = vshll.u32 %v493, 16
        %v1063 = vor.u32 %v1060, %v1061
        %v1064 = vrot.slane %v1060, 4
        %v1066 = vshrl.u32 %v494, 16
        %v1068 = vrot.slane %v1066, 7
        %v1069 = vshll.u32 %v494, 16
        %v1071 = vor.u32 %v1068, %v1069
        %v1072 = vsel %vm566, %v1064, %v1071
        %v1073 = vrot.slane %v1068, 4
        %v1075 = vshrl.u32 %v495, 16
        %v1077 = vrot.slane %v1075, 7
        %v1078 = vshll.u32 %v495, 16
        %v1080 = vor.u32 %v1077, %v1078
        %v1081 = vsel %vm566, %v1073, %v1080
        %v1082 = vrot.slane %v1077, 4
        %v1084 = vshrl.u32 %v496, 16
        %v1086 = vrot.slane %v1084, 7
        %v1087 = vshll.u32 %v496, 16
        %v1089 = vor.u32 %v1086, %v1087
        %v1090 = vsel %vm566, %v1082, %v1089
        %v1091 = vrot.slane %v1086, 4
        %v1093 = vshrl.u32 %v497, 16
        %v1095 = vrot.slane %v1093, 7
        %v1096 = vshll.u32 %v497, 16
        %v1098 = vor.u32 %v1095, %v1096
        %v1099 = vrot.slane %v1095, 4
        %v1101 = vshrl.u32 %v498, 16
        %v1103 = vrot.slane %v1101, 7
        %v1104 = vshll.u32 %v498, 16
        %v1106 = vor.u32 %v1103, %v1104
        %v1107 = vsel %vm566, %v1099, %v1106
        %v1108 = vrot.slane %v1103, 4
        %v1110 = vshrl.u32 %v499, 16
        %v1112 = vrot.slane %v1110, 7
        %v1113 = vshll.u32 %v499, 16
        %v1115 = vor.u32 %v1112, %v1113
        %v1116 = vsel %vm566, %v1108, %v1115
        %v1117 = vrot.slane %v1112, 4
        %v1119 = vshrl.u32 %v500, 16
        %v1121 = vrot.slane %v1119, 7
        %v1122 = vshll.u32 %v500, 16
        %v1124 = vor.u32 %v1121, %v1122
        %v1125 = vsel %vm566, %v1117, %v1124
        %v1126 = vrot.slane %v1121, 4
        %v1128 = vshrl.u32 %v501, 16
        %v1130 = vrot.slane %v1128, 7
        %v1131 = vshll.u32 %v501, 16
        %v1133 = vor.u32 %v1130, %v1131
        %v1134 = vrot.slane %v1130, 4
        %v1136 = vshrl.u32 %v502, 16
        %v1138 = vrot.slane %v1136, 7
        %v1139 = vshll.u32 %v502, 16
        %v1141 = vor.u32 %v1138, %v1139
        %v1142 = vsel %vm566, %v1134, %v1141
        %v1143 = vrot.slane %v1138, 4
        %v1145 = vshrl.u32 %v503, 16
        %v1147 = vrot.slane %v1145, 7
        %v1148 = vshll.u32 %v503, 16
        %v1150 = vor.u32 %v1147, %v1148
        %v1151 = vsel %vm566, %v1143, %v1150
        %v1152 = vrot.slane %v1147, 4
        %v1154 = vshrl.u32 %v504, 16
        %v1156 = vrot.slane %v1154, 7
        %v1157 = vshll.u32 %v504, 16
        %v1159 = vor.u32 %v1156, %v1157
        %v1160 = vsel %vm566, %v1152, %v1159
        %v1161 = vrot.slane %v1156, 4
        %v1163 = vshrl.u32 %v505, 16
        %v1165 = vrot.slane %v1163, 7
        %v1166 = vshll.u32 %v505, 16
        %v1168 = vor.u32 %v1165, %v1166
        %v1169 = vrot.slane %v1165, 4
        %v1171 = vshrl.u32 %v506, 16
        %v1173 = vrot.slane %v1171, 7
        %v1174 = vshll.u32 %v506, 16
        %v1176 = vor.u32 %v1173, %v1174
        %v1177 = vsel %vm566, %v1169, %v1176
        %v1178 = vrot.slane %v1173, 4
        %v1180 = vshrl.u32 %v507, 16
        %v1182 = vrot.slane %v1180, 7
        %v1183 = vshll.u32 %v507, 16
        %v1185 = vor.u32 %v1182, %v1183
        %v1186 = vsel %vm566, %v1178, %v1185
        %v1187 = vrot.slane %v1182, 4
        %v1189 = vshrl.u32 %v508, 16
        %v1191 = vrot.slane %v1189, 7
        %v1192 = vshll.u32 %v508, 16
        %v1194 = vor.u32 %v1191, %v1192
        %v1195 = vsel %vm566, %v1187, %v1194
        %v1196 = vrot.slane %v1191, 4
        %v1198 = vshrl.u32 %v509, 16
        %v1200 = vrot.slane %v1198, 7
        %v1201 = vshll.u32 %v509, 16
        %v1203 = vor.u32 %v1200, %v1201
        %v1204 = vrot.slane %v1200, 4
        %v1206 = vshrl.u32 %v510, 16
        %v1208 = vrot.slane %v1206, 7
        %v1209 = vshll.u32 %v510, 16
        %v1211 = vor.u32 %v1208, %v1209
        %v1212 = vsel %vm566, %v1204, %v1211
        %v1213 = vrot.slane %v1208, 4
        %v1215 = vshrl.u32 %v511, 16
        %v1217 = vrot.slane %v1215, 7
        %v1218 = vshll.u32 %v511, 16
        %v1220 = vor.u32 %v1217, %v1218
        %v1221 = vsel %vm566, %v1213, %v1220
        %v1222 = vrot.slane %v1217, 4
        %v1224 = vshrl.u32 %v512, 16
        %v1226 = vrot.slane %v1224, 7
        %v1227 = vshll.u32 %v512, 16
        %v1229 = vor.u32 %v1226, %v1227
        %v1230 = vsel %vm566, %v1222, %v1229
        %v1231 = vrot.slane %v1226, 4
        %v1233 = vshrl.u32 %v513, 16
        %v1235 = vrot.slane %v1233, 7
        %v1236 = vshll.u32 %v513, 16
        %v1238 = vor.u32 %v1235, %v1236
        %v1239 = vrot.slane %v1235, 4
        %v1241 = vshrl.u32 %v514, 16
        %v1243 = vrot.slane %v1241, 7
        %v1244 = vshll.u32 %v514, 16
        %v1246 = vor.u32 %v1243, %v1244
        %v1247 = vsel %vm566, %v1239, %v1246
        %v1248 = vrot.slane %v1243, 4
        %v1250 = vshrl.u32 %v515, 16
        %v1252 = vrot.slane %v1250, 7
        %v1253 = vshll.u32 %v515, 16
        %v1255 = vor.u32 %v1252, %v1253
        %v1256 = vsel %vm566, %v1248, %v1255
        %v1257 = vrot.slane %v1252, 4
        %v1259 = vshrl.u32 %v516, 16
        %v1261 = vrot.slane %v1259, 7
        %v1262 = vshll.u32 %v516, 16
        %v1264 = vor.u32 %v1261, %v1262
        %v1265 = vsel %vm566, %v1257, %v1264
        %v1266 = vrot.slane %v1261, 4
        %v1268 = vshrl.u32 %v517, 16
        %v1270 = vrot.slane %v1268, 7
        %v1271 = vshll.u32 %v517, 16
        %v1273 = vor.u32 %v1270, %v1271
        %v1274 = vrot.slane %v1270, 4
        %v1276 = vshrl.u32 %v518, 16
        %v1278 = vrot.slane %v1276, 7
        %v1279 = vshll.u32 %v518, 16
        %v1281 = vor.u32 %v1278, %v1279
        %v1282 = vsel %vm566, %v1274, %v1281
        %v1283 = vrot.slane %v1278, 4
        %v1285 = vshrl.u32 %v519, 16
        %v1287 = vrot.slane %v1285, 7
        %v1288 = vshll.u32 %v519, 16
        %v1290 = vor.u32 %v1287, %v1288
        %v1291 = vsel %vm566, %v1283, %v1290
        %v1292 = vrot.slane %v1287, 4
        %v1294 = vshrl.u32 %v520, 16
        %v1296 = vrot.slane %v1294, 7
        %v1297 = vshll.u32 %v520, 16
        %v1299 = vor.u32 %v1296, %v1297
        %v1300 = vsel %vm566, %v1292, %v1299
        %v1301 = vrot.slane %v1296, 4
        %v1303 = vshrl.u32 %v521, 16
        %v1305 = vrot.slane %v1303, 7
        %v1306 = vshll.u32 %v521, 16
        %v1308 = vor.u32 %v1305, %v1306
        %v1309 = vrot.slane %v1305, 4
        %v1311 = vshrl.u32 %v522, 16
        %v1313 = vrot.slane %v1311, 7
        %v1314 = vshll.u32 %v522, 16
        %v1316 = vor.u32 %v1313, %v1314
        %v1317 = vsel %vm566, %v1309, %v1316
        %v1318 = vrot.slane %v1313, 4
        %v1320 = vshrl.u32 %v523, 16
        %v1322 = vrot.slane %v1320, 7
        %v1323 = vshll.u32 %v523, 16
        %v1325 = vor.u32 %v1322, %v1323
        %v1326 = vsel %vm566, %v1318, %v1325
        %v1327 = vrot.slane %v1322, 4
        %v1329 = vshrl.u32 %v524, 16
        %v1331 = vrot.slane %v1329, 7
        %v1332 = vshll.u32 %v524, 16
        %v1334 = vor.u32 %v1331, %v1332
        %v1335 = vsel %vm566, %v1327, %v1334
        %v1336 = vrot.slane %v1331, 4
        %v1338 = vshrl.u32 %v525, 16
        %v1340 = vrot.slane %v1338, 7
        %v1341 = vshll.u32 %v525, 16
        %v1343 = vor.u32 %v1340, %v1341
        %v1344 = vrot.slane %v1340, 4
        %v1346 = vshrl.u32 %v526, 16
        %v1348 = vrot.slane %v1346, 7
        %v1349 = vshll.u32 %v526, 16
        %v1351 = vor.u32 %v1348, %v1349
        %v1352 = vsel %vm566, %v1344, %v1351
        %v1353 = vrot.slane %v1348, 4
        %v1355 = vshrl.u32 %v527, 16
        %v1357 = vrot.slane %v1355, 7
        %v1358 = vshll.u32 %v527, 16
        %v1360 = vor.u32 %v1357, %v1358
        %v1361 = vsel %vm566, %v1353, %v1360
        %v1362 = vrot.slane %v1357, 4
        %v1364 = vshrl.u32 %v528, 16
        %v1366 = vrot.slane %v1364, 7
        %v1367 = vshll.u32 %v528, 16
        %v1369 = vor.u32 %v1366, %v1367
        %v1370 = vsel %vm566, %v1362, %v1369
        %v1371 = vrot.slane %v1366, 4
        %v1373 = vshrl.u32 %v529, 16
        %v1375 = vrot.slane %v1373, 7
        %v1376 = vshll.u32 %v529, 16
        %v1378 = vor.u32 %v1375, %v1376
        %v1379 = vrot.slane %v1375, 4
        %v1381 = vshrl.u32 %v530, 16
        %v1383 = vrot.slane %v1381, 7
        %v1384 = vshll.u32 %v530, 16
        %v1386 = vor.u32 %v1383, %v1384
        %v1387 = vsel %vm566, %v1379, %v1386
        %v1388 = vrot.slane %v1383, 4
        %v1390 = vshrl.u32 %v531, 16
        %v1392 = vrot.slane %v1390, 7
        %v1393 = vshll.u32 %v531, 16
        %v1395 = vor.u32 %v1392, %v1393
        %v1396 = vsel %vm566, %v1388, %v1395
        %v1397 = vrot.slane %v1392, 4
        %v1399 = vshrl.u32 %v532, 16
        %v1401 = vrot.slane %v1399, 7
        %v1402 = vshll.u32 %v532, 16
        %v1404 = vor.u32 %v1401, %v1402
        %v1405 = vsel %vm566, %v1397, %v1404
        %v1406 = vrot.slane %v1401, 4
        %v1408 = vshrl.u32 %v533, 16
        %v1410 = vrot.slane %v1408, 7
        %v1411 = vshll.u32 %v533, 16
        %v1413 = vor.u32 %v1410, %v1411
        %v1414 = vrot.slane %v1410, 4
        %v1416 = vshrl.u32 %v534, 16
        %v1418 = vrot.slane %v1416, 7
        %v1419 = vshll.u32 %v534, 16
        %v1421 = vor.u32 %v1418, %v1419
        %v1422 = vsel %vm566, %v1414, %v1421
        %v1423 = vrot.slane %v1418, 4
        %v1425 = vshrl.u32 %v535, 16
        %v1427 = vrot.slane %v1425, 7
        %v1428 = vshll.u32 %v535, 16
        %v1430 = vor.u32 %v1427, %v1428
        %v1431 = vsel %vm566, %v1423, %v1430
        %v1432 = vrot.slane %v1427, 4
        %v1434 = vshrl.u32 %v536, 16
        %v1436 = vrot.slane %v1434, 7
        %v1437 = vshll.u32 %v536, 16
        %v1439 = vor.u32 %v1436, %v1437
        %v1440 = vsel %vm566, %v1432, %v1439
        %v1441 = vrot.slane %v1436, 4
        %v1443 = vshrl.u32 %v537, 16
        %v1445 = vrot.slane %v1443, 7
        %v1446 = vshll.u32 %v537, 16
        %v1448 = vor.u32 %v1445, %v1446
        %v1449 = vrot.slane %v1445, 4
        %v1451 = vshrl.u32 %v538, 16
        %v1453 = vrot.slane %v1451, 7
        %v1454 = vshll.u32 %v538, 16
        %v1456 = vor.u32 %v1453, %v1454
        %v1457 = vsel %vm566, %v1449, %v1456
        %v1458 = vrot.slane %v1453, 4
        %v1460 = vshrl.u32 %v539, 16
        %v1462 = vrot.slane %v1460, 7
        %v1463 = vshll.u32 %v539, 16
        %v1465 = vor.u32 %v1462, %v1463
        %v1466 = vsel %vm566, %v1458, %v1465
        %v1467 = vrot.slane %v1462, 4
        %v1469 = vshrl.u32 %v540, 16
        %v1471 = vrot.slane %v1469, 7
        %v1472 = vshll.u32 %v540, 16
        %v1474 = vor.u32 %v1471, %v1472
        %v1475 = vsel %vm566, %v1467, %v1474
        %v1476 = vrot.slane %v1471, 4
        %v1478 = vshrl.u32 %v541, 16
        %v1480 = vrot.slane %v1478, 7
        %v1481 = vshll.u32 %v541, 16
        %v1483 = vor.u32 %v1480, %v1481
        %v1484 = vrot.slane %v1480, 4
        %v1486 = vshrl.u32 %v542, 16
        %v1488 = vrot.slane %v1486, 7
        %v1489 = vshll.u32 %v542, 16
        %v1491 = vor.u32 %v1488, %v1489
        %v1492 = vsel %vm566, %v1484, %v1491
        %v1493 = vrot.slane %v1488, 4
        %v1495 = vshrl.u32 %v543, 16
        %v1497 = vrot.slane %v1495, 7
        %v1498 = vshll.u32 %v543, 16
        %v1500 = vor.u32 %v1497, %v1498
        %v1501 = vsel %vm566, %v1493, %v1500
        %v1502 = vrot.slane %v1497, 4
        %v1504 = vshrl.u32 %v544, 16
        %v1506 = vrot.slane %v1504, 7
        %v1507 = vshll.u32 %v544, 16
        %v1509 = vor.u32 %v1506, %v1507
        %v1510 = vsel %vm566, %v1502, %v1509
        %v1511 = vrot.slane %v1506, 4
        %v1513 = vshrl.u32 %v545, 16
        %v1515 = vrot.slane %v1513, 7
        %v1516 = vshll.u32 %v545, 16
        %v1518 = vor.u32 %v1515, %v1516
        %v1519 = vrot.slane %v1515, 4
        %v1521 = vshrl.u32 %v546, 16
        %v1523 = vrot.slane %v1521, 7
        %v1524 = vshll.u32 %v546, 16
        %v1526 = vor.u32 %v1523, %v1524
        %v1527 = vsel %vm566, %v1519, %v1526
        %v1528 = vrot.slane %v1523, 4
        %v1530 = vshrl.u32 %v547, 16
        %v1532 = vrot.slane %v1530, 7
        %v1533 = vshll.u32 %v547, 16
        %v1535 = vor.u32 %v1532, %v1533
        %v1536 = vsel %vm566, %v1528, %v1535
        %v1537 = vrot.slane %v1532, 4
        %v1539 = vshrl.u32 %v548, 16
        %v1541 = vrot.slane %v1539, 7
        %v1542 = vshll.u32 %v548, 16
        %v1544 = vor.u32 %v1541, %v1542
        %v1545 = vsel %vm566, %v1537, %v1544
        %v1546 = vrot.slane %v1541, 4
        %v1548 = vshrl.u32 %v549, 16
        %v1550 = vrot.slane %v1548, 7
        %v1551 = vshll.u32 %v549, 16
        %v1553 = vor.u32 %v1550, %v1551
        %v1554 = vrot.slane %v1550, 4
        %v1556 = vshrl.u32 %v550, 16
        %v1558 = vrot.slane %v1556, 7
        %v1559 = vshll.u32 %v550, 16
        %v1561 = vor.u32 %v1558, %v1559
        %v1562 = vsel %vm566, %v1554, %v1561
        %v1563 = vrot.slane %v1558, 4
        %v1565 = vshrl.u32 %v551, 16
        %v1567 = vrot.slane %v1565, 7
        %v1568 = vshll.u32 %v551, 16
        %v1570 = vor.u32 %v1567, %v1568
        %v1571 = vsel %vm566, %v1563, %v1570
        %v1572 = vrot.slane %v1567, 4
        %v1574 = vshrl.u32 %v552, 16
        %v1576 = vrot.slane %v1574, 7
        %v1577 = vshll.u32 %v552, 16
        %v1579 = vor.u32 %v1576, %v1577
        %v1580 = vsel %vm566, %v1572, %v1579
        %v1581 = vrot.slane %v1576, 4
        %v1583 = vshrl.u32 %v553, 16
        %v1585 = vrot.slane %v1583, 7
        %v1586 = vshll.u32 %v553, 16
        %v1588 = vor.u32 %v1585, %v1586
        %v1589 = vrot.slane %v1585, 4
        %v1591 = vshrl.u32 %v554, 16
        %v1593 = vrot.slane %v1591, 7
        %v1594 = vshll.u32 %v554, 16
        %v1596 = vor.u32 %v1593, %v1594
        %v1597 = vsel %vm566, %v1589, %v1596
        %v1598 = vrot.slane %v1593, 4
        %v1600 = vshrl.u32 %v555, 16
        %v1602 = vrot.slane %v1600, 7
        %v1603 = vshll.u32 %v555, 16
        %v1605 = vor.u32 %v1602, %v1603
        %v1606 = vsel %vm566, %v1598, %v1605
        %v1607 = vrot.slane %v1602, 4
        %v1609 = vshrl.u32 %v556, 16
        %v1611 = vrot.slane %v1609, 7
        %v1612 = vshll.u32 %v556, 16
        %v1614 = vor.u32 %v1611, %v1612
        %v1615 = vsel %vm566, %v1607, %v1614
        %v1616 = vrot.slane %v1611, 4
        %v1618 = vshrl.u32 %v557, 16
        %v1620 = vrot.slane %v1618, 7
        %v1621 = vshll.u32 %v557, 16
        %v1623 = vor.u32 %v1620, %v1621
        %v1624 = vrot.slane %v1620, 4
        %v1626 = vshrl.u32 %v558, 16
        %v1628 = vrot.slane %v1626, 7
        %v1629 = vshll.u32 %v558, 16
        %v1631 = vor.u32 %v1628, %v1629
        %v1632 = vsel %vm566, %v1624, %v1631
        %v1633 = vrot.slane %v1628, 4
        %v1635 = vshrl.u32 %v559, 16
        %v1637 = vrot.slane %v1635, 7
        %v1638 = vshll.u32 %v559, 16
        %v1640 = vor.u32 %v1637, %v1638
        %v1641 = vsel %vm566, %v1633, %v1640
        %v1642 = vrot.slane %v1637, 4
        %v1644 = vshrl.u32 %v560, 16
        %v1646 = vrot.slane %v1644, 7
        %v1647 = vshll.u32 %v560, 16
        %v1649 = vor.u32 %v1646, %v1647
        %v1650 = vsel %vm566, %v1642, %v1649
        %v1651 = vrot.slane %v1646, 4
        %v1653 = vshrl.u32 %v561, 16
        %v1655 = vrot.slane %v1653, 7
        %v1656 = vshll.u32 %v561, 16
        %v1658 = vor.u32 %v1655, %v1656
        %v1659 = vrot.slane %v1655, 4
        %v1661 = vshrl.u32 %v562, 16
        %v1663 = vrot.slane %v1661, 7
        %v1664 = vshll.u32 %v562, 16
        %v1666 = vor.u32 %v1663, %v1664
        %v1667 = vsel %vm566, %v1659, %v1666
        %v1668 = vrot.slane %v1663, 4
        %v1670 = vshrl.u32 %v563, 16
        %v1672 = vrot.slane %v1670, 7
        %v1673 = vshll.u32 %v563, 16
        %v1675 = vor.u32 %v1672, %v1673
        %v1676 = vsel %vm566, %v1668, %v1675
        %v1677 = vrot.slane %v1672, 4
        %v1679 = vshrl.u32 %v564, 16
        %v1681 = vrot.slane %v1679, 7
        %v1682 = vshll.u32 %v564, 16
        %v1684 = vor.u32 %v1681, %v1682
        %v1685 = vsel %vm566, %v1677, %v1684
        %v1686 = vrot.slane %v1681, 4
        %s1847 = scalar_lea.vmem [#allocation2], 20
        %vm1848 = vcmask 19456
        %vm1849 = vmand %vm1848, %vm333
        %v1850 = vld [vmem:[%s1847] sm:$0xf]
        %v1851 = vsel %vm1849, %v573, %v1850
        %1852 = vst [vmem:[%s1847] sm:$0xf] %v1851
        %1853 = vst.msk [vmem:[%s1847 + $0x4] sm:$0xf] %vm215, %v582
        %1854 = vst.msk [vmem:[%s1847 + $0x8] sm:$0xf] %vm215, %v591
        %1855 = vst.msk [vmem:[%s1847 + $0xc] sm:$0xf] %vm215, %v600
        %v1856 = vld [vmem:[%s1847 + $0x10] sm:$0x1]
        %v1857 = vsel %vm230, %v601, %v1856
        %1858 = vst [vmem:[%s1847 + $0x10] sm:$0x1] %v1857
        %v1859 = vld [vmem:[%s1847 + $0x14] sm:$0xf]
        %v1860 = vsel %vm1849, %v608, %v1859
        %1861 = vst [vmem:[%s1847 + $0x14] sm:$0xf] %v1860
        %1862 = vst.msk [vmem:[%s1847 + $0x18] sm:$0xf] %vm215, %v617
        %1863 = vst.msk [vmem:[%s1847 + $0x1c] sm:$0xf] %vm215, %v626
        %1864 = vst.msk [vmem:[%s1847 + $0x20] sm:$0xf] %vm215, %v635
        %v1865 = vld [vmem:[%s1847 + $0x24] sm:$0x1]
        %v1866 = vsel %vm230, %v636, %v1865
        %1867 = vst [vmem:[%s1847 + $0x24] sm:$0x1] %v1866
        %v1868 = vld [vmem:[%s1847 + $0x28] sm:$0xf]
        %v1869 = vsel %vm1849, %v643, %v1868
        %1870 = vst [vmem:[%s1847 + $0x28] sm:$0xf] %v1869
        %1871 = vst.msk [vmem:[%s1847 + $0x2c] sm:$0xf] %vm215, %v652
        %1872 = vst.msk [vmem:[%s1847 + $0x30] sm:$0xf] %vm215, %v661
        %1873 = vst.msk [vmem:[%s1847 + $0x34] sm:$0xf] %vm215, %v670
        %v1874 = vld [vmem:[%s1847 + $0x38] sm:$0x1]
        %v1875 = vsel %vm230, %v671, %v1874
        %1876 = vst [vmem:[%s1847 + $0x38] sm:$0x1] %v1875
        %v1877 = vld [vmem:[%s1847 + $0x3c] sm:$0xf]
        %v1878 = vsel %vm1849, %v678, %v1877
        %1879 = vst [vmem:[%s1847 + $0x3c] sm:$0xf] %v1878
        %1880 = vst.msk [vmem:[%s1847 + $0x40] sm:$0xf] %vm215, %v687
        %1881 = vst.msk [vmem:[%s1847 + $0x44] sm:$0xf] %vm215, %v696
        %1882 = vst.msk [vmem:[%s1847 + $0x48] sm:$0xf] %vm215, %v705
        %v1883 = vld [vmem:[%s1847 + $0x4c] sm:$0x1]
        %v1884 = vsel %vm230, %v706, %v1883
        %1885 = vst [vmem:[%s1847 + $0x4c] sm:$0x1] %v1884
        %v1886 = vld [vmem:[%s1847 + $0x50] sm:$0xf]
        %v1887 = vsel %vm1849, %v713, %v1886
        %1888 = vst [vmem:[%s1847 + $0x50] sm:$0xf] %v1887
        %1889 = vst.msk [vmem:[%s1847 + $0x54] sm:$0xf] %vm215, %v722
        %1890 = vst.msk [vmem:[%s1847 + $0x58] sm:$0xf] %vm215, %v731
        %1891 = vst.msk [vmem:[%s1847 + $0x5c] sm:$0xf] %vm215, %v740
        %v1892 = vld [vmem:[%s1847 + $0x60] sm:$0x1]
        %v1893 = vsel %vm230, %v741, %v1892
        %1894 = vst [vmem:[%s1847 + $0x60] sm:$0x1] %v1893
        %v1895 = vld [vmem:[%s1847 + $0x64] sm:$0xf]
        %v1896 = vsel %vm1849, %v748, %v1895
        %1897 = vst [vmem:[%s1847 + $0x64] sm:$0xf] %v1896
        %1898 = vst.msk [vmem:[%s1847 + $0x68] sm:$0xf] %vm215, %v757
        %1899 = vst.msk [vmem:[%s1847 + $0x6c] sm:$0xf] %vm215, %v766
        %1900 = vst.msk [vmem:[%s1847 + $0x70] sm:$0xf] %vm215, %v775
        %v1901 = vld [vmem:[%s1847 + $0x74] sm:$0x1]
        %v1902 = vsel %vm230, %v776, %v1901
        %1903 = vst [vmem:[%s1847 + $0x74] sm:$0x1] %v1902
        %v1904 = vld [vmem:[%s1847 + $0x78] sm:$0xf]
        %v1905 = vsel %vm1849, %v783, %v1904
        %1906 = vst [vmem:[%s1847 + $0x78] sm:$0xf] %v1905
        %1907 = vst.msk [vmem:[%s1847 + $0x7c] sm:$0xf] %vm215, %v792
        %1908 = vst.msk [vmem:[%s1847 + $0x80] sm:$0xf] %vm215, %v801
        %1909 = vst.msk [vmem:[%s1847 + $0x84] sm:$0xf] %vm215, %v810
        %v1910 = vld [vmem:[%s1847 + $0x88] sm:$0x1]
        %v1911 = vsel %vm230, %v811, %v1910
        %1912 = vst [vmem:[%s1847 + $0x88] sm:$0x1] %v1911
        %v1913 = vld [vmem:[%s1847 + $0x8c] sm:$0xf]
        %v1914 = vsel %vm1849, %v818, %v1913
        %1915 = vst [vmem:[%s1847 + $0x8c] sm:$0xf] %v1914
        %1916 = vst.msk [vmem:[%s1847 + $0x90] sm:$0xf] %vm215, %v827
        %1917 = vst.msk [vmem:[%s1847 + $0x94] sm:$0xf] %vm215, %v836
        %1918 = vst.msk [vmem:[%s1847 + $0x98] sm:$0xf] %vm215, %v845
        %v1919 = vld [vmem:[%s1847 + $0x9c] sm:$0x1]
        %v1920 = vsel %vm230, %v846, %v1919
        %1921 = vst [vmem:[%s1847 + $0x9c] sm:$0x1] %v1920
        %v1922 = vld [vmem:[%s1847 + $0xa0] sm:$0xf]
        %v1923 = vsel %vm1849, %v853, %v1922
        %1924 = vst [vmem:[%s1847 + $0xa0] sm:$0xf] %v1923
        %1925 = vst.msk [vmem:[%s1847 + $0xa4] sm:$0xf] %vm215, %v862
        %1926 = vst.msk [vmem:[%s1847 + $0xa8] sm:$0xf] %vm215, %v871
        %1927 = vst.msk [vmem:[%s1847 + $0xac] sm:$0xf] %vm215, %v880
        %v1928 = vld [vmem:[%s1847 + $0xb0] sm:$0x1]
        %v1929 = vsel %vm230, %v881, %v1928
        %1930 = vst [vmem:[%s1847 + $0xb0] sm:$0x1] %v1929
        %v1931 = vld [vmem:[%s1847 + $0xb4] sm:$0xf]
        %v1932 = vsel %vm1849, %v888, %v1931
        %1933 = vst [vmem:[%s1847 + $0xb4] sm:$0xf] %v1932
        %1934 = vst.msk [vmem:[%s1847 + $0xb8] sm:$0xf] %vm215, %v897
        %1935 = vst.msk [vmem:[%s1847 + $0xbc] sm:$0xf] %vm215, %v906
        %1936 = vst.msk [vmem:[%s1847 + $0xc0] sm:$0xf] %vm215, %v915
        %v1937 = vld [vmem:[%s1847 + $0xc4] sm:$0x1]
        %v1938 = vsel %vm230, %v916, %v1937
        %1939 = vst [vmem:[%s1847 + $0xc4] sm:$0x1] %v1938
        %v1940 = vld [vmem:[%s1847 + $0xc8] sm:$0xf]
        %v1941 = vsel %vm1849, %v923, %v1940
        %1942 = vst [vmem:[%s1847 + $0xc8] sm:$0xf] %v1941
        %1943 = vst.msk [vmem:[%s1847 + $0xcc] sm:$0xf] %vm215, %v932
        %1944 = vst.msk [vmem:[%s1847 + $0xd0] sm:$0xf] %vm215, %v941
        %1945 = vst.msk [vmem:[%s1847 + $0xd4] sm:$0xf] %vm215, %v950
        %v1946 = vld [vmem:[%s1847 + $0xd8] sm:$0x1]
        %v1947 = vsel %vm230, %v951, %v1946
        %1948 = vst [vmem:[%s1847 + $0xd8] sm:$0x1] %v1947
        %v1949 = vld [vmem:[%s1847 + $0xdc] sm:$0xf]
        %v1950 = vsel %vm1849, %v958, %v1949
        %1951 = vst [vmem:[%s1847 + $0xdc] sm:$0xf] %v1950
        %1952 = vst.msk [vmem:[%s1847 + $0xe0] sm:$0xf] %vm215, %v967
        %1953 = vst.msk [vmem:[%s1847 + $0xe4] sm:$0xf] %vm215, %v976
        %1954 = vst.msk [vmem:[%s1847 + $0xe8] sm:$0xf] %vm215, %v985
        %v1955 = vld [vmem:[%s1847 + $0xec] sm:$0x1]
        %v1956 = vsel %vm230, %v986, %v1955
        %1957 = vst [vmem:[%s1847 + $0xec] sm:$0x1] %v1956
        %v1958 = vld [vmem:[%s1847 + $0xf0] sm:$0xf]
        %v1959 = vsel %vm1849, %v993, %v1958
        %1960 = vst [vmem:[%s1847 + $0xf0] sm:$0xf] %v1959
        %1961 = vst.msk [vmem:[%s1847 + $0xf4] sm:$0xf] %vm215, %v1002
        %1962 = vst.msk [vmem:[%s1847 + $0xf8] sm:$0xf] %vm215, %v1011
        %1963 = vst.msk [vmem:[%s1847 + $0xfc] sm:$0xf] %vm215, %v1020
        %v1964 = vld [vmem:[%s1847 + $0x100] sm:$0x1]
        %v1965 = vsel %vm230, %v1021, %v1964
        %1966 = vst [vmem:[%s1847 + $0x100] sm:$0x1] %v1965
        %v1967 = vld [vmem:[%s1847 + $0x104] sm:$0xf]
        %v1968 = vsel %vm1849, %v1028, %v1967
        %1969 = vst [vmem:[%s1847 + $0x104] sm:$0xf] %v1968
        %1970 = vst.msk [vmem:[%s1847 + $0x108] sm:$0xf] %vm215, %v1037
        %1971 = vst.msk [vmem:[%s1847 + $0x10c] sm:$0xf] %vm215, %v1046
        %1972 = vst.msk [vmem:[%s1847 + $0x110] sm:$0xf] %vm215, %v1055
        %v1973 = vld [vmem:[%s1847 + $0x114] sm:$0x1]
        %v1974 = vsel %vm230, %v1056, %v1973
        %1975 = vst [vmem:[%s1847 + $0x114] sm:$0x1] %v1974
        %v1976 = vld [vmem:[%s1847 + $0x118] sm:$0xf]
        %v1977 = vsel %vm1849, %v1063, %v1976
        %1978 = vst [vmem:[%s1847 + $0x118] sm:$0xf] %v1977
        %1979 = vst.msk [vmem:[%s1847 + $0x11c] sm:$0xf] %vm215, %v1072
        %1980 = vst.msk [vmem:[%s1847 + $0x120] sm:$0xf] %vm215, %v1081
        %1981 = vst.msk [vmem:[%s1847 + $0x124] sm:$0xf] %vm215, %v1090
        %v1982 = vld [vmem:[%s1847 + $0x128] sm:$0x1]
        %v1983 = vsel %vm230, %v1091, %v1982
        %1984 = vst [vmem:[%s1847 + $0x128] sm:$0x1] %v1983
        %v1985 = vld [vmem:[%s1847 + $0x12c] sm:$0xf]
        %v1986 = vsel %vm1849, %v1098, %v1985
        %1987 = vst [vmem:[%s1847 + $0x12c] sm:$0xf] %v1986
        %1988 = vst.msk [vmem:[%s1847 + $0x130] sm:$0xf] %vm215, %v1107
        %1989 = vst.msk [vmem:[%s1847 + $0x134] sm:$0xf] %vm215, %v1116
        %1990 = vst.msk [vmem:[%s1847 + $0x138] sm:$0xf] %vm215, %v1125
        %v1991 = vld [vmem:[%s1847 + $0x13c] sm:$0x1]
        %v1992 = vsel %vm230, %v1126, %v1991
        %1993 = vst [vmem:[%s1847 + $0x13c] sm:$0x1] %v1992
        %v1994 = vld [vmem:[%s1847 + $0x140] sm:$0xf]
        %v1995 = vsel %vm1849, %v1133, %v1994
        %1996 = vst [vmem:[%s1847 + $0x140] sm:$0xf] %v1995
        %1997 = vst.msk [vmem:[%s1847 + $0x144] sm:$0xf] %vm215, %v1142
        %1998 = vst.msk [vmem:[%s1847 + $0x148] sm:$0xf] %vm215, %v1151
        %1999 = vst.msk [vmem:[%s1847 + $0x14c] sm:$0xf] %vm215, %v1160
        %v2000 = vld [vmem:[%s1847 + $0x150] sm:$0x1]
        %v2001 = vsel %vm230, %v1161, %v2000
        %2002 = vst [vmem:[%s1847 + $0x150] sm:$0x1] %v2001
        %v2003 = vld [vmem:[%s1847 + $0x154] sm:$0xf]
        %v2004 = vsel %vm1849, %v1168, %v2003
        %2005 = vst [vmem:[%s1847 + $0x154] sm:$0xf] %v2004
        %2006 = vst.msk [vmem:[%s1847 + $0x158] sm:$0xf] %vm215, %v1177
        %2007 = vst.msk [vmem:[%s1847 + $0x15c] sm:$0xf] %vm215, %v1186
        %2008 = vst.msk [vmem:[%s1847 + $0x160] sm:$0xf] %vm215, %v1195
        %v2009 = vld [vmem:[%s1847 + $0x164] sm:$0x1]
        %v2010 = vsel %vm230, %v1196, %v2009
        %2011 = vst [vmem:[%s1847 + $0x164] sm:$0x1] %v2010
        %v2012 = vld [vmem:[%s1847 + $0x168] sm:$0xf]
        %v2013 = vsel %vm1849, %v1203, %v2012
        %2014 = vst [vmem:[%s1847 + $0x168] sm:$0xf] %v2013
        %2015 = vst.msk [vmem:[%s1847 + $0x16c] sm:$0xf] %vm215, %v1212
        %2016 = vst.msk [vmem:[%s1847 + $0x170] sm:$0xf] %vm215, %v1221
        %2017 = vst.msk [vmem:[%s1847 + $0x174] sm:$0xf] %vm215, %v1230
        %v2018 = vld [vmem:[%s1847 + $0x178] sm:$0x1]
        %v2019 = vsel %vm230, %v1231, %v2018
        %2020 = vst [vmem:[%s1847 + $0x178] sm:$0x1] %v2019
        %v2021 = vld [vmem:[%s1847 + $0x17c] sm:$0xf]
        %v2022 = vsel %vm1849, %v1238, %v2021
        %2023 = vst [vmem:[%s1847 + $0x17c] sm:$0xf] %v2022
        %2024 = vst.msk [vmem:[%s1847 + $0x180] sm:$0xf] %vm215, %v1247
        %2025 = vst.msk [vmem:[%s1847 + $0x184] sm:$0xf] %vm215, %v1256
        %2026 = vst.msk [vmem:[%s1847 + $0x188] sm:$0xf] %vm215, %v1265
        %v2027 = vld [vmem:[%s1847 + $0x18c] sm:$0x1]
        %v2028 = vsel %vm230, %v1266, %v2027
        %2029 = vst [vmem:[%s1847 + $0x18c] sm:$0x1] %v2028
        %v2030 = vld [vmem:[%s1847 + $0x190] sm:$0xf]
        %v2031 = vsel %vm1849, %v1273, %v2030
        %2032 = vst [vmem:[%s1847 + $0x190] sm:$0xf] %v2031
        %2033 = vst.msk [vmem:[%s1847 + $0x194] sm:$0xf] %vm215, %v1282
        %2034 = vst.msk [vmem:[%s1847 + $0x198] sm:$0xf] %vm215, %v1291
        %2035 = vst.msk [vmem:[%s1847 + $0x19c] sm:$0xf] %vm215, %v1300
        %v2036 = vld [vmem:[%s1847 + $0x1a0] sm:$0x1]
        %v2037 = vsel %vm230, %v1301, %v2036
        %2038 = vst [vmem:[%s1847 + $0x1a0] sm:$0x1] %v2037
        %v2039 = vld [vmem:[%s1847 + $0x1a4] sm:$0xf]
        %v2040 = vsel %vm1849, %v1308, %v2039
        %2041 = vst [vmem:[%s1847 + $0x1a4] sm:$0xf] %v2040
        %2042 = vst.msk [vmem:[%s1847 + $0x1a8] sm:$0xf] %vm215, %v1317
        %2043 = vst.msk [vmem:[%s1847 + $0x1ac] sm:$0xf] %vm215, %v1326
        %2044 = vst.msk [vmem:[%s1847 + $0x1b0] sm:$0xf] %vm215, %v1335
        %v2045 = vld [vmem:[%s1847 + $0x1b4] sm:$0x1]
        %v2046 = vsel %vm230, %v1336, %v2045
        %2047 = vst [vmem:[%s1847 + $0x1b4] sm:$0x1] %v2046
        %v2048 = vld [vmem:[%s1847 + $0x1b8] sm:$0xf]
        %v2049 = vsel %vm1849, %v1343, %v2048
        %2050 = vst [vmem:[%s1847 + $0x1b8] sm:$0xf] %v2049
        %2051 = vst.msk [vmem:[%s1847 + $0x1bc] sm:$0xf] %vm215, %v1352
        %2052 = vst.msk [vmem:[%s1847 + $0x1c0] sm:$0xf] %vm215, %v1361
        %2053 = vst.msk [vmem:[%s1847 + $0x1c4] sm:$0xf] %vm215, %v1370
        %v2054 = vld [vmem:[%s1847 + $0x1c8] sm:$0x1]
        %v2055 = vsel %vm230, %v1371, %v2054
        %2056 = vst [vmem:[%s1847 + $0x1c8] sm:$0x1] %v2055
        %v2057 = vld [vmem:[%s1847 + $0x1cc] sm:$0xf]
        %v2058 = vsel %vm1849, %v1378, %v2057
        %2059 = vst [vmem:[%s1847 + $0x1cc] sm:$0xf] %v2058
        %2060 = vst.msk [vmem:[%s1847 + $0x1d0] sm:$0xf] %vm215, %v1387
        %2061 = vst.msk [vmem:[%s1847 + $0x1d4] sm:$0xf] %vm215, %v1396
        %2062 = vst.msk [vmem:[%s1847 + $0x1d8] sm:$0xf] %vm215, %v1405
        %v2063 = vld [vmem:[%s1847 + $0x1dc] sm:$0x1]
        %v2064 = vsel %vm230, %v1406, %v2063
        %2065 = vst [vmem:[%s1847 + $0x1dc] sm:$0x1] %v2064
        %v2066 = vld [vmem:[%s1847 + $0x1e0] sm:$0xf]
        %v2067 = vsel %vm1849, %v1413, %v2066
        %2068 = vst [vmem:[%s1847 + $0x1e0] sm:$0xf] %v2067
        %2069 = vst.msk [vmem:[%s1847 + $0x1e4] sm:$0xf] %vm215, %v1422
        %2070 = vst.msk [vmem:[%s1847 + $0x1e8] sm:$0xf] %vm215, %v1431
        %2071 = vst.msk [vmem:[%s1847 + $0x1ec] sm:$0xf] %vm215, %v1440
        %v2072 = vld [vmem:[%s1847 + $0x1f0] sm:$0x1]
        %v2073 = vsel %vm230, %v1441, %v2072
        %2074 = vst [vmem:[%s1847 + $0x1f0] sm:$0x1] %v2073
        %v2075 = vld [vmem:[%s1847 + $0x1f4] sm:$0xf]
        %v2076 = vsel %vm1849, %v1448, %v2075
        %2077 = vst [vmem:[%s1847 + $0x1f4] sm:$0xf] %v2076
        %2078 = vst.msk [vmem:[%s1847 + $0x1f8] sm:$0xf] %vm215, %v1457
        %2079 = vst.msk [vmem:[%s1847 + $0x1fc] sm:$0xf] %vm215, %v1466
        %2080 = vst.msk [vmem:[%s1847 + $0x200] sm:$0xf] %vm215, %v1475
        %v2081 = vld [vmem:[%s1847 + $0x204] sm:$0x1]
        %v2082 = vsel %vm230, %v1476, %v2081
        %2083 = vst [vmem:[%s1847 + $0x204] sm:$0x1] %v2082
        %v2084 = vld [vmem:[%s1847 + $0x208] sm:$0xf]
        %v2085 = vsel %vm1849, %v1483, %v2084
        %2086 = vst [vmem:[%s1847 + $0x208] sm:$0xf] %v2085
        %2087 = vst.msk [vmem:[%s1847 + $0x20c] sm:$0xf] %vm215, %v1492
        %2088 = vst.msk [vmem:[%s1847 + $0x210] sm:$0xf] %vm215, %v1501
        %2089 = vst.msk [vmem:[%s1847 + $0x214] sm:$0xf] %vm215, %v1510
        %v2090 = vld [vmem:[%s1847 + $0x218] sm:$0x1]
        %v2091 = vsel %vm230, %v1511, %v2090
        %2092 = vst [vmem:[%s1847 + $0x218] sm:$0x1] %v2091
        %v2093 = vld [vmem:[%s1847 + $0x21c] sm:$0xf]
        %v2094 = vsel %vm1849, %v1518, %v2093
        %2095 = vst [vmem:[%s1847 + $0x21c] sm:$0xf] %v2094
        %2096 = vst.msk [vmem:[%s1847 + $0x220] sm:$0xf] %vm215, %v1527
        %2097 = vst.msk [vmem:[%s1847 + $0x224] sm:$0xf] %vm215, %v1536
        %2098 = vst.msk [vmem:[%s1847 + $0x228] sm:$0xf] %vm215, %v1545
        %v2099 = vld [vmem:[%s1847 + $0x22c] sm:$0x1]
        %v2100 = vsel %vm230, %v1546, %v2099
        %2101 = vst [vmem:[%s1847 + $0x22c] sm:$0x1] %v2100
        %v2102 = vld [vmem:[%s1847 + $0x230] sm:$0xf]
        %v2103 = vsel %vm1849, %v1553, %v2102
        %2104 = vst [vmem:[%s1847 + $0x230] sm:$0xf] %v2103
        %2105 = vst.msk [vmem:[%s1847 + $0x234] sm:$0xf] %vm215, %v1562
        %2106 = vst.msk [vmem:[%s1847 + $0x238] sm:$0xf] %vm215, %v1571
        %2107 = vst.msk [vmem:[%s1847 + $0x23c] sm:$0xf] %vm215, %v1580
        %v2108 = vld [vmem:[%s1847 + $0x240] sm:$0x1]
        %v2109 = vsel %vm230, %v1581, %v2108
        %2110 = vst [vmem:[%s1847 + $0x240] sm:$0x1] %v2109
        %v2111 = vld [vmem:[%s1847 + $0x244] sm:$0xf]
        %v2112 = vsel %vm1849, %v1588, %v2111
        %2113 = vst [vmem:[%s1847 + $0x244] sm:$0xf] %v2112
        %2114 = vst.msk [vmem:[%s1847 + $0x248] sm:$0xf] %vm215, %v1597
        %2115 = vst.msk [vmem:[%s1847 + $0x24c] sm:$0xf] %vm215, %v1606
        %2116 = vst.msk [vmem:[%s1847 + $0x250] sm:$0xf] %vm215, %v1615
        %v2117 = vld [vmem:[%s1847 + $0x254] sm:$0x1]
        %v2118 = vsel %vm230, %v1616, %v2117
        %2119 = vst [vmem:[%s1847 + $0x254] sm:$0x1] %v2118
        %v2120 = vld [vmem:[%s1847 + $0x258] sm:$0xf]
        %v2121 = vsel %vm1849, %v1623, %v2120
        %2122 = vst [vmem:[%s1847 + $0x258] sm:$0xf] %v2121
        %2123 = vst.msk [vmem:[%s1847 + $0x25c] sm:$0xf] %vm215, %v1632
        %2124 = vst.msk [vmem:[%s1847 + $0x260] sm:$0xf] %vm215, %v1641
        %2125 = vst.msk [vmem:[%s1847 + $0x264] sm:$0xf] %vm215, %v1650
        %v2126 = vld [vmem:[%s1847 + $0x268] sm:$0x1]
        %v2127 = vsel %vm230, %v1651, %v2126
        %2128 = vst [vmem:[%s1847 + $0x268] sm:$0x1] %v2127
        %v2129 = vld [vmem:[%s1847 + $0x26c] sm:$0xf]
        %v2130 = vsel %vm1849, %v1658, %v2129
        %2131 = vst [vmem:[%s1847 + $0x26c] sm:$0xf] %v2130
        %2132 = vst.msk [vmem:[%s1847 + $0x270] sm:$0xf] %vm215, %v1667
        %2133 = vst.msk [vmem:[%s1847 + $0x274] sm:$0xf] %vm215, %v1676
        %2134 = vst.msk [vmem:[%s1847 + $0x278] sm:$0xf] %vm215, %v1685
        %v2135 = vld [vmem:[%s1847 + $0x27c] sm:$0x1]
        %v2136 = vsel %vm230, %v1686, %v2135
        %2137 = vst [vmem:[%s1847 + $0x27c] sm:$0x1] %v2136
        %v2138 = vld [vmem:[%s213] sm:$0x1]
        %v2139 = vld [vmem:[#allocation2] sm:$0xf]
        %v2140 = vld [vmem:[#allocation2 + $0x4] sm:$0xf]
        %v2141 = vld [vmem:[#allocation2 + $0x8] sm:$0xf]
        %v2142 = vld [vmem:[#allocation2 + $0xc] sm:$0xf]
        %v2143 = vld [vmem:[#allocation2 + $0x10] sm:$0x1]
        %v2144 = vld [vmem:[#allocation2 + $0x14] sm:$0xf]
        %v2145 = vld [vmem:[#allocation2 + $0x18] sm:$0xf]
        %v2146 = vld [vmem:[#allocation2 + $0x1c] sm:$0xf]
        %v2147 = vld [vmem:[#allocation2 + $0x20] sm:$0xf]
        %v2148 = vld [vmem:[#allocation2 + $0x24] sm:$0x1]
        %v2149 = vld [vmem:[#allocation2 + $0x28] sm:$0xf]
        %v2150 = vld [vmem:[#allocation2 + $0x2c] sm:$0xf]
        %v2151 = vld [vmem:[#allocation2 + $0x30] sm:$0xf]
        %v2152 = vld [vmem:[#allocation2 + $0x34] sm:$0xf]
        %v2153 = vld [vmem:[#allocation2 + $0x38] sm:$0x1]
        %v2154 = vld [vmem:[#allocation2 + $0x3c] sm:$0xf]
        %v2155 = vld [vmem:[#allocation2 + $0x40] sm:$0xf]
        %v2156 = vld [vmem:[#allocation2 + $0x44] sm:$0xf]
        %v2157 = vld [vmem:[#allocation2 + $0x48] sm:$0xf]
        %v2158 = vld [vmem:[#allocation2 + $0x4c] sm:$0x1]
        %v2159 = vld [vmem:[#allocation2 + $0x50] sm:$0xf]
        %v2160 = vld [vmem:[#allocation2 + $0x54] sm:$0xf]
        %v2161 = vld [vmem:[#allocation2 + $0x58] sm:$0xf]
        %v2162 = vld [vmem:[#allocation2 + $0x5c] sm:$0xf]
        %v2163 = vld [vmem:[#allocation2 + $0x60] sm:$0x1]
        %v2164 = vld [vmem:[#allocation2 + $0x64] sm:$0xf]
        %v2165 = vld [vmem:[#allocation2 + $0x68] sm:$0xf]
        %v2166 = vld [vmem:[#allocation2 + $0x6c] sm:$0xf]
        %v2167 = vld [vmem:[#allocation2 + $0x70] sm:$0xf]
        %v2168 = vld [vmem:[#allocation2 + $0x74] sm:$0x1]
        %v2169 = vld [vmem:[#allocation2 + $0x78] sm:$0xf]
        %v2170 = vld [vmem:[#allocation2 + $0x7c] sm:$0xf]
        %v2171 = vld [vmem:[#allocation2 + $0x80] sm:$0xf]
        %v2172 = vld [vmem:[#allocation2 + $0x84] sm:$0xf]
        %v2173 = vld [vmem:[#allocation2 + $0x88] sm:$0x1]
        %v2174 = vld [vmem:[#allocation2 + $0x8c] sm:$0xf]
        %v2175 = vld [vmem:[#allocation2 + $0x90] sm:$0xf]
        %v2176 = vld [vmem:[#allocation2 + $0x94] sm:$0xf]
        %v2177 = vld [vmem:[#allocation2 + $0x98] sm:$0xf]
        %v2178 = vld [vmem:[#allocation2 + $0x9c] sm:$0x1]
        %v2179 = vld [vmem:[%s1847] sm:$0xf]
        %v2180 = vld [vmem:[%s1847 + $0x4] sm:$0xf]
        %v2181 = vld [vmem:[%s1847 + $0x8] sm:$0xf]
        %v2182 = vld [vmem:[%s1847 + $0xc] sm:$0xf]
        %v2183 = vld [vmem:[%s1847 + $0x10] sm:$0x1]
        %v2184 = vld [vmem:[%s1847 + $0x14] sm:$0xf]
        %v2185 = vld [vmem:[%s1847 + $0x18] sm:$0xf]
        %v2186 = vld [vmem:[%s1847 + $0x1c] sm:$0xf]
        %v2187 = vld [vmem:[%s1847 + $0x20] sm:$0xf]
        %v2188 = vld [vmem:[%s1847 + $0x24] sm:$0x1]
        %v2189 = vld [vmem:[%s1847 + $0x28] sm:$0xf]
        %v2190 = vld [vmem:[%s1847 + $0x2c] sm:$0xf]
        %v2191 = vld [vmem:[%s1847 + $0x30] sm:$0xf]
        %v2192 = vld [vmem:[%s1847 + $0x34] sm:$0xf]
        %v2193 = vld [vmem:[%s1847 + $0x38] sm:$0x1]
        %v2194 = vld [vmem:[%s1847 + $0x3c] sm:$0xf]
        %v2195 = vld [vmem:[%s1847 + $0x40] sm:$0xf]
        %v2196 = vld [vmem:[%s1847 + $0x44] sm:$0xf]
        %v2197 = vld [vmem:[%s1847 + $0x48] sm:$0xf]
        %v2198 = vld [vmem:[%s1847 + $0x4c] sm:$0x1]
        %v2199 = vld [vmem:[%s1847 + $0x50] sm:$0xf]
        %v2200 = vld [vmem:[%s1847 + $0x54] sm:$0xf]
        %v2201 = vld [vmem:[%s1847 + $0x58] sm:$0xf]
        %v2202 = vld [vmem:[%s1847 + $0x5c] sm:$0xf]
        %v2203 = vld [vmem:[%s1847 + $0x60] sm:$0x1]
        %v2204 = vld [vmem:[%s1847 + $0x64] sm:$0xf]
        %v2205 = vld [vmem:[%s1847 + $0x68] sm:$0xf]
        %v2206 = vld [vmem:[%s1847 + $0x6c] sm:$0xf]
        %v2207 = vld [vmem:[%s1847 + $0x70] sm:$0xf]
        %v2208 = vld [vmem:[%s1847 + $0x74] sm:$0x1]
        %v2209 = vld [vmem:[%s1847 + $0x78] sm:$0xf]
        %v2210 = vld [vmem:[%s1847 + $0x7c] sm:$0xf]
        %v2211 = vld [vmem:[%s1847 + $0x80] sm:$0xf]
        %v2212 = vld [vmem:[%s1847 + $0x84] sm:$0xf]
        %v2213 = vld [vmem:[%s1847 + $0x88] sm:$0x1]
        %v2214 = vld [vmem:[%s1847 + $0x8c] sm:$0xf]
        %v2215 = vld [vmem:[%s1847 + $0x90] sm:$0xf]
        %v2216 = vld [vmem:[%s1847 + $0x94] sm:$0xf]
        %v2217 = vld [vmem:[%s1847 + $0x98] sm:$0xf]
        %v2218 = vld [vmem:[%s1847 + $0x9c] sm:$0x1]
        %s2219 = scalar_lea.vmem [#allocation2], 40
        %v2220 = vld [vmem:[%s2219] sm:$0xf]
        %v2221 = vld [vmem:[%s2219 + $0x4] sm:$0xf]
        %v2222 = vld [vmem:[%s2219 + $0x8] sm:$0xf]
        %v2223 = vld [vmem:[%s2219 + $0xc] sm:$0xf]
        %v2224 = vld [vmem:[%s2219 + $0x10] sm:$0x1]
        %v2225 = vld [vmem:[%s2219 + $0x14] sm:$0xf]
        %v2226 = vld [vmem:[%s2219 + $0x18] sm:$0xf]
        %v2227 = vld [vmem:[%s2219 + $0x1c] sm:$0xf]
        %v2228 = vld [vmem:[%s2219 + $0x20] sm:$0xf]
        %v2229 = vld [vmem:[%s2219 + $0x24] sm:$0x1]
        %v2230 = vld [vmem:[%s2219 + $0x28] sm:$0xf]
        %v2231 = vld [vmem:[%s2219 + $0x2c] sm:$0xf]
        %v2232 = vld [vmem:[%s2219 + $0x30] sm:$0xf]
        %v2233 = vld [vmem:[%s2219 + $0x34] sm:$0xf]
        %v2234 = vld [vmem:[%s2219 + $0x38] sm:$0x1]
        %v2235 = vld [vmem:[%s2219 + $0x3c] sm:$0xf]
        %v2236 = vld [vmem:[%s2219 + $0x40] sm:$0xf]
        %v2237 = vld [vmem:[%s2219 + $0x44] sm:$0xf]
        %v2238 = vld [vmem:[%s2219 + $0x48] sm:$0xf]
        %v2239 = vld [vmem:[%s2219 + $0x4c] sm:$0x1]
        %v2240 = vld [vmem:[%s2219 + $0x50] sm:$0xf]
        %v2241 = vld [vmem:[%s2219 + $0x54] sm:$0xf]
        %v2242 = vld [vmem:[%s2219 + $0x58] sm:$0xf]
        %v2243 = vld [vmem:[%s2219 + $0x5c] sm:$0xf]
        %v2244 = vld [vmem:[%s2219 + $0x60] sm:$0x1]
        %v2245 = vld [vmem:[%s2219 + $0x64] sm:$0xf]
        %v2246 = vld [vmem:[%s2219 + $0x68] sm:$0xf]
        %v2247 = vld [vmem:[%s2219 + $0x6c] sm:$0xf]
        %v2248 = vld [vmem:[%s2219 + $0x70] sm:$0xf]
        %v2249 = vld [vmem:[%s2219 + $0x74] sm:$0x1]
        %v2250 = vld [vmem:[%s2219 + $0x78] sm:$0xf]
        %v2251 = vld [vmem:[%s2219 + $0x7c] sm:$0xf]
        %v2252 = vld [vmem:[%s2219 + $0x80] sm:$0xf]
        %v2253 = vld [vmem:[%s2219 + $0x84] sm:$0xf]
        %v2254 = vld [vmem:[%s2219 + $0x88] sm:$0x1]
        %v2255 = vld [vmem:[%s2219 + $0x8c] sm:$0xf]
        %v2256 = vld [vmem:[%s2219 + $0x90] sm:$0xf]
        %v2257 = vld [vmem:[%s2219 + $0x94] sm:$0xf]
        %v2258 = vld [vmem:[%s2219 + $0x98] sm:$0xf]
        %v2259 = vld [vmem:[%s2219 + $0x9c] sm:$0x1]
        %v2292 = vunpack.c.l.b16 %v2139
        %v2293 = vunpack.c.l.b16 %v2140
        %v2294 = vunpack.c.l.b16 %v2141
        %v2295 = vunpack.c.l.b16 %v2142
        %v2296 = vunpack.c.l.b16 %v2144
        %v2297 = vunpack.c.l.b16 %v2145
        %v2298 = vunpack.c.l.b16 %v2146
        %v2299 = vunpack.c.l.b16 %v2147
        %v2300 = vunpack.c.l.b16 %v2149
        %v2301 = vunpack.c.l.b16 %v2150
        %v2302 = vunpack.c.l.b16 %v2151
        %v2303 = vunpack.c.l.b16 %v2152
        %v2304 = vunpack.c.l.b16 %v2154
        %v2305 = vunpack.c.l.b16 %v2155
        %v2306 = vunpack.c.l.b16 %v2156
        %v2307 = vunpack.c.l.b16 %v2157
        %v2308 = vunpack.c.l.b16 %v2159
        %v2309 = vunpack.c.l.b16 %v2160
        %v2310 = vunpack.c.l.b16 %v2161
        %v2311 = vunpack.c.l.b16 %v2162
        %v2312 = vunpack.c.l.b16 %v2164
        %v2313 = vunpack.c.l.b16 %v2165
        %v2314 = vunpack.c.l.b16 %v2166
        %v2315 = vunpack.c.l.b16 %v2167
        %v2316 = vunpack.c.l.b16 %v2169
        %v2317 = vunpack.c.l.b16 %v2170
        %v2318 = vunpack.c.l.b16 %v2171
        %v2319 = vunpack.c.l.b16 %v2172
        %v2320 = vunpack.c.l.b16 %v2174
        %v2321 = vunpack.c.l.b16 %v2175
        %v2322 = vunpack.c.l.b16 %v2176
        %v2323 = vunpack.c.l.b16 %v2177
        %v2324 = vpack.c.b16 %v2293, %v2292
        %v2325 = vpack.c.b16 %v2295, %v2294
        %v2326 = vpack.c.b16 %v2297, %v2296
        %v2327 = vpack.c.b16 %v2299, %v2298
        %v2328 = vpack.c.b16 %v2301, %v2300
        %v2329 = vpack.c.b16 %v2303, %v2302
        %v2330 = vpack.c.b16 %v2305, %v2304
        %v2331 = vpack.c.b16 %v2307, %v2306
        %v2332 = vpack.c.b16 %v2309, %v2308
        %v2333 = vpack.c.b16 %v2311, %v2310
        %v2334 = vpack.c.b16 %v2313, %v2312
        %v2335 = vpack.c.b16 %v2315, %v2314
        %v2336 = vpack.c.b16 %v2317, %v2316
        %v2337 = vpack.c.b16 %v2319, %v2318
        %v2338 = vpack.c.b16 %v2321, %v2320
        %v2339 = vpack.c.b16 %v2323, %v2322
        %v2348 = vunpack.c.l.b16 %v2143
        %v2349 = vunpack.c.l.b16 %v2148
        %v2350 = vunpack.c.l.b16 %v2153
        %v2351 = vunpack.c.l.b16 %v2158
        %v2352 = vunpack.c.l.b16 %v2163
        %v2353 = vunpack.c.l.b16 %v2168
        %v2354 = vunpack.c.l.b16 %v2173
        %v2355 = vunpack.c.l.b16 %v2178
        %v2356 = vpack.c.b16 %v2348, %v2348
        %v2357 = vpack.c.b16 %v2349, %v2349
        %v2358 = vpack.c.b16 %v2350, %v2350
        %v2359 = vpack.c.b16 %v2351, %v2351
        %v2360 = vpack.c.b16 %v2352, %v2352
        %v2361 = vpack.c.b16 %v2353, %v2353
        %v2362 = vpack.c.b16 %v2354, %v2354
        %v2363 = vpack.c.b16 %v2355, %v2355
        %vm2364 = vsmask.f32 7424
        %v2366 = vshrl.u32 %v2324, 16
        %v2368 = vshll.u32 %v2324, 16
        %v2370 = vrot.slane %v2368, 1
        %v2371 = vor.u32 %v2366, %v2370
        %v2373 = vshll.u32 %v2325, 16
        %v2375 = vrot.slane %v2373, 1
        %v2376 = vsel %vm2364, %v2371, %v2375
        %v2377 = vshrl.u32 %v2325, 16
        %v2379 = vor.u32 %v2377, %v2375
        %v2381 = vshll.u32 %v2356, 16
        %v2383 = vrot.slane %v2381, 1
        %v2384 = vsel %vm2364, %v2379, %v2383
        %v2386 = vshrl.u32 %v2326, 16
        %v2388 = vshll.u32 %v2326, 16
        %v2390 = vrot.slane %v2388, 1
        %v2391 = vor.u32 %v2386, %v2390
        %v2393 = vshll.u32 %v2327, 16
        %v2395 = vrot.slane %v2393, 1
        %v2396 = vsel %vm2364, %v2391, %v2395
        %v2397 = vshrl.u32 %v2327, 16
        %v2399 = vor.u32 %v2397, %v2395
        %v2401 = vshll.u32 %v2357, 16
        %v2403 = vrot.slane %v2401, 1
        %v2404 = vsel %vm2364, %v2399, %v2403
        %v2406 = vshrl.u32 %v2328, 16
        %v2408 = vshll.u32 %v2328, 16
        %v2410 = vrot.slane %v2408, 1
        %v2411 = vor.u32 %v2406, %v2410
        %v2413 = vshll.u32 %v2329, 16
        %v2415 = vrot.slane %v2413, 1
        %v2416 = vsel %vm2364, %v2411, %v2415
        %v2417 = vshrl.u32 %v2329, 16
        %v2419 = vor.u32 %v2417, %v2415
        %v2421 = vshll.u32 %v2358, 16
        %v2423 = vrot.slane %v2421, 1
        %v2424 = vsel %vm2364, %v2419, %v2423
        %v2426 = vshrl.u32 %v2330, 16
        %v2428 = vshll.u32 %v2330, 16
        %v2430 = vrot.slane %v2428, 1
        %v2431 = vor.u32 %v2426, %v2430
        %v2433 = vshll.u32 %v2331, 16
        %v2435 = vrot.slane %v2433, 1
        %v2436 = vsel %vm2364, %v2431, %v2435
        %v2437 = vshrl.u32 %v2331, 16
        %v2439 = vor.u32 %v2437, %v2435
        %v2441 = vshll.u32 %v2359, 16
        %v2443 = vrot.slane %v2441, 1
        %v2444 = vsel %vm2364, %v2439, %v2443
        %v2446 = vshrl.u32 %v2332, 16
        %v2448 = vshll.u32 %v2332, 16
        %v2450 = vrot.slane %v2448, 1
        %v2451 = vor.u32 %v2446, %v2450
        %v2453 = vshll.u32 %v2333, 16
        %v2455 = vrot.slane %v2453, 1
        %v2456 = vsel %vm2364, %v2451, %v2455
        %v2457 = vshrl.u32 %v2333, 16
        %v2459 = vor.u32 %v2457, %v2455
        %v2461 = vshll.u32 %v2360, 16
        %v2463 = vrot.slane %v2461, 1
        %v2464 = vsel %vm2364, %v2459, %v2463
        %v2466 = vshrl.u32 %v2334, 16
        %v2468 = vshll.u32 %v2334, 16
        %v2470 = vrot.slane %v2468, 1
        %v2471 = vor.u32 %v2466, %v2470
        %v2473 = vshll.u32 %v2335, 16
        %v2475 = vrot.slane %v2473, 1
        %v2476 = vsel %vm2364, %v2471, %v2475
        %v2477 = vshrl.u32 %v2335, 16
        %v2479 = vor.u32 %v2477, %v2475
        %v2481 = vshll.u32 %v2361, 16
        %v2483 = vrot.slane %v2481, 1
        %v2484 = vsel %vm2364, %v2479, %v2483
        %v2486 = vshrl.u32 %v2336, 16
        %v2488 = vshll.u32 %v2336, 16
        %v2490 = vrot.slane %v2488, 1
        %v2491 = vor.u32 %v2486, %v2490
        %v2493 = vshll.u32 %v2337, 16
        %v2495 = vrot.slane %v2493, 1
        %v2496 = vsel %vm2364, %v2491, %v2495
        %v2497 = vshrl.u32 %v2337, 16
        %v2499 = vor.u32 %v2497, %v2495
        %v2501 = vshll.u32 %v2362, 16
        %v2503 = vrot.slane %v2501, 1
        %v2504 = vsel %vm2364, %v2499, %v2503
        %v2506 = vshrl.u32 %v2338, 16
        %v2508 = vshll.u32 %v2338, 16
        %v2510 = vrot.slane %v2508, 1
        %v2511 = vor.u32 %v2506, %v2510
        %v2513 = vshll.u32 %v2339, 16
        %v2515 = vrot.slane %v2513, 1
        %v2516 = vsel %vm2364, %v2511, %v2515
        %v2517 = vshrl.u32 %v2339, 16
        %v2519 = vor.u32 %v2517, %v2515
        %v2521 = vshll.u32 %v2363, 16
        %v2523 = vrot.slane %v2521, 1
        %v2524 = vsel %vm2364, %v2519, %v2523
        %2525 = vrot.lane.b32.xlu0 %v2376, 3
        %v2526 = vpop.permute.xlu0 %2525
        %2527 = vrot.lane.b32.xlu0 %v2384, 3
        %v2528 = vpop.permute.xlu0 %2527
        %2529 = vrot.lane.b32.xlu0 %v2396, 3
        %v2530 = vpop.permute.xlu0 %2529
        %2531 = vrot.lane.b32.xlu0 %v2404, 3
        %v2532 = vpop.permute.xlu0 %2531
        %2533 = vrot.lane.b32.xlu0 %v2416, 3
        %v2534 = vpop.permute.xlu0 %2533
        %2535 = vrot.lane.b32.xlu0 %v2424, 3
        %v2536 = vpop.permute.xlu0 %2535
        %2537 = vrot.lane.b32.xlu0 %v2436, 3
        %v2538 = vpop.permute.xlu0 %2537
        %2539 = vrot.lane.b32.xlu0 %v2444, 3
        %v2540 = vpop.permute.xlu0 %2539
        %2541 = vrot.lane.b32.xlu0 %v2456, 3
        %v2542 = vpop.permute.xlu0 %2541
        %2543 = vrot.lane.b32.xlu0 %v2464, 3
        %v2544 = vpop.permute.xlu0 %2543
        %2545 = vrot.lane.b32.xlu0 %v2476, 3
        %v2546 = vpop.permute.xlu0 %2545
        %2547 = vrot.lane.b32.xlu0 %v2484, 3
        %v2548 = vpop.permute.xlu0 %2547
        %2549 = vrot.lane.b32.xlu0 %v2496, 3
        %v2550 = vpop.permute.xlu0 %2549
        %2551 = vrot.lane.b32.xlu0 %v2504, 3
        %v2552 = vpop.permute.xlu0 %2551
        %2553 = vrot.lane.b32.xlu0 %v2516, 3
        %v2554 = vpop.permute.xlu0 %2553
        %2555 = vrot.lane.b32.xlu0 %v2524, 3
        %v2556 = vpop.permute.xlu0 %2555
        %vm2557 = vcmask 1046528
        %v2558 = vrot.slane %v2324, 1
        %v2559 = vrot.slane %v2325, 1
        %v2560 = vsel %vm2557, %v2558, %v2559
        %v2561 = vrot.slane %v2356, 1
        %v2562 = vsel %vm2557, %v2559, %v2561
        %v2563 = vrot.slane %v2326, 1
        %v2564 = vrot.slane %v2327, 1
        %v2565 = vsel %vm2557, %v2563, %v2564
        %v2566 = vrot.slane %v2357, 1
        %v2567 = vsel %vm2557, %v2564, %v2566
        %v2568 = vrot.slane %v2328, 1
        %v2569 = vrot.slane %v2329, 1
        %v2570 = vsel %vm2557, %v2568, %v2569
        %v2571 = vrot.slane %v2358, 1
        %v2572 = vsel %vm2557, %v2569, %v2571
        %v2573 = vrot.slane %v2330, 1
        %v2574 = vrot.slane %v2331, 1
        %v2575 = vsel %vm2557, %v2573, %v2574
        %v2576 = vrot.slane %v2359, 1
        %v2577 = vsel %vm2557, %v2574, %v2576
        %v2578 = vrot.slane %v2332, 1
        %v2579 = vrot.slane %v2333, 1
        %v2580 = vsel %vm2557, %v2578, %v2579
        %v2581 = vrot.slane %v2360, 1
        %v2582 = vsel %vm2557, %v2579, %v2581
        %v2583 = vrot.slane %v2334, 1
        %v2584 = vrot.slane %v2335, 1
        %v2585 = vsel %vm2557, %v2583, %v2584
        %v2586 = vrot.slane %v2361, 1
        %v2587 = vsel %vm2557, %v2584, %v2586
        %v2588 = vrot.slane %v2336, 1
        %v2589 = vrot.slane %v2337, 1
        %v2590 = vsel %vm2557, %v2588, %v2589
        %v2591 = vrot.slane %v2362, 1
        %v2592 = vsel %vm2557, %v2589, %v2591
        %v2593 = vrot.slane %v2338, 1
        %v2594 = vrot.slane %v2339, 1
        %v2595 = vsel %vm2557, %v2593, %v2594
        %v2596 = vrot.slane %v2363, 1
        %v2597 = vsel %vm2557, %v2594, %v2596
        %2598 = vrot.lane.b32.xlu0 %v2560, 6
        %v2599 = vpop.permute.xlu0 %2598
        %2600 = vrot.lane.b32.xlu0 %v2562, 6
        %v2601 = vpop.permute.xlu0 %2600
        %2602 = vrot.lane.b32.xlu0 %v2565, 6
        %v2603 = vpop.permute.xlu0 %2602
        %2604 = vrot.lane.b32.xlu0 %v2567, 6
        %v2605 = vpop.permute.xlu0 %2604
        %2606 = vrot.lane.b32.xlu0 %v2570, 6
        %v2607 = vpop.permute.xlu0 %2606
        %2608 = vrot.lane.b32.xlu0 %v2572, 6
        %v2609 = vpop.permute.xlu0 %2608
        %2610 = vrot.lane.b32.xlu0 %v2575, 6
        %v2611 = vpop.permute.xlu0 %2610
        %2612 = vrot.lane.b32.xlu0 %v2577, 6
        %v2613 = vpop.permute.xlu0 %2612
        %2614 = vrot.lane.b32.xlu0 %v2580, 6
        %v2615 = vpop.permute.xlu0 %2614
        %2616 = vrot.lane.b32.xlu0 %v2582, 6
        %v2617 = vpop.permute.xlu0 %2616
        %2618 = vrot.lane.b32.xlu0 %v2585, 6
        %v2619 = vpop.permute.xlu0 %2618
        %2620 = vrot.lane.b32.xlu0 %v2587, 6
        %v2621 = vpop.permute.xlu0 %2620
        %2622 = vrot.lane.b32.xlu0 %v2590, 6
        %v2623 = vpop.permute.xlu0 %2622
        %2624 = vrot.lane.b32.xlu0 %v2592, 6
        %v2625 = vpop.permute.xlu0 %2624
        %2626 = vrot.lane.b32.xlu0 %v2595, 6
        %v2627 = vpop.permute.xlu0 %2626
        %2628 = vrot.lane.b32.xlu0 %v2597, 6
        %v2629 = vpop.permute.xlu0 %2628
        %v2662 = vunpack.c.l.b16 %v2179
        %v2663 = vunpack.c.l.b16 %v2180
        %v2664 = vunpack.c.l.b16 %v2181
        %v2665 = vunpack.c.l.b16 %v2182
        %v2666 = vunpack.c.l.b16 %v2184
        %v2667 = vunpack.c.l.b16 %v2185
        %v2668 = vunpack.c.l.b16 %v2186
        %v2669 = vunpack.c.l.b16 %v2187
        %v2670 = vunpack.c.l.b16 %v2189
        %v2671 = vunpack.c.l.b16 %v2190
        %v2672 = vunpack.c.l.b16 %v2191
        %v2673 = vunpack.c.l.b16 %v2192
        %v2674 = vunpack.c.l.b16 %v2194
        %v2675 = vunpack.c.l.b16 %v2195
        %v2676 = vunpack.c.l.b16 %v2196
        %v2677 = vunpack.c.l.b16 %v2197
        %v2678 = vunpack.c.l.b16 %v2199
        %v2679 = vunpack.c.l.b16 %v2200
        %v2680 = vunpack.c.l.b16 %v2201
        %v2681 = vunpack.c.l.b16 %v2202
        %v2682 = vunpack.c.l.b16 %v2204
        %v2683 = vunpack.c.l.b16 %v2205
        %v2684 = vunpack.c.l.b16 %v2206
        %v2685 = vunpack.c.l.b16 %v2207
        %v2686 = vunpack.c.l.b16 %v2209
        %v2687 = vunpack.c.l.b16 %v2210
        %v2688 = vunpack.c.l.b16 %v2211
        %v2689 = vunpack.c.l.b16 %v2212
        %v2690 = vunpack.c.l.b16 %v2214
        %v2691 = vunpack.c.l.b16 %v2215
        %v2692 = vunpack.c.l.b16 %v2216
        %v2693 = vunpack.c.l.b16 %v2217
        %v2694 = vpack.c.b16 %v2663, %v2662
        %v2695 = vpack.c.b16 %v2665, %v2664
        %v2696 = vpack.c.b16 %v2667, %v2666
        %v2697 = vpack.c.b16 %v2669, %v2668
        %v2698 = vpack.c.b16 %v2671, %v2670
        %v2699 = vpack.c.b16 %v2673, %v2672
        %v2700 = vpack.c.b16 %v2675, %v2674
        %v2701 = vpack.c.b16 %v2677, %v2676
        %v2702 = vpack.c.b16 %v2679, %v2678
        %v2703 = vpack.c.b16 %v2681, %v2680
        %v2704 = vpack.c.b16 %v2683, %v2682
        %v2705 = vpack.c.b16 %v2685, %v2684
        %v2706 = vpack.c.b16 %v2687, %v2686
        %v2707 = vpack.c.b16 %v2689, %v2688
        %v2708 = vpack.c.b16 %v2691, %v2690
        %v2709 = vpack.c.b16 %v2693, %v2692
        %2710 = vrot.lane.b32.xlu0 %v2694, 9
        %v2711 = vpop.permute.xlu0 %2710
        %2712 = vrot.lane.b32.xlu0 %v2695, 9
        %v2713 = vpop.permute.xlu0 %2712
        %2714 = vrot.lane.b32.xlu0 %v2696, 9
        %v2715 = vpop.permute.xlu0 %2714
        %2716 = vrot.lane.b32.xlu0 %v2697, 9
        %v2717 = vpop.permute.xlu0 %2716
        %2718 = vrot.lane.b32.xlu0 %v2698, 9
        %v2719 = vpop.permute.xlu0 %2718
        %2720 = vrot.lane.b32.xlu0 %v2699, 9
        %v2721 = vpop.permute.xlu0 %2720
        %2722 = vrot.lane.b32.xlu0 %v2700, 9
        %v2723 = vpop.permute.xlu0 %2722
        %2724 = vrot.lane.b32.xlu0 %v2701, 9
        %v2725 = vpop.permute.xlu0 %2724
        %2726 = vrot.lane.b32.xlu0 %v2702, 9
        %v2727 = vpop.permute.xlu0 %2726
        %2728 = vrot.lane.b32.xlu0 %v2703, 9
        %v2729 = vpop.permute.xlu0 %2728
        %2730 = vrot.lane.b32.xlu0 %v2704, 9
        %v2731 = vpop.permute.xlu0 %2730
        %2732 = vrot.lane.b32.xlu0 %v2705, 9
        %v2733 = vpop.permute.xlu0 %2732
        %2734 = vrot.lane.b32.xlu0 %v2706, 9
        %v2735 = vpop.permute.xlu0 %2734
        %2736 = vrot.lane.b32.xlu0 %v2707, 9
        %v2737 = vpop.permute.xlu0 %2736
        %2738 = vrot.lane.b32.xlu0 %v2708, 9
        %v2739 = vpop.permute.xlu0 %2738
        %2740 = vrot.lane.b32.xlu0 %v2709, 9
        %v2741 = vpop.permute.xlu0 %2740
        %v2750 = vunpack.c.l.b16 %v2183
        %v2751 = vunpack.c.l.b16 %v2188
        %v2752 = vunpack.c.l.b16 %v2193
        %v2753 = vunpack.c.l.b16 %v2198
        %v2754 = vunpack.c.l.b16 %v2203
        %v2755 = vunpack.c.l.b16 %v2208
        %v2756 = vunpack.c.l.b16 %v2213
        %v2757 = vunpack.c.l.b16 %v2218
        %v2758 = vpack.c.b16 %v2750, %v2750
        %v2759 = vpack.c.b16 %v2751, %v2751
        %v2760 = vpack.c.b16 %v2752, %v2752
        %v2761 = vpack.c.b16 %v2753, %v2753
        %v2762 = vpack.c.b16 %v2754, %v2754
        %v2763 = vpack.c.b16 %v2755, %v2755
        %v2764 = vpack.c.b16 %v2756, %v2756
        %v2765 = vpack.c.b16 %v2757, %v2757
        %v2767 = vshrl.u32 %v2694, 16
        %v2769 = vshll.u32 %v2694, 16
        %v2771 = vrot.slane %v2769, 1
        %v2772 = vor.u32 %v2767, %v2771
        %v2774 = vshll.u32 %v2695, 16
        %v2776 = vrot.slane %v2774, 1
        %v2777 = vsel %vm2364, %v2772, %v2776
        %v2778 = vshrl.u32 %v2695, 16
        %v2780 = vor.u32 %v2778, %v2776
        %v2782 = vshll.u32 %v2758, 16
        %v2784 = vrot.slane %v2782, 1
        %v2785 = vsel %vm2364, %v2780, %v2784
        %v2787 = vshrl.u32 %v2696, 16
        %v2789 = vshll.u32 %v2696, 16
        %v2791 = vrot.slane %v2789, 1
        %v2792 = vor.u32 %v2787, %v2791
        %v2794 = vshll.u32 %v2697, 16
        %v2796 = vrot.slane %v2794, 1
        %v2797 = vsel %vm2364, %v2792, %v2796
        %v2798 = vshrl.u32 %v2697, 16
        %v2800 = vor.u32 %v2798, %v2796
        %v2802 = vshll.u32 %v2759, 16
        %v2804 = vrot.slane %v2802, 1
        %v2805 = vsel %vm2364, %v2800, %v2804
        %v2807 = vshrl.u32 %v2698, 16
        %v2809 = vshll.u32 %v2698, 16
        %v2811 = vrot.slane %v2809, 1
        %v2812 = vor.u32 %v2807, %v2811
        %v2814 = vshll.u32 %v2699, 16
        %v2816 = vrot.slane %v2814, 1
        %v2817 = vsel %vm2364, %v2812, %v2816
        %v2818 = vshrl.u32 %v2699, 16
        %v2820 = vor.u32 %v2818, %v2816
        %v2822 = vshll.u32 %v2760, 16
        %v2824 = vrot.slane %v2822, 1
        %v2825 = vsel %vm2364, %v2820, %v2824
        %v2827 = vshrl.u32 %v2700, 16
        %v2829 = vshll.u32 %v2700, 16
        %v2831 = vrot.slane %v2829, 1
        %v2832 = vor.u32 %v2827, %v2831
        %v2834 = vshll.u32 %v2701, 16
        %v2836 = vrot.slane %v2834, 1
        %v2837 = vsel %vm2364, %v2832, %v2836
        %v2838 = vshrl.u32 %v2701, 16
        %v2840 = vor.u32 %v2838, %v2836
        %v2842 = vshll.u32 %v2761, 16
        %v2844 = vrot.slane %v2842, 1
        %v2845 = vsel %vm2364, %v2840, %v2844
        %v2847 = vshrl.u32 %v2702, 16
        %v2849 = vshll.u32 %v2702, 16
        %v2851 = vrot.slane %v2849, 1
        %v2852 = vor.u32 %v2847, %v2851
        %v2854 = vshll.u32 %v2703, 16
        %v2856 = vrot.slane %v2854, 1
        %v2857 = vsel %vm2364, %v2852, %v2856
        %v2858 = vshrl.u32 %v2703, 16
        %v2860 = vor.u32 %v2858, %v2856
        %v2862 = vshll.u32 %v2762, 16
        %v2864 = vrot.slane %v2862, 1
        %v2865 = vsel %vm2364, %v2860, %v2864
        %v2867 = vshrl.u32 %v2704, 16
        %v2869 = vshll.u32 %v2704, 16
        %v2871 = vrot.slane %v2869, 1
        %v2872 = vor.u32 %v2867, %v2871
        %v2874 = vshll.u32 %v2705, 16
        %v2876 = vrot.slane %v2874, 1
        %v2877 = vsel %vm2364, %v2872, %v2876
        %v2878 = vshrl.u32 %v2705, 16
        %v2880 = vor.u32 %v2878, %v2876
        %v2882 = vshll.u32 %v2763, 16
        %v2884 = vrot.slane %v2882, 1
        %v2885 = vsel %vm2364, %v2880, %v2884
        %v2887 = vshrl.u32 %v2706, 16
        %v2889 = vshll.u32 %v2706, 16
        %v2891 = vrot.slane %v2889, 1
        %v2892 = vor.u32 %v2887, %v2891
        %v2894 = vshll.u32 %v2707, 16
        %v2896 = vrot.slane %v2894, 1
        %v2897 = vsel %vm2364, %v2892, %v2896
        %v2898 = vshrl.u32 %v2707, 16
        %v2900 = vor.u32 %v2898, %v2896
        %v2902 = vshll.u32 %v2764, 16
        %v2904 = vrot.slane %v2902, 1
        %v2905 = vsel %vm2364, %v2900, %v2904
        %v2907 = vshrl.u32 %v2708, 16
        %v2909 = vshll.u32 %v2708, 16
        %v2911 = vrot.slane %v2909, 1
        %v2912 = vor.u32 %v2907, %v2911
        %v2914 = vshll.u32 %v2709, 16
        %v2916 = vrot.slane %v2914, 1
        %v2917 = vsel %vm2364, %v2912, %v2916
        %v2918 = vshrl.u32 %v2709, 16
        %v2920 = vor.u32 %v2918, %v2916
        %v2922 = vshll.u32 %v2765, 16
        %v2924 = vrot.slane %v2922, 1
        %v2925 = vsel %vm2364, %v2920, %v2924
        %2926 = vrot.lane.b32.xlu0 %v2777, 12
        %v2927 = vpop.permute.xlu0 %2926
        %2928 = vrot.lane.b32.xlu0 %v2785, 12
        %v2929 = vpop.permute.xlu0 %2928
        %2930 = vrot.lane.b32.xlu0 %v2797, 12
        %v2931 = vpop.permute.xlu0 %2930
        %2932 = vrot.lane.b32.xlu0 %v2805, 12
        %v2933 = vpop.permute.xlu0 %2932
        %2934 = vrot.lane.b32.xlu0 %v2817, 12
        %v2935 = vpop.permute.xlu0 %2934
        %2936 = vrot.lane.b32.xlu0 %v2825, 12
        %v2937 = vpop.permute.xlu0 %2936
        %2938 = vrot.lane.b32.xlu0 %v2837, 12
        %v2939 = vpop.permute.xlu0 %2938
        %2940 = vrot.lane.b32.xlu0 %v2845, 12
        %v2941 = vpop.permute.xlu0 %2940
        %2942 = vrot.lane.b32.xlu0 %v2857, 12
        %v2943 = vpop.permute.xlu0 %2942
        %2944 = vrot.lane.b32.xlu0 %v2865, 12
        %v2945 = vpop.permute.xlu0 %2944
        %2946 = vrot.lane.b32.xlu0 %v2877, 12
        %v2947 = vpop.permute.xlu0 %2946
        %2948 = vrot.lane.b32.xlu0 %v2885, 12
        %v2949 = vpop.permute.xlu0 %2948
        %2950 = vrot.lane.b32.xlu0 %v2897, 12
        %v2951 = vpop.permute.xlu0 %2950
        %2952 = vrot.lane.b32.xlu0 %v2905, 12
        %v2953 = vpop.permute.xlu0 %2952
        %2954 = vrot.lane.b32.xlu0 %v2917, 12
        %v2955 = vpop.permute.xlu0 %2954
        %2956 = vrot.lane.b32.xlu0 %v2925, 12
        %v2957 = vpop.permute.xlu0 %2956
        %v2958 = vrot.slane %v2694, 1
        %v2959 = vrot.slane %v2695, 1
        %v2960 = vsel %vm2557, %v2958, %v2959
        %v2961 = vrot.slane %v2758, 1
        %v2962 = vsel %vm2557, %v2959, %v2961
        %v2963 = vrot.slane %v2696, 1
        %v2964 = vrot.slane %v2697, 1
        %v2965 = vsel %vm2557, %v2963, %v2964
        %v2966 = vrot.slane %v2759, 1
        %v2967 = vsel %vm2557, %v2964, %v2966
        %v2968 = vrot.slane %v2698, 1
        %v2969 = vrot.slane %v2699, 1
        %v2970 = vsel %vm2557, %v2968, %v2969
        %v2971 = vrot.slane %v2760, 1
        %v2972 = vsel %vm2557, %v2969, %v2971
        %v2973 = vrot.slane %v2700, 1
        %v2974 = vrot.slane %v2701, 1
        %v2975 = vsel %vm2557, %v2973, %v2974
        %v2976 = vrot.slane %v2761, 1
        %v2977 = vsel %vm2557, %v2974, %v2976
        %v2978 = vrot.slane %v2702, 1
        %v2979 = vrot.slane %v2703, 1
        %v2980 = vsel %vm2557, %v2978, %v2979
        %v2981 = vrot.slane %v2762, 1
        %v2982 = vsel %vm2557, %v2979, %v2981
        %v2983 = vrot.slane %v2704, 1
        %v2984 = vrot.slane %v2705, 1
        %v2985 = vsel %vm2557, %v2983, %v2984
        %v2986 = vrot.slane %v2763, 1
        %v2987 = vsel %vm2557, %v2984, %v2986
        %v2988 = vrot.slane %v2706, 1
        %v2989 = vrot.slane %v2707, 1
        %v2990 = vsel %vm2557, %v2988, %v2989
        %v2991 = vrot.slane %v2764, 1
        %v2992 = vsel %vm2557, %v2989, %v2991
        %v2993 = vrot.slane %v2708, 1
        %v2994 = vrot.slane %v2709, 1
        %v2995 = vsel %vm2557, %v2993, %v2994
        %v2996 = vrot.slane %v2765, 1
        %v2997 = vsel %vm2557, %v2994, %v2996
        %2998 = vrot.lane.b32.xlu0 %v2960, 15
        %v2999 = vpop.permute.xlu0 %2998
        %3000 = vrot.lane.b32.xlu0 %v2962, 15
        %v3001 = vpop.permute.xlu0 %3000
        %3002 = vrot.lane.b32.xlu0 %v2965, 15
        %v3003 = vpop.permute.xlu0 %3002
        %3004 = vrot.lane.b32.xlu0 %v2967, 15
        %v3005 = vpop.permute.xlu0 %3004
        %3006 = vrot.lane.b32.xlu0 %v2970, 15
        %v3007 = vpop.permute.xlu0 %3006
        %3008 = vrot.lane.b32.xlu0 %v2972, 15
        %v3009 = vpop.permute.xlu0 %3008
        %3010 = vrot.lane.b32.xlu0 %v2975, 15
        %v3011 = vpop.permute.xlu0 %3010
        %3012 = vrot.lane.b32.xlu0 %v2977, 15
        %v3013 = vpop.permute.xlu0 %3012
        %3014 = vrot.lane.b32.xlu0 %v2980, 15
        %v3015 = vpop.permute.xlu0 %3014
        %3016 = vrot.lane.b32.xlu0 %v2982, 15
        %v3017 = vpop.permute.xlu0 %3016
        %3018 = vrot.lane.b32.xlu0 %v2985, 15
        %v3019 = vpop.permute.xlu0 %3018
        %3020 = vrot.lane.b32.xlu0 %v2987, 15
        %v3021 = vpop.permute.xlu0 %3020
        %3022 = vrot.lane.b32.xlu0 %v2990, 15
        %v3023 = vpop.permute.xlu0 %3022
        %3024 = vrot.lane.b32.xlu0 %v2992, 15
        %v3025 = vpop.permute.xlu0 %3024
        %3026 = vrot.lane.b32.xlu0 %v2995, 15
        %v3027 = vpop.permute.xlu0 %3026
        %3028 = vrot.lane.b32.xlu0 %v2997, 15
        %v3029 = vpop.permute.xlu0 %3028
        %v3062 = vunpack.c.l.b16 %v2220
        %v3063 = vunpack.c.l.b16 %v2221
        %v3064 = vunpack.c.l.b16 %v2222
        %v3065 = vunpack.c.l.b16 %v2223
        %v3066 = vunpack.c.l.b16 %v2225
        %v3067 = vunpack.c.l.b16 %v2226
        %v3068 = vunpack.c.l.b16 %v2227
        %v3069 = vunpack.c.l.b16 %v2228
        %v3070 = vunpack.c.l.b16 %v2230
        %v3071 = vunpack.c.l.b16 %v2231
        %v3072 = vunpack.c.l.b16 %v2232
        %v3073 = vunpack.c.l.b16 %v2233
        %v3074 = vunpack.c.l.b16 %v2235
        %v3075 = vunpack.c.l.b16 %v2236
        %v3076 = vunpack.c.l.b16 %v2237
        %v3077 = vunpack.c.l.b16 %v2238
        %v3078 = vunpack.c.l.b16 %v2240
        %v3079 = vunpack.c.l.b16 %v2241
        %v3080 = vunpack.c.l.b16 %v2242
        %v3081 = vunpack.c.l.b16 %v2243
        %v3082 = vunpack.c.l.b16 %v2245
        %v3083 = vunpack.c.l.b16 %v2246
        %v3084 = vunpack.c.l.b16 %v2247
        %v3085 = vunpack.c.l.b16 %v2248
        %v3086 = vunpack.c.l.b16 %v2250
        %v3087 = vunpack.c.l.b16 %v2251
        %v3088 = vunpack.c.l.b16 %v2252
        %v3089 = vunpack.c.l.b16 %v2253
        %v3090 = vunpack.c.l.b16 %v2255
        %v3091 = vunpack.c.l.b16 %v2256
        %v3092 = vunpack.c.l.b16 %v2257
        %v3093 = vunpack.c.l.b16 %v2258
        %v3094 = vpack.c.b16 %v3063, %v3062
        %v3095 = vpack.c.b16 %v3065, %v3064
        %v3096 = vpack.c.b16 %v3067, %v3066
        %v3097 = vpack.c.b16 %v3069, %v3068
        %v3098 = vpack.c.b16 %v3071, %v3070
        %v3099 = vpack.c.b16 %v3073, %v3072
        %v3100 = vpack.c.b16 %v3075, %v3074
        %v3101 = vpack.c.b16 %v3077, %v3076
        %v3102 = vpack.c.b16 %v3079, %v3078
        %v3103 = vpack.c.b16 %v3081, %v3080
        %v3104 = vpack.c.b16 %v3083, %v3082
        %v3105 = vpack.c.b16 %v3085, %v3084
        %v3106 = vpack.c.b16 %v3087, %v3086
        %v3107 = vpack.c.b16 %v3089, %v3088
        %v3108 = vpack.c.b16 %v3091, %v3090
        %v3109 = vpack.c.b16 %v3093, %v3092
        %3110 = vrot.lane.b32.xlu0 %v3094, 18
        %v3111 = vpop.permute.xlu0 %3110
        %3112 = vrot.lane.b32.xlu0 %v3095, 18
        %v3113 = vpop.permute.xlu0 %3112
        %3114 = vrot.lane.b32.xlu0 %v3096, 18
        %v3115 = vpop.permute.xlu0 %3114
        %3116 = vrot.lane.b32.xlu0 %v3097, 18
        %v3117 = vpop.permute.xlu0 %3116
        %3118 = vrot.lane.b32.xlu0 %v3098, 18
        %v3119 = vpop.permute.xlu0 %3118
        %3120 = vrot.lane.b32.xlu0 %v3099, 18
        %v3121 = vpop.permute.xlu0 %3120
        %3122 = vrot.lane.b32.xlu0 %v3100, 18
        %v3123 = vpop.permute.xlu0 %3122
        %3124 = vrot.lane.b32.xlu0 %v3101, 18
        %v3125 = vpop.permute.xlu0 %3124
        %3126 = vrot.lane.b32.xlu0 %v3102, 18
        %v3127 = vpop.permute.xlu0 %3126
        %3128 = vrot.lane.b32.xlu0 %v3103, 18
        %v3129 = vpop.permute.xlu0 %3128
        %3130 = vrot.lane.b32.xlu0 %v3104, 18
        %v3131 = vpop.permute.xlu0 %3130
        %3132 = vrot.lane.b32.xlu0 %v3105, 18
        %v3133 = vpop.permute.xlu0 %3132
        %3134 = vrot.lane.b32.xlu0 %v3106, 18
        %v3135 = vpop.permute.xlu0 %3134
        %3136 = vrot.lane.b32.xlu0 %v3107, 18
        %v3137 = vpop.permute.xlu0 %3136
        %3138 = vrot.lane.b32.xlu0 %v3108, 18
        %v3139 = vpop.permute.xlu0 %3138
        %3140 = vrot.lane.b32.xlu0 %v3109, 18
        %v3141 = vpop.permute.xlu0 %3140
        %v3150 = vunpack.c.l.b16 %v2224
        %v3151 = vunpack.c.l.b16 %v2229
        %v3152 = vunpack.c.l.b16 %v2234
        %v3153 = vunpack.c.l.b16 %v2239
        %v3154 = vunpack.c.l.b16 %v2244
        %v3155 = vunpack.c.l.b16 %v2249
        %v3156 = vunpack.c.l.b16 %v2254
        %v3157 = vunpack.c.l.b16 %v2259
        %v3158 = vpack.c.b16 %v3150, %v3150
        %v3159 = vpack.c.b16 %v3151, %v3151
        %v3160 = vpack.c.b16 %v3152, %v3152
        %v3161 = vpack.c.b16 %v3153, %v3153
        %v3162 = vpack.c.b16 %v3154, %v3154
        %v3163 = vpack.c.b16 %v3155, %v3155
        %v3164 = vpack.c.b16 %v3156, %v3156
        %v3165 = vpack.c.b16 %v3157, %v3157
        %v3167 = vshrl.u32 %v3094, 16
        %v3169 = vshll.u32 %v3094, 16
        %v3171 = vrot.slane %v3169, 1
        %v3172 = vor.u32 %v3167, %v3171
        %v3174 = vshll.u32 %v3095, 16
        %v3176 = vrot.slane %v3174, 1
        %v3177 = vsel %vm2364, %v3172, %v3176
        %v3178 = vshrl.u32 %v3095, 16
        %v3180 = vor.u32 %v3178, %v3176
        %v3182 = vshll.u32 %v3158, 16
        %v3184 = vrot.slane %v3182, 1
        %v3185 = vsel %vm2364, %v3180, %v3184
        %v3187 = vshrl.u32 %v3096, 16
        %v3189 = vshll.u32 %v3096, 16
        %v3191 = vrot.slane %v3189, 1
        %v3192 = vor.u32 %v3187, %v3191
        %v3194 = vshll.u32 %v3097, 16
        %v3196 = vrot.slane %v3194, 1
        %v3197 = vsel %vm2364, %v3192, %v3196
        %v3198 = vshrl.u32 %v3097, 16
        %v3200 = vor.u32 %v3198, %v3196
        %v3202 = vshll.u32 %v3159, 16
        %v3204 = vrot.slane %v3202, 1
        %v3205 = vsel %vm2364, %v3200, %v3204
        %v3207 = vshrl.u32 %v3098, 16
        %v3209 = vshll.u32 %v3098, 16
        %v3211 = vrot.slane %v3209, 1
        %v3212 = vor.u32 %v3207, %v3211
        %v3214 = vshll.u32 %v3099, 16
        %v3216 = vrot.slane %v3214, 1
        %v3217 = vsel %vm2364, %v3212, %v3216
        %v3218 = vshrl.u32 %v3099, 16
        %v3220 = vor.u32 %v3218, %v3216
        %v3222 = vshll.u32 %v3160, 16
        %v3224 = vrot.slane %v3222, 1
        %v3225 = vsel %vm2364, %v3220, %v3224
        %v3227 = vshrl.u32 %v3100, 16
        %v3229 = vshll.u32 %v3100, 16
        %v3231 = vrot.slane %v3229, 1
        %v3232 = vor.u32 %v3227, %v3231
        %v3234 = vshll.u32 %v3101, 16
        %v3236 = vrot.slane %v3234, 1
        %v3237 = vsel %vm2364, %v3232, %v3236
        %v3238 = vshrl.u32 %v3101, 16
        %v3240 = vor.u32 %v3238, %v3236
        %v3242 = vshll.u32 %v3161, 16
        %v3244 = vrot.slane %v3242, 1
        %v3245 = vsel %vm2364, %v3240, %v3244
        %v3247 = vshrl.u32 %v3102, 16
        %v3249 = vshll.u32 %v3102, 16
        %v3251 = vrot.slane %v3249, 1
        %v3252 = vor.u32 %v3247, %v3251
        %v3254 = vshll.u32 %v3103, 16
        %v3256 = vrot.slane %v3254, 1
        %v3257 = vsel %vm2364, %v3252, %v3256
        %v3258 = vshrl.u32 %v3103, 16
        %v3260 = vor.u32 %v3258, %v3256
        %v3262 = vshll.u32 %v3162, 16
        %v3264 = vrot.slane %v3262, 1
        %v3265 = vsel %vm2364, %v3260, %v3264
        %v3267 = vshrl.u32 %v3104, 16
        %v3269 = vshll.u32 %v3104, 16
        %v3271 = vrot.slane %v3269, 1
        %v3272 = vor.u32 %v3267, %v3271
        %v3274 = vshll.u32 %v3105, 16
        %v3276 = vrot.slane %v3274, 1
        %v3277 = vsel %vm2364, %v3272, %v3276
        %v3278 = vshrl.u32 %v3105, 16
        %v3280 = vor.u32 %v3278, %v3276
        %v3282 = vshll.u32 %v3163, 16
        %v3284 = vrot.slane %v3282, 1
        %v3285 = vsel %vm2364, %v3280, %v3284
        %v3287 = vshrl.u32 %v3106, 16
        %v3289 = vshll.u32 %v3106, 16
        %v3291 = vrot.slane %v3289, 1
        %v3292 = vor.u32 %v3287, %v3291
        %v3294 = vshll.u32 %v3107, 16
        %v3296 = vrot.slane %v3294, 1
        %v3297 = vsel %vm2364, %v3292, %v3296
        %v3298 = vshrl.u32 %v3107, 16
        %v3300 = vor.u32 %v3298, %v3296
        %v3302 = vshll.u32 %v3164, 16
        %v3304 = vrot.slane %v3302, 1
        %v3305 = vsel %vm2364, %v3300, %v3304
        %v3307 = vshrl.u32 %v3108, 16
        %v3309 = vshll.u32 %v3108, 16
        %v3311 = vrot.slane %v3309, 1
        %v3312 = vor.u32 %v3307, %v3311
        %v3314 = vshll.u32 %v3109, 16
        %v3316 = vrot.slane %v3314, 1
        %v3317 = vsel %vm2364, %v3312, %v3316
        %v3318 = vshrl.u32 %v3109, 16
        %v3320 = vor.u32 %v3318, %v3316
        %v3322 = vshll.u32 %v3165, 16
        %v3324 = vrot.slane %v3322, 1
        %v3325 = vsel %vm2364, %v3320, %v3324
        %3326 = vrot.lane.b32.xlu0 %v3177, 21
        %v3327 = vpop.permute.xlu0 %3326
        %3328 = vrot.lane.b32.xlu0 %v3185, 21
        %v3329 = vpop.permute.xlu0 %3328
        %3330 = vrot.lane.b32.xlu0 %v3197, 21
        %v3331 = vpop.permute.xlu0 %3330
        %3332 = vrot.lane.b32.xlu0 %v3205, 21
        %v3333 = vpop.permute.xlu0 %3332
        %3334 = vrot.lane.b32.xlu0 %v3217, 21
        %v3335 = vpop.permute.xlu0 %3334
        %3336 = vrot.lane.b32.xlu0 %v3225, 21
        %v3337 = vpop.permute.xlu0 %3336
        %3338 = vrot.lane.b32.xlu0 %v3237, 21
        %v3339 = vpop.permute.xlu0 %3338
        %3340 = vrot.lane.b32.xlu0 %v3245, 21
        %v3341 = vpop.permute.xlu0 %3340
        %3342 = vrot.lane.b32.xlu0 %v3257, 21
        %v3343 = vpop.permute.xlu0 %3342
        %3344 = vrot.lane.b32.xlu0 %v3265, 21
        %v3345 = vpop.permute.xlu0 %3344
        %3346 = vrot.lane.b32.xlu0 %v3277, 21
        %v3347 = vpop.permute.xlu0 %3346
        %3348 = vrot.lane.b32.xlu0 %v3285, 21
        %v3349 = vpop.permute.xlu0 %3348
        %3350 = vrot.lane.b32.xlu0 %v3297, 21
        %v3351 = vpop.permute.xlu0 %3350
        %3352 = vrot.lane.b32.xlu0 %v3305, 21
        %v3353 = vpop.permute.xlu0 %3352
        %3354 = vrot.lane.b32.xlu0 %v3317, 21
        %v3355 = vpop.permute.xlu0 %3354
        %3356 = vrot.lane.b32.xlu0 %v3325, 21
        %v3357 = vpop.permute.xlu0 %3356
        %v3358 = vrot.slane %v3094, 1
        %v3359 = vrot.slane %v3095, 1
        %v3360 = vsel %vm2557, %v3358, %v3359
        %v3361 = vrot.slane %v3158, 1
        %v3362 = vsel %vm2557, %v3359, %v3361
        %v3363 = vrot.slane %v3096, 1
        %v3364 = vrot.slane %v3097, 1
        %v3365 = vsel %vm2557, %v3363, %v3364
        %v3366 = vrot.slane %v3159, 1
        %v3367 = vsel %vm2557, %v3364, %v3366
        %v3368 = vrot.slane %v3098, 1
        %v3369 = vrot.slane %v3099, 1
        %v3370 = vsel %vm2557, %v3368, %v3369
        %v3371 = vrot.slane %v3160, 1
        %v3372 = vsel %vm2557, %v3369, %v3371
        %v3373 = vrot.slane %v3100, 1
        %v3374 = vrot.slane %v3101, 1
        %v3375 = vsel %vm2557, %v3373, %v3374
        %v3376 = vrot.slane %v3161, 1
        %v3377 = vsel %vm2557, %v3374, %v3376
        %v3378 = vrot.slane %v3102, 1
        %v3379 = vrot.slane %v3103, 1
        %v3380 = vsel %vm2557, %v3378, %v3379
        %v3381 = vrot.slane %v3162, 1
        %v3382 = vsel %vm2557, %v3379, %v3381
        %v3383 = vrot.slane %v3104, 1
        %v3384 = vrot.slane %v3105, 1
        %v3385 = vsel %vm2557, %v3383, %v3384
        %v3386 = vrot.slane %v3163, 1
        %v3387 = vsel %vm2557, %v3384, %v3386
        %v3388 = vrot.slane %v3106, 1
        %v3389 = vrot.slane %v3107, 1
        %v3390 = vsel %vm2557, %v3388, %v3389
        %v3391 = vrot.slane %v3164, 1
        %v3392 = vsel %vm2557, %v3389, %v3391
        %v3393 = vrot.slane %v3108, 1
        %v3394 = vrot.slane %v3109, 1
        %v3395 = vsel %vm2557, %v3393, %v3394
        %v3396 = vrot.slane %v3165, 1
        %v3397 = vsel %vm2557, %v3394, %v3396
        %3398 = vrot.lane.b32.xlu0 %v3360, 24
        %v3399 = vpop.permute.xlu0 %3398
        %3400 = vrot.lane.b32.xlu0 %v3362, 24
        %v3401 = vpop.permute.xlu0 %3400
        %3402 = vrot.lane.b32.xlu0 %v3365, 24
        %v3403 = vpop.permute.xlu0 %3402
        %3404 = vrot.lane.b32.xlu0 %v3367, 24
        %v3405 = vpop.permute.xlu0 %3404
        %3406 = vrot.lane.b32.xlu0 %v3370, 24
        %v3407 = vpop.permute.xlu0 %3406
        %3408 = vrot.lane.b32.xlu0 %v3372, 24
        %v3409 = vpop.permute.xlu0 %3408
        %3410 = vrot.lane.b32.xlu0 %v3375, 24
        %v3411 = vpop.permute.xlu0 %3410
        %3412 = vrot.lane.b32.xlu0 %v3377, 24
        %v3413 = vpop.permute.xlu0 %3412
        %3414 = vrot.lane.b32.xlu0 %v3380, 24
        %v3415 = vpop.permute.xlu0 %3414
        %3416 = vrot.lane.b32.xlu0 %v3382, 24
        %v3417 = vpop.permute.xlu0 %3416
        %3418 = vrot.lane.b32.xlu0 %v3385, 24
        %v3419 = vpop.permute.xlu0 %3418
        %3420 = vrot.lane.b32.xlu0 %v3387, 24
        %v3421 = vpop.permute.xlu0 %3420
        %3422 = vrot.lane.b32.xlu0 %v3390, 24
        %v3423 = vpop.permute.xlu0 %3422
        %3424 = vrot.lane.b32.xlu0 %v3392, 24
        %v3425 = vpop.permute.xlu0 %3424
        %3426 = vrot.lane.b32.xlu0 %v3395, 24
        %v3427 = vpop.permute.xlu0 %3426
        %3428 = vrot.lane.b32.xlu0 %v3397, 24
        %v3429 = vpop.permute.xlu0 %3428
        %vm3430 = vcmask 23552
        %v3432 = vsel %vm3430, %v2324, %v2526
        %v3434 = vsel %vm3430, %v2325, %v2528
        %v3436 = vsel %vm3430, %v2326, %v2530
        %v3438 = vsel %vm3430, %v2327, %v2532
        %v3440 = vsel %vm3430, %v2328, %v2534
        %v3442 = vsel %vm3430, %v2329, %v2536
        %v3444 = vsel %vm3430, %v2330, %v2538
        %v3446 = vsel %vm3430, %v2331, %v2540
        %v3448 = vsel %vm3430, %v2332, %v2542
        %v3450 = vsel %vm3430, %v2333, %v2544
        %v3452 = vsel %vm3430, %v2334, %v2546
        %v3454 = vsel %vm3430, %v2335, %v2548
        %v3456 = vsel %vm3430, %v2336, %v2550
        %v3458 = vsel %vm3430, %v2337, %v2552
        %v3460 = vsel %vm3430, %v2338, %v2554
        %v3462 = vsel %vm3430, %v2339, %v2556
        %vm3463 = vcmask 48128
        %v3465 = vsel %vm3463, %v3432, %v2599
        %v3467 = vsel %vm3463, %v3434, %v2601
        %v3469 = vsel %vm3463, %v3436, %v2603
        %v3471 = vsel %vm3463, %v3438, %v2605
        %v3473 = vsel %vm3463, %v3440, %v2607
        %v3475 = vsel %vm3463, %v3442, %v2609
        %v3477 = vsel %vm3463, %v3444, %v2611
        %v3479 = vsel %vm3463, %v3446, %v2613
        %v3481 = vsel %vm3463, %v3448, %v2615
        %v3483 = vsel %vm3463, %v3450, %v2617
        %v3485 = vsel %vm3463, %v3452, %v2619
        %v3487 = vsel %vm3463, %v3454, %v2621
        %v3489 = vsel %vm3463, %v3456, %v2623
        %v3491 = vsel %vm3463, %v3458, %v2625
        %v3493 = vsel %vm3463, %v3460, %v2627
        %v3495 = vsel %vm3463, %v3462, %v2629
        %vm3496 = vcmask 72704
        %v3498 = vsel %vm3496, %v3465, %v2711
        %v3500 = vsel %vm3496, %v3467, %v2713
        %v3502 = vsel %vm3496, %v3469, %v2715
        %v3504 = vsel %vm3496, %v3471, %v2717
        %v3506 = vsel %vm3496, %v3473, %v2719
        %v3508 = vsel %vm3496, %v3475, %v2721
        %v3510 = vsel %vm3496, %v3477, %v2723
        %v3512 = vsel %vm3496, %v3479, %v2725
        %v3514 = vsel %vm3496, %v3481, %v2727
        %v3516 = vsel %vm3496, %v3483, %v2729
        %v3518 = vsel %vm3496, %v3485, %v2731
        %v3520 = vsel %vm3496, %v3487, %v2733
        %v3522 = vsel %vm3496, %v3489, %v2735
        %v3524 = vsel %vm3496, %v3491, %v2737
        %v3526 = vsel %vm3496, %v3493, %v2739
        %v3528 = vsel %vm3496, %v3495, %v2741
        %vm3529 = vcmask 97280
        %v3531 = vsel %vm3529, %v3498, %v2927
        %v3533 = vsel %vm3529, %v3500, %v2929
        %v3535 = vsel %vm3529, %v3502, %v2931
        %v3537 = vsel %vm3529, %v3504, %v2933
        %v3539 = vsel %vm3529, %v3506, %v2935
        %v3541 = vsel %vm3529, %v3508, %v2937
        %v3543 = vsel %vm3529, %v3510, %v2939
        %v3545 = vsel %vm3529, %v3512, %v2941
        %v3547 = vsel %vm3529, %v3514, %v2943
        %v3549 = vsel %vm3529, %v3516, %v2945
        %v3551 = vsel %vm3529, %v3518, %v2947
        %v3553 = vsel %vm3529, %v3520, %v2949
        %v3555 = vsel %vm3529, %v3522, %v2951
        %v3557 = vsel %vm3529, %v3524, %v2953
        %v3559 = vsel %vm3529, %v3526, %v2955
        %v3561 = vsel %vm3529, %v3528, %v2957
        %vm3562 = vcmask 121856
        %v3564 = vsel %vm3562, %v3531, %v2999
        %v3566 = vsel %vm3562, %v3533, %v3001
        %v3568 = vsel %vm3562, %v3535, %v3003
        %v3570 = vsel %vm3562, %v3537, %v3005
        %v3572 = vsel %vm3562, %v3539, %v3007
        %v3574 = vsel %vm3562, %v3541, %v3009
        %v3576 = vsel %vm3562, %v3543, %v3011
        %v3578 = vsel %vm3562, %v3545, %v3013
        %v3580 = vsel %vm3562, %v3547, %v3015
        %v3582 = vsel %vm3562, %v3549, %v3017
        %v3584 = vsel %vm3562, %v3551, %v3019
        %v3586 = vsel %vm3562, %v3553, %v3021
        %v3588 = vsel %vm3562, %v3555, %v3023
        %v3590 = vsel %vm3562, %v3557, %v3025
        %v3592 = vsel %vm3562, %v3559, %v3027
        %v3594 = vsel %vm3562, %v3561, %v3029
        %vm3595 = vcmask 146432
        %v3597 = vsel %vm3595, %v3564, %v3111
        %v3599 = vsel %vm3595, %v3566, %v3113
        %v3601 = vsel %vm3595, %v3568, %v3115
        %v3603 = vsel %vm3595, %v3570, %v3117
        %v3605 = vsel %vm3595, %v3572, %v3119
        %v3607 = vsel %vm3595, %v3574, %v3121
        %v3609 = vsel %vm3595, %v3576, %v3123
        %v3611 = vsel %vm3595, %v3578, %v3125
        %v3613 = vsel %vm3595, %v3580, %v3127
        %v3615 = vsel %vm3595, %v3582, %v3129
        %v3617 = vsel %vm3595, %v3584, %v3131
        %v3619 = vsel %vm3595, %v3586, %v3133
        %v3621 = vsel %vm3595, %v3588, %v3135
        %v3623 = vsel %vm3595, %v3590, %v3137
        %v3625 = vsel %vm3595, %v3592, %v3139
        %v3627 = vsel %vm3595, %v3594, %v3141
        %vm3628 = vcmask 171008
        %v3630 = vsel %vm3628, %v3597, %v3327
        %v3632 = vsel %vm3628, %v3599, %v3329
        %v3634 = vsel %vm3628, %v3601, %v3331
        %v3636 = vsel %vm3628, %v3603, %v3333
        %v3638 = vsel %vm3628, %v3605, %v3335
        %v3640 = vsel %vm3628, %v3607, %v3337
        %v3642 = vsel %vm3628, %v3609, %v3339
        %v3644 = vsel %vm3628, %v3611, %v3341
        %v3646 = vsel %vm3628, %v3613, %v3343
        %v3648 = vsel %vm3628, %v3615, %v3345
        %v3650 = vsel %vm3628, %v3617, %v3347
        %v3652 = vsel %vm3628, %v3619, %v3349
        %v3654 = vsel %vm3628, %v3621, %v3351
        %v3656 = vsel %vm3628, %v3623, %v3353
        %v3658 = vsel %vm3628, %v3625, %v3355
        %v3660 = vsel %vm3628, %v3627, %v3357
        %vm3661 = vcmask 195584
        %v3663 = vsel %vm3661, %v3630, %v3399
        %v3665 = vsel %vm3661, %v3632, %v3401
        %v3667 = vsel %vm3661, %v3634, %v3403
        %v3669 = vsel %vm3661, %v3636, %v3405
        %v3671 = vsel %vm3661, %v3638, %v3407
        %v3673 = vsel %vm3661, %v3640, %v3409
        %v3675 = vsel %vm3661, %v3642, %v3411
        %v3677 = vsel %vm3661, %v3644, %v3413
        %v3679 = vsel %vm3661, %v3646, %v3415
        %v3681 = vsel %vm3661, %v3648, %v3417
        %v3683 = vsel %vm3661, %v3650, %v3419
        %v3685 = vsel %vm3661, %v3652, %v3421
        %v3687 = vsel %vm3661, %v3654, %v3423
        %v3689 = vsel %vm3661, %v3656, %v3425
        %v3691 = vsel %vm3661, %v3658, %v3427
        %v3693 = vsel %vm3661, %v3660, %v3429
        %v3694 = vld [vmem:[%s210] sm:$0xf]
        %v3695 = vld [vmem:[%s210 + $0x4] sm:$0xf]
        %v3696 = vld [vmem:[%s210 + $0x8] sm:$0xf]
        %v3697 = vld [vmem:[%s210 + $0xc] sm:$0x3]
        %v3699 = vlaneseq
        %v3700 = vshrl.u32 %v3699, 7
        %v3701 = vsub.s32 0, %v3700
        %v3702 = vrot.slane %v2138, %v3701
        %v3708 = vunpack.c.l.b16 %v3694
        %v3709 = vunpack.c.l.b16 %v3695
        %v3710 = vunpack.c.l.b16 %v3696
        %v3711 = vunpack.c.l.b16 %v3697
        %v3712 = vpack.c.b16 %v3709, %v3708
        %v3713 = vpack.c.b16 %v3711, %v3710
        %vm3715 = vcmask 220160
        %v3716 = vsel %vm3715, %v3663, 0
        %v3718 = vsel %vm3715, %v3665, 0
        %v3720 = vsel %vm3715, %v3667, 0
        %v3722 = vsel %vm3715, %v3669, 0
        %v3724 = vsel %vm3715, %v3671, 0
        %v3726 = vsel %vm3715, %v3673, 0
        %v3728 = vsel %vm3715, %v3675, 0
        %v3730 = vsel %vm3715, %v3677, 0
        %v3732 = vsel %vm3715, %v3679, 0
        %v3734 = vsel %vm3715, %v3681, 0
        %v3736 = vsel %vm3715, %v3683, 0
        %v3738 = vsel %vm3715, %v3685, 0
        %v3740 = vsel %vm3715, %v3687, 0
        %v3742 = vsel %vm3715, %v3689, 0
        %v3744 = vsel %vm3715, %v3691, 0
        %v3746 = vsel %vm3715, %v3693, 0
        %vm3748 = vcmask 1044480
        %vm3749 = vcmask 1045504
        %v3750 = vsel %vm3748, 4294967295, 65535
        %v3751 = vsel %vm3749, %v3750, 0
        %v3753 = vand.u32 %v3713, %v3751
        %3755 = vmatprep.subr.bf16.mxu0 0
        %3756 = vmatpush1.bf16.msra.mxu0 0
        %3757 = vmatprep.subr.bf16.mxu0 0
        %3758 = vmatpush1.bf16.msra.mxu0 0
        %3759 = vmatprep.subr.bf16.mxu0 0
        %3760 = vmatpush1.bf16.msra.mxu0 0
        %3761 = vmatprep.subr.bf16.mxu0 0
        %3762 = vmatpush1.bf16.msra.mxu0 0
        %3763 = vmatprep.subr.bf16.mxu0 0
        %3764 = vmatpush1.bf16.msra.mxu0 0
        %3765 = vmatprep.subr.bf16.mxu0 0
        %3766 = vmatpush1.bf16.msra.mxu0 0
        %3767 = vmatprep.subr.bf16.mxu0 0
        %3768 = vmatpush1.bf16.msra.mxu0 %v3753
        %3769 = vmatprep.subr.bf16.mxu0 0
        %3770 = vmatpush1.bf16.msra.mxu0 %v3712
        %3771 = vmatprep.subr.bf16.mxu0 0
        %3772 = vmatpush2.bf16.msra.mxu0 0
        %3773 = vmatprep.subr.bf16.mxu0 0
        %3774 = vmatpush2.bf16.msra.mxu0 0
        %3775 = vmatprep.subr.bf16.mxu0 0
        %3776 = vmatpush2.bf16.msra.mxu0 0
        %3777 = vmatprep.subr.bf16.mxu0 0
        %3778 = vmatpush2.bf16.msra.mxu0 0
        %3779 = vmatprep.subr.bf16.mxu0 0
        %3780 = vmatpush2.bf16.msra.mxu0 0
        %3781 = vmatprep.subr.bf16.mxu0 0
        %3782 = vmatpush2.bf16.msra.mxu0 0
        %3783 = vmatprep.subr.bf16.mxu0 0
        %3784 = vmatpush2.bf16.msra.mxu0 0
        %3785 = vmatprep.subr.bf16.mxu0 0
        %3786 = vmatpush2.bf16.msra.mxu0 0
        %3787 = vmatprep.mubr.bf16.mxu0 0
        %3788 = vmatmul.mubr.bf16.gmra.mxu0 %v3716
        %v3789 = vpop.f32.mrf.mxu0
        %v3790 = vadd.f32 %v3702, %v3789
        %v3791 = vpop.f32.mrf.mxu0
        %v3792 = vpop.f32.mrf.mxu0
        %v3793 = vadd.f32 %v3702, %v3792
        %v3794 = vpop.f32.mrf.mxu0
        %3795 = vmatprep.mubr.bf16.mxu0 0
        %3796 = vmatmul.mubr.bf16.gmra.mxu0 %v3718
        %v3797 = vpop.f32.mrf.mxu0
        %v3798 = vadd.f32 %v3702, %v3797
        %v3799 = vpop.f32.mrf.mxu0
        %v3800 = vpop.f32.mrf.mxu0
        %v3801 = vadd.f32 %v3702, %v3800
        %v3802 = vpop.f32.mrf.mxu0
        %3803 = vmatprep.mubr.bf16.mxu0 0
        %3804 = vmatmul.mubr.bf16.gmra.mxu0 %v3720
        %v3805 = vpop.f32.mrf.mxu0
        %v3806 = vadd.f32 %v3702, %v3805
        %v3807 = vpop.f32.mrf.mxu0
        %v3808 = vpop.f32.mrf.mxu0
        %v3809 = vadd.f32 %v3702, %v3808
        %v3810 = vpop.f32.mrf.mxu0
        %3811 = vmatprep.mubr.bf16.mxu0 0
        %3812 = vmatmul.mubr.bf16.gmra.mxu0 %v3722
        %v3813 = vpop.f32.mrf.mxu0
        %v3814 = vadd.f32 %v3702, %v3813
        %v3815 = vpop.f32.mrf.mxu0
        %v3816 = vpop.f32.mrf.mxu0
        %v3817 = vadd.f32 %v3702, %v3816
        %v3818 = vpop.f32.mrf.mxu0
        %3819 = vmatprep.mubr.bf16.mxu0 0
        %3820 = vmatmul.mubr.bf16.gmra.mxu0 %v3724
        %v3821 = vpop.f32.mrf.mxu0
        %v3822 = vadd.f32 %v3702, %v3821
        %v3823 = vpop.f32.mrf.mxu0
        %v3824 = vpop.f32.mrf.mxu0
        %v3825 = vadd.f32 %v3702, %v3824
        %v3826 = vpop.f32.mrf.mxu0
        %3827 = vmatprep.mubr.bf16.mxu0 0
        %3828 = vmatmul.mubr.bf16.gmra.mxu0 %v3726
        %v3829 = vpop.f32.mrf.mxu0
        %v3830 = vadd.f32 %v3702, %v3829
        %v3831 = vpop.f32.mrf.mxu0
        %v3832 = vpop.f32.mrf.mxu0
        %v3833 = vadd.f32 %v3702, %v3832
        %v3834 = vpop.f32.mrf.mxu0
        %3835 = vmatprep.mubr.bf16.mxu0 0
        %3836 = vmatmul.mubr.bf16.gmra.mxu0 %v3728
        %v3837 = vpop.f32.mrf.mxu0
        %v3838 = vadd.f32 %v3702, %v3837
        %v3839 = vpop.f32.mrf.mxu0
        %v3840 = vpop.f32.mrf.mxu0
        %v3841 = vadd.f32 %v3702, %v3840
        %v3842 = vpop.f32.mrf.mxu0
        %3843 = vmatprep.mubr.bf16.mxu0 0
        %3844 = vmatmul.mubr.bf16.gmra.mxu0 %v3730
        %v3845 = vpop.f32.mrf.mxu0
        %v3846 = vadd.f32 %v3702, %v3845
        %v3847 = vpop.f32.mrf.mxu0
        %v3848 = vpop.f32.mrf.mxu0
        %v3849 = vadd.f32 %v3702, %v3848
        %v3850 = vpop.f32.mrf.mxu0
        %3851 = vmatprep.mubr.bf16.mxu0 0
        %3852 = vmatmul.mubr.bf16.gmra.mxu0 %v3732
        %v3853 = vpop.f32.mrf.mxu0
        %v3854 = vadd.f32 %v3702, %v3853
        %v3855 = vpop.f32.mrf.mxu0
        %v3856 = vpop.f32.mrf.mxu0
        %v3857 = vadd.f32 %v3702, %v3856
        %v3858 = vpop.f32.mrf.mxu0
        %3859 = vmatprep.mubr.bf16.mxu0 0
        %3860 = vmatmul.mubr.bf16.gmra.mxu0 %v3734
        %v3861 = vpop.f32.mrf.mxu0
        %v3862 = vadd.f32 %v3702, %v3861
        %v3863 = vpop.f32.mrf.mxu0
        %v3864 = vpop.f32.mrf.mxu0
        %v3865 = vadd.f32 %v3702, %v3864
        %v3866 = vpop.f32.mrf.mxu0
        %3867 = vmatprep.mubr.bf16.mxu0 0
        %3868 = vmatmul.mubr.bf16.gmra.mxu0 %v3736
        %v3869 = vpop.f32.mrf.mxu0
        %v3870 = vadd.f32 %v3702, %v3869
        %v3871 = vpop.f32.mrf.mxu0
        %v3872 = vpop.f32.mrf.mxu0
        %v3873 = vadd.f32 %v3702, %v3872
        %v3874 = vpop.f32.mrf.mxu0
        %3875 = vmatprep.mubr.bf16.mxu0 0
        %3876 = vmatmul.mubr.bf16.gmra.mxu0 %v3738
        %v3877 = vpop.f32.mrf.mxu0
        %v3878 = vadd.f32 %v3702, %v3877
        %v3879 = vpop.f32.mrf.mxu0
        %v3880 = vpop.f32.mrf.mxu0
        %v3881 = vadd.f32 %v3702, %v3880
        %v3882 = vpop.f32.mrf.mxu0
        %3883 = vmatprep.mubr.bf16.mxu0 0
        %3884 = vmatmul.mubr.bf16.gmra.mxu0 %v3740
        %v3885 = vpop.f32.mrf.mxu0
        %v3886 = vadd.f32 %v3702, %v3885
        %v3887 = vpop.f32.mrf.mxu0
        %v3888 = vpop.f32.mrf.mxu0
        %v3889 = vadd.f32 %v3702, %v3888
        %v3890 = vpop.f32.mrf.mxu0
        %3891 = vmatprep.mubr.bf16.mxu0 0
        %3892 = vmatmul.mubr.bf16.gmra.mxu0 %v3742
        %v3893 = vpop.f32.mrf.mxu0
        %v3894 = vadd.f32 %v3702, %v3893
        %v3895 = vpop.f32.mrf.mxu0
        %v3896 = vpop.f32.mrf.mxu0
        %v3897 = vadd.f32 %v3702, %v3896
        %v3898 = vpop.f32.mrf.mxu0
        %3899 = vmatprep.mubr.bf16.mxu0 0
        %3900 = vmatmul.mubr.bf16.gmra.mxu0 %v3744
        %v3901 = vpop.f32.mrf.mxu0
        %v3902 = vadd.f32 %v3702, %v3901
        %v3903 = vpop.f32.mrf.mxu0
        %v3904 = vpop.f32.mrf.mxu0
        %v3905 = vadd.f32 %v3702, %v3904
        %v3906 = vpop.f32.mrf.mxu0
        %3907 = vmatprep.mubr.bf16.mxu0 0
        %3908 = vmatmul.mubr.bf16.gmra.mxu0 %v3746
        %v3909 = vpop.f32.mrf.mxu0
        %v3910 = vadd.f32 %v3702, %v3909
        %v3911 = vpop.f32.mrf.mxu0
        %v3912 = vpop.f32.mrf.mxu0
        %v3913 = vadd.f32 %v3702, %v3912
        %v3914 = vpop.f32.mrf.mxu0
        %3915 = vdwg.mxu0
        %v3916 = vmax.f32 %v3790, 0.0
        %v3917 = vmax.f32 %v3793, 0.0
        %v3918 = vmax.f32 %v3798, 0.0
        %v3919 = vmax.f32 %v3801, 0.0
        %v3920 = vmax.f32 %v3806, 0.0
        %v3921 = vmax.f32 %v3809, 0.0
        %v3922 = vmax.f32 %v3814, 0.0
        %v3923 = vmax.f32 %v3817, 0.0
        %v3924 = vmax.f32 %v3822, 0.0
        %v3925 = vmax.f32 %v3825, 0.0
        %v3926 = vmax.f32 %v3830, 0.0
        %v3927 = vmax.f32 %v3833, 0.0
        %v3928 = vmax.f32 %v3838, 0.0
        %v3929 = vmax.f32 %v3841, 0.0
        %v3930 = vmax.f32 %v3846, 0.0
        %v3931 = vmax.f32 %v3849, 0.0
        %v3932 = vmax.f32 %v3854, 0.0
        %v3933 = vmax.f32 %v3857, 0.0
        %v3934 = vmax.f32 %v3862, 0.0
        %v3935 = vmax.f32 %v3865, 0.0
        %v3936 = vmax.f32 %v3870, 0.0
        %v3937 = vmax.f32 %v3873, 0.0
        %v3938 = vmax.f32 %v3878, 0.0
        %v3939 = vmax.f32 %v3881, 0.0
        %v3940 = vmax.f32 %v3886, 0.0
        %v3941 = vmax.f32 %v3889, 0.0
        %v3942 = vmax.f32 %v3894, 0.0
        %v3943 = vmax.f32 %v3897, 0.0
        %v3944 = vmax.f32 %v3902, 0.0
        %v3945 = vmax.f32 %v3905, 0.0
        %v3946 = vmax.f32 %v3910, 0.0
        %v3947 = vmax.f32 %v3913, 0.0
        %v3948 = vpack.c.bf16 %v3917, %v3916
        %v3949 = vpack.c.bf16 %v3919, %v3918
        %v3950 = vpack.c.bf16 %v3921, %v3920
        %v3951 = vpack.c.bf16 %v3923, %v3922
        %v3952 = vpack.c.bf16 %v3925, %v3924
        %v3953 = vpack.c.bf16 %v3927, %v3926
        %v3954 = vpack.c.bf16 %v3929, %v3928
        %v3955 = vpack.c.bf16 %v3931, %v3930
        %v3956 = vpack.c.bf16 %v3933, %v3932
        %v3957 = vpack.c.bf16 %v3935, %v3934
        %v3958 = vpack.c.bf16 %v3937, %v3936
        %v3959 = vpack.c.bf16 %v3939, %v3938
        %v3960 = vpack.c.bf16 %v3941, %v3940
        %v3961 = vpack.c.bf16 %v3943, %v3942
        %v3962 = vpack.c.bf16 %v3945, %v3944
        %v3963 = vpack.c.bf16 %v3947, %v3946
        %v3980 = vunpack.c.l.b16 %v3948
        %v3981 = vunpack.c.h.b16 %v3948
        %v3982 = vunpack.c.l.b16 %v3949
        %v3983 = vunpack.c.h.b16 %v3949
        %v3984 = vunpack.c.l.b16 %v3950
        %v3985 = vunpack.c.h.b16 %v3950
        %v3986 = vunpack.c.l.b16 %v3951
        %v3987 = vunpack.c.h.b16 %v3951
        %v3988 = vunpack.c.l.b16 %v3952
        %v3989 = vunpack.c.h.b16 %v3952
        %v3990 = vunpack.c.l.b16 %v3953
        %v3991 = vunpack.c.h.b16 %v3953
        %v3992 = vunpack.c.l.b16 %v3954
        %v3993 = vunpack.c.h.b16 %v3954
        %v3994 = vunpack.c.l.b16 %v3955
        %v3995 = vunpack.c.h.b16 %v3955
        %v3996 = vunpack.c.l.b16 %v3956
        %v3997 = vunpack.c.h.b16 %v3956
        %v3998 = vunpack.c.l.b16 %v3957
        %v3999 = vunpack.c.h.b16 %v3957
        %v4000 = vunpack.c.l.b16 %v3958
        %v4001 = vunpack.c.h.b16 %v3958
        %v4002 = vunpack.c.l.b16 %v3959
        %v4003 = vunpack.c.h.b16 %v3959
        %v4004 = vunpack.c.l.b16 %v3960
        %v4005 = vunpack.c.h.b16 %v3960
        %v4006 = vunpack.c.l.b16 %v3961
        %v4007 = vunpack.c.h.b16 %v3961
        %v4008 = vunpack.c.l.b16 %v3962
        %v4009 = vunpack.c.h.b16 %v3962
        %v4010 = vunpack.c.l.b16 %v3963
        %v4011 = vunpack.c.h.b16 %v3963
        %v4012 = vpack.c.b16 %v3980, %v3980
        %v4013 = vpack.c.b16 %v3981, %v3981
        %v4014 = vpack.c.b16 %v3982, %v3982
        %v4015 = vpack.c.b16 %v3983, %v3983
        %v4016 = vpack.c.b16 %v3984, %v3984
        %v4017 = vpack.c.b16 %v3985, %v3985
        %v4018 = vpack.c.b16 %v3986, %v3986
        %v4019 = vpack.c.b16 %v3987, %v3987
        %v4020 = vpack.c.b16 %v3988, %v3988
        %v4021 = vpack.c.b16 %v3989, %v3989
        %v4022 = vpack.c.b16 %v3990, %v3990
        %v4023 = vpack.c.b16 %v3991, %v3991
        %v4024 = vpack.c.b16 %v3992, %v3992
        %v4025 = vpack.c.b16 %v3993, %v3993
        %v4026 = vpack.c.b16 %v3994, %v3994
        %v4027 = vpack.c.b16 %v3995, %v3995
        %v4028 = vpack.c.b16 %v3996, %v3996
        %v4029 = vpack.c.b16 %v3997, %v3997
        %v4030 = vpack.c.b16 %v3998, %v3998
        %v4031 = vpack.c.b16 %v3999, %v3999
        %v4032 = vpack.c.b16 %v4000, %v4000
        %v4033 = vpack.c.b16 %v4001, %v4001
        %v4034 = vpack.c.b16 %v4002, %v4002
        %v4035 = vpack.c.b16 %v4003, %v4003
        %v4036 = vpack.c.b16 %v4004, %v4004
        %v4037 = vpack.c.b16 %v4005, %v4005
        %v4038 = vpack.c.b16 %v4006, %v4006
        %v4039 = vpack.c.b16 %v4007, %v4007
        %v4040 = vpack.c.b16 %v4008, %v4008
        %v4041 = vpack.c.b16 %v4009, %v4009
        %v4042 = vpack.c.b16 %v4010, %v4010
        %v4043 = vpack.c.b16 %v4011, %v4011
        %vm4076 = vcmask 519168
        %4077 = vst.msk [vmem:[%s201] sm:$0xf] %vm4076, %v4012
        %4078 = vst.msk [vmem:[%s201 + $0x4] sm:$0xf] %vm4076, %v4013
        %4079 = vst.msk [vmem:[%s201 + $0x8] sm:$0xf] %vm4076, %v4014
        %4080 = vst.msk [vmem:[%s201 + $0xc] sm:$0xf] %vm4076, %v4015
        %4081 = vst.msk [vmem:[%s201 + $0x10] sm:$0xf] %vm4076, %v4016
        %4082 = vst.msk [vmem:[%s201 + $0x14] sm:$0xf] %vm4076, %v4017
        %4083 = vst.msk [vmem:[%s201 + $0x18] sm:$0xf] %vm4076, %v4018
        %4084 = vst.msk [vmem:[%s201 + $0x1c] sm:$0xf] %vm4076, %v4019
        %4085 = vst.msk [vmem:[%s201 + $0x20] sm:$0xf] %vm4076, %v4020
        %4086 = vst.msk [vmem:[%s201 + $0x24] sm:$0xf] %vm4076, %v4021
        %4087 = vst.msk [vmem:[%s201 + $0x28] sm:$0xf] %vm4076, %v4022
        %4088 = vst.msk [vmem:[%s201 + $0x2c] sm:$0xf] %vm4076, %v4023
        %4089 = vst.msk [vmem:[%s201 + $0x30] sm:$0xf] %vm4076, %v4024
        %4090 = vst.msk [vmem:[%s201 + $0x34] sm:$0xf] %vm4076, %v4025
        %4091 = vst.msk [vmem:[%s201 + $0x38] sm:$0xf] %vm4076, %v4026
        %4092 = vst.msk [vmem:[%s201 + $0x3c] sm:$0xf] %vm4076, %v4027
        %4093 = vst.msk [vmem:[%s201 + $0x40] sm:$0xf] %vm4076, %v4028
        %4094 = vst.msk [vmem:[%s201 + $0x44] sm:$0xf] %vm4076, %v4029
        %4095 = vst.msk [vmem:[%s201 + $0x48] sm:$0xf] %vm4076, %v4030
        %4096 = vst.msk [vmem:[%s201 + $0x4c] sm:$0xf] %vm4076, %v4031
        %4097 = vst.msk [vmem:[%s201 + $0x50] sm:$0xf] %vm4076, %v4032
        %4098 = vst.msk [vmem:[%s201 + $0x54] sm:$0xf] %vm4076, %v4033
        %4099 = vst.msk [vmem:[%s201 + $0x58] sm:$0xf] %vm4076, %v4034
        %4100 = vst.msk [vmem:[%s201 + $0x5c] sm:$0xf] %vm4076, %v4035
        %4101 = vst.msk [vmem:[%s201 + $0x60] sm:$0xf] %vm4076, %v4036
        %4102 = vst.msk [vmem:[%s201 + $0x64] sm:$0xf] %vm4076, %v4037
        %4103 = vst.msk [vmem:[%s201 + $0x68] sm:$0xf] %vm4076, %v4038
        %4104 = vst.msk [vmem:[%s201 + $0x6c] sm:$0xf] %vm4076, %v4039
        %4105 = vst.msk [vmem:[%s201 + $0x70] sm:$0xf] %vm4076, %v4040
        %4106 = vst.msk [vmem:[%s201 + $0x74] sm:$0xf] %vm4076, %v4041
        %4107 = vst.msk [vmem:[%s201 + $0x78] sm:$0xf] %vm4076, %v4042
        %4108 = vst.msk [vmem:[%s201 + $0x7c] sm:$0xf] %vm4076, %v4043
        %s4109 = scalar_lea.vmem [#allocation2], 160
        %v4110 = vld [vmem:[%s4109] sm:$0xf]
        %v4111 = vld [vmem:[%s4109 + $0x4] sm:$0xf]
        %v4112 = vld [vmem:[%s4109 + $0x8] sm:$0xf]
        %v4113 = vld [vmem:[%s4109 + $0xc] sm:$0xf]
        %v4114 = vld [vmem:[%s4109 + $0x10] sm:$0x1]
        %v4115 = vld [vmem:[%s4109 + $0x14] sm:$0xf]
        %v4116 = vld [vmem:[%s4109 + $0x18] sm:$0xf]
        %v4117 = vld [vmem:[%s4109 + $0x1c] sm:$0xf]
        %v4118 = vld [vmem:[%s4109 + $0x20] sm:$0xf]
        %v4119 = vld [vmem:[%s4109 + $0x24] sm:$0x1]
        %v4120 = vld [vmem:[%s4109 + $0x28] sm:$0xf]
        %v4121 = vld [vmem:[%s4109 + $0x2c] sm:$0xf]
        %v4122 = vld [vmem:[%s4109 + $0x30] sm:$0xf]
        %v4123 = vld [vmem:[%s4109 + $0x34] sm:$0xf]
        %v4124 = vld [vmem:[%s4109 + $0x38] sm:$0x1]
        %v4125 = vld [vmem:[%s4109 + $0x3c] sm:$0xf]
        %v4126 = vld [vmem:[%s4109 + $0x40] sm:$0xf]
        %v4127 = vld [vmem:[%s4109 + $0x44] sm:$0xf]
        %v4128 = vld [vmem:[%s4109 + $0x48] sm:$0xf]
        %v4129 = vld [vmem:[%s4109 + $0x4c] sm:$0x1]
        %v4130 = vld [vmem:[%s4109 + $0x50] sm:$0xf]
        %v4131 = vld [vmem:[%s4109 + $0x54] sm:$0xf]
        %v4132 = vld [vmem:[%s4109 + $0x58] sm:$0xf]
        %v4133 = vld [vmem:[%s4109 + $0x5c] sm:$0xf]
        %v4134 = vld [vmem:[%s4109 + $0x60] sm:$0x1]
        %v4135 = vld [vmem:[%s4109 + $0x64] sm:$0xf]
        %v4136 = vld [vmem:[%s4109 + $0x68] sm:$0xf]
        %v4137 = vld [vmem:[%s4109 + $0x6c] sm:$0xf]
        %v4138 = vld [vmem:[%s4109 + $0x70] sm:$0xf]
        %v4139 = vld [vmem:[%s4109 + $0x74] sm:$0x1]
        %v4140 = vld [vmem:[%s4109 + $0x78] sm:$0xf]
        %v4141 = vld [vmem:[%s4109 + $0x7c] sm:$0xf]
        %v4142 = vld [vmem:[%s4109 + $0x80] sm:$0xf]
        %v4143 = vld [vmem:[%s4109 + $0x84] sm:$0xf]
        %v4144 = vld [vmem:[%s4109 + $0x88] sm:$0x1]
        %v4145 = vld [vmem:[%s4109 + $0x8c] sm:$0xf]
        %v4146 = vld [vmem:[%s4109 + $0x90] sm:$0xf]
        %v4147 = vld [vmem:[%s4109 + $0x94] sm:$0xf]
        %v4148 = vld [vmem:[%s4109 + $0x98] sm:$0xf]
        %v4149 = vld [vmem:[%s4109 + $0x9c] sm:$0x1]
        %s4150 = scalar_lea.vmem [#allocation2], 180
        %v4151 = vld [vmem:[%s4150] sm:$0xf]
        %v4152 = vld [vmem:[%s4150 + $0x4] sm:$0xf]
        %v4153 = vld [vmem:[%s4150 + $0x8] sm:$0xf]
        %v4154 = vld [vmem:[%s4150 + $0xc] sm:$0xf]
        %v4155 = vld [vmem:[%s4150 + $0x10] sm:$0x1]
        %v4156 = vld [vmem:[%s4150 + $0x14] sm:$0xf]
        %v4157 = vld [vmem:[%s4150 + $0x18] sm:$0xf]
        %v4158 = vld [vmem:[%s4150 + $0x1c] sm:$0xf]
        %v4159 = vld [vmem:[%s4150 + $0x20] sm:$0xf]
        %v4160 = vld [vmem:[%s4150 + $0x24] sm:$0x1]
        %v4161 = vld [vmem:[%s4150 + $0x28] sm:$0xf]
        %v4162 = vld [vmem:[%s4150 + $0x2c] sm:$0xf]
        %v4163 = vld [vmem:[%s4150 + $0x30] sm:$0xf]
        %v4164 = vld [vmem:[%s4150 + $0x34] sm:$0xf]
        %v4165 = vld [vmem:[%s4150 + $0x38] sm:$0x1]
        %v4166 = vld [vmem:[%s4150 + $0x3c] sm:$0xf]
        %v4167 = vld [vmem:[%s4150 + $0x40] sm:$0xf]
        %v4168 = vld [vmem:[%s4150 + $0x44] sm:$0xf]
        %v4169 = vld [vmem:[%s4150 + $0x48] sm:$0xf]
        %v4170 = vld [vmem:[%s4150 + $0x4c] sm:$0x1]
        %v4171 = vld [vmem:[%s4150 + $0x50] sm:$0xf]
        %v4172 = vld [vmem:[%s4150 + $0x54] sm:$0xf]
        %v4173 = vld [vmem:[%s4150 + $0x58] sm:$0xf]
        %v4174 = vld [vmem:[%s4150 + $0x5c] sm:$0xf]
        %v4175 = vld [vmem:[%s4150 + $0x60] sm:$0x1]
        %v4176 = vld [vmem:[%s4150 + $0x64] sm:$0xf]
        %v4177 = vld [vmem:[%s4150 + $0x68] sm:$0xf]
        %v4178 = vld [vmem:[%s4150 + $0x6c] sm:$0xf]
        %v4179 = vld [vmem:[%s4150 + $0x70] sm:$0xf]
        %v4180 = vld [vmem:[%s4150 + $0x74] sm:$0x1]
        %v4181 = vld [vmem:[%s4150 + $0x78] sm:$0xf]
        %v4182 = vld [vmem:[%s4150 + $0x7c] sm:$0xf]
        %v4183 = vld [vmem:[%s4150 + $0x80] sm:$0xf]
        %v4184 = vld [vmem:[%s4150 + $0x84] sm:$0xf]
        %v4185 = vld [vmem:[%s4150 + $0x88] sm:$0x1]
        %v4186 = vld [vmem:[%s4150 + $0x8c] sm:$0xf]
        %v4187 = vld [vmem:[%s4150 + $0x90] sm:$0xf]
        %v4188 = vld [vmem:[%s4150 + $0x94] sm:$0xf]
        %v4189 = vld [vmem:[%s4150 + $0x98] sm:$0xf]
        %v4190 = vld [vmem:[%s4150 + $0x9c] sm:$0x1]
        %s4191 = scalar_lea.vmem [#allocation2], 200
        %v4192 = vld [vmem:[%s4191] sm:$0xf]
        %v4193 = vld [vmem:[%s4191 + $0x4] sm:$0xf]
        %v4194 = vld [vmem:[%s4191 + $0x8] sm:$0xf]
        %v4195 = vld [vmem:[%s4191 + $0xc] sm:$0xf]
        %v4196 = vld [vmem:[%s4191 + $0x10] sm:$0x1]
        %v4197 = vld [vmem:[%s4191 + $0x14] sm:$0xf]
        %v4198 = vld [vmem:[%s4191 + $0x18] sm:$0xf]
        %v4199 = vld [vmem:[%s4191 + $0x1c] sm:$0xf]
        %v4200 = vld [vmem:[%s4191 + $0x20] sm:$0xf]
        %v4201 = vld [vmem:[%s4191 + $0x24] sm:$0x1]
        %v4202 = vld [vmem:[%s4191 + $0x28] sm:$0xf]
        %v4203 = vld [vmem:[%s4191 + $0x2c] sm:$0xf]
        %v4204 = vld [vmem:[%s4191 + $0x30] sm:$0xf]
        %v4205 = vld [vmem:[%s4191 + $0x34] sm:$0xf]
        %v4206 = vld [vmem:[%s4191 + $0x38] sm:$0x1]
        %v4207 = vld [vmem:[%s4191 + $0x3c] sm:$0xf]
        %v4208 = vld [vmem:[%s4191 + $0x40] sm:$0xf]
        %v4209 = vld [vmem:[%s4191 + $0x44] sm:$0xf]
        %v4210 = vld [vmem:[%s4191 + $0x48] sm:$0xf]
        %v4211 = vld [vmem:[%s4191 + $0x4c] sm:$0x1]
        %v4212 = vld [vmem:[%s4191 + $0x50] sm:$0xf]
        %v4213 = vld [vmem:[%s4191 + $0x54] sm:$0xf]
        %v4214 = vld [vmem:[%s4191 + $0x58] sm:$0xf]
        %v4215 = vld [vmem:[%s4191 + $0x5c] sm:$0xf]
        %v4216 = vld [vmem:[%s4191 + $0x60] sm:$0x1]
        %v4217 = vld [vmem:[%s4191 + $0x64] sm:$0xf]
        %v4218 = vld [vmem:[%s4191 + $0x68] sm:$0xf]
        %v4219 = vld [vmem:[%s4191 + $0x6c] sm:$0xf]
        %v4220 = vld [vmem:[%s4191 + $0x70] sm:$0xf]
        %v4221 = vld [vmem:[%s4191 + $0x74] sm:$0x1]
        %v4222 = vld [vmem:[%s4191 + $0x78] sm:$0xf]
        %v4223 = vld [vmem:[%s4191 + $0x7c] sm:$0xf]
        %v4224 = vld [vmem:[%s4191 + $0x80] sm:$0xf]
        %v4225 = vld [vmem:[%s4191 + $0x84] sm:$0xf]
        %v4226 = vld [vmem:[%s4191 + $0x88] sm:$0x1]
        %v4227 = vld [vmem:[%s4191 + $0x8c] sm:$0xf]
        %v4228 = vld [vmem:[%s4191 + $0x90] sm:$0xf]
        %v4229 = vld [vmem:[%s4191 + $0x94] sm:$0xf]
        %v4230 = vld [vmem:[%s4191 + $0x98] sm:$0xf]
        %v4231 = vld [vmem:[%s4191 + $0x9c] sm:$0x1]
        %v4264 = vunpack.c.l.b16 %v4110
        %v4265 = vunpack.c.l.b16 %v4111
        %v4266 = vunpack.c.l.b16 %v4112
        %v4267 = vunpack.c.l.b16 %v4113
        %v4268 = vunpack.c.l.b16 %v4115
        %v4269 = vunpack.c.l.b16 %v4116
        %v4270 = vunpack.c.l.b16 %v4117
        %v4271 = vunpack.c.l.b16 %v4118
        %v4272 = vunpack.c.l.b16 %v4120
        %v4273 = vunpack.c.l.b16 %v4121
        %v4274 = vunpack.c.l.b16 %v4122
        %v4275 = vunpack.c.l.b16 %v4123
        %v4276 = vunpack.c.l.b16 %v4125
        %v4277 = vunpack.c.l.b16 %v4126
        %v4278 = vunpack.c.l.b16 %v4127
        %v4279 = vunpack.c.l.b16 %v4128
        %v4280 = vunpack.c.l.b16 %v4130
        %v4281 = vunpack.c.l.b16 %v4131
        %v4282 = vunpack.c.l.b16 %v4132
        %v4283 = vunpack.c.l.b16 %v4133
        %v4284 = vunpack.c.l.b16 %v4135
        %v4285 = vunpack.c.l.b16 %v4136
        %v4286 = vunpack.c.l.b16 %v4137
        %v4287 = vunpack.c.l.b16 %v4138
        %v4288 = vunpack.c.l.b16 %v4140
        %v4289 = vunpack.c.l.b16 %v4141
        %v4290 = vunpack.c.l.b16 %v4142
        %v4291 = vunpack.c.l.b16 %v4143
        %v4292 = vunpack.c.l.b16 %v4145
        %v4293 = vunpack.c.l.b16 %v4146
        %v4294 = vunpack.c.l.b16 %v4147
        %v4295 = vunpack.c.l.b16 %v4148
        %v4296 = vpack.c.b16 %v4265, %v4264
        %v4297 = vpack.c.b16 %v4267, %v4266
        %v4298 = vpack.c.b16 %v4269, %v4268
        %v4299 = vpack.c.b16 %v4271, %v4270
        %v4300 = vpack.c.b16 %v4273, %v4272
        %v4301 = vpack.c.b16 %v4275, %v4274
        %v4302 = vpack.c.b16 %v4277, %v4276
        %v4303 = vpack.c.b16 %v4279, %v4278
        %v4304 = vpack.c.b16 %v4281, %v4280
        %v4305 = vpack.c.b16 %v4283, %v4282
        %v4306 = vpack.c.b16 %v4285, %v4284
        %v4307 = vpack.c.b16 %v4287, %v4286
        %v4308 = vpack.c.b16 %v4289, %v4288
        %v4309 = vpack.c.b16 %v4291, %v4290
        %v4310 = vpack.c.b16 %v4293, %v4292
        %v4311 = vpack.c.b16 %v4295, %v4294
        %v4320 = vunpack.c.l.b16 %v4114
        %v4321 = vunpack.c.l.b16 %v4119
        %v4322 = vunpack.c.l.b16 %v4124
        %v4323 = vunpack.c.l.b16 %v4129
        %v4324 = vunpack.c.l.b16 %v4134
        %v4325 = vunpack.c.l.b16 %v4139
        %v4326 = vunpack.c.l.b16 %v4144
        %v4327 = vunpack.c.l.b16 %v4149
        %v4328 = vpack.c.b16 %v4320, %v4320
        %v4329 = vpack.c.b16 %v4321, %v4321
        %v4330 = vpack.c.b16 %v4322, %v4322
        %v4331 = vpack.c.b16 %v4323, %v4323
        %v4332 = vpack.c.b16 %v4324, %v4324
        %v4333 = vpack.c.b16 %v4325, %v4325
        %v4334 = vpack.c.b16 %v4326, %v4326
        %v4335 = vpack.c.b16 %v4327, %v4327
        %v4337 = vshrl.u32 %v4296, 16
        %v4339 = vshll.u32 %v4296, 16
        %v4341 = vrot.slane %v4339, 1
        %v4342 = vor.u32 %v4337, %v4341
        %v4344 = vshll.u32 %v4297, 16
        %v4346 = vrot.slane %v4344, 1
        %v4347 = vsel %vm2364, %v4342, %v4346
        %v4348 = vshrl.u32 %v4297, 16
        %v4350 = vor.u32 %v4348, %v4346
        %v4352 = vshll.u32 %v4328, 16
        %v4354 = vrot.slane %v4352, 1
        %v4355 = vsel %vm2364, %v4350, %v4354
        %v4357 = vshrl.u32 %v4298, 16
        %v4359 = vshll.u32 %v4298, 16
        %v4361 = vrot.slane %v4359, 1
        %v4362 = vor.u32 %v4357, %v4361
        %v4364 = vshll.u32 %v4299, 16
        %v4366 = vrot.slane %v4364, 1
        %v4367 = vsel %vm2364, %v4362, %v4366
        %v4368 = vshrl.u32 %v4299, 16
        %v4370 = vor.u32 %v4368, %v4366
        %v4372 = vshll.u32 %v4329, 16
        %v4374 = vrot.slane %v4372, 1
        %v4375 = vsel %vm2364, %v4370, %v4374
        %v4377 = vshrl.u32 %v4300, 16
        %v4379 = vshll.u32 %v4300, 16
        %v4381 = vrot.slane %v4379, 1
        %v4382 = vor.u32 %v4377, %v4381
        %v4384 = vshll.u32 %v4301, 16
        %v4386 = vrot.slane %v4384, 1
        %v4387 = vsel %vm2364, %v4382, %v4386
        %v4388 = vshrl.u32 %v4301, 16
        %v4390 = vor.u32 %v4388, %v4386
        %v4392 = vshll.u32 %v4330, 16
        %v4394 = vrot.slane %v4392, 1
        %v4395 = vsel %vm2364, %v4390, %v4394
        %v4397 = vshrl.u32 %v4302, 16
        %v4399 = vshll.u32 %v4302, 16
        %v4401 = vrot.slane %v4399, 1
        %v4402 = vor.u32 %v4397, %v4401
        %v4404 = vshll.u32 %v4303, 16
        %v4406 = vrot.slane %v4404, 1
        %v4407 = vsel %vm2364, %v4402, %v4406
        %v4408 = vshrl.u32 %v4303, 16
        %v4410 = vor.u32 %v4408, %v4406
        %v4412 = vshll.u32 %v4331, 16
        %v4414 = vrot.slane %v4412, 1
        %v4415 = vsel %vm2364, %v4410, %v4414
        %v4417 = vshrl.u32 %v4304, 16
        %v4419 = vshll.u32 %v4304, 16
        %v4421 = vrot.slane %v4419, 1
        %v4422 = vor.u32 %v4417, %v4421
        %v4424 = vshll.u32 %v4305, 16
        %v4426 = vrot.slane %v4424, 1
        %v4427 = vsel %vm2364, %v4422, %v4426
        %v4428 = vshrl.u32 %v4305, 16
        %v4430 = vor.u32 %v4428, %v4426
        %v4432 = vshll.u32 %v4332, 16
        %v4434 = vrot.slane %v4432, 1
        %v4435 = vsel %vm2364, %v4430, %v4434
        %v4437 = vshrl.u32 %v4306, 16
        %v4439 = vshll.u32 %v4306, 16
        %v4441 = vrot.slane %v4439, 1
        %v4442 = vor.u32 %v4437, %v4441
        %v4444 = vshll.u32 %v4307, 16
        %v4446 = vrot.slane %v4444, 1
        %v4447 = vsel %vm2364, %v4442, %v4446
        %v4448 = vshrl.u32 %v4307, 16
        %v4450 = vor.u32 %v4448, %v4446
        %v4452 = vshll.u32 %v4333, 16
        %v4454 = vrot.slane %v4452, 1
        %v4455 = vsel %vm2364, %v4450, %v4454
        %v4457 = vshrl.u32 %v4308, 16
        %v4459 = vshll.u32 %v4308, 16
        %v4461 = vrot.slane %v4459, 1
        %v4462 = vor.u32 %v4457, %v4461
        %v4464 = vshll.u32 %v4309, 16
        %v4466 = vrot.slane %v4464, 1
        %v4467 = vsel %vm2364, %v4462, %v4466
        %v4468 = vshrl.u32 %v4309, 16
        %v4470 = vor.u32 %v4468, %v4466
        %v4472 = vshll.u32 %v4334, 16
        %v4474 = vrot.slane %v4472, 1
        %v4475 = vsel %vm2364, %v4470, %v4474
        %v4477 = vshrl.u32 %v4310, 16
        %v4479 = vshll.u32 %v4310, 16
        %v4481 = vrot.slane %v4479, 1
        %v4482 = vor.u32 %v4477, %v4481
        %v4484 = vshll.u32 %v4311, 16
        %v4486 = vrot.slane %v4484, 1
        %v4487 = vsel %vm2364, %v4482, %v4486
        %v4488 = vshrl.u32 %v4311, 16
        %v4490 = vor.u32 %v4488, %v4486
        %v4492 = vshll.u32 %v4335, 16
        %v4494 = vrot.slane %v4492, 1
        %v4495 = vsel %vm2364, %v4490, %v4494
        %4496 = vrot.lane.b32.xlu0 %v4347, 3
        %v4497 = vpop.permute.xlu0 %4496
        %4498 = vrot.lane.b32.xlu0 %v4355, 3
        %v4499 = vpop.permute.xlu0 %4498
        %4500 = vrot.lane.b32.xlu0 %v4367, 3
        %v4501 = vpop.permute.xlu0 %4500
        %4502 = vrot.lane.b32.xlu0 %v4375, 3
        %v4503 = vpop.permute.xlu0 %4502
        %4504 = vrot.lane.b32.xlu0 %v4387, 3
        %v4505 = vpop.permute.xlu0 %4504
        %4506 = vrot.lane.b32.xlu0 %v4395, 3
        %v4507 = vpop.permute.xlu0 %4506
        %4508 = vrot.lane.b32.xlu0 %v4407, 3
        %v4509 = vpop.permute.xlu0 %4508
        %4510 = vrot.lane.b32.xlu0 %v4415, 3
        %v4511 = vpop.permute.xlu0 %4510
        %4512 = vrot.lane.b32.xlu0 %v4427, 3
        %v4513 = vpop.permute.xlu0 %4512
        %4514 = vrot.lane.b32.xlu0 %v4435, 3
        %v4515 = vpop.permute.xlu0 %4514
        %4516 = vrot.lane.b32.xlu0 %v4447, 3
        %v4517 = vpop.permute.xlu0 %4516
        %4518 = vrot.lane.b32.xlu0 %v4455, 3
        %v4519 = vpop.permute.xlu0 %4518
        %4520 = vrot.lane.b32.xlu0 %v4467, 3
        %v4521 = vpop.permute.xlu0 %4520
        %4522 = vrot.lane.b32.xlu0 %v4475, 3
        %v4523 = vpop.permute.xlu0 %4522
        %4524 = vrot.lane.b32.xlu0 %v4487, 3
        %v4525 = vpop.permute.xlu0 %4524
        %4526 = vrot.lane.b32.xlu0 %v4495, 3
        %v4527 = vpop.permute.xlu0 %4526
        %v4528 = vrot.slane %v4296, 1
        %v4529 = vrot.slane %v4297, 1
        %v4530 = vsel %vm2557, %v4528, %v4529
        %v4531 = vrot.slane %v4328, 1
        %v4532 = vsel %vm2557, %v4529, %v4531
        %v4533 = vrot.slane %v4298, 1
        %v4534 = vrot.slane %v4299, 1
        %v4535 = vsel %vm2557, %v4533, %v4534
        %v4536 = vrot.slane %v4329, 1
        %v4537 = vsel %vm2557, %v4534, %v4536
        %v4538 = vrot.slane %v4300, 1
        %v4539 = vrot.slane %v4301, 1
        %v4540 = vsel %vm2557, %v4538, %v4539
        %v4541 = vrot.slane %v4330, 1
        %v4542 = vsel %vm2557, %v4539, %v4541
        %v4543 = vrot.slane %v4302, 1
        %v4544 = vrot.slane %v4303, 1
        %v4545 = vsel %vm2557, %v4543, %v4544
        %v4546 = vrot.slane %v4331, 1
        %v4547 = vsel %vm2557, %v4544, %v4546
        %v4548 = vrot.slane %v4304, 1
        %v4549 = vrot.slane %v4305, 1
        %v4550 = vsel %vm2557, %v4548, %v4549
        %v4551 = vrot.slane %v4332, 1
        %v4552 = vsel %vm2557, %v4549, %v4551
        %v4553 = vrot.slane %v4306, 1
        %v4554 = vrot.slane %v4307, 1
        %v4555 = vsel %vm2557, %v4553, %v4554
        %v4556 = vrot.slane %v4333, 1
        %v4557 = vsel %vm2557, %v4554, %v4556
        %v4558 = vrot.slane %v4308, 1
        %v4559 = vrot.slane %v4309, 1
        %v4560 = vsel %vm2557, %v4558, %v4559
        %v4561 = vrot.slane %v4334, 1
        %v4562 = vsel %vm2557, %v4559, %v4561
        %v4563 = vrot.slane %v4310, 1
        %v4564 = vrot.slane %v4311, 1
        %v4565 = vsel %vm2557, %v4563, %v4564
        %v4566 = vrot.slane %v4335, 1
        %v4567 = vsel %vm2557, %v4564, %v4566
        %4568 = vrot.lane.b32.xlu0 %v4530, 6
        %v4569 = vpop.permute.xlu0 %4568
        %4570 = vrot.lane.b32.xlu0 %v4532, 6
        %v4571 = vpop.permute.xlu0 %4570
        %4572 = vrot.lane.b32.xlu0 %v4535, 6
        %v4573 = vpop.permute.xlu0 %4572
        %4574 = vrot.lane.b32.xlu0 %v4537, 6
        %v4575 = vpop.permute.xlu0 %4574
        %4576 = vrot.lane.b32.xlu0 %v4540, 6
        %v4577 = vpop.permute.xlu0 %4576
        %4578 = vrot.lane.b32.xlu0 %v4542, 6
        %v4579 = vpop.permute.xlu0 %4578
        %4580 = vrot.lane.b32.xlu0 %v4545, 6
        %v4581 = vpop.permute.xlu0 %4580
        %4582 = vrot.lane.b32.xlu0 %v4547, 6
        %v4583 = vpop.permute.xlu0 %4582
        %4584 = vrot.lane.b32.xlu0 %v4550, 6
        %v4585 = vpop.permute.xlu0 %4584
        %4586 = vrot.lane.b32.xlu0 %v4552, 6
        %v4587 = vpop.permute.xlu0 %4586
        %4588 = vrot.lane.b32.xlu0 %v4555, 6
        %v4589 = vpop.permute.xlu0 %4588
        %4590 = vrot.lane.b32.xlu0 %v4557, 6
        %v4591 = vpop.permute.xlu0 %4590
        %4592 = vrot.lane.b32.xlu0 %v4560, 6
        %v4593 = vpop.permute.xlu0 %4592
        %4594 = vrot.lane.b32.xlu0 %v4562, 6
        %v4595 = vpop.permute.xlu0 %4594
        %4596 = vrot.lane.b32.xlu0 %v4565, 6
        %v4597 = vpop.permute.xlu0 %4596
        %4598 = vrot.lane.b32.xlu0 %v4567, 6
        %v4599 = vpop.permute.xlu0 %4598
        %v4632 = vunpack.c.l.b16 %v4151
        %v4633 = vunpack.c.l.b16 %v4152
        %v4634 = vunpack.c.l.b16 %v4153
        %v4635 = vunpack.c.l.b16 %v4154
        %v4636 = vunpack.c.l.b16 %v4156
        %v4637 = vunpack.c.l.b16 %v4157
        %v4638 = vunpack.c.l.b16 %v4158
        %v4639 = vunpack.c.l.b16 %v4159
        %v4640 = vunpack.c.l.b16 %v4161
        %v4641 = vunpack.c.l.b16 %v4162
        %v4642 = vunpack.c.l.b16 %v4163
        %v4643 = vunpack.c.l.b16 %v4164
        %v4644 = vunpack.c.l.b16 %v4166
        %v4645 = vunpack.c.l.b16 %v4167
        %v4646 = vunpack.c.l.b16 %v4168
        %v4647 = vunpack.c.l.b16 %v4169
        %v4648 = vunpack.c.l.b16 %v4171
        %v4649 = vunpack.c.l.b16 %v4172
        %v4650 = vunpack.c.l.b16 %v4173
        %v4651 = vunpack.c.l.b16 %v4174
        %v4652 = vunpack.c.l.b16 %v4176
        %v4653 = vunpack.c.l.b16 %v4177
        %v4654 = vunpack.c.l.b16 %v4178
        %v4655 = vunpack.c.l.b16 %v4179
        %v4656 = vunpack.c.l.b16 %v4181
        %v4657 = vunpack.c.l.b16 %v4182
        %v4658 = vunpack.c.l.b16 %v4183
        %v4659 = vunpack.c.l.b16 %v4184
        %v4660 = vunpack.c.l.b16 %v4186
        %v4661 = vunpack.c.l.b16 %v4187
        %v4662 = vunpack.c.l.b16 %v4188
        %v4663 = vunpack.c.l.b16 %v4189
        %v4664 = vpack.c.b16 %v4633, %v4632
        %v4665 = vpack.c.b16 %v4635, %v4634
        %v4666 = vpack.c.b16 %v4637, %v4636
        %v4667 = vpack.c.b16 %v4639, %v4638
        %v4668 = vpack.c.b16 %v4641, %v4640
        %v4669 = vpack.c.b16 %v4643, %v4642
        %v4670 = vpack.c.b16 %v4645, %v4644
        %v4671 = vpack.c.b16 %v4647, %v4646
        %v4672 = vpack.c.b16 %v4649, %v4648
        %v4673 = vpack.c.b16 %v4651, %v4650
        %v4674 = vpack.c.b16 %v4653, %v4652
        %v4675 = vpack.c.b16 %v4655, %v4654
        %v4676 = vpack.c.b16 %v4657, %v4656
        %v4677 = vpack.c.b16 %v4659, %v4658
        %v4678 = vpack.c.b16 %v4661, %v4660
        %v4679 = vpack.c.b16 %v4663, %v4662
        %4680 = vrot.lane.b32.xlu0 %v4664, 9
        %v4681 = vpop.permute.xlu0 %4680
        %4682 = vrot.lane.b32.xlu0 %v4665, 9
        %v4683 = vpop.permute.xlu0 %4682
        %4684 = vrot.lane.b32.xlu0 %v4666, 9
        %v4685 = vpop.permute.xlu0 %4684
        %4686 = vrot.lane.b32.xlu0 %v4667, 9
        %v4687 = vpop.permute.xlu0 %4686
        %4688 = vrot.lane.b32.xlu0 %v4668, 9
        %v4689 = vpop.permute.xlu0 %4688
        %4690 = vrot.lane.b32.xlu0 %v4669, 9
        %v4691 = vpop.permute.xlu0 %4690
        %4692 = vrot.lane.b32.xlu0 %v4670, 9
        %v4693 = vpop.permute.xlu0 %4692
        %4694 = vrot.lane.b32.xlu0 %v4671, 9
        %v4695 = vpop.permute.xlu0 %4694
        %4696 = vrot.lane.b32.xlu0 %v4672, 9
        %v4697 = vpop.permute.xlu0 %4696
        %4698 = vrot.lane.b32.xlu0 %v4673, 9
        %v4699 = vpop.permute.xlu0 %4698
        %4700 = vrot.lane.b32.xlu0 %v4674, 9
        %v4701 = vpop.permute.xlu0 %4700
        %4702 = vrot.lane.b32.xlu0 %v4675, 9
        %v4703 = vpop.permute.xlu0 %4702
        %4704 = vrot.lane.b32.xlu0 %v4676, 9
        %v4705 = vpop.permute.xlu0 %4704
        %4706 = vrot.lane.b32.xlu0 %v4677, 9
        %v4707 = vpop.permute.xlu0 %4706
        %4708 = vrot.lane.b32.xlu0 %v4678, 9
        %v4709 = vpop.permute.xlu0 %4708
        %4710 = vrot.lane.b32.xlu0 %v4679, 9
        %v4711 = vpop.permute.xlu0 %4710
        %v4720 = vunpack.c.l.b16 %v4155
        %v4721 = vunpack.c.l.b16 %v4160
        %v4722 = vunpack.c.l.b16 %v4165
        %v4723 = vunpack.c.l.b16 %v4170
        %v4724 = vunpack.c.l.b16 %v4175
        %v4725 = vunpack.c.l.b16 %v4180
        %v4726 = vunpack.c.l.b16 %v4185
        %v4727 = vunpack.c.l.b16 %v4190
        %v4728 = vpack.c.b16 %v4720, %v4720
        %v4729 = vpack.c.b16 %v4721, %v4721
        %v4730 = vpack.c.b16 %v4722, %v4722
        %v4731 = vpack.c.b16 %v4723, %v4723
        %v4732 = vpack.c.b16 %v4724, %v4724
        %v4733 = vpack.c.b16 %v4725, %v4725
        %v4734 = vpack.c.b16 %v4726, %v4726
        %v4735 = vpack.c.b16 %v4727, %v4727
        %v4737 = vshrl.u32 %v4664, 16
        %v4739 = vshll.u32 %v4664, 16
        %v4741 = vrot.slane %v4739, 1
        %v4742 = vor.u32 %v4737, %v4741
        %v4744 = vshll.u32 %v4665, 16
        %v4746 = vrot.slane %v4744, 1
        %v4747 = vsel %vm2364, %v4742, %v4746
        %v4748 = vshrl.u32 %v4665, 16
        %v4750 = vor.u32 %v4748, %v4746
        %v4752 = vshll.u32 %v4728, 16
        %v4754 = vrot.slane %v4752, 1
        %v4755 = vsel %vm2364, %v4750, %v4754
        %v4757 = vshrl.u32 %v4666, 16
        %v4759 = vshll.u32 %v4666, 16
        %v4761 = vrot.slane %v4759, 1
        %v4762 = vor.u32 %v4757, %v4761
        %v4764 = vshll.u32 %v4667, 16
        %v4766 = vrot.slane %v4764, 1
        %v4767 = vsel %vm2364, %v4762, %v4766
        %v4768 = vshrl.u32 %v4667, 16
        %v4770 = vor.u32 %v4768, %v4766
        %v4772 = vshll.u32 %v4729, 16
        %v4774 = vrot.slane %v4772, 1
        %v4775 = vsel %vm2364, %v4770, %v4774
        %v4777 = vshrl.u32 %v4668, 16
        %v4779 = vshll.u32 %v4668, 16
        %v4781 = vrot.slane %v4779, 1
        %v4782 = vor.u32 %v4777, %v4781
        %v4784 = vshll.u32 %v4669, 16
        %v4786 = vrot.slane %v4784, 1
        %v4787 = vsel %vm2364, %v4782, %v4786
        %v4788 = vshrl.u32 %v4669, 16
        %v4790 = vor.u32 %v4788, %v4786
        %v4792 = vshll.u32 %v4730, 16
        %v4794 = vrot.slane %v4792, 1
        %v4795 = vsel %vm2364, %v4790, %v4794
        %v4797 = vshrl.u32 %v4670, 16
        %v4799 = vshll.u32 %v4670, 16
        %v4801 = vrot.slane %v4799, 1
        %v4802 = vor.u32 %v4797, %v4801
        %v4804 = vshll.u32 %v4671, 16
        %v4806 = vrot.slane %v4804, 1
        %v4807 = vsel %vm2364, %v4802, %v4806
        %v4808 = vshrl.u32 %v4671, 16
        %v4810 = vor.u32 %v4808, %v4806
        %v4812 = vshll.u32 %v4731, 16
        %v4814 = vrot.slane %v4812, 1
        %v4815 = vsel %vm2364, %v4810, %v4814
        %v4817 = vshrl.u32 %v4672, 16
        %v4819 = vshll.u32 %v4672, 16
        %v4821 = vrot.slane %v4819, 1
        %v4822 = vor.u32 %v4817, %v4821
        %v4824 = vshll.u32 %v4673, 16
        %v4826 = vrot.slane %v4824, 1
        %v4827 = vsel %vm2364, %v4822, %v4826
        %v4828 = vshrl.u32 %v4673, 16
        %v4830 = vor.u32 %v4828, %v4826
        %v4832 = vshll.u32 %v4732, 16
        %v4834 = vrot.slane %v4832, 1
        %v4835 = vsel %vm2364, %v4830, %v4834
        %v4837 = vshrl.u32 %v4674, 16
        %v4839 = vshll.u32 %v4674, 16
        %v4841 = vrot.slane %v4839, 1
        %v4842 = vor.u32 %v4837, %v4841
        %v4844 = vshll.u32 %v4675, 16
        %v4846 = vrot.slane %v4844, 1
        %v4847 = vsel %vm2364, %v4842, %v4846
        %v4848 = vshrl.u32 %v4675, 16
        %v4850 = vor.u32 %v4848, %v4846
        %v4852 = vshll.u32 %v4733, 16
        %v4854 = vrot.slane %v4852, 1
        %v4855 = vsel %vm2364, %v4850, %v4854
        %v4857 = vshrl.u32 %v4676, 16
        %v4859 = vshll.u32 %v4676, 16
        %v4861 = vrot.slane %v4859, 1
        %v4862 = vor.u32 %v4857, %v4861
        %v4864 = vshll.u32 %v4677, 16
        %v4866 = vrot.slane %v4864, 1
        %v4867 = vsel %vm2364, %v4862, %v4866
        %v4868 = vshrl.u32 %v4677, 16
        %v4870 = vor.u32 %v4868, %v4866
        %v4872 = vshll.u32 %v4734, 16
        %v4874 = vrot.slane %v4872, 1
        %v4875 = vsel %vm2364, %v4870, %v4874
        %v4877 = vshrl.u32 %v4678, 16
        %v4879 = vshll.u32 %v4678, 16
        %v4881 = vrot.slane %v4879, 1
        %v4882 = vor.u32 %v4877, %v4881
        %v4884 = vshll.u32 %v4679, 16
        %v4886 = vrot.slane %v4884, 1
        %v4887 = vsel %vm2364, %v4882, %v4886
        %v4888 = vshrl.u32 %v4679, 16
        %v4890 = vor.u32 %v4888, %v4886
        %v4892 = vshll.u32 %v4735, 16
        %v4894 = vrot.slane %v4892, 1
        %v4895 = vsel %vm2364, %v4890, %v4894
        %4896 = vrot.lane.b32.xlu0 %v4747, 12
        %v4897 = vpop.permute.xlu0 %4896
        %4898 = vrot.lane.b32.xlu0 %v4755, 12
        %v4899 = vpop.permute.xlu0 %4898
        %4900 = vrot.lane.b32.xlu0 %v4767, 12
        %v4901 = vpop.permute.xlu0 %4900
        %4902 = vrot.lane.b32.xlu0 %v4775, 12
        %v4903 = vpop.permute.xlu0 %4902
        %4904 = vrot.lane.b32.xlu0 %v4787, 12
        %v4905 = vpop.permute.xlu0 %4904
        %4906 = vrot.lane.b32.xlu0 %v4795, 12
        %v4907 = vpop.permute.xlu0 %4906
        %4908 = vrot.lane.b32.xlu0 %v4807, 12
        %v4909 = vpop.permute.xlu0 %4908
        %4910 = vrot.lane.b32.xlu0 %v4815, 12
        %v4911 = vpop.permute.xlu0 %4910
        %4912 = vrot.lane.b32.xlu0 %v4827, 12
        %v4913 = vpop.permute.xlu0 %4912
        %4914 = vrot.lane.b32.xlu0 %v4835, 12
        %v4915 = vpop.permute.xlu0 %4914
        %4916 = vrot.lane.b32.xlu0 %v4847, 12
        %v4917 = vpop.permute.xlu0 %4916
        %4918 = vrot.lane.b32.xlu0 %v4855, 12
        %v4919 = vpop.permute.xlu0 %4918
        %4920 = vrot.lane.b32.xlu0 %v4867, 12
        %v4921 = vpop.permute.xlu0 %4920
        %4922 = vrot.lane.b32.xlu0 %v4875, 12
        %v4923 = vpop.permute.xlu0 %4922
        %4924 = vrot.lane.b32.xlu0 %v4887, 12
        %v4925 = vpop.permute.xlu0 %4924
        %4926 = vrot.lane.b32.xlu0 %v4895, 12
        %v4927 = vpop.permute.xlu0 %4926
        %v4928 = vrot.slane %v4664, 1
        %v4929 = vrot.slane %v4665, 1
        %v4930 = vsel %vm2557, %v4928, %v4929
        %v4931 = vrot.slane %v4728, 1
        %v4932 = vsel %vm2557, %v4929, %v4931
        %v4933 = vrot.slane %v4666, 1
        %v4934 = vrot.slane %v4667, 1
        %v4935 = vsel %vm2557, %v4933, %v4934
        %v4936 = vrot.slane %v4729, 1
        %v4937 = vsel %vm2557, %v4934, %v4936
        %v4938 = vrot.slane %v4668, 1
        %v4939 = vrot.slane %v4669, 1
        %v4940 = vsel %vm2557, %v4938, %v4939
        %v4941 = vrot.slane %v4730, 1
        %v4942 = vsel %vm2557, %v4939, %v4941
        %v4943 = vrot.slane %v4670, 1
        %v4944 = vrot.slane %v4671, 1
        %v4945 = vsel %vm2557, %v4943, %v4944
        %v4946 = vrot.slane %v4731, 1
        %v4947 = vsel %vm2557, %v4944, %v4946
        %v4948 = vrot.slane %v4672, 1
        %v4949 = vrot.slane %v4673, 1
        %v4950 = vsel %vm2557, %v4948, %v4949
        %v4951 = vrot.slane %v4732, 1
        %v4952 = vsel %vm2557, %v4949, %v4951
        %v4953 = vrot.slane %v4674, 1
        %v4954 = vrot.slane %v4675, 1
        %v4955 = vsel %vm2557, %v4953, %v4954
        %v4956 = vrot.slane %v4733, 1
        %v4957 = vsel %vm2557, %v4954, %v4956
        %v4958 = vrot.slane %v4676, 1
        %v4959 = vrot.slane %v4677, 1
        %v4960 = vsel %vm2557, %v4958, %v4959
        %v4961 = vrot.slane %v4734, 1
        %v4962 = vsel %vm2557, %v4959, %v4961
        %v4963 = vrot.slane %v4678, 1
        %v4964 = vrot.slane %v4679, 1
        %v4965 = vsel %vm2557, %v4963, %v4964
        %v4966 = vrot.slane %v4735, 1
        %v4967 = vsel %vm2557, %v4964, %v4966
        %4968 = vrot.lane.b32.xlu0 %v4930, 15
        %v4969 = vpop.permute.xlu0 %4968
        %4970 = vrot.lane.b32.xlu0 %v4932, 15
        %v4971 = vpop.permute.xlu0 %4970
        %4972 = vrot.lane.b32.xlu0 %v4935, 15
        %v4973 = vpop.permute.xlu0 %4972
        %4974 = vrot.lane.b32.xlu0 %v4937, 15
        %v4975 = vpop.permute.xlu0 %4974
        %4976 = vrot.lane.b32.xlu0 %v4940, 15
        %v4977 = vpop.permute.xlu0 %4976
        %4978 = vrot.lane.b32.xlu0 %v4942, 15
        %v4979 = vpop.permute.xlu0 %4978
        %4980 = vrot.lane.b32.xlu0 %v4945, 15
        %v4981 = vpop.permute.xlu0 %4980
        %4982 = vrot.lane.b32.xlu0 %v4947, 15
        %v4983 = vpop.permute.xlu0 %4982
        %4984 = vrot.lane.b32.xlu0 %v4950, 15
        %v4985 = vpop.permute.xlu0 %4984
        %4986 = vrot.lane.b32.xlu0 %v4952, 15
        %v4987 = vpop.permute.xlu0 %4986
        %4988 = vrot.lane.b32.xlu0 %v4955, 15
        %v4989 = vpop.permute.xlu0 %4988
        %4990 = vrot.lane.b32.xlu0 %v4957, 15
        %v4991 = vpop.permute.xlu0 %4990
        %4992 = vrot.lane.b32.xlu0 %v4960, 15
        %v4993 = vpop.permute.xlu0 %4992
        %4994 = vrot.lane.b32.xlu0 %v4962, 15
        %v4995 = vpop.permute.xlu0 %4994
        %4996 = vrot.lane.b32.xlu0 %v4965, 15
        %v4997 = vpop.permute.xlu0 %4996
        %4998 = vrot.lane.b32.xlu0 %v4967, 15
        %v4999 = vpop.permute.xlu0 %4998
        %v5032 = vunpack.c.l.b16 %v4192
        %v5033 = vunpack.c.l.b16 %v4193
        %v5034 = vunpack.c.l.b16 %v4194
        %v5035 = vunpack.c.l.b16 %v4195
        %v5036 = vunpack.c.l.b16 %v4197
        %v5037 = vunpack.c.l.b16 %v4198
        %v5038 = vunpack.c.l.b16 %v4199
        %v5039 = vunpack.c.l.b16 %v4200
        %v5040 = vunpack.c.l.b16 %v4202
        %v5041 = vunpack.c.l.b16 %v4203
        %v5042 = vunpack.c.l.b16 %v4204
        %v5043 = vunpack.c.l.b16 %v4205
        %v5044 = vunpack.c.l.b16 %v4207
        %v5045 = vunpack.c.l.b16 %v4208
        %v5046 = vunpack.c.l.b16 %v4209
        %v5047 = vunpack.c.l.b16 %v4210
        %v5048 = vunpack.c.l.b16 %v4212
        %v5049 = vunpack.c.l.b16 %v4213
        %v5050 = vunpack.c.l.b16 %v4214
        %v5051 = vunpack.c.l.b16 %v4215
        %v5052 = vunpack.c.l.b16 %v4217
        %v5053 = vunpack.c.l.b16 %v4218
        %v5054 = vunpack.c.l.b16 %v4219
        %v5055 = vunpack.c.l.b16 %v4220
        %v5056 = vunpack.c.l.b16 %v4222
        %v5057 = vunpack.c.l.b16 %v4223
        %v5058 = vunpack.c.l.b16 %v4224
        %v5059 = vunpack.c.l.b16 %v4225
        %v5060 = vunpack.c.l.b16 %v4227
        %v5061 = vunpack.c.l.b16 %v4228
        %v5062 = vunpack.c.l.b16 %v4229
        %v5063 = vunpack.c.l.b16 %v4230
        %v5064 = vpack.c.b16 %v5033, %v5032
        %v5065 = vpack.c.b16 %v5035, %v5034
        %v5066 = vpack.c.b16 %v5037, %v5036
        %v5067 = vpack.c.b16 %v5039, %v5038
        %v5068 = vpack.c.b16 %v5041, %v5040
        %v5069 = vpack.c.b16 %v5043, %v5042
        %v5070 = vpack.c.b16 %v5045, %v5044
        %v5071 = vpack.c.b16 %v5047, %v5046
        %v5072 = vpack.c.b16 %v5049, %v5048
        %v5073 = vpack.c.b16 %v5051, %v5050
        %v5074 = vpack.c.b16 %v5053, %v5052
        %v5075 = vpack.c.b16 %v5055, %v5054
        %v5076 = vpack.c.b16 %v5057, %v5056
        %v5077 = vpack.c.b16 %v5059, %v5058
        %v5078 = vpack.c.b16 %v5061, %v5060
        %v5079 = vpack.c.b16 %v5063, %v5062
        %5080 = vrot.lane.b32.xlu0 %v5064, 18
        %v5081 = vpop.permute.xlu0 %5080
        %5082 = vrot.lane.b32.xlu0 %v5065, 18
        %v5083 = vpop.permute.xlu0 %5082
        %5084 = vrot.lane.b32.xlu0 %v5066, 18
        %v5085 = vpop.permute.xlu0 %5084
        %5086 = vrot.lane.b32.xlu0 %v5067, 18
        %v5087 = vpop.permute.xlu0 %5086
        %5088 = vrot.lane.b32.xlu0 %v5068, 18
        %v5089 = vpop.permute.xlu0 %5088
        %5090 = vrot.lane.b32.xlu0 %v5069, 18
        %v5091 = vpop.permute.xlu0 %5090
        %5092 = vrot.lane.b32.xlu0 %v5070, 18
        %v5093 = vpop.permute.xlu0 %5092
        %5094 = vrot.lane.b32.xlu0 %v5071, 18
        %v5095 = vpop.permute.xlu0 %5094
        %5096 = vrot.lane.b32.xlu0 %v5072, 18
        %v5097 = vpop.permute.xlu0 %5096
        %5098 = vrot.lane.b32.xlu0 %v5073, 18
        %v5099 = vpop.permute.xlu0 %5098
        %5100 = vrot.lane.b32.xlu0 %v5074, 18
        %v5101 = vpop.permute.xlu0 %5100
        %5102 = vrot.lane.b32.xlu0 %v5075, 18
        %v5103 = vpop.permute.xlu0 %5102
        %5104 = vrot.lane.b32.xlu0 %v5076, 18
        %v5105 = vpop.permute.xlu0 %5104
        %5106 = vrot.lane.b32.xlu0 %v5077, 18
        %v5107 = vpop.permute.xlu0 %5106
        %5108 = vrot.lane.b32.xlu0 %v5078, 18
        %v5109 = vpop.permute.xlu0 %5108
        %5110 = vrot.lane.b32.xlu0 %v5079, 18
        %v5111 = vpop.permute.xlu0 %5110
        %v5120 = vunpack.c.l.b16 %v4196
        %v5121 = vunpack.c.l.b16 %v4201
        %v5122 = vunpack.c.l.b16 %v4206
        %v5123 = vunpack.c.l.b16 %v4211
        %v5124 = vunpack.c.l.b16 %v4216
        %v5125 = vunpack.c.l.b16 %v4221
        %v5126 = vunpack.c.l.b16 %v4226
        %v5127 = vunpack.c.l.b16 %v4231
        %v5128 = vpack.c.b16 %v5120, %v5120
        %v5129 = vpack.c.b16 %v5121, %v5121
        %v5130 = vpack.c.b16 %v5122, %v5122
        %v5131 = vpack.c.b16 %v5123, %v5123
        %v5132 = vpack.c.b16 %v5124, %v5124
        %v5133 = vpack.c.b16 %v5125, %v5125
        %v5134 = vpack.c.b16 %v5126, %v5126
        %v5135 = vpack.c.b16 %v5127, %v5127
        %v5137 = vshrl.u32 %v5064, 16
        %v5139 = vshll.u32 %v5064, 16
        %v5141 = vrot.slane %v5139, 1
        %v5142 = vor.u32 %v5137, %v5141
        %v5144 = vshll.u32 %v5065, 16
        %v5146 = vrot.slane %v5144, 1
        %v5147 = vsel %vm2364, %v5142, %v5146
        %v5148 = vshrl.u32 %v5065, 16
        %v5150 = vor.u32 %v5148, %v5146
        %v5152 = vshll.u32 %v5128, 16
        %v5154 = vrot.slane %v5152, 1
        %v5155 = vsel %vm2364, %v5150, %v5154
        %v5157 = vshrl.u32 %v5066, 16
        %v5159 = vshll.u32 %v5066, 16
        %v5161 = vrot.slane %v5159, 1
        %v5162 = vor.u32 %v5157, %v5161
        %v5164 = vshll.u32 %v5067, 16
        %v5166 = vrot.slane %v5164, 1
        %v5167 = vsel %vm2364, %v5162, %v5166
        %v5168 = vshrl.u32 %v5067, 16
        %v5170 = vor.u32 %v5168, %v5166
        %v5172 = vshll.u32 %v5129, 16
        %v5174 = vrot.slane %v5172, 1
        %v5175 = vsel %vm2364, %v5170, %v5174
        %v5177 = vshrl.u32 %v5068, 16
        %v5179 = vshll.u32 %v5068, 16
        %v5181 = vrot.slane %v5179, 1
        %v5182 = vor.u32 %v5177, %v5181
        %v5184 = vshll.u32 %v5069, 16
        %v5186 = vrot.slane %v5184, 1
        %v5187 = vsel %vm2364, %v5182, %v5186
        %v5188 = vshrl.u32 %v5069, 16
        %v5190 = vor.u32 %v5188, %v5186
        %v5192 = vshll.u32 %v5130, 16
        %v5194 = vrot.slane %v5192, 1
        %v5195 = vsel %vm2364, %v5190, %v5194
        %v5197 = vshrl.u32 %v5070, 16
        %v5199 = vshll.u32 %v5070, 16
        %v5201 = vrot.slane %v5199, 1
        %v5202 = vor.u32 %v5197, %v5201
        %v5204 = vshll.u32 %v5071, 16
        %v5206 = vrot.slane %v5204, 1
        %v5207 = vsel %vm2364, %v5202, %v5206
        %v5208 = vshrl.u32 %v5071, 16
        %v5210 = vor.u32 %v5208, %v5206
        %v5212 = vshll.u32 %v5131, 16
        %v5214 = vrot.slane %v5212, 1
        %v5215 = vsel %vm2364, %v5210, %v5214
        %v5217 = vshrl.u32 %v5072, 16
        %v5219 = vshll.u32 %v5072, 16
        %v5221 = vrot.slane %v5219, 1
        %v5222 = vor.u32 %v5217, %v5221
        %v5224 = vshll.u32 %v5073, 16
        %v5226 = vrot.slane %v5224, 1
        %v5227 = vsel %vm2364, %v5222, %v5226
        %v5228 = vshrl.u32 %v5073, 16
        %v5230 = vor.u32 %v5228, %v5226
        %v5232 = vshll.u32 %v5132, 16
        %v5234 = vrot.slane %v5232, 1
        %v5235 = vsel %vm2364, %v5230, %v5234
        %v5237 = vshrl.u32 %v5074, 16
        %v5239 = vshll.u32 %v5074, 16
        %v5241 = vrot.slane %v5239, 1
        %v5242 = vor.u32 %v5237, %v5241
        %v5244 = vshll.u32 %v5075, 16
        %v5246 = vrot.slane %v5244, 1
        %v5247 = vsel %vm2364, %v5242, %v5246
        %v5248 = vshrl.u32 %v5075, 16
        %v5250 = vor.u32 %v5248, %v5246
        %v5252 = vshll.u32 %v5133, 16
        %v5254 = vrot.slane %v5252, 1
        %v5255 = vsel %vm2364, %v5250, %v5254
        %v5257 = vshrl.u32 %v5076, 16
        %v5259 = vshll.u32 %v5076, 16
        %v5261 = vrot.slane %v5259, 1
        %v5262 = vor.u32 %v5257, %v5261
        %v5264 = vshll.u32 %v5077, 16
        %v5266 = vrot.slane %v5264, 1
        %v5267 = vsel %vm2364, %v5262, %v5266
        %v5268 = vshrl.u32 %v5077, 16
        %v5270 = vor.u32 %v5268, %v5266
        %v5272 = vshll.u32 %v5134, 16
        %v5274 = vrot.slane %v5272, 1
        %v5275 = vsel %vm2364, %v5270, %v5274
        %v5277 = vshrl.u32 %v5078, 16
        %v5279 = vshll.u32 %v5078, 16
        %v5281 = vrot.slane %v5279, 1
        %v5282 = vor.u32 %v5277, %v5281
        %v5284 = vshll.u32 %v5079, 16
        %v5286 = vrot.slane %v5284, 1
        %v5287 = vsel %vm2364, %v5282, %v5286
        %v5288 = vshrl.u32 %v5079, 16
        %v5290 = vor.u32 %v5288, %v5286
        %v5292 = vshll.u32 %v5135, 16
        %v5294 = vrot.slane %v5292, 1
        %v5295 = vsel %vm2364, %v5290, %v5294
        %5296 = vrot.lane.b32.xlu0 %v5147, 21
        %v5297 = vpop.permute.xlu0 %5296
        %5298 = vrot.lane.b32.xlu0 %v5155, 21
        %v5299 = vpop.permute.xlu0 %5298
        %5300 = vrot.lane.b32.xlu0 %v5167, 21
        %v5301 = vpop.permute.xlu0 %5300
        %5302 = vrot.lane.b32.xlu0 %v5175, 21
        %v5303 = vpop.permute.xlu0 %5302
        %5304 = vrot.lane.b32.xlu0 %v5187, 21
        %v5305 = vpop.permute.xlu0 %5304
        %5306 = vrot.lane.b32.xlu0 %v5195, 21
        %v5307 = vpop.permute.xlu0 %5306
        %5308 = vrot.lane.b32.xlu0 %v5207, 21
        %v5309 = vpop.permute.xlu0 %5308
        %5310 = vrot.lane.b32.xlu0 %v5215, 21
        %v5311 = vpop.permute.xlu0 %5310
        %5312 = vrot.lane.b32.xlu0 %v5227, 21
        %v5313 = vpop.permute.xlu0 %5312
        %5314 = vrot.lane.b32.xlu0 %v5235, 21
        %v5315 = vpop.permute.xlu0 %5314
        %5316 = vrot.lane.b32.xlu0 %v5247, 21
        %v5317 = vpop.permute.xlu0 %5316
        %5318 = vrot.lane.b32.xlu0 %v5255, 21
        %v5319 = vpop.permute.xlu0 %5318
        %5320 = vrot.lane.b32.xlu0 %v5267, 21
        %v5321 = vpop.permute.xlu0 %5320
        %5322 = vrot.lane.b32.xlu0 %v5275, 21
        %v5323 = vpop.permute.xlu0 %5322
        %5324 = vrot.lane.b32.xlu0 %v5287, 21
        %v5325 = vpop.permute.xlu0 %5324
        %5326 = vrot.lane.b32.xlu0 %v5295, 21
        %v5327 = vpop.permute.xlu0 %5326
        %v5328 = vrot.slane %v5064, 1
        %v5329 = vrot.slane %v5065, 1
        %v5330 = vsel %vm2557, %v5328, %v5329
        %v5331 = vrot.slane %v5128, 1
        %v5332 = vsel %vm2557, %v5329, %v5331
        %v5333 = vrot.slane %v5066, 1
        %v5334 = vrot.slane %v5067, 1
        %v5335 = vsel %vm2557, %v5333, %v5334
        %v5336 = vrot.slane %v5129, 1
        %v5337 = vsel %vm2557, %v5334, %v5336
        %v5338 = vrot.slane %v5068, 1
        %v5339 = vrot.slane %v5069, 1
        %v5340 = vsel %vm2557, %v5338, %v5339
        %v5341 = vrot.slane %v5130, 1
        %v5342 = vsel %vm2557, %v5339, %v5341
        %v5343 = vrot.slane %v5070, 1
        %v5344 = vrot.slane %v5071, 1
        %v5345 = vsel %vm2557, %v5343, %v5344
        %v5346 = vrot.slane %v5131, 1
        %v5347 = vsel %vm2557, %v5344, %v5346
        %v5348 = vrot.slane %v5072, 1
        %v5349 = vrot.slane %v5073, 1
        %v5350 = vsel %vm2557, %v5348, %v5349
        %v5351 = vrot.slane %v5132, 1
        %v5352 = vsel %vm2557, %v5349, %v5351
        %v5353 = vrot.slane %v5074, 1
        %v5354 = vrot.slane %v5075, 1
        %v5355 = vsel %vm2557, %v5353, %v5354
        %v5356 = vrot.slane %v5133, 1
        %v5357 = vsel %vm2557, %v5354, %v5356
        %v5358 = vrot.slane %v5076, 1
        %v5359 = vrot.slane %v5077, 1
        %v5360 = vsel %vm2557, %v5358, %v5359
        %v5361 = vrot.slane %v5134, 1
        %v5362 = vsel %vm2557, %v5359, %v5361
        %v5363 = vrot.slane %v5078, 1
        %v5364 = vrot.slane %v5079, 1
        %v5365 = vsel %vm2557, %v5363, %v5364
        %v5366 = vrot.slane %v5135, 1
        %v5367 = vsel %vm2557, %v5364, %v5366
        %5368 = vrot.lane.b32.xlu0 %v5330, 24
        %v5369 = vpop.permute.xlu0 %5368
        %5370 = vrot.lane.b32.xlu0 %v5332, 24
        %v5371 = vpop.permute.xlu0 %5370
        %5372 = vrot.lane.b32.xlu0 %v5335, 24
        %v5373 = vpop.permute.xlu0 %5372
        %5374 = vrot.lane.b32.xlu0 %v5337, 24
        %v5375 = vpop.permute.xlu0 %5374
        %5376 = vrot.lane.b32.xlu0 %v5340, 24
        %v5377 = vpop.permute.xlu0 %5376
        %5378 = vrot.lane.b32.xlu0 %v5342, 24
        %v5379 = vpop.permute.xlu0 %5378
        %5380 = vrot.lane.b32.xlu0 %v5345, 24
        %v5381 = vpop.permute.xlu0 %5380
        %5382 = vrot.lane.b32.xlu0 %v5347, 24
        %v5383 = vpop.permute.xlu0 %5382
        %5384 = vrot.lane.b32.xlu0 %v5350, 24
        %v5385 = vpop.permute.xlu0 %5384
        %5386 = vrot.lane.b32.xlu0 %v5352, 24
        %v5387 = vpop.permute.xlu0 %5386
        %5388 = vrot.lane.b32.xlu0 %v5355, 24
        %v5389 = vpop.permute.xlu0 %5388
        %5390 = vrot.lane.b32.xlu0 %v5357, 24
        %v5391 = vpop.permute.xlu0 %5390
        %5392 = vrot.lane.b32.xlu0 %v5360, 24
        %v5393 = vpop.permute.xlu0 %5392
        %5394 = vrot.lane.b32.xlu0 %v5362, 24
        %v5395 = vpop.permute.xlu0 %5394
        %5396 = vrot.lane.b32.xlu0 %v5365, 24
        %v5397 = vpop.permute.xlu0 %5396
        %5398 = vrot.lane.b32.xlu0 %v5367, 24
        %v5399 = vpop.permute.xlu0 %5398
        %v5401 = vsel %vm3430, %v4296, %v4497
        %v5403 = vsel %vm3430, %v4297, %v4499
        %v5405 = vsel %vm3430, %v4298, %v4501
        %v5407 = vsel %vm3430, %v4299, %v4503
        %v5409 = vsel %vm3430, %v4300, %v4505
        %v5411 = vsel %vm3430, %v4301, %v4507
        %v5413 = vsel %vm3430, %v4302, %v4509
        %v5415 = vsel %vm3430, %v4303, %v4511
        %v5417 = vsel %vm3430, %v4304, %v4513
        %v5419 = vsel %vm3430, %v4305, %v4515
        %v5421 = vsel %vm3430, %v4306, %v4517
        %v5423 = vsel %vm3430, %v4307, %v4519
        %v5425 = vsel %vm3430, %v4308, %v4521
        %v5427 = vsel %vm3430, %v4309, %v4523
        %v5429 = vsel %vm3430, %v4310, %v4525
        %v5431 = vsel %vm3430, %v4311, %v4527
        %v5433 = vsel %vm3463, %v5401, %v4569
        %v5435 = vsel %vm3463, %v5403, %v4571
        %v5437 = vsel %vm3463, %v5405, %v4573
        %v5439 = vsel %vm3463, %v5407, %v4575
        %v5441 = vsel %vm3463, %v5409, %v4577
        %v5443 = vsel %vm3463, %v5411, %v4579
        %v5445 = vsel %vm3463, %v5413, %v4581
        %v5447 = vsel %vm3463, %v5415, %v4583
        %v5449 = vsel %vm3463, %v5417, %v4585
        %v5451 = vsel %vm3463, %v5419, %v4587
        %v5453 = vsel %vm3463, %v5421, %v4589
        %v5455 = vsel %vm3463, %v5423, %v4591
        %v5457 = vsel %vm3463, %v5425, %v4593
        %v5459 = vsel %vm3463, %v5427, %v4595
        %v5461 = vsel %vm3463, %v5429, %v4597
        %v5463 = vsel %vm3463, %v5431, %v4599
        %v5465 = vsel %vm3496, %v5433, %v4681
        %v5467 = vsel %vm3496, %v5435, %v4683
        %v5469 = vsel %vm3496, %v5437, %v4685
        %v5471 = vsel %vm3496, %v5439, %v4687
        %v5473 = vsel %vm3496, %v5441, %v4689
        %v5475 = vsel %vm3496, %v5443, %v4691
        %v5477 = vsel %vm3496, %v5445, %v4693
        %v5479 = vsel %vm3496, %v5447, %v4695
        %v5481 = vsel %vm3496, %v5449, %v4697
        %v5483 = vsel %vm3496, %v5451, %v4699
        %v5485 = vsel %vm3496, %v5453, %v4701
        %v5487 = vsel %vm3496, %v5455, %v4703
        %v5489 = vsel %vm3496, %v5457, %v4705
        %v5491 = vsel %vm3496, %v5459, %v4707
        %v5493 = vsel %vm3496, %v5461, %v4709
        %v5495 = vsel %vm3496, %v5463, %v4711
        %v5497 = vsel %vm3529, %v5465, %v4897
        %v5499 = vsel %vm3529, %v5467, %v4899
        %v5501 = vsel %vm3529, %v5469, %v4901
        %v5503 = vsel %vm3529, %v5471, %v4903
        %v5505 = vsel %vm3529, %v5473, %v4905
        %v5507 = vsel %vm3529, %v5475, %v4907
        %v5509 = vsel %vm3529, %v5477, %v4909
        %v5511 = vsel %vm3529, %v5479, %v4911
        %v5513 = vsel %vm3529, %v5481, %v4913
        %v5515 = vsel %vm3529, %v5483, %v4915
        %v5517 = vsel %vm3529, %v5485, %v4917
        %v5519 = vsel %vm3529, %v5487, %v4919
        %v5521 = vsel %vm3529, %v5489, %v4921
        %v5523 = vsel %vm3529, %v5491, %v4923
        %v5525 = vsel %vm3529, %v5493, %v4925
        %v5527 = vsel %vm3529, %v5495, %v4927
        %v5529 = vsel %vm3562, %v5497, %v4969
        %v5531 = vsel %vm3562, %v5499, %v4971
        %v5533 = vsel %vm3562, %v5501, %v4973
        %v5535 = vsel %vm3562, %v5503, %v4975
        %v5537 = vsel %vm3562, %v5505, %v4977
        %v5539 = vsel %vm3562, %v5507, %v4979
        %v5541 = vsel %vm3562, %v5509, %v4981
        %v5543 = vsel %vm3562, %v5511, %v4983
        %v5545 = vsel %vm3562, %v5513, %v4985
        %v5547 = vsel %vm3562, %v5515, %v4987
        %v5549 = vsel %vm3562, %v5517, %v4989
        %v5551 = vsel %vm3562, %v5519, %v4991
        %v5553 = vsel %vm3562, %v5521, %v4993
        %v5555 = vsel %vm3562, %v5523, %v4995
        %v5557 = vsel %vm3562, %v5525, %v4997
        %v5559 = vsel %vm3562, %v5527, %v4999
        %v5561 = vsel %vm3595, %v5529, %v5081
        %v5563 = vsel %vm3595, %v5531, %v5083
        %v5565 = vsel %vm3595, %v5533, %v5085
        %v5567 = vsel %vm3595, %v5535, %v5087
        %v5569 = vsel %vm3595, %v5537, %v5089
        %v5571 = vsel %vm3595, %v5539, %v5091
        %v5573 = vsel %vm3595, %v5541, %v5093
        %v5575 = vsel %vm3595, %v5543, %v5095
        %v5577 = vsel %vm3595, %v5545, %v5097
        %v5579 = vsel %vm3595, %v5547, %v5099
        %v5581 = vsel %vm3595, %v5549, %v5101
        %v5583 = vsel %vm3595, %v5551, %v5103
        %v5585 = vsel %vm3595, %v5553, %v5105
        %v5587 = vsel %vm3595, %v5555, %v5107
        %v5589 = vsel %vm3595, %v5557, %v5109
        %v5591 = vsel %vm3595, %v5559, %v5111
        %v5593 = vsel %vm3628, %v5561, %v5297
        %v5595 = vsel %vm3628, %v5563, %v5299
        %v5597 = vsel %vm3628, %v5565, %v5301
        %v5599 = vsel %vm3628, %v5567, %v5303
        %v5601 = vsel %vm3628, %v5569, %v5305
        %v5603 = vsel %vm3628, %v5571, %v5307
        %v5605 = vsel %vm3628, %v5573, %v5309
        %v5607 = vsel %vm3628, %v5575, %v5311
        %v5609 = vsel %vm3628, %v5577, %v5313
        %v5611 = vsel %vm3628, %v5579, %v5315
        %v5613 = vsel %vm3628, %v5581, %v5317
        %v5615 = vsel %vm3628, %v5583, %v5319
        %v5617 = vsel %vm3628, %v5585, %v5321
        %v5619 = vsel %vm3628, %v5587, %v5323
        %v5621 = vsel %vm3628, %v5589, %v5325
        %v5623 = vsel %vm3628, %v5591, %v5327
        %v5625 = vsel %vm3661, %v5593, %v5369
        %v5627 = vsel %vm3661, %v5595, %v5371
        %v5629 = vsel %vm3661, %v5597, %v5373
        %v5631 = vsel %vm3661, %v5599, %v5375
        %v5633 = vsel %vm3661, %v5601, %v5377
        %v5635 = vsel %vm3661, %v5603, %v5379
        %v5637 = vsel %vm3661, %v5605, %v5381
        %v5639 = vsel %vm3661, %v5607, %v5383
        %v5641 = vsel %vm3661, %v5609, %v5385
        %v5643 = vsel %vm3661, %v5611, %v5387
        %v5645 = vsel %vm3661, %v5613, %v5389
        %v5647 = vsel %vm3661, %v5615, %v5391
        %v5649 = vsel %vm3661, %v5617, %v5393
        %v5651 = vsel %vm3661, %v5619, %v5395
        %v5653 = vsel %vm3661, %v5621, %v5397
        %v5655 = vsel %vm3661, %v5623, %v5399
        %v5656 = vld [vmem:[%s210] sm:$0xf]
        %v5657 = vld [vmem:[%s210 + $0x4] sm:$0xf]
        %v5658 = vld [vmem:[%s210 + $0x8] sm:$0xf]
        %v5659 = vld [vmem:[%s210 + $0xc] sm:$0x3]
        %v5664 = vunpack.c.l.b16 %v5656
        %v5665 = vunpack.c.l.b16 %v5657
        %v5666 = vunpack.c.l.b16 %v5658
        %v5667 = vunpack.c.l.b16 %v5659
        %v5668 = vpack.c.b16 %v5665, %v5664
        %v5669 = vpack.c.b16 %v5667, %v5666
        %v5671 = vsel %vm3715, %v5625, 0
        %v5673 = vsel %vm3715, %v5627, 0
        %v5675 = vsel %vm3715, %v5629, 0
        %v5677 = vsel %vm3715, %v5631, 0
        %v5679 = vsel %vm3715, %v5633, 0
        %v5681 = vsel %vm3715, %v5635, 0
        %v5683 = vsel %vm3715, %v5637, 0
        %v5685 = vsel %vm3715, %v5639, 0
        %v5687 = vsel %vm3715, %v5641, 0
        %v5689 = vsel %vm3715, %v5643, 0
        %v5691 = vsel %vm3715, %v5645, 0
        %v5693 = vsel %vm3715, %v5647, 0
        %v5695 = vsel %vm3715, %v5649, 0
        %v5697 = vsel %vm3715, %v5651, 0
        %v5699 = vsel %vm3715, %v5653, 0
        %v5701 = vsel %vm3715, %v5655, 0
        %v5704 = vand.u32 %v5669, %v3751
        %5706 = vmatprep.subr.bf16.mxu0 0
        %5707 = vmatpush1.bf16.msra.mxu0 0
        %5708 = vmatprep.subr.bf16.mxu0 0
        %5709 = vmatpush1.bf16.msra.mxu0 0
        %5710 = vmatprep.subr.bf16.mxu0 0
        %5711 = vmatpush1.bf16.msra.mxu0 0
        %5712 = vmatprep.subr.bf16.mxu0 0
        %5713 = vmatpush1.bf16.msra.mxu0 0
        %5714 = vmatprep.subr.bf16.mxu0 0
        %5715 = vmatpush1.bf16.msra.mxu0 0
        %5716 = vmatprep.subr.bf16.mxu0 0
        %5717 = vmatpush1.bf16.msra.mxu0 0
        %5718 = vmatprep.subr.bf16.mxu0 0
        %5719 = vmatpush1.bf16.msra.mxu0 %v5704
        %5720 = vmatprep.subr.bf16.mxu0 0
        %5721 = vmatpush1.bf16.msra.mxu0 %v5668
        %5722 = vmatprep.subr.bf16.mxu0 0
        %5723 = vmatpush2.bf16.msra.mxu0 0
        %5724 = vmatprep.subr.bf16.mxu0 0
        %5725 = vmatpush2.bf16.msra.mxu0 0
        %5726 = vmatprep.subr.bf16.mxu0 0
        %5727 = vmatpush2.bf16.msra.mxu0 0
        %5728 = vmatprep.subr.bf16.mxu0 0
        %5729 = vmatpush2.bf16.msra.mxu0 0
        %5730 = vmatprep.subr.bf16.mxu0 0
        %5731 = vmatpush2.bf16.msra.mxu0 0
        %5732 = vmatprep.subr.bf16.mxu0 0
        %5733 = vmatpush2.bf16.msra.mxu0 0
        %5734 = vmatprep.subr.bf16.mxu0 0
        %5735 = vmatpush2.bf16.msra.mxu0 0
        %5736 = vmatprep.subr.bf16.mxu0 0
        %5737 = vmatpush2.bf16.msra.mxu0 0
        %5738 = vmatprep.mubr.bf16.mxu0 0
        %5739 = vmatmul.mubr.bf16.gmra.mxu0 %v5671
        %v5740 = vpop.f32.mrf.mxu0
        %v5741 = vadd.f32 %v3702, %v5740
        %v5742 = vpop.f32.mrf.mxu0
        %v5743 = vpop.f32.mrf.mxu0
        %v5744 = vadd.f32 %v3702, %v5743
        %v5745 = vpop.f32.mrf.mxu0
        %5746 = vmatprep.mubr.bf16.mxu0 0
        %5747 = vmatmul.mubr.bf16.gmra.mxu0 %v5673
        %v5748 = vpop.f32.mrf.mxu0
        %v5749 = vadd.f32 %v3702, %v5748
        %v5750 = vpop.f32.mrf.mxu0
        %v5751 = vpop.f32.mrf.mxu0
        %v5752 = vadd.f32 %v3702, %v5751
        %v5753 = vpop.f32.mrf.mxu0
        %5754 = vmatprep.mubr.bf16.mxu0 0
        %5755 = vmatmul.mubr.bf16.gmra.mxu0 %v5675
        %v5756 = vpop.f32.mrf.mxu0
        %v5757 = vadd.f32 %v3702, %v5756
        %v5758 = vpop.f32.mrf.mxu0
        %v5759 = vpop.f32.mrf.mxu0
        %v5760 = vadd.f32 %v3702, %v5759
        %v5761 = vpop.f32.mrf.mxu0
        %5762 = vmatprep.mubr.bf16.mxu0 0
        %5763 = vmatmul.mubr.bf16.gmra.mxu0 %v5677
        %v5764 = vpop.f32.mrf.mxu0
        %v5765 = vadd.f32 %v3702, %v5764
        %v5766 = vpop.f32.mrf.mxu0
        %v5767 = vpop.f32.mrf.mxu0
        %v5768 = vadd.f32 %v3702, %v5767
        %v5769 = vpop.f32.mrf.mxu0
        %5770 = vmatprep.mubr.bf16.mxu0 0
        %5771 = vmatmul.mubr.bf16.gmra.mxu0 %v5679
        %v5772 = vpop.f32.mrf.mxu0
        %v5773 = vadd.f32 %v3702, %v5772
        %v5774 = vpop.f32.mrf.mxu0
        %v5775 = vpop.f32.mrf.mxu0
        %v5776 = vadd.f32 %v3702, %v5775
        %v5777 = vpop.f32.mrf.mxu0
        %5778 = vmatprep.mubr.bf16.mxu0 0
        %5779 = vmatmul.mubr.bf16.gmra.mxu0 %v5681
        %v5780 = vpop.f32.mrf.mxu0
        %v5781 = vadd.f32 %v3702, %v5780
        %v5782 = vpop.f32.mrf.mxu0
        %v5783 = vpop.f32.mrf.mxu0
        %v5784 = vadd.f32 %v3702, %v5783
        %v5785 = vpop.f32.mrf.mxu0
        %5786 = vmatprep.mubr.bf16.mxu0 0
        %5787 = vmatmul.mubr.bf16.gmra.mxu0 %v5683
        %v5788 = vpop.f32.mrf.mxu0
        %v5789 = vadd.f32 %v3702, %v5788
        %v5790 = vpop.f32.mrf.mxu0
        %v5791 = vpop.f32.mrf.mxu0
        %v5792 = vadd.f32 %v3702, %v5791
        %v5793 = vpop.f32.mrf.mxu0
        %5794 = vmatprep.mubr.bf16.mxu0 0
        %5795 = vmatmul.mubr.bf16.gmra.mxu0 %v5685
        %v5796 = vpop.f32.mrf.mxu0
        %v5797 = vadd.f32 %v3702, %v5796
        %v5798 = vpop.f32.mrf.mxu0
        %v5799 = vpop.f32.mrf.mxu0
        %v5800 = vadd.f32 %v3702, %v5799
        %v5801 = vpop.f32.mrf.mxu0
        %5802 = vmatprep.mubr.bf16.mxu0 0
        %5803 = vmatmul.mubr.bf16.gmra.mxu0 %v5687
        %v5804 = vpop.f32.mrf.mxu0
        %v5805 = vadd.f32 %v3702, %v5804
        %v5806 = vpop.f32.mrf.mxu0
        %v5807 = vpop.f32.mrf.mxu0
        %v5808 = vadd.f32 %v3702, %v5807
        %v5809 = vpop.f32.mrf.mxu0
        %5810 = vmatprep.mubr.bf16.mxu0 0
        %5811 = vmatmul.mubr.bf16.gmra.mxu0 %v5689
        %v5812 = vpop.f32.mrf.mxu0
        %v5813 = vadd.f32 %v3702, %v5812
        %v5814 = vpop.f32.mrf.mxu0
        %v5815 = vpop.f32.mrf.mxu0
        %v5816 = vadd.f32 %v3702, %v5815
        %v5817 = vpop.f32.mrf.mxu0
        %5818 = vmatprep.mubr.bf16.mxu0 0
        %5819 = vmatmul.mubr.bf16.gmra.mxu0 %v5691
        %v5820 = vpop.f32.mrf.mxu0
        %v5821 = vadd.f32 %v3702, %v5820
        %v5822 = vpop.f32.mrf.mxu0
        %v5823 = vpop.f32.mrf.mxu0
        %v5824 = vadd.f32 %v3702, %v5823
        %v5825 = vpop.f32.mrf.mxu0
        %5826 = vmatprep.mubr.bf16.mxu0 0
        %5827 = vmatmul.mubr.bf16.gmra.mxu0 %v5693
        %v5828 = vpop.f32.mrf.mxu0
        %v5829 = vadd.f32 %v3702, %v5828
        %v5830 = vpop.f32.mrf.mxu0
        %v5831 = vpop.f32.mrf.mxu0
        %v5832 = vadd.f32 %v3702, %v5831
        %v5833 = vpop.f32.mrf.mxu0
        %5834 = vmatprep.mubr.bf16.mxu0 0
        %5835 = vmatmul.mubr.bf16.gmra.mxu0 %v5695
        %v5836 = vpop.f32.mrf.mxu0
        %v5837 = vadd.f32 %v3702, %v5836
        %v5838 = vpop.f32.mrf.mxu0
        %v5839 = vpop.f32.mrf.mxu0
        %v5840 = vadd.f32 %v3702, %v5839
        %v5841 = vpop.f32.mrf.mxu0
        %5842 = vmatprep.mubr.bf16.mxu0 0
        %5843 = vmatmul.mubr.bf16.gmra.mxu0 %v5697
        %v5844 = vpop.f32.mrf.mxu0
        %v5845 = vadd.f32 %v3702, %v5844
        %v5846 = vpop.f32.mrf.mxu0
        %v5847 = vpop.f32.mrf.mxu0
        %v5848 = vadd.f32 %v3702, %v5847
        %v5849 = vpop.f32.mrf.mxu0
        %5850 = vmatprep.mubr.bf16.mxu0 0
        %5851 = vmatmul.mubr.bf16.gmra.mxu0 %v5699
        %v5852 = vpop.f32.mrf.mxu0
        %v5853 = vadd.f32 %v3702, %v5852
        %v5854 = vpop.f32.mrf.mxu0
        %v5855 = vpop.f32.mrf.mxu0
        %v5856 = vadd.f32 %v3702, %v5855
        %v5857 = vpop.f32.mrf.mxu0
        %5858 = vmatprep.mubr.bf16.mxu0 0
        %5859 = vmatmul.mubr.bf16.gmra.mxu0 %v5701
        %v5860 = vpop.f32.mrf.mxu0
        %v5861 = vadd.f32 %v3702, %v5860
        %v5862 = vpop.f32.mrf.mxu0
        %v5863 = vpop.f32.mrf.mxu0
        %v5864 = vadd.f32 %v3702, %v5863
        %v5865 = vpop.f32.mrf.mxu0
        %5866 = vdwg.mxu0
        %v5867 = vmax.f32 %v5741, 0.0
        %v5868 = vmax.f32 %v5744, 0.0
        %v5869 = vmax.f32 %v5749, 0.0
        %v5870 = vmax.f32 %v5752, 0.0
        %v5871 = vmax.f32 %v5757, 0.0
        %v5872 = vmax.f32 %v5760, 0.0
        %v5873 = vmax.f32 %v5765, 0.0
        %v5874 = vmax.f32 %v5768, 0.0
        %v5875 = vmax.f32 %v5773, 0.0
        %v5876 = vmax.f32 %v5776, 0.0
        %v5877 = vmax.f32 %v5781, 0.0
        %v5878 = vmax.f32 %v5784, 0.0
        %v5879 = vmax.f32 %v5789, 0.0
        %v5880 = vmax.f32 %v5792, 0.0
        %v5881 = vmax.f32 %v5797, 0.0
        %v5882 = vmax.f32 %v5800, 0.0
        %v5883 = vmax.f32 %v5805, 0.0
        %v5884 = vmax.f32 %v5808, 0.0
        %v5885 = vmax.f32 %v5813, 0.0
        %v5886 = vmax.f32 %v5816, 0.0
        %v5887 = vmax.f32 %v5821, 0.0
        %v5888 = vmax.f32 %v5824, 0.0
        %v5889 = vmax.f32 %v5829, 0.0
        %v5890 = vmax.f32 %v5832, 0.0
        %v5891 = vmax.f32 %v5837, 0.0
        %v5892 = vmax.f32 %v5840, 0.0
        %v5893 = vmax.f32 %v5845, 0.0
        %v5894 = vmax.f32 %v5848, 0.0
        %v5895 = vmax.f32 %v5853, 0.0
        %v5896 = vmax.f32 %v5856, 0.0
        %v5897 = vmax.f32 %v5861, 0.0
        %v5898 = vmax.f32 %v5864, 0.0
        %v5899 = vpack.c.bf16 %v5868, %v5867
        %v5900 = vpack.c.bf16 %v5870, %v5869
        %v5901 = vpack.c.bf16 %v5872, %v5871
        %v5902 = vpack.c.bf16 %v5874, %v5873
        %v5903 = vpack.c.bf16 %v5876, %v5875
        %v5904 = vpack.c.bf16 %v5878, %v5877
        %v5905 = vpack.c.bf16 %v5880, %v5879
        %v5906 = vpack.c.bf16 %v5882, %v5881
        %v5907 = vpack.c.bf16 %v5884, %v5883
        %v5908 = vpack.c.bf16 %v5886, %v5885
        %v5909 = vpack.c.bf16 %v5888, %v5887
        %v5910 = vpack.c.bf16 %v5890, %v5889
        %v5911 = vpack.c.bf16 %v5892, %v5891
        %v5912 = vpack.c.bf16 %v5894, %v5893
        %v5913 = vpack.c.bf16 %v5896, %v5895
        %v5914 = vpack.c.bf16 %v5898, %v5897
        %v5931 = vunpack.c.l.b16 %v5899
        %v5932 = vunpack.c.h.b16 %v5899
        %v5933 = vunpack.c.l.b16 %v5900
        %v5934 = vunpack.c.h.b16 %v5900
        %v5935 = vunpack.c.l.b16 %v5901
        %v5936 = vunpack.c.h.b16 %v5901
        %v5937 = vunpack.c.l.b16 %v5902
        %v5938 = vunpack.c.h.b16 %v5902
        %v5939 = vunpack.c.l.b16 %v5903
        %v5940 = vunpack.c.h.b16 %v5903
        %v5941 = vunpack.c.l.b16 %v5904
        %v5942 = vunpack.c.h.b16 %v5904
        %v5943 = vunpack.c.l.b16 %v5905
        %v5944 = vunpack.c.h.b16 %v5905
        %v5945 = vunpack.c.l.b16 %v5906
        %v5946 = vunpack.c.h.b16 %v5906
        %v5947 = vunpack.c.l.b16 %v5907
        %v5948 = vunpack.c.h.b16 %v5907
        %v5949 = vunpack.c.l.b16 %v5908
        %v5950 = vunpack.c.h.b16 %v5908
        %v5951 = vunpack.c.l.b16 %v5909
        %v5952 = vunpack.c.h.b16 %v5909
        %v5953 = vunpack.c.l.b16 %v5910
        %v5954 = vunpack.c.h.b16 %v5910
        %v5955 = vunpack.c.l.b16 %v5911
        %v5956 = vunpack.c.h.b16 %v5911
        %v5957 = vunpack.c.l.b16 %v5912
        %v5958 = vunpack.c.h.b16 %v5912
        %v5959 = vunpack.c.l.b16 %v5913
        %v5960 = vunpack.c.h.b16 %v5913
        %v5961 = vunpack.c.l.b16 %v5914
        %v5962 = vunpack.c.h.b16 %v5914
        %v5963 = vpack.c.b16 %v5931, %v5931
        %v5964 = vpack.c.b16 %v5932, %v5932
        %v5965 = vpack.c.b16 %v5933, %v5933
        %v5966 = vpack.c.b16 %v5934, %v5934
        %v5967 = vpack.c.b16 %v5935, %v5935
        %v5968 = vpack.c.b16 %v5936, %v5936
        %v5969 = vpack.c.b16 %v5937, %v5937
        %v5970 = vpack.c.b16 %v5938, %v5938
        %v5971 = vpack.c.b16 %v5939, %v5939
        %v5972 = vpack.c.b16 %v5940, %v5940
        %v5973 = vpack.c.b16 %v5941, %v5941
        %v5974 = vpack.c.b16 %v5942, %v5942
        %v5975 = vpack.c.b16 %v5943, %v5943
        %v5976 = vpack.c.b16 %v5944, %v5944
        %v5977 = vpack.c.b16 %v5945, %v5945
        %v5978 = vpack.c.b16 %v5946, %v5946
        %v5979 = vpack.c.b16 %v5947, %v5947
        %v5980 = vpack.c.b16 %v5948, %v5948
        %v5981 = vpack.c.b16 %v5949, %v5949
        %v5982 = vpack.c.b16 %v5950, %v5950
        %v5983 = vpack.c.b16 %v5951, %v5951
        %v5984 = vpack.c.b16 %v5952, %v5952
        %v5985 = vpack.c.b16 %v5953, %v5953
        %v5986 = vpack.c.b16 %v5954, %v5954
        %v5987 = vpack.c.b16 %v5955, %v5955
        %v5988 = vpack.c.b16 %v5956, %v5956
        %v5989 = vpack.c.b16 %v5957, %v5957
        %v5990 = vpack.c.b16 %v5958, %v5958
        %v5991 = vpack.c.b16 %v5959, %v5959
        %v5992 = vpack.c.b16 %v5960, %v5960
        %v5993 = vpack.c.b16 %v5961, %v5961
        %v5994 = vpack.c.b16 %v5962, %v5962
        %s6027 = scalar_lea.vmem %s201, 128 [#allocation3]
        %6028 = vst.msk [vmem:[%s6027] sm:$0xf] %vm4076, %v5963
        %6029 = vst.msk [vmem:[%s6027 + $0x4] sm:$0xf] %vm4076, %v5964
        %6030 = vst.msk [vmem:[%s6027 + $0x8] sm:$0xf] %vm4076, %v5965
        %6031 = vst.msk [vmem:[%s6027 + $0xc] sm:$0xf] %vm4076, %v5966
        %6032 = vst.msk [vmem:[%s6027 + $0x10] sm:$0xf] %vm4076, %v5967
        %6033 = vst.msk [vmem:[%s6027 + $0x14] sm:$0xf] %vm4076, %v5968
        %6034 = vst.msk [vmem:[%s6027 + $0x18] sm:$0xf] %vm4076, %v5969
        %6035 = vst.msk [vmem:[%s6027 + $0x1c] sm:$0xf] %vm4076, %v5970
        %6036 = vst.msk [vmem:[%s6027 + $0x20] sm:$0xf] %vm4076, %v5971
        %6037 = vst.msk [vmem:[%s6027 + $0x24] sm:$0xf] %vm4076, %v5972
        %6038 = vst.msk [vmem:[%s6027 + $0x28] sm:$0xf] %vm4076, %v5973
        %6039 = vst.msk [vmem:[%s6027 + $0x2c] sm:$0xf] %vm4076, %v5974
        %6040 = vst.msk [vmem:[%s6027 + $0x30] sm:$0xf] %vm4076, %v5975
        %6041 = vst.msk [vmem:[%s6027 + $0x34] sm:$0xf] %vm4076, %v5976
        %6042 = vst.msk [vmem:[%s6027 + $0x38] sm:$0xf] %vm4076, %v5977
        %6043 = vst.msk [vmem:[%s6027 + $0x3c] sm:$0xf] %vm4076, %v5978
        %6044 = vst.msk [vmem:[%s6027 + $0x40] sm:$0xf] %vm4076, %v5979
        %6045 = vst.msk [vmem:[%s6027 + $0x44] sm:$0xf] %vm4076, %v5980
        %6046 = vst.msk [vmem:[%s6027 + $0x48] sm:$0xf] %vm4076, %v5981
        %6047 = vst.msk [vmem:[%s6027 + $0x4c] sm:$0xf] %vm4076, %v5982
        %6048 = vst.msk [vmem:[%s6027 + $0x50] sm:$0xf] %vm4076, %v5983
        %6049 = vst.msk [vmem:[%s6027 + $0x54] sm:$0xf] %vm4076, %v5984
        %6050 = vst.msk [vmem:[%s6027 + $0x58] sm:$0xf] %vm4076, %v5985
        %6051 = vst.msk [vmem:[%s6027 + $0x5c] sm:$0xf] %vm4076, %v5986
        %6052 = vst.msk [vmem:[%s6027 + $0x60] sm:$0xf] %vm4076, %v5987
        %6053 = vst.msk [vmem:[%s6027 + $0x64] sm:$0xf] %vm4076, %v5988
        %6054 = vst.msk [vmem:[%s6027 + $0x68] sm:$0xf] %vm4076, %v5989
        %6055 = vst.msk [vmem:[%s6027 + $0x6c] sm:$0xf] %vm4076, %v5990
        %6056 = vst.msk [vmem:[%s6027 + $0x70] sm:$0xf] %vm4076, %v5991
        %6057 = vst.msk [vmem:[%s6027 + $0x74] sm:$0xf] %vm4076, %v5992
        %6058 = vst.msk [vmem:[%s6027 + $0x78] sm:$0xf] %vm4076, %v5993
        %6059 = vst.msk [vmem:[%s6027 + $0x7c] sm:$0xf] %vm4076, %v5994
        %s6060 = scalar_lea.vmem [#allocation2], 320
        %v6061 = vld [vmem:[%s6060] sm:$0xf]
        %v6062 = vld [vmem:[%s6060 + $0x4] sm:$0xf]
        %v6063 = vld [vmem:[%s6060 + $0x8] sm:$0xf]
        %v6064 = vld [vmem:[%s6060 + $0xc] sm:$0xf]
        %v6065 = vld [vmem:[%s6060 + $0x10] sm:$0x1]
        %v6066 = vld [vmem:[%s6060 + $0x14] sm:$0xf]
        %v6067 = vld [vmem:[%s6060 + $0x18] sm:$0xf]
        %v6068 = vld [vmem:[%s6060 + $0x1c] sm:$0xf]
        %v6069 = vld [vmem:[%s6060 + $0x20] sm:$0xf]
        %v6070 = vld [vmem:[%s6060 + $0x24] sm:$0x1]
        %v6071 = vld [vmem:[%s6060 + $0x28] sm:$0xf]
        %v6072 = vld [vmem:[%s6060 + $0x2c] sm:$0xf]
        %v6073 = vld [vmem:[%s6060 + $0x30] sm:$0xf]
        %v6074 = vld [vmem:[%s6060 + $0x34] sm:$0xf]
        %v6075 = vld [vmem:[%s6060 + $0x38] sm:$0x1]
        %v6076 = vld [vmem:[%s6060 + $0x3c] sm:$0xf]
        %v6077 = vld [vmem:[%s6060 + $0x40] sm:$0xf]
        %v6078 = vld [vmem:[%s6060 + $0x44] sm:$0xf]
        %v6079 = vld [vmem:[%s6060 + $0x48] sm:$0xf]
        %v6080 = vld [vmem:[%s6060 + $0x4c] sm:$0x1]
        %v6081 = vld [vmem:[%s6060 + $0x50] sm:$0xf]
        %v6082 = vld [vmem:[%s6060 + $0x54] sm:$0xf]
        %v6083 = vld [vmem:[%s6060 + $0x58] sm:$0xf]
        %v6084 = vld [vmem:[%s6060 + $0x5c] sm:$0xf]
        %v6085 = vld [vmem:[%s6060 + $0x60] sm:$0x1]
        %v6086 = vld [vmem:[%s6060 + $0x64] sm:$0xf]
        %v6087 = vld [vmem:[%s6060 + $0x68] sm:$0xf]
        %v6088 = vld [vmem:[%s6060 + $0x6c] sm:$0xf]
        %v6089 = vld [vmem:[%s6060 + $0x70] sm:$0xf]
        %v6090 = vld [vmem:[%s6060 + $0x74] sm:$0x1]
        %v6091 = vld [vmem:[%s6060 + $0x78] sm:$0xf]
        %v6092 = vld [vmem:[%s6060 + $0x7c] sm:$0xf]
        %v6093 = vld [vmem:[%s6060 + $0x80] sm:$0xf]
        %v6094 = vld [vmem:[%s6060 + $0x84] sm:$0xf]
        %v6095 = vld [vmem:[%s6060 + $0x88] sm:$0x1]
        %v6096 = vld [vmem:[%s6060 + $0x8c] sm:$0xf]
        %v6097 = vld [vmem:[%s6060 + $0x90] sm:$0xf]
        %v6098 = vld [vmem:[%s6060 + $0x94] sm:$0xf]
        %v6099 = vld [vmem:[%s6060 + $0x98] sm:$0xf]
        %v6100 = vld [vmem:[%s6060 + $0x9c] sm:$0x1]
        %s6101 = scalar_lea.vmem [#allocation2], 340
        %v6102 = vld [vmem:[%s6101] sm:$0xf]
        %v6103 = vld [vmem:[%s6101 + $0x4] sm:$0xf]
        %v6104 = vld [vmem:[%s6101 + $0x8] sm:$0xf]
        %v6105 = vld [vmem:[%s6101 + $0xc] sm:$0xf]
        %v6106 = vld [vmem:[%s6101 + $0x10] sm:$0x1]
        %v6107 = vld [vmem:[%s6101 + $0x14] sm:$0xf]
        %v6108 = vld [vmem:[%s6101 + $0x18] sm:$0xf]
        %v6109 = vld [vmem:[%s6101 + $0x1c] sm:$0xf]
        %v6110 = vld [vmem:[%s6101 + $0x20] sm:$0xf]
        %v6111 = vld [vmem:[%s6101 + $0x24] sm:$0x1]
        %v6112 = vld [vmem:[%s6101 + $0x28] sm:$0xf]
        %v6113 = vld [vmem:[%s6101 + $0x2c] sm:$0xf]
        %v6114 = vld [vmem:[%s6101 + $0x30] sm:$0xf]
        %v6115 = vld [vmem:[%s6101 + $0x34] sm:$0xf]
        %v6116 = vld [vmem:[%s6101 + $0x38] sm:$0x1]
        %v6117 = vld [vmem:[%s6101 + $0x3c] sm:$0xf]
        %v6118 = vld [vmem:[%s6101 + $0x40] sm:$0xf]
        %v6119 = vld [vmem:[%s6101 + $0x44] sm:$0xf]
        %v6120 = vld [vmem:[%s6101 + $0x48] sm:$0xf]
        %v6121 = vld [vmem:[%s6101 + $0x4c] sm:$0x1]
        %v6122 = vld [vmem:[%s6101 + $0x50] sm:$0xf]
        %v6123 = vld [vmem:[%s6101 + $0x54] sm:$0xf]
        %v6124 = vld [vmem:[%s6101 + $0x58] sm:$0xf]
        %v6125 = vld [vmem:[%s6101 + $0x5c] sm:$0xf]
        %v6126 = vld [vmem:[%s6101 + $0x60] sm:$0x1]
        %v6127 = vld [vmem:[%s6101 + $0x64] sm:$0xf]
        %v6128 = vld [vmem:[%s6101 + $0x68] sm:$0xf]
        %v6129 = vld [vmem:[%s6101 + $0x6c] sm:$0xf]
        %v6130 = vld [vmem:[%s6101 + $0x70] sm:$0xf]
        %v6131 = vld [vmem:[%s6101 + $0x74] sm:$0x1]
        %v6132 = vld [vmem:[%s6101 + $0x78] sm:$0xf]
        %v6133 = vld [vmem:[%s6101 + $0x7c] sm:$0xf]
        %v6134 = vld [vmem:[%s6101 + $0x80] sm:$0xf]
        %v6135 = vld [vmem:[%s6101 + $0x84] sm:$0xf]
        %v6136 = vld [vmem:[%s6101 + $0x88] sm:$0x1]
        %v6137 = vld [vmem:[%s6101 + $0x8c] sm:$0xf]
        %v6138 = vld [vmem:[%s6101 + $0x90] sm:$0xf]
        %v6139 = vld [vmem:[%s6101 + $0x94] sm:$0xf]
        %v6140 = vld [vmem:[%s6101 + $0x98] sm:$0xf]
        %v6141 = vld [vmem:[%s6101 + $0x9c] sm:$0x1]
        %s6142 = scalar_lea.vmem [#allocation2], 360
        %v6143 = vld [vmem:[%s6142] sm:$0xf]
        %v6144 = vld [vmem:[%s6142 + $0x4] sm:$0xf]
        %v6145 = vld [vmem:[%s6142 + $0x8] sm:$0xf]
        %v6146 = vld [vmem:[%s6142 + $0xc] sm:$0xf]
        %v6147 = vld [vmem:[%s6142 + $0x10] sm:$0x1]
        %v6148 = vld [vmem:[%s6142 + $0x14] sm:$0xf]
        %v6149 = vld [vmem:[%s6142 + $0x18] sm:$0xf]
        %v6150 = vld [vmem:[%s6142 + $0x1c] sm:$0xf]
        %v6151 = vld [vmem:[%s6142 + $0x20] sm:$0xf]
        %v6152 = vld [vmem:[%s6142 + $0x24] sm:$0x1]
        %v6153 = vld [vmem:[%s6142 + $0x28] sm:$0xf]
        %v6154 = vld [vmem:[%s6142 + $0x2c] sm:$0xf]
        %v6155 = vld [vmem:[%s6142 + $0x30] sm:$0xf]
        %v6156 = vld [vmem:[%s6142 + $0x34] sm:$0xf]
        %v6157 = vld [vmem:[%s6142 + $0x38] sm:$0x1]
        %v6158 = vld [vmem:[%s6142 + $0x3c] sm:$0xf]
        %v6159 = vld [vmem:[%s6142 + $0x40] sm:$0xf]
        %v6160 = vld [vmem:[%s6142 + $0x44] sm:$0xf]
        %v6161 = vld [vmem:[%s6142 + $0x48] sm:$0xf]
        %v6162 = vld [vmem:[%s6142 + $0x4c] sm:$0x1]
        %v6163 = vld [vmem:[%s6142 + $0x50] sm:$0xf]
        %v6164 = vld [vmem:[%s6142 + $0x54] sm:$0xf]
        %v6165 = vld [vmem:[%s6142 + $0x58] sm:$0xf]
        %v6166 = vld [vmem:[%s6142 + $0x5c] sm:$0xf]
        %v6167 = vld [vmem:[%s6142 + $0x60] sm:$0x1]
        %v6168 = vld [vmem:[%s6142 + $0x64] sm:$0xf]
        %v6169 = vld [vmem:[%s6142 + $0x68] sm:$0xf]
        %v6170 = vld [vmem:[%s6142 + $0x6c] sm:$0xf]
        %v6171 = vld [vmem:[%s6142 + $0x70] sm:$0xf]
        %v6172 = vld [vmem:[%s6142 + $0x74] sm:$0x1]
        %v6173 = vld [vmem:[%s6142 + $0x78] sm:$0xf]
        %v6174 = vld [vmem:[%s6142 + $0x7c] sm:$0xf]
        %v6175 = vld [vmem:[%s6142 + $0x80] sm:$0xf]
        %v6176 = vld [vmem:[%s6142 + $0x84] sm:$0xf]
        %v6177 = vld [vmem:[%s6142 + $0x88] sm:$0x1]
        %v6178 = vld [vmem:[%s6142 + $0x8c] sm:$0xf]
        %v6179 = vld [vmem:[%s6142 + $0x90] sm:$0xf]
        %v6180 = vld [vmem:[%s6142 + $0x94] sm:$0xf]
        %v6181 = vld [vmem:[%s6142 + $0x98] sm:$0xf]
        %v6182 = vld [vmem:[%s6142 + $0x9c] sm:$0x1]
        %v6215 = vunpack.c.l.b16 %v6061
        %v6216 = vunpack.c.l.b16 %v6062
        %v6217 = vunpack.c.l.b16 %v6063
        %v6218 = vunpack.c.l.b16 %v6064
        %v6219 = vunpack.c.l.b16 %v6066
        %v6220 = vunpack.c.l.b16 %v6067
        %v6221 = vunpack.c.l.b16 %v6068
        %v6222 = vunpack.c.l.b16 %v6069
        %v6223 = vunpack.c.l.b16 %v6071
        %v6224 = vunpack.c.l.b16 %v6072
        %v6225 = vunpack.c.l.b16 %v6073
        %v6226 = vunpack.c.l.b16 %v6074
        %v6227 = vunpack.c.l.b16 %v6076
        %v6228 = vunpack.c.l.b16 %v6077
        %v6229 = vunpack.c.l.b16 %v6078
        %v6230 = vunpack.c.l.b16 %v6079
        %v6231 = vunpack.c.l.b16 %v6081
        %v6232 = vunpack.c.l.b16 %v6082
        %v6233 = vunpack.c.l.b16 %v6083
        %v6234 = vunpack.c.l.b16 %v6084
        %v6235 = vunpack.c.l.b16 %v6086
        %v6236 = vunpack.c.l.b16 %v6087
        %v6237 = vunpack.c.l.b16 %v6088
        %v6238 = vunpack.c.l.b16 %v6089
        %v6239 = vunpack.c.l.b16 %v6091
        %v6240 = vunpack.c.l.b16 %v6092
        %v6241 = vunpack.c.l.b16 %v6093
        %v6242 = vunpack.c.l.b16 %v6094
        %v6243 = vunpack.c.l.b16 %v6096
        %v6244 = vunpack.c.l.b16 %v6097
        %v6245 = vunpack.c.l.b16 %v6098
        %v6246 = vunpack.c.l.b16 %v6099
        %v6247 = vpack.c.b16 %v6216, %v6215
        %v6248 = vpack.c.b16 %v6218, %v6217
        %v6249 = vpack.c.b16 %v6220, %v6219
        %v6250 = vpack.c.b16 %v6222, %v6221
        %v6251 = vpack.c.b16 %v6224, %v6223
        %v6252 = vpack.c.b16 %v6226, %v6225
        %v6253 = vpack.c.b16 %v6228, %v6227
        %v6254 = vpack.c.b16 %v6230, %v6229
        %v6255 = vpack.c.b16 %v6232, %v6231
        %v6256 = vpack.c.b16 %v6234, %v6233
        %v6257 = vpack.c.b16 %v6236, %v6235
        %v6258 = vpack.c.b16 %v6238, %v6237
        %v6259 = vpack.c.b16 %v6240, %v6239
        %v6260 = vpack.c.b16 %v6242, %v6241
        %v6261 = vpack.c.b16 %v6244, %v6243
        %v6262 = vpack.c.b16 %v6246, %v6245
        %v6271 = vunpack.c.l.b16 %v6065
        %v6272 = vunpack.c.l.b16 %v6070
        %v6273 = vunpack.c.l.b16 %v6075
        %v6274 = vunpack.c.l.b16 %v6080
        %v6275 = vunpack.c.l.b16 %v6085
        %v6276 = vunpack.c.l.b16 %v6090
        %v6277 = vunpack.c.l.b16 %v6095
        %v6278 = vunpack.c.l.b16 %v6100
        %v6279 = vpack.c.b16 %v6271, %v6271
        %v6280 = vpack.c.b16 %v6272, %v6272
        %v6281 = vpack.c.b16 %v6273, %v6273
        %v6282 = vpack.c.b16 %v6274, %v6274
        %v6283 = vpack.c.b16 %v6275, %v6275
        %v6284 = vpack.c.b16 %v6276, %v6276
        %v6285 = vpack.c.b16 %v6277, %v6277
        %v6286 = vpack.c.b16 %v6278, %v6278
        %v6288 = vshrl.u32 %v6247, 16
        %v6290 = vshll.u32 %v6247, 16
        %v6292 = vrot.slane %v6290, 1
        %v6293 = vor.u32 %v6288, %v6292
        %v6295 = vshll.u32 %v6248, 16
        %v6297 = vrot.slane %v6295, 1
        %v6298 = vsel %vm2364, %v6293, %v6297
        %v6299 = vshrl.u32 %v6248, 16
        %v6301 = vor.u32 %v6299, %v6297
        %v6303 = vshll.u32 %v6279, 16
        %v6305 = vrot.slane %v6303, 1
        %v6306 = vsel %vm2364, %v6301, %v6305
        %v6308 = vshrl.u32 %v6249, 16
        %v6310 = vshll.u32 %v6249, 16
        %v6312 = vrot.slane %v6310, 1
        %v6313 = vor.u32 %v6308, %v6312
        %v6315 = vshll.u32 %v6250, 16
        %v6317 = vrot.slane %v6315, 1
        %v6318 = vsel %vm2364, %v6313, %v6317
        %v6319 = vshrl.u32 %v6250, 16
        %v6321 = vor.u32 %v6319, %v6317
        %v6323 = vshll.u32 %v6280, 16
        %v6325 = vrot.slane %v6323, 1
        %v6326 = vsel %vm2364, %v6321, %v6325
        %v6328 = vshrl.u32 %v6251, 16
        %v6330 = vshll.u32 %v6251, 16
        %v6332 = vrot.slane %v6330, 1
        %v6333 = vor.u32 %v6328, %v6332
        %v6335 = vshll.u32 %v6252, 16
        %v6337 = vrot.slane %v6335, 1
        %v6338 = vsel %vm2364, %v6333, %v6337
        %v6339 = vshrl.u32 %v6252, 16
        %v6341 = vor.u32 %v6339, %v6337
        %v6343 = vshll.u32 %v6281, 16
        %v6345 = vrot.slane %v6343, 1
        %v6346 = vsel %vm2364, %v6341, %v6345
        %v6348 = vshrl.u32 %v6253, 16
        %v6350 = vshll.u32 %v6253, 16
        %v6352 = vrot.slane %v6350, 1
        %v6353 = vor.u32 %v6348, %v6352
        %v6355 = vshll.u32 %v6254, 16
        %v6357 = vrot.slane %v6355, 1
        %v6358 = vsel %vm2364, %v6353, %v6357
        %v6359 = vshrl.u32 %v6254, 16
        %v6361 = vor.u32 %v6359, %v6357
        %v6363 = vshll.u32 %v6282, 16
        %v6365 = vrot.slane %v6363, 1
        %v6366 = vsel %vm2364, %v6361, %v6365
        %v6368 = vshrl.u32 %v6255, 16
        %v6370 = vshll.u32 %v6255, 16
        %v6372 = vrot.slane %v6370, 1
        %v6373 = vor.u32 %v6368, %v6372
        %v6375 = vshll.u32 %v6256, 16
        %v6377 = vrot.slane %v6375, 1
        %v6378 = vsel %vm2364, %v6373, %v6377
        %v6379 = vshrl.u32 %v6256, 16
        %v6381 = vor.u32 %v6379, %v6377
        %v6383 = vshll.u32 %v6283, 16
        %v6385 = vrot.slane %v6383, 1
        %v6386 = vsel %vm2364, %v6381, %v6385
        %v6388 = vshrl.u32 %v6257, 16
        %v6390 = vshll.u32 %v6257, 16
        %v6392 = vrot.slane %v6390, 1
        %v6393 = vor.u32 %v6388, %v6392
        %v6395 = vshll.u32 %v6258, 16
        %v6397 = vrot.slane %v6395, 1
        %v6398 = vsel %vm2364, %v6393, %v6397
        %v6399 = vshrl.u32 %v6258, 16
        %v6401 = vor.u32 %v6399, %v6397
        %v6403 = vshll.u32 %v6284, 16
        %v6405 = vrot.slane %v6403, 1
        %v6406 = vsel %vm2364, %v6401, %v6405
        %v6408 = vshrl.u32 %v6259, 16
        %v6410 = vshll.u32 %v6259, 16
        %v6412 = vrot.slane %v6410, 1
        %v6413 = vor.u32 %v6408, %v6412
        %v6415 = vshll.u32 %v6260, 16
        %v6417 = vrot.slane %v6415, 1
        %v6418 = vsel %vm2364, %v6413, %v6417
        %v6419 = vshrl.u32 %v6260, 16
        %v6421 = vor.u32 %v6419, %v6417
        %v6423 = vshll.u32 %v6285, 16
        %v6425 = vrot.slane %v6423, 1
        %v6426 = vsel %vm2364, %v6421, %v6425
        %v6428 = vshrl.u32 %v6261, 16
        %v6430 = vshll.u32 %v6261, 16
        %v6432 = vrot.slane %v6430, 1
        %v6433 = vor.u32 %v6428, %v6432
        %v6435 = vshll.u32 %v6262, 16
        %v6437 = vrot.slane %v6435, 1
        %v6438 = vsel %vm2364, %v6433, %v6437
        %v6439 = vshrl.u32 %v6262, 16
        %v6441 = vor.u32 %v6439, %v6437
        %v6443 = vshll.u32 %v6286, 16
        %v6445 = vrot.slane %v6443, 1
        %v6446 = vsel %vm2364, %v6441, %v6445
        %6447 = vrot.lane.b32.xlu0 %v6298, 3
        %v6448 = vpop.permute.xlu0 %6447
        %6449 = vrot.lane.b32.xlu0 %v6306, 3
        %v6450 = vpop.permute.xlu0 %6449
        %6451 = vrot.lane.b32.xlu0 %v6318, 3
        %v6452 = vpop.permute.xlu0 %6451
        %6453 = vrot.lane.b32.xlu0 %v6326, 3
        %v6454 = vpop.permute.xlu0 %6453
        %6455 = vrot.lane.b32.xlu0 %v6338, 3
        %v6456 = vpop.permute.xlu0 %6455
        %6457 = vrot.lane.b32.xlu0 %v6346, 3
        %v6458 = vpop.permute.xlu0 %6457
        %6459 = vrot.lane.b32.xlu0 %v6358, 3
        %v6460 = vpop.permute.xlu0 %6459
        %6461 = vrot.lane.b32.xlu0 %v6366, 3
        %v6462 = vpop.permute.xlu0 %6461
        %6463 = vrot.lane.b32.xlu0 %v6378, 3
        %v6464 = vpop.permute.xlu0 %6463
        %6465 = vrot.lane.b32.xlu0 %v6386, 3
        %v6466 = vpop.permute.xlu0 %6465
        %6467 = vrot.lane.b32.xlu0 %v6398, 3
        %v6468 = vpop.permute.xlu0 %6467
        %6469 = vrot.lane.b32.xlu0 %v6406, 3
        %v6470 = vpop.permute.xlu0 %6469
        %6471 = vrot.lane.b32.xlu0 %v6418, 3
        %v6472 = vpop.permute.xlu0 %6471
        %6473 = vrot.lane.b32.xlu0 %v6426, 3
        %v6474 = vpop.permute.xlu0 %6473
        %6475 = vrot.lane.b32.xlu0 %v6438, 3
        %v6476 = vpop.permute.xlu0 %6475
        %6477 = vrot.lane.b32.xlu0 %v6446, 3
        %v6478 = vpop.permute.xlu0 %6477
        %v6479 = vrot.slane %v6247, 1
        %v6480 = vrot.slane %v6248, 1
        %v6481 = vsel %vm2557, %v6479, %v6480
        %v6482 = vrot.slane %v6279, 1
        %v6483 = vsel %vm2557, %v6480, %v6482
        %v6484 = vrot.slane %v6249, 1
        %v6485 = vrot.slane %v6250, 1
        %v6486 = vsel %vm2557, %v6484, %v6485
        %v6487 = vrot.slane %v6280, 1
        %v6488 = vsel %vm2557, %v6485, %v6487
        %v6489 = vrot.slane %v6251, 1
        %v6490 = vrot.slane %v6252, 1
        %v6491 = vsel %vm2557, %v6489, %v6490
        %v6492 = vrot.slane %v6281, 1
        %v6493 = vsel %vm2557, %v6490, %v6492
        %v6494 = vrot.slane %v6253, 1
        %v6495 = vrot.slane %v6254, 1
        %v6496 = vsel %vm2557, %v6494, %v6495
        %v6497 = vrot.slane %v6282, 1
        %v6498 = vsel %vm2557, %v6495, %v6497
        %v6499 = vrot.slane %v6255, 1
        %v6500 = vrot.slane %v6256, 1
        %v6501 = vsel %vm2557, %v6499, %v6500
        %v6502 = vrot.slane %v6283, 1
        %v6503 = vsel %vm2557, %v6500, %v6502
        %v6504 = vrot.slane %v6257, 1
        %v6505 = vrot.slane %v6258, 1
        %v6506 = vsel %vm2557, %v6504, %v6505
        %v6507 = vrot.slane %v6284, 1
        %v6508 = vsel %vm2557, %v6505, %v6507
        %v6509 = vrot.slane %v6259, 1
        %v6510 = vrot.slane %v6260, 1
        %v6511 = vsel %vm2557, %v6509, %v6510
        %v6512 = vrot.slane %v6285, 1
        %v6513 = vsel %vm2557, %v6510, %v6512
        %v6514 = vrot.slane %v6261, 1
        %v6515 = vrot.slane %v6262, 1
        %v6516 = vsel %vm2557, %v6514, %v6515
        %v6517 = vrot.slane %v6286, 1
        %v6518 = vsel %vm2557, %v6515, %v6517
        %6519 = vrot.lane.b32.xlu0 %v6481, 6
        %v6520 = vpop.permute.xlu0 %6519
        %6521 = vrot.lane.b32.xlu0 %v6483, 6
        %v6522 = vpop.permute.xlu0 %6521
        %6523 = vrot.lane.b32.xlu0 %v6486, 6
        %v6524 = vpop.permute.xlu0 %6523
        %6525 = vrot.lane.b32.xlu0 %v6488, 6
        %v6526 = vpop.permute.xlu0 %6525
        %6527 = vrot.lane.b32.xlu0 %v6491, 6
        %v6528 = vpop.permute.xlu0 %6527
        %6529 = vrot.lane.b32.xlu0 %v6493, 6
        %v6530 = vpop.permute.xlu0 %6529
        %6531 = vrot.lane.b32.xlu0 %v6496, 6
        %v6532 = vpop.permute.xlu0 %6531
        %6533 = vrot.lane.b32.xlu0 %v6498, 6
        %v6534 = vpop.permute.xlu0 %6533
        %6535 = vrot.lane.b32.xlu0 %v6501, 6
        %v6536 = vpop.permute.xlu0 %6535
        %6537 = vrot.lane.b32.xlu0 %v6503, 6
        %v6538 = vpop.permute.xlu0 %6537
        %6539 = vrot.lane.b32.xlu0 %v6506, 6
        %v6540 = vpop.permute.xlu0 %6539
        %6541 = vrot.lane.b32.xlu0 %v6508, 6
        %v6542 = vpop.permute.xlu0 %6541
        %6543 = vrot.lane.b32.xlu0 %v6511, 6
        %v6544 = vpop.permute.xlu0 %6543
        %6545 = vrot.lane.b32.xlu0 %v6513, 6
        %v6546 = vpop.permute.xlu0 %6545
        %6547 = vrot.lane.b32.xlu0 %v6516, 6
        %v6548 = vpop.permute.xlu0 %6547
        %6549 = vrot.lane.b32.xlu0 %v6518, 6
        %v6550 = vpop.permute.xlu0 %6549
        %v6583 = vunpack.c.l.b16 %v6102
        %v6584 = vunpack.c.l.b16 %v6103
        %v6585 = vunpack.c.l.b16 %v6104
        %v6586 = vunpack.c.l.b16 %v6105
        %v6587 = vunpack.c.l.b16 %v6107
        %v6588 = vunpack.c.l.b16 %v6108
        %v6589 = vunpack.c.l.b16 %v6109
        %v6590 = vunpack.c.l.b16 %v6110
        %v6591 = vunpack.c.l.b16 %v6112
        %v6592 = vunpack.c.l.b16 %v6113
        %v6593 = vunpack.c.l.b16 %v6114
        %v6594 = vunpack.c.l.b16 %v6115
        %v6595 = vunpack.c.l.b16 %v6117
        %v6596 = vunpack.c.l.b16 %v6118
        %v6597 = vunpack.c.l.b16 %v6119
        %v6598 = vunpack.c.l.b16 %v6120
        %v6599 = vunpack.c.l.b16 %v6122
        %v6600 = vunpack.c.l.b16 %v6123
        %v6601 = vunpack.c.l.b16 %v6124
        %v6602 = vunpack.c.l.b16 %v6125
        %v6603 = vunpack.c.l.b16 %v6127
        %v6604 = vunpack.c.l.b16 %v6128
        %v6605 = vunpack.c.l.b16 %v6129
        %v6606 = vunpack.c.l.b16 %v6130
        %v6607 = vunpack.c.l.b16 %v6132
        %v6608 = vunpack.c.l.b16 %v6133
        %v6609 = vunpack.c.l.b16 %v6134
        %v6610 = vunpack.c.l.b16 %v6135
        %v6611 = vunpack.c.l.b16 %v6137
        %v6612 = vunpack.c.l.b16 %v6138
        %v6613 = vunpack.c.l.b16 %v6139
        %v6614 = vunpack.c.l.b16 %v6140
        %v6615 = vpack.c.b16 %v6584, %v6583
        %v6616 = vpack.c.b16 %v6586, %v6585
        %v6617 = vpack.c.b16 %v6588, %v6587
        %v6618 = vpack.c.b16 %v6590, %v6589
        %v6619 = vpack.c.b16 %v6592, %v6591
        %v6620 = vpack.c.b16 %v6594, %v6593
        %v6621 = vpack.c.b16 %v6596, %v6595
        %v6622 = vpack.c.b16 %v6598, %v6597
        %v6623 = vpack.c.b16 %v6600, %v6599
        %v6624 = vpack.c.b16 %v6602, %v6601
        %v6625 = vpack.c.b16 %v6604, %v6603
        %v6626 = vpack.c.b16 %v6606, %v6605
        %v6627 = vpack.c.b16 %v6608, %v6607
        %v6628 = vpack.c.b16 %v6610, %v6609
        %v6629 = vpack.c.b16 %v6612, %v6611
        %v6630 = vpack.c.b16 %v6614, %v6613
        %6631 = vrot.lane.b32.xlu0 %v6615, 9
        %v6632 = vpop.permute.xlu0 %6631
        %6633 = vrot.lane.b32.xlu0 %v6616, 9
        %v6634 = vpop.permute.xlu0 %6633
        %6635 = vrot.lane.b32.xlu0 %v6617, 9
        %v6636 = vpop.permute.xlu0 %6635
        %6637 = vrot.lane.b32.xlu0 %v6618, 9
        %v6638 = vpop.permute.xlu0 %6637
        %6639 = vrot.lane.b32.xlu0 %v6619, 9
        %v6640 = vpop.permute.xlu0 %6639
        %6641 = vrot.lane.b32.xlu0 %v6620, 9
        %v6642 = vpop.permute.xlu0 %6641
        %6643 = vrot.lane.b32.xlu0 %v6621, 9
        %v6644 = vpop.permute.xlu0 %6643
        %6645 = vrot.lane.b32.xlu0 %v6622, 9
        %v6646 = vpop.permute.xlu0 %6645
        %6647 = vrot.lane.b32.xlu0 %v6623, 9
        %v6648 = vpop.permute.xlu0 %6647
        %6649 = vrot.lane.b32.xlu0 %v6624, 9
        %v6650 = vpop.permute.xlu0 %6649
        %6651 = vrot.lane.b32.xlu0 %v6625, 9
        %v6652 = vpop.permute.xlu0 %6651
        %6653 = vrot.lane.b32.xlu0 %v6626, 9
        %v6654 = vpop.permute.xlu0 %6653
        %6655 = vrot.lane.b32.xlu0 %v6627, 9
        %v6656 = vpop.permute.xlu0 %6655
        %6657 = vrot.lane.b32.xlu0 %v6628, 9
        %v6658 = vpop.permute.xlu0 %6657
        %6659 = vrot.lane.b32.xlu0 %v6629, 9
        %v6660 = vpop.permute.xlu0 %6659
        %6661 = vrot.lane.b32.xlu0 %v6630, 9
        %v6662 = vpop.permute.xlu0 %6661
        %v6671 = vunpack.c.l.b16 %v6106
        %v6672 = vunpack.c.l.b16 %v6111
        %v6673 = vunpack.c.l.b16 %v6116
        %v6674 = vunpack.c.l.b16 %v6121
        %v6675 = vunpack.c.l.b16 %v6126
        %v6676 = vunpack.c.l.b16 %v6131
        %v6677 = vunpack.c.l.b16 %v6136
        %v6678 = vunpack.c.l.b16 %v6141
        %v6679 = vpack.c.b16 %v6671, %v6671
        %v6680 = vpack.c.b16 %v6672, %v6672
        %v6681 = vpack.c.b16 %v6673, %v6673
        %v6682 = vpack.c.b16 %v6674, %v6674
        %v6683 = vpack.c.b16 %v6675, %v6675
        %v6684 = vpack.c.b16 %v6676, %v6676
        %v6685 = vpack.c.b16 %v6677, %v6677
        %v6686 = vpack.c.b16 %v6678, %v6678
        %v6688 = vshrl.u32 %v6615, 16
        %v6690 = vshll.u32 %v6615, 16
        %v6692 = vrot.slane %v6690, 1
        %v6693 = vor.u32 %v6688, %v6692
        %v6695 = vshll.u32 %v6616, 16
        %v6697 = vrot.slane %v6695, 1
        %v6698 = vsel %vm2364, %v6693, %v6697
        %v6699 = vshrl.u32 %v6616, 16
        %v6701 = vor.u32 %v6699, %v6697
        %v6703 = vshll.u32 %v6679, 16
        %v6705 = vrot.slane %v6703, 1
        %v6706 = vsel %vm2364, %v6701, %v6705
        %v6708 = vshrl.u32 %v6617, 16
        %v6710 = vshll.u32 %v6617, 16
        %v6712 = vrot.slane %v6710, 1
        %v6713 = vor.u32 %v6708, %v6712
        %v6715 = vshll.u32 %v6618, 16
        %v6717 = vrot.slane %v6715, 1
        %v6718 = vsel %vm2364, %v6713, %v6717
        %v6719 = vshrl.u32 %v6618, 16
        %v6721 = vor.u32 %v6719, %v6717
        %v6723 = vshll.u32 %v6680, 16
        %v6725 = vrot.slane %v6723, 1
        %v6726 = vsel %vm2364, %v6721, %v6725
        %v6728 = vshrl.u32 %v6619, 16
        %v6730 = vshll.u32 %v6619, 16
        %v6732 = vrot.slane %v6730, 1
        %v6733 = vor.u32 %v6728, %v6732
        %v6735 = vshll.u32 %v6620, 16
        %v6737 = vrot.slane %v6735, 1
        %v6738 = vsel %vm2364, %v6733, %v6737
        %v6739 = vshrl.u32 %v6620, 16
        %v6741 = vor.u32 %v6739, %v6737
        %v6743 = vshll.u32 %v6681, 16
        %v6745 = vrot.slane %v6743, 1
        %v6746 = vsel %vm2364, %v6741, %v6745
        %v6748 = vshrl.u32 %v6621, 16
        %v6750 = vshll.u32 %v6621, 16
        %v6752 = vrot.slane %v6750, 1
        %v6753 = vor.u32 %v6748, %v6752
        %v6755 = vshll.u32 %v6622, 16
        %v6757 = vrot.slane %v6755, 1
        %v6758 = vsel %vm2364, %v6753, %v6757
        %v6759 = vshrl.u32 %v6622, 16
        %v6761 = vor.u32 %v6759, %v6757
        %v6763 = vshll.u32 %v6682, 16
        %v6765 = vrot.slane %v6763, 1
        %v6766 = vsel %vm2364, %v6761, %v6765
        %v6768 = vshrl.u32 %v6623, 16
        %v6770 = vshll.u32 %v6623, 16
        %v6772 = vrot.slane %v6770, 1
        %v6773 = vor.u32 %v6768, %v6772
        %v6775 = vshll.u32 %v6624, 16
        %v6777 = vrot.slane %v6775, 1
        %v6778 = vsel %vm2364, %v6773, %v6777
        %v6779 = vshrl.u32 %v6624, 16
        %v6781 = vor.u32 %v6779, %v6777
        %v6783 = vshll.u32 %v6683, 16
        %v6785 = vrot.slane %v6783, 1
        %v6786 = vsel %vm2364, %v6781, %v6785
        %v6788 = vshrl.u32 %v6625, 16
        %v6790 = vshll.u32 %v6625, 16
        %v6792 = vrot.slane %v6790, 1
        %v6793 = vor.u32 %v6788, %v6792
        %v6795 = vshll.u32 %v6626, 16
        %v6797 = vrot.slane %v6795, 1
        %v6798 = vsel %vm2364, %v6793, %v6797
        %v6799 = vshrl.u32 %v6626, 16
        %v6801 = vor.u32 %v6799, %v6797
        %v6803 = vshll.u32 %v6684, 16
        %v6805 = vrot.slane %v6803, 1
        %v6806 = vsel %vm2364, %v6801, %v6805
        %v6808 = vshrl.u32 %v6627, 16
        %v6810 = vshll.u32 %v6627, 16
        %v6812 = vrot.slane %v6810, 1
        %v6813 = vor.u32 %v6808, %v6812
        %v6815 = vshll.u32 %v6628, 16
        %v6817 = vrot.slane %v6815, 1
        %v6818 = vsel %vm2364, %v6813, %v6817
        %v6819 = vshrl.u32 %v6628, 16
        %v6821 = vor.u32 %v6819, %v6817
        %v6823 = vshll.u32 %v6685, 16
        %v6825 = vrot.slane %v6823, 1
        %v6826 = vsel %vm2364, %v6821, %v6825
        %v6828 = vshrl.u32 %v6629, 16
        %v6830 = vshll.u32 %v6629, 16
        %v6832 = vrot.slane %v6830, 1
        %v6833 = vor.u32 %v6828, %v6832
        %v6835 = vshll.u32 %v6630, 16
        %v6837 = vrot.slane %v6835, 1
        %v6838 = vsel %vm2364, %v6833, %v6837
        %v6839 = vshrl.u32 %v6630, 16
        %v6841 = vor.u32 %v6839, %v6837
        %v6843 = vshll.u32 %v6686, 16
        %v6845 = vrot.slane %v6843, 1
        %v6846 = vsel %vm2364, %v6841, %v6845
        %6847 = vrot.lane.b32.xlu0 %v6698, 12
        %v6848 = vpop.permute.xlu0 %6847
        %6849 = vrot.lane.b32.xlu0 %v6706, 12
        %v6850 = vpop.permute.xlu0 %6849
        %6851 = vrot.lane.b32.xlu0 %v6718, 12
        %v6852 = vpop.permute.xlu0 %6851
        %6853 = vrot.lane.b32.xlu0 %v6726, 12
        %v6854 = vpop.permute.xlu0 %6853
        %6855 = vrot.lane.b32.xlu0 %v6738, 12
        %v6856 = vpop.permute.xlu0 %6855
        %6857 = vrot.lane.b32.xlu0 %v6746, 12
        %v6858 = vpop.permute.xlu0 %6857
        %6859 = vrot.lane.b32.xlu0 %v6758, 12
        %v6860 = vpop.permute.xlu0 %6859
        %6861 = vrot.lane.b32.xlu0 %v6766, 12
        %v6862 = vpop.permute.xlu0 %6861
        %6863 = vrot.lane.b32.xlu0 %v6778, 12
        %v6864 = vpop.permute.xlu0 %6863
        %6865 = vrot.lane.b32.xlu0 %v6786, 12
        %v6866 = vpop.permute.xlu0 %6865
        %6867 = vrot.lane.b32.xlu0 %v6798, 12
        %v6868 = vpop.permute.xlu0 %6867
        %6869 = vrot.lane.b32.xlu0 %v6806, 12
        %v6870 = vpop.permute.xlu0 %6869
        %6871 = vrot.lane.b32.xlu0 %v6818, 12
        %v6872 = vpop.permute.xlu0 %6871
        %6873 = vrot.lane.b32.xlu0 %v6826, 12
        %v6874 = vpop.permute.xlu0 %6873
        %6875 = vrot.lane.b32.xlu0 %v6838, 12
        %v6876 = vpop.permute.xlu0 %6875
        %6877 = vrot.lane.b32.xlu0 %v6846, 12
        %v6878 = vpop.permute.xlu0 %6877
        %v6879 = vrot.slane %v6615, 1
        %v6880 = vrot.slane %v6616, 1
        %v6881 = vsel %vm2557, %v6879, %v6880
        %v6882 = vrot.slane %v6679, 1
        %v6883 = vsel %vm2557, %v6880, %v6882
        %v6884 = vrot.slane %v6617, 1
        %v6885 = vrot.slane %v6618, 1
        %v6886 = vsel %vm2557, %v6884, %v6885
        %v6887 = vrot.slane %v6680, 1
        %v6888 = vsel %vm2557, %v6885, %v6887
        %v6889 = vrot.slane %v6619, 1
        %v6890 = vrot.slane %v6620, 1
        %v6891 = vsel %vm2557, %v6889, %v6890
        %v6892 = vrot.slane %v6681, 1
        %v6893 = vsel %vm2557, %v6890, %v6892
        %v6894 = vrot.slane %v6621, 1
        %v6895 = vrot.slane %v6622, 1
        %v6896 = vsel %vm2557, %v6894, %v6895
        %v6897 = vrot.slane %v6682, 1
        %v6898 = vsel %vm2557, %v6895, %v6897
        %v6899 = vrot.slane %v6623, 1
        %v6900 = vrot.slane %v6624, 1
        %v6901 = vsel %vm2557, %v6899, %v6900
        %v6902 = vrot.slane %v6683, 1
        %v6903 = vsel %vm2557, %v6900, %v6902
        %v6904 = vrot.slane %v6625, 1
        %v6905 = vrot.slane %v6626, 1
        %v6906 = vsel %vm2557, %v6904, %v6905
        %v6907 = vrot.slane %v6684, 1
        %v6908 = vsel %vm2557, %v6905, %v6907
        %v6909 = vrot.slane %v6627, 1
        %v6910 = vrot.slane %v6628, 1
        %v6911 = vsel %vm2557, %v6909, %v6910
        %v6912 = vrot.slane %v6685, 1
        %v6913 = vsel %vm2557, %v6910, %v6912
        %v6914 = vrot.slane %v6629, 1
        %v6915 = vrot.slane %v6630, 1
        %v6916 = vsel %vm2557, %v6914, %v6915
        %v6917 = vrot.slane %v6686, 1
        %v6918 = vsel %vm2557, %v6915, %v6917
        %6919 = vrot.lane.b32.xlu0 %v6881, 15
        %v6920 = vpop.permute.xlu0 %6919
        %6921 = vrot.lane.b32.xlu0 %v6883, 15
        %v6922 = vpop.permute.xlu0 %6921
        %6923 = vrot.lane.b32.xlu0 %v6886, 15
        %v6924 = vpop.permute.xlu0 %6923
        %6925 = vrot.lane.b32.xlu0 %v6888, 15
        %v6926 = vpop.permute.xlu0 %6925
        %6927 = vrot.lane.b32.xlu0 %v6891, 15
        %v6928 = vpop.permute.xlu0 %6927
        %6929 = vrot.lane.b32.xlu0 %v6893, 15
        %v6930 = vpop.permute.xlu0 %6929
        %6931 = vrot.lane.b32.xlu0 %v6896, 15
        %v6932 = vpop.permute.xlu0 %6931
        %6933 = vrot.lane.b32.xlu0 %v6898, 15
        %v6934 = vpop.permute.xlu0 %6933
        %6935 = vrot.lane.b32.xlu0 %v6901, 15
        %v6936 = vpop.permute.xlu0 %6935
        %6937 = vrot.lane.b32.xlu0 %v6903, 15
        %v6938 = vpop.permute.xlu0 %6937
        %6939 = vrot.lane.b32.xlu0 %v6906, 15
        %v6940 = vpop.permute.xlu0 %6939
        %6941 = vrot.lane.b32.xlu0 %v6908, 15
        %v6942 = vpop.permute.xlu0 %6941
        %6943 = vrot.lane.b32.xlu0 %v6911, 15
        %v6944 = vpop.permute.xlu0 %6943
        %6945 = vrot.lane.b32.xlu0 %v6913, 15
        %v6946 = vpop.permute.xlu0 %6945
        %6947 = vrot.lane.b32.xlu0 %v6916, 15
        %v6948 = vpop.permute.xlu0 %6947
        %6949 = vrot.lane.b32.xlu0 %v6918, 15
        %v6950 = vpop.permute.xlu0 %6949
        %v6983 = vunpack.c.l.b16 %v6143
        %v6984 = vunpack.c.l.b16 %v6144
        %v6985 = vunpack.c.l.b16 %v6145
        %v6986 = vunpack.c.l.b16 %v6146
        %v6987 = vunpack.c.l.b16 %v6148
        %v6988 = vunpack.c.l.b16 %v6149
        %v6989 = vunpack.c.l.b16 %v6150
        %v6990 = vunpack.c.l.b16 %v6151
        %v6991 = vunpack.c.l.b16 %v6153
        %v6992 = vunpack.c.l.b16 %v6154
        %v6993 = vunpack.c.l.b16 %v6155
        %v6994 = vunpack.c.l.b16 %v6156
        %v6995 = vunpack.c.l.b16 %v6158
        %v6996 = vunpack.c.l.b16 %v6159
        %v6997 = vunpack.c.l.b16 %v6160
        %v6998 = vunpack.c.l.b16 %v6161
        %v6999 = vunpack.c.l.b16 %v6163
        %v7000 = vunpack.c.l.b16 %v6164
        %v7001 = vunpack.c.l.b16 %v6165
        %v7002 = vunpack.c.l.b16 %v6166
        %v7003 = vunpack.c.l.b16 %v6168
        %v7004 = vunpack.c.l.b16 %v6169
        %v7005 = vunpack.c.l.b16 %v6170
        %v7006 = vunpack.c.l.b16 %v6171
        %v7007 = vunpack.c.l.b16 %v6173
        %v7008 = vunpack.c.l.b16 %v6174
        %v7009 = vunpack.c.l.b16 %v6175
        %v7010 = vunpack.c.l.b16 %v6176
        %v7011 = vunpack.c.l.b16 %v6178
        %v7012 = vunpack.c.l.b16 %v6179
        %v7013 = vunpack.c.l.b16 %v6180
        %v7014 = vunpack.c.l.b16 %v6181
        %v7015 = vpack.c.b16 %v6984, %v6983
        %v7016 = vpack.c.b16 %v6986, %v6985
        %v7017 = vpack.c.b16 %v6988, %v6987
        %v7018 = vpack.c.b16 %v6990, %v6989
        %v7019 = vpack.c.b16 %v6992, %v6991
        %v7020 = vpack.c.b16 %v6994, %v6993
        %v7021 = vpack.c.b16 %v6996, %v6995
        %v7022 = vpack.c.b16 %v6998, %v6997
        %v7023 = vpack.c.b16 %v7000, %v6999
        %v7024 = vpack.c.b16 %v7002, %v7001
        %v7025 = vpack.c.b16 %v7004, %v7003
        %v7026 = vpack.c.b16 %v7006, %v7005
        %v7027 = vpack.c.b16 %v7008, %v7007
        %v7028 = vpack.c.b16 %v7010, %v7009
        %v7029 = vpack.c.b16 %v7012, %v7011
        %v7030 = vpack.c.b16 %v7014, %v7013
        %7031 = vrot.lane.b32.xlu0 %v7015, 18
        %v7032 = vpop.permute.xlu0 %7031
        %7033 = vrot.lane.b32.xlu0 %v7016, 18
        %v7034 = vpop.permute.xlu0 %7033
        %7035 = vrot.lane.b32.xlu0 %v7017, 18
        %v7036 = vpop.permute.xlu0 %7035
        %7037 = vrot.lane.b32.xlu0 %v7018, 18
        %v7038 = vpop.permute.xlu0 %7037
        %7039 = vrot.lane.b32.xlu0 %v7019, 18
        %v7040 = vpop.permute.xlu0 %7039
        %7041 = vrot.lane.b32.xlu0 %v7020, 18
        %v7042 = vpop.permute.xlu0 %7041
        %7043 = vrot.lane.b32.xlu0 %v7021, 18
        %v7044 = vpop.permute.xlu0 %7043
        %7045 = vrot.lane.b32.xlu0 %v7022, 18
        %v7046 = vpop.permute.xlu0 %7045
        %7047 = vrot.lane.b32.xlu0 %v7023, 18
        %v7048 = vpop.permute.xlu0 %7047
        %7049 = vrot.lane.b32.xlu0 %v7024, 18
        %v7050 = vpop.permute.xlu0 %7049
        %7051 = vrot.lane.b32.xlu0 %v7025, 18
        %v7052 = vpop.permute.xlu0 %7051
        %7053 = vrot.lane.b32.xlu0 %v7026, 18
        %v7054 = vpop.permute.xlu0 %7053
        %7055 = vrot.lane.b32.xlu0 %v7027, 18
        %v7056 = vpop.permute.xlu0 %7055
        %7057 = vrot.lane.b32.xlu0 %v7028, 18
        %v7058 = vpop.permute.xlu0 %7057
        %7059 = vrot.lane.b32.xlu0 %v7029, 18
        %v7060 = vpop.permute.xlu0 %7059
        %7061 = vrot.lane.b32.xlu0 %v7030, 18
        %v7062 = vpop.permute.xlu0 %7061
        %v7071 = vunpack.c.l.b16 %v6147
        %v7072 = vunpack.c.l.b16 %v6152
        %v7073 = vunpack.c.l.b16 %v6157
        %v7074 = vunpack.c.l.b16 %v6162
        %v7075 = vunpack.c.l.b16 %v6167
        %v7076 = vunpack.c.l.b16 %v6172
        %v7077 = vunpack.c.l.b16 %v6177
        %v7078 = vunpack.c.l.b16 %v6182
        %v7079 = vpack.c.b16 %v7071, %v7071
        %v7080 = vpack.c.b16 %v7072, %v7072
        %v7081 = vpack.c.b16 %v7073, %v7073
        %v7082 = vpack.c.b16 %v7074, %v7074
        %v7083 = vpack.c.b16 %v7075, %v7075
        %v7084 = vpack.c.b16 %v7076, %v7076
        %v7085 = vpack.c.b16 %v7077, %v7077
        %v7086 = vpack.c.b16 %v7078, %v7078
        %v7088 = vshrl.u32 %v7015, 16
        %v7090 = vshll.u32 %v7015, 16
        %v7092 = vrot.slane %v7090, 1
        %v7093 = vor.u32 %v7088, %v7092
        %v7095 = vshll.u32 %v7016, 16
        %v7097 = vrot.slane %v7095, 1
        %v7098 = vsel %vm2364, %v7093, %v7097
        %v7099 = vshrl.u32 %v7016, 16
        %v7101 = vor.u32 %v7099, %v7097
        %v7103 = vshll.u32 %v7079, 16
        %v7105 = vrot.slane %v7103, 1
        %v7106 = vsel %vm2364, %v7101, %v7105
        %v7108 = vshrl.u32 %v7017, 16
        %v7110 = vshll.u32 %v7017, 16
        %v7112 = vrot.slane %v7110, 1
        %v7113 = vor.u32 %v7108, %v7112
        %v7115 = vshll.u32 %v7018, 16
        %v7117 = vrot.slane %v7115, 1
        %v7118 = vsel %vm2364, %v7113, %v7117
        %v7119 = vshrl.u32 %v7018, 16
        %v7121 = vor.u32 %v7119, %v7117
        %v7123 = vshll.u32 %v7080, 16
        %v7125 = vrot.slane %v7123, 1
        %v7126 = vsel %vm2364, %v7121, %v7125
        %v7128 = vshrl.u32 %v7019, 16
        %v7130 = vshll.u32 %v7019, 16
        %v7132 = vrot.slane %v7130, 1
        %v7133 = vor.u32 %v7128, %v7132
        %v7135 = vshll.u32 %v7020, 16
        %v7137 = vrot.slane %v7135, 1
        %v7138 = vsel %vm2364, %v7133, %v7137
        %v7139 = vshrl.u32 %v7020, 16
        %v7141 = vor.u32 %v7139, %v7137
        %v7143 = vshll.u32 %v7081, 16
        %v7145 = vrot.slane %v7143, 1
        %v7146 = vsel %vm2364, %v7141, %v7145
        %v7148 = vshrl.u32 %v7021, 16
        %v7150 = vshll.u32 %v7021, 16
        %v7152 = vrot.slane %v7150, 1
        %v7153 = vor.u32 %v7148, %v7152
        %v7155 = vshll.u32 %v7022, 16
        %v7157 = vrot.slane %v7155, 1
        %v7158 = vsel %vm2364, %v7153, %v7157
        %v7159 = vshrl.u32 %v7022, 16
        %v7161 = vor.u32 %v7159, %v7157
        %v7163 = vshll.u32 %v7082, 16
        %v7165 = vrot.slane %v7163, 1
        %v7166 = vsel %vm2364, %v7161, %v7165
        %v7168 = vshrl.u32 %v7023, 16
        %v7170 = vshll.u32 %v7023, 16
        %v7172 = vrot.slane %v7170, 1
        %v7173 = vor.u32 %v7168, %v7172
        %v7175 = vshll.u32 %v7024, 16
        %v7177 = vrot.slane %v7175, 1
        %v7178 = vsel %vm2364, %v7173, %v7177
        %v7179 = vshrl.u32 %v7024, 16
        %v7181 = vor.u32 %v7179, %v7177
        %v7183 = vshll.u32 %v7083, 16
        %v7185 = vrot.slane %v7183, 1
        %v7186 = vsel %vm2364, %v7181, %v7185
        %v7188 = vshrl.u32 %v7025, 16
        %v7190 = vshll.u32 %v7025, 16
        %v7192 = vrot.slane %v7190, 1
        %v7193 = vor.u32 %v7188, %v7192
        %v7195 = vshll.u32 %v7026, 16
        %v7197 = vrot.slane %v7195, 1
        %v7198 = vsel %vm2364, %v7193, %v7197
        %v7199 = vshrl.u32 %v7026, 16
        %v7201 = vor.u32 %v7199, %v7197
        %v7203 = vshll.u32 %v7084, 16
        %v7205 = vrot.slane %v7203, 1
        %v7206 = vsel %vm2364, %v7201, %v7205
        %v7208 = vshrl.u32 %v7027, 16
        %v7210 = vshll.u32 %v7027, 16
        %v7212 = vrot.slane %v7210, 1
        %v7213 = vor.u32 %v7208, %v7212
        %v7215 = vshll.u32 %v7028, 16
        %v7217 = vrot.slane %v7215, 1
        %v7218 = vsel %vm2364, %v7213, %v7217
        %v7219 = vshrl.u32 %v7028, 16
        %v7221 = vor.u32 %v7219, %v7217
        %v7223 = vshll.u32 %v7085, 16
        %v7225 = vrot.slane %v7223, 1
        %v7226 = vsel %vm2364, %v7221, %v7225
        %v7228 = vshrl.u32 %v7029, 16
        %v7230 = vshll.u32 %v7029, 16
        %v7232 = vrot.slane %v7230, 1
        %v7233 = vor.u32 %v7228, %v7232
        %v7235 = vshll.u32 %v7030, 16
        %v7237 = vrot.slane %v7235, 1
        %v7238 = vsel %vm2364, %v7233, %v7237
        %v7239 = vshrl.u32 %v7030, 16
        %v7241 = vor.u32 %v7239, %v7237
        %v7243 = vshll.u32 %v7086, 16
        %v7245 = vrot.slane %v7243, 1
        %v7246 = vsel %vm2364, %v7241, %v7245
        %7247 = vrot.lane.b32.xlu0 %v7098, 21
        %v7248 = vpop.permute.xlu0 %7247
        %7249 = vrot.lane.b32.xlu0 %v7106, 21
        %v7250 = vpop.permute.xlu0 %7249
        %7251 = vrot.lane.b32.xlu0 %v7118, 21
        %v7252 = vpop.permute.xlu0 %7251
        %7253 = vrot.lane.b32.xlu0 %v7126, 21
        %v7254 = vpop.permute.xlu0 %7253
        %7255 = vrot.lane.b32.xlu0 %v7138, 21
        %v7256 = vpop.permute.xlu0 %7255
        %7257 = vrot.lane.b32.xlu0 %v7146, 21
        %v7258 = vpop.permute.xlu0 %7257
        %7259 = vrot.lane.b32.xlu0 %v7158, 21
        %v7260 = vpop.permute.xlu0 %7259
        %7261 = vrot.lane.b32.xlu0 %v7166, 21
        %v7262 = vpop.permute.xlu0 %7261
        %7263 = vrot.lane.b32.xlu0 %v7178, 21
        %v7264 = vpop.permute.xlu0 %7263
        %7265 = vrot.lane.b32.xlu0 %v7186, 21
        %v7266 = vpop.permute.xlu0 %7265
        %7267 = vrot.lane.b32.xlu0 %v7198, 21
        %v7268 = vpop.permute.xlu0 %7267
        %7269 = vrot.lane.b32.xlu0 %v7206, 21
        %v7270 = vpop.permute.xlu0 %7269
        %7271 = vrot.lane.b32.xlu0 %v7218, 21
        %v7272 = vpop.permute.xlu0 %7271
        %7273 = vrot.lane.b32.xlu0 %v7226, 21
        %v7274 = vpop.permute.xlu0 %7273
        %7275 = vrot.lane.b32.xlu0 %v7238, 21
        %v7276 = vpop.permute.xlu0 %7275
        %7277 = vrot.lane.b32.xlu0 %v7246, 21
        %v7278 = vpop.permute.xlu0 %7277
        %v7279 = vrot.slane %v7015, 1
        %v7280 = vrot.slane %v7016, 1
        %v7281 = vsel %vm2557, %v7279, %v7280
        %v7282 = vrot.slane %v7079, 1
        %v7283 = vsel %vm2557, %v7280, %v7282
        %v7284 = vrot.slane %v7017, 1
        %v7285 = vrot.slane %v7018, 1
        %v7286 = vsel %vm2557, %v7284, %v7285
        %v7287 = vrot.slane %v7080, 1
        %v7288 = vsel %vm2557, %v7285, %v7287
        %v7289 = vrot.slane %v7019, 1
        %v7290 = vrot.slane %v7020, 1
        %v7291 = vsel %vm2557, %v7289, %v7290
        %v7292 = vrot.slane %v7081, 1
        %v7293 = vsel %vm2557, %v7290, %v7292
        %v7294 = vrot.slane %v7021, 1
        %v7295 = vrot.slane %v7022, 1
        %v7296 = vsel %vm2557, %v7294, %v7295
        %v7297 = vrot.slane %v7082, 1
        %v7298 = vsel %vm2557, %v7295, %v7297
        %v7299 = vrot.slane %v7023, 1
        %v7300 = vrot.slane %v7024, 1
        %v7301 = vsel %vm2557, %v7299, %v7300
        %v7302 = vrot.slane %v7083, 1
        %v7303 = vsel %vm2557, %v7300, %v7302
        %v7304 = vrot.slane %v7025, 1
        %v7305 = vrot.slane %v7026, 1
        %v7306 = vsel %vm2557, %v7304, %v7305
        %v7307 = vrot.slane %v7084, 1
        %v7308 = vsel %vm2557, %v7305, %v7307
        %v7309 = vrot.slane %v7027, 1
        %v7310 = vrot.slane %v7028, 1
        %v7311 = vsel %vm2557, %v7309, %v7310
        %v7312 = vrot.slane %v7085, 1
        %v7313 = vsel %vm2557, %v7310, %v7312
        %v7314 = vrot.slane %v7029, 1
        %v7315 = vrot.slane %v7030, 1
        %v7316 = vsel %vm2557, %v7314, %v7315
        %v7317 = vrot.slane %v7086, 1
        %v7318 = vsel %vm2557, %v7315, %v7317
        %7319 = vrot.lane.b32.xlu0 %v7281, 24
        %v7320 = vpop.permute.xlu0 %7319
        %7321 = vrot.lane.b32.xlu0 %v7283, 24
        %v7322 = vpop.permute.xlu0 %7321
        %7323 = vrot.lane.b32.xlu0 %v7286, 24
        %v7324 = vpop.permute.xlu0 %7323
        %7325 = vrot.lane.b32.xlu0 %v7288, 24
        %v7326 = vpop.permute.xlu0 %7325
        %7327 = vrot.lane.b32.xlu0 %v7291, 24
        %v7328 = vpop.permute.xlu0 %7327
        %7329 = vrot.lane.b32.xlu0 %v7293, 24
        %v7330 = vpop.permute.xlu0 %7329
        %7331 = vrot.lane.b32.xlu0 %v7296, 24
        %v7332 = vpop.permute.xlu0 %7331
        %7333 = vrot.lane.b32.xlu0 %v7298, 24
        %v7334 = vpop.permute.xlu0 %7333
        %7335 = vrot.lane.b32.xlu0 %v7301, 24
        %v7336 = vpop.permute.xlu0 %7335
        %7337 = vrot.lane.b32.xlu0 %v7303, 24
        %v7338 = vpop.permute.xlu0 %7337
        %7339 = vrot.lane.b32.xlu0 %v7306, 24
        %v7340 = vpop.permute.xlu0 %7339
        %7341 = vrot.lane.b32.xlu0 %v7308, 24
        %v7342 = vpop.permute.xlu0 %7341
        %7343 = vrot.lane.b32.xlu0 %v7311, 24
        %v7344 = vpop.permute.xlu0 %7343
        %7345 = vrot.lane.b32.xlu0 %v7313, 24
        %v7346 = vpop.permute.xlu0 %7345
        %7347 = vrot.lane.b32.xlu0 %v7316, 24
        %v7348 = vpop.permute.xlu0 %7347
        %7349 = vrot.lane.b32.xlu0 %v7318, 24
        %v7350 = vpop.permute.xlu0 %7349
        %v7352 = vsel %vm3430, %v6247, %v6448
        %v7354 = vsel %vm3430, %v6248, %v6450
        %v7356 = vsel %vm3430, %v6249, %v6452
        %v7358 = vsel %vm3430, %v6250, %v6454
        %v7360 = vsel %vm3430, %v6251, %v6456
        %v7362 = vsel %vm3430, %v6252, %v6458
        %v7364 = vsel %vm3430, %v6253, %v6460
        %v7366 = vsel %vm3430, %v6254, %v6462
        %v7368 = vsel %vm3430, %v6255, %v6464
        %v7370 = vsel %vm3430, %v6256, %v6466
        %v7372 = vsel %vm3430, %v6257, %v6468
        %v7374 = vsel %vm3430, %v6258, %v6470
        %v7376 = vsel %vm3430, %v6259, %v6472
        %v7378 = vsel %vm3430, %v6260, %v6474
        %v7380 = vsel %vm3430, %v6261, %v6476
        %v7382 = vsel %vm3430, %v6262, %v6478
        %v7384 = vsel %vm3463, %v7352, %v6520
        %v7386 = vsel %vm3463, %v7354, %v6522
        %v7388 = vsel %vm3463, %v7356, %v6524
        %v7390 = vsel %vm3463, %v7358, %v6526
        %v7392 = vsel %vm3463, %v7360, %v6528
        %v7394 = vsel %vm3463, %v7362, %v6530
        %v7396 = vsel %vm3463, %v7364, %v6532
        %v7398 = vsel %vm3463, %v7366, %v6534
        %v7400 = vsel %vm3463, %v7368, %v6536
        %v7402 = vsel %vm3463, %v7370, %v6538
        %v7404 = vsel %vm3463, %v7372, %v6540
        %v7406 = vsel %vm3463, %v7374, %v6542
        %v7408 = vsel %vm3463, %v7376, %v6544
        %v7410 = vsel %vm3463, %v7378, %v6546
        %v7412 = vsel %vm3463, %v7380, %v6548
        %v7414 = vsel %vm3463, %v7382, %v6550
        %v7416 = vsel %vm3496, %v7384, %v6632
        %v7418 = vsel %vm3496, %v7386, %v6634
        %v7420 = vsel %vm3496, %v7388, %v6636
        %v7422 = vsel %vm3496, %v7390, %v6638
        %v7424 = vsel %vm3496, %v7392, %v6640
        %v7426 = vsel %vm3496, %v7394, %v6642
        %v7428 = vsel %vm3496, %v7396, %v6644
        %v7430 = vsel %vm3496, %v7398, %v6646
        %v7432 = vsel %vm3496, %v7400, %v6648
        %v7434 = vsel %vm3496, %v7402, %v6650
        %v7436 = vsel %vm3496, %v7404, %v6652
        %v7438 = vsel %vm3496, %v7406, %v6654
        %v7440 = vsel %vm3496, %v7408, %v6656
        %v7442 = vsel %vm3496, %v7410, %v6658
        %v7444 = vsel %vm3496, %v7412, %v6660
        %v7446 = vsel %vm3496, %v7414, %v6662
        %v7448 = vsel %vm3529, %v7416, %v6848
        %v7450 = vsel %vm3529, %v7418, %v6850
        %v7452 = vsel %vm3529, %v7420, %v6852
        %v7454 = vsel %vm3529, %v7422, %v6854
        %v7456 = vsel %vm3529, %v7424, %v6856
        %v7458 = vsel %vm3529, %v7426, %v6858
        %v7460 = vsel %vm3529, %v7428, %v6860
        %v7462 = vsel %vm3529, %v7430, %v6862
        %v7464 = vsel %vm3529, %v7432, %v6864
        %v7466 = vsel %vm3529, %v7434, %v6866
        %v7468 = vsel %vm3529, %v7436, %v6868
        %v7470 = vsel %vm3529, %v7438, %v6870
        %v7472 = vsel %vm3529, %v7440, %v6872
        %v7474 = vsel %vm3529, %v7442, %v6874
        %v7476 = vsel %vm3529, %v7444, %v6876
        %v7478 = vsel %vm3529, %v7446, %v6878
        %v7480 = vsel %vm3562, %v7448, %v6920
        %v7482 = vsel %vm3562, %v7450, %v6922
        %v7484 = vsel %vm3562, %v7452, %v6924
        %v7486 = vsel %vm3562, %v7454, %v6926
        %v7488 = vsel %vm3562, %v7456, %v6928
        %v7490 = vsel %vm3562, %v7458, %v6930
        %v7492 = vsel %vm3562, %v7460, %v6932
        %v7494 = vsel %vm3562, %v7462, %v6934
        %v7496 = vsel %vm3562, %v7464, %v6936
        %v7498 = vsel %vm3562, %v7466, %v6938
        %v7500 = vsel %vm3562, %v7468, %v6940
        %v7502 = vsel %vm3562, %v7470, %v6942
        %v7504 = vsel %vm3562, %v7472, %v6944
        %v7506 = vsel %vm3562, %v7474, %v6946
        %v7508 = vsel %vm3562, %v7476, %v6948
        %v7510 = vsel %vm3562, %v7478, %v6950
        %v7512 = vsel %vm3595, %v7480, %v7032
        %v7514 = vsel %vm3595, %v7482, %v7034
        %v7516 = vsel %vm3595, %v7484, %v7036
        %v7518 = vsel %vm3595, %v7486, %v7038
        %v7520 = vsel %vm3595, %v7488, %v7040
        %v7522 = vsel %vm3595, %v7490, %v7042
        %v7524 = vsel %vm3595, %v7492, %v7044
        %v7526 = vsel %vm3595, %v7494, %v7046
        %v7528 = vsel %vm3595, %v7496, %v7048
        %v7530 = vsel %vm3595, %v7498, %v7050
        %v7532 = vsel %vm3595, %v7500, %v7052
        %v7534 = vsel %vm3595, %v7502, %v7054
        %v7536 = vsel %vm3595, %v7504, %v7056
        %v7538 = vsel %vm3595, %v7506, %v7058
        %v7540 = vsel %vm3595, %v7508, %v7060
        %v7542 = vsel %vm3595, %v7510, %v7062
        %v7544 = vsel %vm3628, %v7512, %v7248
        %v7546 = vsel %vm3628, %v7514, %v7250
        %v7548 = vsel %vm3628, %v7516, %v7252
        %v7550 = vsel %vm3628, %v7518, %v7254
        %v7552 = vsel %vm3628, %v7520, %v7256
        %v7554 = vsel %vm3628, %v7522, %v7258
        %v7556 = vsel %vm3628, %v7524, %v7260
        %v7558 = vsel %vm3628, %v7526, %v7262
        %v7560 = vsel %vm3628, %v7528, %v7264
        %v7562 = vsel %vm3628, %v7530, %v7266
        %v7564 = vsel %vm3628, %v7532, %v7268
        %v7566 = vsel %vm3628, %v7534, %v7270
        %v7568 = vsel %vm3628, %v7536, %v7272
        %v7570 = vsel %vm3628, %v7538, %v7274
        %v7572 = vsel %vm3628, %v7540, %v7276
        %v7574 = vsel %vm3628, %v7542, %v7278
        %v7576 = vsel %vm3661, %v7544, %v7320
        %v7578 = vsel %vm3661, %v7546, %v7322
        %v7580 = vsel %vm3661, %v7548, %v7324
        %v7582 = vsel %vm3661, %v7550, %v7326
        %v7584 = vsel %vm3661, %v7552, %v7328
        %v7586 = vsel %vm3661, %v7554, %v7330
        %v7588 = vsel %vm3661, %v7556, %v7332
        %v7590 = vsel %vm3661, %v7558, %v7334
        %v7592 = vsel %vm3661, %v7560, %v7336
        %v7594 = vsel %vm3661, %v7562, %v7338
        %v7596 = vsel %vm3661, %v7564, %v7340
        %v7598 = vsel %vm3661, %v7566, %v7342
        %v7600 = vsel %vm3661, %v7568, %v7344
        %v7602 = vsel %vm3661, %v7570, %v7346
        %v7604 = vsel %vm3661, %v7572, %v7348
        %v7606 = vsel %vm3661, %v7574, %v7350
        %v7607 = vld [vmem:[%s210] sm:$0xf]
        %v7608 = vld [vmem:[%s210 + $0x4] sm:$0xf]
        %v7609 = vld [vmem:[%s210 + $0x8] sm:$0xf]
        %v7610 = vld [vmem:[%s210 + $0xc] sm:$0x3]
        %v7615 = vunpack.c.l.b16 %v7607
        %v7616 = vunpack.c.l.b16 %v7608
        %v7617 = vunpack.c.l.b16 %v7609
        %v7618 = vunpack.c.l.b16 %v7610
        %v7619 = vpack.c.b16 %v7616, %v7615
        %v7620 = vpack.c.b16 %v7618, %v7617
        %v7622 = vsel %vm3715, %v7576, 0
        %v7624 = vsel %vm3715, %v7578, 0
        %v7626 = vsel %vm3715, %v7580, 0
        %v7628 = vsel %vm3715, %v7582, 0
        %v7630 = vsel %vm3715, %v7584, 0
        %v7632 = vsel %vm3715, %v7586, 0
        %v7634 = vsel %vm3715, %v7588, 0
        %v7636 = vsel %vm3715, %v7590, 0
        %v7638 = vsel %vm3715, %v7592, 0
        %v7640 = vsel %vm3715, %v7594, 0
        %v7642 = vsel %vm3715, %v7596, 0
        %v7644 = vsel %vm3715, %v7598, 0
        %v7646 = vsel %vm3715, %v7600, 0
        %v7648 = vsel %vm3715, %v7602, 0
        %v7650 = vsel %vm3715, %v7604, 0
        %v7652 = vsel %vm3715, %v7606, 0
        %v7655 = vand.u32 %v7620, %v3751
        %7657 = vmatprep.subr.bf16.mxu0 0
        %7658 = vmatpush1.bf16.msra.mxu0 0
        %7659 = vmatprep.subr.bf16.mxu0 0
        %7660 = vmatpush1.bf16.msra.mxu0 0
        %7661 = vmatprep.subr.bf16.mxu0 0
        %7662 = vmatpush1.bf16.msra.mxu0 0
        %7663 = vmatprep.subr.bf16.mxu0 0
        %7664 = vmatpush1.bf16.msra.mxu0 0
        %7665 = vmatprep.subr.bf16.mxu0 0
        %7666 = vmatpush1.bf16.msra.mxu0 0
        %7667 = vmatprep.subr.bf16.mxu0 0
        %7668 = vmatpush1.bf16.msra.mxu0 0
        %7669 = vmatprep.subr.bf16.mxu0 0
        %7670 = vmatpush1.bf16.msra.mxu0 %v7655
        %7671 = vmatprep.subr.bf16.mxu0 0
        %7672 = vmatpush1.bf16.msra.mxu0 %v7619
        %7673 = vmatprep.subr.bf16.mxu0 0
        %7674 = vmatpush2.bf16.msra.mxu0 0
        %7675 = vmatprep.subr.bf16.mxu0 0
        %7676 = vmatpush2.bf16.msra.mxu0 0
        %7677 = vmatprep.subr.bf16.mxu0 0
        %7678 = vmatpush2.bf16.msra.mxu0 0
        %7679 = vmatprep.subr.bf16.mxu0 0
        %7680 = vmatpush2.bf16.msra.mxu0 0
        %7681 = vmatprep.subr.bf16.mxu0 0
        %7682 = vmatpush2.bf16.msra.mxu0 0
        %7683 = vmatprep.subr.bf16.mxu0 0
        %7684 = vmatpush2.bf16.msra.mxu0 0
        %7685 = vmatprep.subr.bf16.mxu0 0
        %7686 = vmatpush2.bf16.msra.mxu0 0
        %7687 = vmatprep.subr.bf16.mxu0 0
        %7688 = vmatpush2.bf16.msra.mxu0 0
        %7689 = vmatprep.mubr.bf16.mxu0 0
        %7690 = vmatmul.mubr.bf16.gmra.mxu0 %v7622
        %v7691 = vpop.f32.mrf.mxu0
        %v7692 = vadd.f32 %v3702, %v7691
        %v7693 = vpop.f32.mrf.mxu0
        %v7694 = vpop.f32.mrf.mxu0
        %v7695 = vadd.f32 %v3702, %v7694
        %v7696 = vpop.f32.mrf.mxu0
        %7697 = vmatprep.mubr.bf16.mxu0 0
        %7698 = vmatmul.mubr.bf16.gmra.mxu0 %v7624
        %v7699 = vpop.f32.mrf.mxu0
        %v7700 = vadd.f32 %v3702, %v7699
        %v7701 = vpop.f32.mrf.mxu0
        %v7702 = vpop.f32.mrf.mxu0
        %v7703 = vadd.f32 %v3702, %v7702
        %v7704 = vpop.f32.mrf.mxu0
        %7705 = vmatprep.mubr.bf16.mxu0 0
        %7706 = vmatmul.mubr.bf16.gmra.mxu0 %v7626
        %v7707 = vpop.f32.mrf.mxu0
        %v7708 = vadd.f32 %v3702, %v7707
        %v7709 = vpop.f32.mrf.mxu0
        %v7710 = vpop.f32.mrf.mxu0
        %v7711 = vadd.f32 %v3702, %v7710
        %v7712 = vpop.f32.mrf.mxu0
        %7713 = vmatprep.mubr.bf16.mxu0 0
        %7714 = vmatmul.mubr.bf16.gmra.mxu0 %v7628
        %v7715 = vpop.f32.mrf.mxu0
        %v7716 = vadd.f32 %v3702, %v7715
        %v7717 = vpop.f32.mrf.mxu0
        %v7718 = vpop.f32.mrf.mxu0
        %v7719 = vadd.f32 %v3702, %v7718
        %v7720 = vpop.f32.mrf.mxu0
        %7721 = vmatprep.mubr.bf16.mxu0 0
        %7722 = vmatmul.mubr.bf16.gmra.mxu0 %v7630
        %v7723 = vpop.f32.mrf.mxu0
        %v7724 = vadd.f32 %v3702, %v7723
        %v7725 = vpop.f32.mrf.mxu0
        %v7726 = vpop.f32.mrf.mxu0
        %v7727 = vadd.f32 %v3702, %v7726
        %v7728 = vpop.f32.mrf.mxu0
        %7729 = vmatprep.mubr.bf16.mxu0 0
        %7730 = vmatmul.mubr.bf16.gmra.mxu0 %v7632
        %v7731 = vpop.f32.mrf.mxu0
        %v7732 = vadd.f32 %v3702, %v7731
        %v7733 = vpop.f32.mrf.mxu0
        %v7734 = vpop.f32.mrf.mxu0
        %v7735 = vadd.f32 %v3702, %v7734
        %v7736 = vpop.f32.mrf.mxu0
        %7737 = vmatprep.mubr.bf16.mxu0 0
        %7738 = vmatmul.mubr.bf16.gmra.mxu0 %v7634
        %v7739 = vpop.f32.mrf.mxu0
        %v7740 = vadd.f32 %v3702, %v7739
        %v7741 = vpop.f32.mrf.mxu0
        %v7742 = vpop.f32.mrf.mxu0
        %v7743 = vadd.f32 %v3702, %v7742
        %v7744 = vpop.f32.mrf.mxu0
        %7745 = vmatprep.mubr.bf16.mxu0 0
        %7746 = vmatmul.mubr.bf16.gmra.mxu0 %v7636
        %v7747 = vpop.f32.mrf.mxu0
        %v7748 = vadd.f32 %v3702, %v7747
        %v7749 = vpop.f32.mrf.mxu0
        %v7750 = vpop.f32.mrf.mxu0
        %v7751 = vadd.f32 %v3702, %v7750
        %v7752 = vpop.f32.mrf.mxu0
        %7753 = vmatprep.mubr.bf16.mxu0 0
        %7754 = vmatmul.mubr.bf16.gmra.mxu0 %v7638
        %v7755 = vpop.f32.mrf.mxu0
        %v7756 = vadd.f32 %v3702, %v7755
        %v7757 = vpop.f32.mrf.mxu0
        %v7758 = vpop.f32.mrf.mxu0
        %v7759 = vadd.f32 %v3702, %v7758
        %v7760 = vpop.f32.mrf.mxu0
        %7761 = vmatprep.mubr.bf16.mxu0 0
        %7762 = vmatmul.mubr.bf16.gmra.mxu0 %v7640
        %v7763 = vpop.f32.mrf.mxu0
        %v7764 = vadd.f32 %v3702, %v7763
        %v7765 = vpop.f32.mrf.mxu0
        %v7766 = vpop.f32.mrf.mxu0
        %v7767 = vadd.f32 %v3702, %v7766
        %v7768 = vpop.f32.mrf.mxu0
        %7769 = vmatprep.mubr.bf16.mxu0 0
        %7770 = vmatmul.mubr.bf16.gmra.mxu0 %v7642
        %v7771 = vpop.f32.mrf.mxu0
        %v7772 = vadd.f32 %v3702, %v7771
        %v7773 = vpop.f32.mrf.mxu0
        %v7774 = vpop.f32.mrf.mxu0
        %v7775 = vadd.f32 %v3702, %v7774
        %v7776 = vpop.f32.mrf.mxu0
        %7777 = vmatprep.mubr.bf16.mxu0 0
        %7778 = vmatmul.mubr.bf16.gmra.mxu0 %v7644
        %v7779 = vpop.f32.mrf.mxu0
        %v7780 = vadd.f32 %v3702, %v7779
        %v7781 = vpop.f32.mrf.mxu0
        %v7782 = vpop.f32.mrf.mxu0
        %v7783 = vadd.f32 %v3702, %v7782
        %v7784 = vpop.f32.mrf.mxu0
        %7785 = vmatprep.mubr.bf16.mxu0 0
        %7786 = vmatmul.mubr.bf16.gmra.mxu0 %v7646
        %v7787 = vpop.f32.mrf.mxu0
        %v7788 = vadd.f32 %v3702, %v7787
        %v7789 = vpop.f32.mrf.mxu0
        %v7790 = vpop.f32.mrf.mxu0
        %v7791 = vadd.f32 %v3702, %v7790
        %v7792 = vpop.f32.mrf.mxu0
        %7793 = vmatprep.mubr.bf16.mxu0 0
        %7794 = vmatmul.mubr.bf16.gmra.mxu0 %v7648
        %v7795 = vpop.f32.mrf.mxu0
        %v7796 = vadd.f32 %v3702, %v7795
        %v7797 = vpop.f32.mrf.mxu0
        %v7798 = vpop.f32.mrf.mxu0
        %v7799 = vadd.f32 %v3702, %v7798
        %v7800 = vpop.f32.mrf.mxu0
        %7801 = vmatprep.mubr.bf16.mxu0 0
        %7802 = vmatmul.mubr.bf16.gmra.mxu0 %v7650
        %v7803 = vpop.f32.mrf.mxu0
        %v7804 = vadd.f32 %v3702, %v7803
        %v7805 = vpop.f32.mrf.mxu0
        %v7806 = vpop.f32.mrf.mxu0
        %v7807 = vadd.f32 %v3702, %v7806
        %v7808 = vpop.f32.mrf.mxu0
        %7809 = vmatprep.mubr.bf16.mxu0 0
        %7810 = vmatmul.mubr.bf16.gmra.mxu0 %v7652
        %v7811 = vpop.f32.mrf.mxu0
        %v7812 = vadd.f32 %v3702, %v7811
        %v7813 = vpop.f32.mrf.mxu0
        %v7814 = vpop.f32.mrf.mxu0
        %v7815 = vadd.f32 %v3702, %v7814
        %v7816 = vpop.f32.mrf.mxu0
        %7817 = vdwg.mxu0
        %v7818 = vmax.f32 %v7692, 0.0
        %v7819 = vmax.f32 %v7695, 0.0
        %v7820 = vmax.f32 %v7700, 0.0
        %v7821 = vmax.f32 %v7703, 0.0
        %v7822 = vmax.f32 %v7708, 0.0
        %v7823 = vmax.f32 %v7711, 0.0
        %v7824 = vmax.f32 %v7716, 0.0
        %v7825 = vmax.f32 %v7719, 0.0
        %v7826 = vmax.f32 %v7724, 0.0
        %v7827 = vmax.f32 %v7727, 0.0
        %v7828 = vmax.f32 %v7732, 0.0
        %v7829 = vmax.f32 %v7735, 0.0
        %v7830 = vmax.f32 %v7740, 0.0
        %v7831 = vmax.f32 %v7743, 0.0
        %v7832 = vmax.f32 %v7748, 0.0
        %v7833 = vmax.f32 %v7751, 0.0
        %v7834 = vmax.f32 %v7756, 0.0
        %v7835 = vmax.f32 %v7759, 0.0
        %v7836 = vmax.f32 %v7764, 0.0
        %v7837 = vmax.f32 %v7767, 0.0
        %v7838 = vmax.f32 %v7772, 0.0
        %v7839 = vmax.f32 %v7775, 0.0
        %v7840 = vmax.f32 %v7780, 0.0
        %v7841 = vmax.f32 %v7783, 0.0
        %v7842 = vmax.f32 %v7788, 0.0
        %v7843 = vmax.f32 %v7791, 0.0
        %v7844 = vmax.f32 %v7796, 0.0
        %v7845 = vmax.f32 %v7799, 0.0
        %v7846 = vmax.f32 %v7804, 0.0
        %v7847 = vmax.f32 %v7807, 0.0
        %v7848 = vmax.f32 %v7812, 0.0
        %v7849 = vmax.f32 %v7815, 0.0
        %v7850 = vpack.c.bf16 %v7819, %v7818
        %v7851 = vpack.c.bf16 %v7821, %v7820
        %v7852 = vpack.c.bf16 %v7823, %v7822
        %v7853 = vpack.c.bf16 %v7825, %v7824
        %v7854 = vpack.c.bf16 %v7827, %v7826
        %v7855 = vpack.c.bf16 %v7829, %v7828
        %v7856 = vpack.c.bf16 %v7831, %v7830
        %v7857 = vpack.c.bf16 %v7833, %v7832
        %v7858 = vpack.c.bf16 %v7835, %v7834
        %v7859 = vpack.c.bf16 %v7837, %v7836
        %v7860 = vpack.c.bf16 %v7839, %v7838
        %v7861 = vpack.c.bf16 %v7841, %v7840
        %v7862 = vpack.c.bf16 %v7843, %v7842
        %v7863 = vpack.c.bf16 %v7845, %v7844
        %v7864 = vpack.c.bf16 %v7847, %v7846
        %v7865 = vpack.c.bf16 %v7849, %v7848
        %v7882 = vunpack.c.l.b16 %v7850
        %v7883 = vunpack.c.h.b16 %v7850
        %v7884 = vunpack.c.l.b16 %v7851
        %v7885 = vunpack.c.h.b16 %v7851
        %v7886 = vunpack.c.l.b16 %v7852
        %v7887 = vunpack.c.h.b16 %v7852
        %v7888 = vunpack.c.l.b16 %v7853
        %v7889 = vunpack.c.h.b16 %v7853
        %v7890 = vunpack.c.l.b16 %v7854
        %v7891 = vunpack.c.h.b16 %v7854
        %v7892 = vunpack.c.l.b16 %v7855
        %v7893 = vunpack.c.h.b16 %v7855
        %v7894 = vunpack.c.l.b16 %v7856
        %v7895 = vunpack.c.h.b16 %v7856
        %v7896 = vunpack.c.l.b16 %v7857
        %v7897 = vunpack.c.h.b16 %v7857
        %v7898 = vunpack.c.l.b16 %v7858
        %v7899 = vunpack.c.h.b16 %v7858
        %v7900 = vunpack.c.l.b16 %v7859
        %v7901 = vunpack.c.h.b16 %v7859
        %v7902 = vunpack.c.l.b16 %v7860
        %v7903 = vunpack.c.h.b16 %v7860
        %v7904 = vunpack.c.l.b16 %v7861
        %v7905 = vunpack.c.h.b16 %v7861
        %v7906 = vunpack.c.l.b16 %v7862
        %v7907 = vunpack.c.h.b16 %v7862
        %v7908 = vunpack.c.l.b16 %v7863
        %v7909 = vunpack.c.h.b16 %v7863
        %v7910 = vunpack.c.l.b16 %v7864
        %v7911 = vunpack.c.h.b16 %v7864
        %v7912 = vunpack.c.l.b16 %v7865
        %v7913 = vunpack.c.h.b16 %v7865
        %v7914 = vpack.c.b16 %v7882, %v7882
        %v7915 = vpack.c.b16 %v7883, %v7883
        %v7916 = vpack.c.b16 %v7884, %v7884
        %v7917 = vpack.c.b16 %v7885, %v7885
        %v7918 = vpack.c.b16 %v7886, %v7886
        %v7919 = vpack.c.b16 %v7887, %v7887
        %v7920 = vpack.c.b16 %v7888, %v7888
        %v7921 = vpack.c.b16 %v7889, %v7889
        %v7922 = vpack.c.b16 %v7890, %v7890
        %v7923 = vpack.c.b16 %v7891, %v7891
        %v7924 = vpack.c.b16 %v7892, %v7892
        %v7925 = vpack.c.b16 %v7893, %v7893
        %v7926 = vpack.c.b16 %v7894, %v7894
        %v7927 = vpack.c.b16 %v7895, %v7895
        %v7928 = vpack.c.b16 %v7896, %v7896
        %v7929 = vpack.c.b16 %v7897, %v7897
        %v7930 = vpack.c.b16 %v7898, %v7898
        %v7931 = vpack.c.b16 %v7899, %v7899
        %v7932 = vpack.c.b16 %v7900, %v7900
        %v7933 = vpack.c.b16 %v7901, %v7901
        %v7934 = vpack.c.b16 %v7902, %v7902
        %v7935 = vpack.c.b16 %v7903, %v7903
        %v7936 = vpack.c.b16 %v7904, %v7904
        %v7937 = vpack.c.b16 %v7905, %v7905
        %v7938 = vpack.c.b16 %v7906, %v7906
        %v7939 = vpack.c.b16 %v7907, %v7907
        %v7940 = vpack.c.b16 %v7908, %v7908
        %v7941 = vpack.c.b16 %v7909, %v7909
        %v7942 = vpack.c.b16 %v7910, %v7910
        %v7943 = vpack.c.b16 %v7911, %v7911
        %v7944 = vpack.c.b16 %v7912, %v7912
        %v7945 = vpack.c.b16 %v7913, %v7913
        %s7978 = scalar_lea.vmem %s201, 256 [#allocation3]
        %7979 = vst.msk [vmem:[%s7978] sm:$0xf] %vm4076, %v7914
        %7980 = vst.msk [vmem:[%s7978 + $0x4] sm:$0xf] %vm4076, %v7915
        %7981 = vst.msk [vmem:[%s7978 + $0x8] sm:$0xf] %vm4076, %v7916
        %7982 = vst.msk [vmem:[%s7978 + $0xc] sm:$0xf] %vm4076, %v7917
        %7983 = vst.msk [vmem:[%s7978 + $0x10] sm:$0xf] %vm4076, %v7918
        %7984 = vst.msk [vmem:[%s7978 + $0x14] sm:$0xf] %vm4076, %v7919
        %7985 = vst.msk [vmem:[%s7978 + $0x18] sm:$0xf] %vm4076, %v7920
        %7986 = vst.msk [vmem:[%s7978 + $0x1c] sm:$0xf] %vm4076, %v7921
        %7987 = vst.msk [vmem:[%s7978 + $0x20] sm:$0xf] %vm4076, %v7922
        %7988 = vst.msk [vmem:[%s7978 + $0x24] sm:$0xf] %vm4076, %v7923
        %7989 = vst.msk [vmem:[%s7978 + $0x28] sm:$0xf] %vm4076, %v7924
        %7990 = vst.msk [vmem:[%s7978 + $0x2c] sm:$0xf] %vm4076, %v7925
        %7991 = vst.msk [vmem:[%s7978 + $0x30] sm:$0xf] %vm4076, %v7926
        %7992 = vst.msk [vmem:[%s7978 + $0x34] sm:$0xf] %vm4076, %v7927
        %7993 = vst.msk [vmem:[%s7978 + $0x38] sm:$0xf] %vm4076, %v7928
        %7994 = vst.msk [vmem:[%s7978 + $0x3c] sm:$0xf] %vm4076, %v7929
        %7995 = vst.msk [vmem:[%s7978 + $0x40] sm:$0xf] %vm4076, %v7930
        %7996 = vst.msk [vmem:[%s7978 + $0x44] sm:$0xf] %vm4076, %v7931
        %7997 = vst.msk [vmem:[%s7978 + $0x48] sm:$0xf] %vm4076, %v7932
        %7998 = vst.msk [vmem:[%s7978 + $0x4c] sm:$0xf] %vm4076, %v7933
        %7999 = vst.msk [vmem:[%s7978 + $0x50] sm:$0xf] %vm4076, %v7934
        %8000 = vst.msk [vmem:[%s7978 + $0x54] sm:$0xf] %vm4076, %v7935
        %8001 = vst.msk [vmem:[%s7978 + $0x58] sm:$0xf] %vm4076, %v7936
        %8002 = vst.msk [vmem:[%s7978 + $0x5c] sm:$0xf] %vm4076, %v7937
        %8003 = vst.msk [vmem:[%s7978 + $0x60] sm:$0xf] %vm4076, %v7938
        %8004 = vst.msk [vmem:[%s7978 + $0x64] sm:$0xf] %vm4076, %v7939
        %8005 = vst.msk [vmem:[%s7978 + $0x68] sm:$0xf] %vm4076, %v7940
        %8006 = vst.msk [vmem:[%s7978 + $0x6c] sm:$0xf] %vm4076, %v7941
        %8007 = vst.msk [vmem:[%s7978 + $0x70] sm:$0xf] %vm4076, %v7942
        %8008 = vst.msk [vmem:[%s7978 + $0x74] sm:$0xf] %vm4076, %v7943
        %8009 = vst.msk [vmem:[%s7978 + $0x78] sm:$0xf] %vm4076, %v7944
        %8010 = vst.msk [vmem:[%s7978 + $0x7c] sm:$0xf] %vm4076, %v7945
        %s8011 = scalar_lea.vmem [#allocation2], 480
        %v8012 = vld [vmem:[%s8011] sm:$0xf]
        %v8013 = vld [vmem:[%s8011 + $0x4] sm:$0xf]
        %v8014 = vld [vmem:[%s8011 + $0x8] sm:$0xf]
        %v8015 = vld [vmem:[%s8011 + $0xc] sm:$0xf]
        %v8016 = vld [vmem:[%s8011 + $0x10] sm:$0x1]
        %v8017 = vld [vmem:[%s8011 + $0x14] sm:$0xf]
        %v8018 = vld [vmem:[%s8011 + $0x18] sm:$0xf]
        %v8019 = vld [vmem:[%s8011 + $0x1c] sm:$0xf]
        %v8020 = vld [vmem:[%s8011 + $0x20] sm:$0xf]
        %v8021 = vld [vmem:[%s8011 + $0x24] sm:$0x1]
        %v8022 = vld [vmem:[%s8011 + $0x28] sm:$0xf]
        %v8023 = vld [vmem:[%s8011 + $0x2c] sm:$0xf]
        %v8024 = vld [vmem:[%s8011 + $0x30] sm:$0xf]
        %v8025 = vld [vmem:[%s8011 + $0x34] sm:$0xf]
        %v8026 = vld [vmem:[%s8011 + $0x38] sm:$0x1]
        %v8027 = vld [vmem:[%s8011 + $0x3c] sm:$0xf]
        %v8028 = vld [vmem:[%s8011 + $0x40] sm:$0xf]
        %v8029 = vld [vmem:[%s8011 + $0x44] sm:$0xf]
        %v8030 = vld [vmem:[%s8011 + $0x48] sm:$0xf]
        %v8031 = vld [vmem:[%s8011 + $0x4c] sm:$0x1]
        %v8032 = vld [vmem:[%s8011 + $0x50] sm:$0xf]
        %v8033 = vld [vmem:[%s8011 + $0x54] sm:$0xf]
        %v8034 = vld [vmem:[%s8011 + $0x58] sm:$0xf]
        %v8035 = vld [vmem:[%s8011 + $0x5c] sm:$0xf]
        %v8036 = vld [vmem:[%s8011 + $0x60] sm:$0x1]
        %v8037 = vld [vmem:[%s8011 + $0x64] sm:$0xf]
        %v8038 = vld [vmem:[%s8011 + $0x68] sm:$0xf]
        %v8039 = vld [vmem:[%s8011 + $0x6c] sm:$0xf]
        %v8040 = vld [vmem:[%s8011 + $0x70] sm:$0xf]
        %v8041 = vld [vmem:[%s8011 + $0x74] sm:$0x1]
        %v8042 = vld [vmem:[%s8011 + $0x78] sm:$0xf]
        %v8043 = vld [vmem:[%s8011 + $0x7c] sm:$0xf]
        %v8044 = vld [vmem:[%s8011 + $0x80] sm:$0xf]
        %v8045 = vld [vmem:[%s8011 + $0x84] sm:$0xf]
        %v8046 = vld [vmem:[%s8011 + $0x88] sm:$0x1]
        %v8047 = vld [vmem:[%s8011 + $0x8c] sm:$0xf]
        %v8048 = vld [vmem:[%s8011 + $0x90] sm:$0xf]
        %v8049 = vld [vmem:[%s8011 + $0x94] sm:$0xf]
        %v8050 = vld [vmem:[%s8011 + $0x98] sm:$0xf]
        %v8051 = vld [vmem:[%s8011 + $0x9c] sm:$0x1]
        %s8052 = scalar_lea.vmem [#allocation2], 500
        %v8053 = vld [vmem:[%s8052] sm:$0xf]
        %v8054 = vld [vmem:[%s8052 + $0x4] sm:$0xf]
        %v8055 = vld [vmem:[%s8052 + $0x8] sm:$0xf]
        %v8056 = vld [vmem:[%s8052 + $0xc] sm:$0xf]
        %v8057 = vld [vmem:[%s8052 + $0x10] sm:$0x1]
        %v8058 = vld [vmem:[%s8052 + $0x14] sm:$0xf]
        %v8059 = vld [vmem:[%s8052 + $0x18] sm:$0xf]
        %v8060 = vld [vmem:[%s8052 + $0x1c] sm:$0xf]
        %v8061 = vld [vmem:[%s8052 + $0x20] sm:$0xf]
        %v8062 = vld [vmem:[%s8052 + $0x24] sm:$0x1]
        %v8063 = vld [vmem:[%s8052 + $0x28] sm:$0xf]
        %v8064 = vld [vmem:[%s8052 + $0x2c] sm:$0xf]
        %v8065 = vld [vmem:[%s8052 + $0x30] sm:$0xf]
        %v8066 = vld [vmem:[%s8052 + $0x34] sm:$0xf]
        %v8067 = vld [vmem:[%s8052 + $0x38] sm:$0x1]
        %v8068 = vld [vmem:[%s8052 + $0x3c] sm:$0xf]
        %v8069 = vld [vmem:[%s8052 + $0x40] sm:$0xf]
        %v8070 = vld [vmem:[%s8052 + $0x44] sm:$0xf]
        %v8071 = vld [vmem:[%s8052 + $0x48] sm:$0xf]
        %v8072 = vld [vmem:[%s8052 + $0x4c] sm:$0x1]
        %v8073 = vld [vmem:[%s8052 + $0x50] sm:$0xf]
        %v8074 = vld [vmem:[%s8052 + $0x54] sm:$0xf]
        %v8075 = vld [vmem:[%s8052 + $0x58] sm:$0xf]
        %v8076 = vld [vmem:[%s8052 + $0x5c] sm:$0xf]
        %v8077 = vld [vmem:[%s8052 + $0x60] sm:$0x1]
        %v8078 = vld [vmem:[%s8052 + $0x64] sm:$0xf]
        %v8079 = vld [vmem:[%s8052 + $0x68] sm:$0xf]
        %v8080 = vld [vmem:[%s8052 + $0x6c] sm:$0xf]
        %v8081 = vld [vmem:[%s8052 + $0x70] sm:$0xf]
        %v8082 = vld [vmem:[%s8052 + $0x74] sm:$0x1]
        %v8083 = vld [vmem:[%s8052 + $0x78] sm:$0xf]
        %v8084 = vld [vmem:[%s8052 + $0x7c] sm:$0xf]
        %v8085 = vld [vmem:[%s8052 + $0x80] sm:$0xf]
        %v8086 = vld [vmem:[%s8052 + $0x84] sm:$0xf]
        %v8087 = vld [vmem:[%s8052 + $0x88] sm:$0x1]
        %v8088 = vld [vmem:[%s8052 + $0x8c] sm:$0xf]
        %v8089 = vld [vmem:[%s8052 + $0x90] sm:$0xf]
        %v8090 = vld [vmem:[%s8052 + $0x94] sm:$0xf]
        %v8091 = vld [vmem:[%s8052 + $0x98] sm:$0xf]
        %v8092 = vld [vmem:[%s8052 + $0x9c] sm:$0x1]
        %s8093 = scalar_lea.vmem [#allocation2], 520
        %v8094 = vld [vmem:[%s8093] sm:$0xf]
        %v8095 = vld [vmem:[%s8093 + $0x4] sm:$0xf]
        %v8096 = vld [vmem:[%s8093 + $0x8] sm:$0xf]
        %v8097 = vld [vmem:[%s8093 + $0xc] sm:$0xf]
        %v8098 = vld [vmem:[%s8093 + $0x10] sm:$0x1]
        %v8099 = vld [vmem:[%s8093 + $0x14] sm:$0xf]
        %v8100 = vld [vmem:[%s8093 + $0x18] sm:$0xf]
        %v8101 = vld [vmem:[%s8093 + $0x1c] sm:$0xf]
        %v8102 = vld [vmem:[%s8093 + $0x20] sm:$0xf]
        %v8103 = vld [vmem:[%s8093 + $0x24] sm:$0x1]
        %v8104 = vld [vmem:[%s8093 + $0x28] sm:$0xf]
        %v8105 = vld [vmem:[%s8093 + $0x2c] sm:$0xf]
        %v8106 = vld [vmem:[%s8093 + $0x30] sm:$0xf]
        %v8107 = vld [vmem:[%s8093 + $0x34] sm:$0xf]
        %v8108 = vld [vmem:[%s8093 + $0x38] sm:$0x1]
        %v8109 = vld [vmem:[%s8093 + $0x3c] sm:$0xf]
        %v8110 = vld [vmem:[%s8093 + $0x40] sm:$0xf]
        %v8111 = vld [vmem:[%s8093 + $0x44] sm:$0xf]
        %v8112 = vld [vmem:[%s8093 + $0x48] sm:$0xf]
        %v8113 = vld [vmem:[%s8093 + $0x4c] sm:$0x1]
        %v8114 = vld [vmem:[%s8093 + $0x50] sm:$0xf]
        %v8115 = vld [vmem:[%s8093 + $0x54] sm:$0xf]
        %v8116 = vld [vmem:[%s8093 + $0x58] sm:$0xf]
        %v8117 = vld [vmem:[%s8093 + $0x5c] sm:$0xf]
        %v8118 = vld [vmem:[%s8093 + $0x60] sm:$0x1]
        %v8119 = vld [vmem:[%s8093 + $0x64] sm:$0xf]
        %v8120 = vld [vmem:[%s8093 + $0x68] sm:$0xf]
        %v8121 = vld [vmem:[%s8093 + $0x6c] sm:$0xf]
        %v8122 = vld [vmem:[%s8093 + $0x70] sm:$0xf]
        %v8123 = vld [vmem:[%s8093 + $0x74] sm:$0x1]
        %v8124 = vld [vmem:[%s8093 + $0x78] sm:$0xf]
        %v8125 = vld [vmem:[%s8093 + $0x7c] sm:$0xf]
        %v8126 = vld [vmem:[%s8093 + $0x80] sm:$0xf]
        %v8127 = vld [vmem:[%s8093 + $0x84] sm:$0xf]
        %v8128 = vld [vmem:[%s8093 + $0x88] sm:$0x1]
        %v8129 = vld [vmem:[%s8093 + $0x8c] sm:$0xf]
        %v8130 = vld [vmem:[%s8093 + $0x90] sm:$0xf]
        %v8131 = vld [vmem:[%s8093 + $0x94] sm:$0xf]
        %v8132 = vld [vmem:[%s8093 + $0x98] sm:$0xf]
        %v8133 = vld [vmem:[%s8093 + $0x9c] sm:$0x1]
        %v8166 = vunpack.c.l.b16 %v8012
        %v8167 = vunpack.c.l.b16 %v8013
        %v8168 = vunpack.c.l.b16 %v8014
        %v8169 = vunpack.c.l.b16 %v8015
        %v8170 = vunpack.c.l.b16 %v8017
        %v8171 = vunpack.c.l.b16 %v8018
        %v8172 = vunpack.c.l.b16 %v8019
        %v8173 = vunpack.c.l.b16 %v8020
        %v8174 = vunpack.c.l.b16 %v8022
        %v8175 = vunpack.c.l.b16 %v8023
        %v8176 = vunpack.c.l.b16 %v8024
        %v8177 = vunpack.c.l.b16 %v8025
        %v8178 = vunpack.c.l.b16 %v8027
        %v8179 = vunpack.c.l.b16 %v8028
        %v8180 = vunpack.c.l.b16 %v8029
        %v8181 = vunpack.c.l.b16 %v8030
        %v8182 = vunpack.c.l.b16 %v8032
        %v8183 = vunpack.c.l.b16 %v8033
        %v8184 = vunpack.c.l.b16 %v8034
        %v8185 = vunpack.c.l.b16 %v8035
        %v8186 = vunpack.c.l.b16 %v8037
        %v8187 = vunpack.c.l.b16 %v8038
        %v8188 = vunpack.c.l.b16 %v8039
        %v8189 = vunpack.c.l.b16 %v8040
        %v8190 = vunpack.c.l.b16 %v8042
        %v8191 = vunpack.c.l.b16 %v8043
        %v8192 = vunpack.c.l.b16 %v8044
        %v8193 = vunpack.c.l.b16 %v8045
        %v8194 = vunpack.c.l.b16 %v8047
        %v8195 = vunpack.c.l.b16 %v8048
        %v8196 = vunpack.c.l.b16 %v8049
        %v8197 = vunpack.c.l.b16 %v8050
        %v8198 = vpack.c.b16 %v8167, %v8166
        %v8199 = vpack.c.b16 %v8169, %v8168
        %v8200 = vpack.c.b16 %v8171, %v8170
        %v8201 = vpack.c.b16 %v8173, %v8172
        %v8202 = vpack.c.b16 %v8175, %v8174
        %v8203 = vpack.c.b16 %v8177, %v8176
        %v8204 = vpack.c.b16 %v8179, %v8178
        %v8205 = vpack.c.b16 %v8181, %v8180
        %v8206 = vpack.c.b16 %v8183, %v8182
        %v8207 = vpack.c.b16 %v8185, %v8184
        %v8208 = vpack.c.b16 %v8187, %v8186
        %v8209 = vpack.c.b16 %v8189, %v8188
        %v8210 = vpack.c.b16 %v8191, %v8190
        %v8211 = vpack.c.b16 %v8193, %v8192
        %v8212 = vpack.c.b16 %v8195, %v8194
        %v8213 = vpack.c.b16 %v8197, %v8196
        %v8222 = vunpack.c.l.b16 %v8016
        %v8223 = vunpack.c.l.b16 %v8021
        %v8224 = vunpack.c.l.b16 %v8026
        %v8225 = vunpack.c.l.b16 %v8031
        %v8226 = vunpack.c.l.b16 %v8036
        %v8227 = vunpack.c.l.b16 %v8041
        %v8228 = vunpack.c.l.b16 %v8046
        %v8229 = vunpack.c.l.b16 %v8051
        %v8230 = vpack.c.b16 %v8222, %v8222
        %v8231 = vpack.c.b16 %v8223, %v8223
        %v8232 = vpack.c.b16 %v8224, %v8224
        %v8233 = vpack.c.b16 %v8225, %v8225
        %v8234 = vpack.c.b16 %v8226, %v8226
        %v8235 = vpack.c.b16 %v8227, %v8227
        %v8236 = vpack.c.b16 %v8228, %v8228
        %v8237 = vpack.c.b16 %v8229, %v8229
        %v8239 = vshrl.u32 %v8198, 16
        %v8241 = vshll.u32 %v8198, 16
        %v8243 = vrot.slane %v8241, 1
        %v8244 = vor.u32 %v8239, %v8243
        %v8246 = vshll.u32 %v8199, 16
        %v8248 = vrot.slane %v8246, 1
        %v8249 = vsel %vm2364, %v8244, %v8248
        %v8250 = vshrl.u32 %v8199, 16
        %v8252 = vor.u32 %v8250, %v8248
        %v8254 = vshll.u32 %v8230, 16
        %v8256 = vrot.slane %v8254, 1
        %v8257 = vsel %vm2364, %v8252, %v8256
        %v8259 = vshrl.u32 %v8200, 16
        %v8261 = vshll.u32 %v8200, 16
        %v8263 = vrot.slane %v8261, 1
        %v8264 = vor.u32 %v8259, %v8263
        %v8266 = vshll.u32 %v8201, 16
        %v8268 = vrot.slane %v8266, 1
        %v8269 = vsel %vm2364, %v8264, %v8268
        %v8270 = vshrl.u32 %v8201, 16
        %v8272 = vor.u32 %v8270, %v8268
        %v8274 = vshll.u32 %v8231, 16
        %v8276 = vrot.slane %v8274, 1
        %v8277 = vsel %vm2364, %v8272, %v8276
        %v8279 = vshrl.u32 %v8202, 16
        %v8281 = vshll.u32 %v8202, 16
        %v8283 = vrot.slane %v8281, 1
        %v8284 = vor.u32 %v8279, %v8283
        %v8286 = vshll.u32 %v8203, 16
        %v8288 = vrot.slane %v8286, 1
        %v8289 = vsel %vm2364, %v8284, %v8288
        %v8290 = vshrl.u32 %v8203, 16
        %v8292 = vor.u32 %v8290, %v8288
        %v8294 = vshll.u32 %v8232, 16
        %v8296 = vrot.slane %v8294, 1
        %v8297 = vsel %vm2364, %v8292, %v8296
        %v8299 = vshrl.u32 %v8204, 16
        %v8301 = vshll.u32 %v8204, 16
        %v8303 = vrot.slane %v8301, 1
        %v8304 = vor.u32 %v8299, %v8303
        %v8306 = vshll.u32 %v8205, 16
        %v8308 = vrot.slane %v8306, 1
        %v8309 = vsel %vm2364, %v8304, %v8308
        %v8310 = vshrl.u32 %v8205, 16
        %v8312 = vor.u32 %v8310, %v8308
        %v8314 = vshll.u32 %v8233, 16
        %v8316 = vrot.slane %v8314, 1
        %v8317 = vsel %vm2364, %v8312, %v8316
        %v8319 = vshrl.u32 %v8206, 16
        %v8321 = vshll.u32 %v8206, 16
        %v8323 = vrot.slane %v8321, 1
        %v8324 = vor.u32 %v8319, %v8323
        %v8326 = vshll.u32 %v8207, 16
        %v8328 = vrot.slane %v8326, 1
        %v8329 = vsel %vm2364, %v8324, %v8328
        %v8330 = vshrl.u32 %v8207, 16
        %v8332 = vor.u32 %v8330, %v8328
        %v8334 = vshll.u32 %v8234, 16
        %v8336 = vrot.slane %v8334, 1
        %v8337 = vsel %vm2364, %v8332, %v8336
        %v8339 = vshrl.u32 %v8208, 16
        %v8341 = vshll.u32 %v8208, 16
        %v8343 = vrot.slane %v8341, 1
        %v8344 = vor.u32 %v8339, %v8343
        %v8346 = vshll.u32 %v8209, 16
        %v8348 = vrot.slane %v8346, 1
        %v8349 = vsel %vm2364, %v8344, %v8348
        %v8350 = vshrl.u32 %v8209, 16
        %v8352 = vor.u32 %v8350, %v8348
        %v8354 = vshll.u32 %v8235, 16
        %v8356 = vrot.slane %v8354, 1
        %v8357 = vsel %vm2364, %v8352, %v8356
        %v8359 = vshrl.u32 %v8210, 16
        %v8361 = vshll.u32 %v8210, 16
        %v8363 = vrot.slane %v8361, 1
        %v8364 = vor.u32 %v8359, %v8363
        %v8366 = vshll.u32 %v8211, 16
        %v8368 = vrot.slane %v8366, 1
        %v8369 = vsel %vm2364, %v8364, %v8368
        %v8370 = vshrl.u32 %v8211, 16
        %v8372 = vor.u32 %v8370, %v8368
        %v8374 = vshll.u32 %v8236, 16
        %v8376 = vrot.slane %v8374, 1
        %v8377 = vsel %vm2364, %v8372, %v8376
        %v8379 = vshrl.u32 %v8212, 16
        %v8381 = vshll.u32 %v8212, 16
        %v8383 = vrot.slane %v8381, 1
        %v8384 = vor.u32 %v8379, %v8383
        %v8386 = vshll.u32 %v8213, 16
        %v8388 = vrot.slane %v8386, 1
        %v8389 = vsel %vm2364, %v8384, %v8388
        %v8390 = vshrl.u32 %v8213, 16
        %v8392 = vor.u32 %v8390, %v8388
        %v8394 = vshll.u32 %v8237, 16
        %v8396 = vrot.slane %v8394, 1
        %v8397 = vsel %vm2364, %v8392, %v8396
        %8398 = vrot.lane.b32.xlu0 %v8249, 3
        %v8399 = vpop.permute.xlu0 %8398
        %8400 = vrot.lane.b32.xlu0 %v8257, 3
        %v8401 = vpop.permute.xlu0 %8400
        %8402 = vrot.lane.b32.xlu0 %v8269, 3
        %v8403 = vpop.permute.xlu0 %8402
        %8404 = vrot.lane.b32.xlu0 %v8277, 3
        %v8405 = vpop.permute.xlu0 %8404
        %8406 = vrot.lane.b32.xlu0 %v8289, 3
        %v8407 = vpop.permute.xlu0 %8406
        %8408 = vrot.lane.b32.xlu0 %v8297, 3
        %v8409 = vpop.permute.xlu0 %8408
        %8410 = vrot.lane.b32.xlu0 %v8309, 3
        %v8411 = vpop.permute.xlu0 %8410
        %8412 = vrot.lane.b32.xlu0 %v8317, 3
        %v8413 = vpop.permute.xlu0 %8412
        %8414 = vrot.lane.b32.xlu0 %v8329, 3
        %v8415 = vpop.permute.xlu0 %8414
        %8416 = vrot.lane.b32.xlu0 %v8337, 3
        %v8417 = vpop.permute.xlu0 %8416
        %8418 = vrot.lane.b32.xlu0 %v8349, 3
        %v8419 = vpop.permute.xlu0 %8418
        %8420 = vrot.lane.b32.xlu0 %v8357, 3
        %v8421 = vpop.permute.xlu0 %8420
        %8422 = vrot.lane.b32.xlu0 %v8369, 3
        %v8423 = vpop.permute.xlu0 %8422
        %8424 = vrot.lane.b32.xlu0 %v8377, 3
        %v8425 = vpop.permute.xlu0 %8424
        %8426 = vrot.lane.b32.xlu0 %v8389, 3
        %v8427 = vpop.permute.xlu0 %8426
        %8428 = vrot.lane.b32.xlu0 %v8397, 3
        %v8429 = vpop.permute.xlu0 %8428
        %v8430 = vrot.slane %v8198, 1
        %v8431 = vrot.slane %v8199, 1
        %v8432 = vsel %vm2557, %v8430, %v8431
        %v8433 = vrot.slane %v8230, 1
        %v8434 = vsel %vm2557, %v8431, %v8433
        %v8435 = vrot.slane %v8200, 1
        %v8436 = vrot.slane %v8201, 1
        %v8437 = vsel %vm2557, %v8435, %v8436
        %v8438 = vrot.slane %v8231, 1
        %v8439 = vsel %vm2557, %v8436, %v8438
        %v8440 = vrot.slane %v8202, 1
        %v8441 = vrot.slane %v8203, 1
        %v8442 = vsel %vm2557, %v8440, %v8441
        %v8443 = vrot.slane %v8232, 1
        %v8444 = vsel %vm2557, %v8441, %v8443
        %v8445 = vrot.slane %v8204, 1
        %v8446 = vrot.slane %v8205, 1
        %v8447 = vsel %vm2557, %v8445, %v8446
        %v8448 = vrot.slane %v8233, 1
        %v8449 = vsel %vm2557, %v8446, %v8448
        %v8450 = vrot.slane %v8206, 1
        %v8451 = vrot.slane %v8207, 1
        %v8452 = vsel %vm2557, %v8450, %v8451
        %v8453 = vrot.slane %v8234, 1
        %v8454 = vsel %vm2557, %v8451, %v8453
        %v8455 = vrot.slane %v8208, 1
        %v8456 = vrot.slane %v8209, 1
        %v8457 = vsel %vm2557, %v8455, %v8456
        %v8458 = vrot.slane %v8235, 1
        %v8459 = vsel %vm2557, %v8456, %v8458
        %v8460 = vrot.slane %v8210, 1
        %v8461 = vrot.slane %v8211, 1
        %v8462 = vsel %vm2557, %v8460, %v8461
        %v8463 = vrot.slane %v8236, 1
        %v8464 = vsel %vm2557, %v8461, %v8463
        %v8465 = vrot.slane %v8212, 1
        %v8466 = vrot.slane %v8213, 1
        %v8467 = vsel %vm2557, %v8465, %v8466
        %v8468 = vrot.slane %v8237, 1
        %v8469 = vsel %vm2557, %v8466, %v8468
        %8470 = vrot.lane.b32.xlu0 %v8432, 6
        %v8471 = vpop.permute.xlu0 %8470
        %8472 = vrot.lane.b32.xlu0 %v8434, 6
        %v8473 = vpop.permute.xlu0 %8472
        %8474 = vrot.lane.b32.xlu0 %v8437, 6
        %v8475 = vpop.permute.xlu0 %8474
        %8476 = vrot.lane.b32.xlu0 %v8439, 6
        %v8477 = vpop.permute.xlu0 %8476
        %8478 = vrot.lane.b32.xlu0 %v8442, 6
        %v8479 = vpop.permute.xlu0 %8478
        %8480 = vrot.lane.b32.xlu0 %v8444, 6
        %v8481 = vpop.permute.xlu0 %8480
        %8482 = vrot.lane.b32.xlu0 %v8447, 6
        %v8483 = vpop.permute.xlu0 %8482
        %8484 = vrot.lane.b32.xlu0 %v8449, 6
        %v8485 = vpop.permute.xlu0 %8484
        %8486 = vrot.lane.b32.xlu0 %v8452, 6
        %v8487 = vpop.permute.xlu0 %8486
        %8488 = vrot.lane.b32.xlu0 %v8454, 6
        %v8489 = vpop.permute.xlu0 %8488
        %8490 = vrot.lane.b32.xlu0 %v8457, 6
        %v8491 = vpop.permute.xlu0 %8490
        %8492 = vrot.lane.b32.xlu0 %v8459, 6
        %v8493 = vpop.permute.xlu0 %8492
        %8494 = vrot.lane.b32.xlu0 %v8462, 6
        %v8495 = vpop.permute.xlu0 %8494
        %8496 = vrot.lane.b32.xlu0 %v8464, 6
        %v8497 = vpop.permute.xlu0 %8496
        %8498 = vrot.lane.b32.xlu0 %v8467, 6
        %v8499 = vpop.permute.xlu0 %8498
        %8500 = vrot.lane.b32.xlu0 %v8469, 6
        %v8501 = vpop.permute.xlu0 %8500
        %v8534 = vunpack.c.l.b16 %v8053
        %v8535 = vunpack.c.l.b16 %v8054
        %v8536 = vunpack.c.l.b16 %v8055
        %v8537 = vunpack.c.l.b16 %v8056
        %v8538 = vunpack.c.l.b16 %v8058
        %v8539 = vunpack.c.l.b16 %v8059
        %v8540 = vunpack.c.l.b16 %v8060
        %v8541 = vunpack.c.l.b16 %v8061
        %v8542 = vunpack.c.l.b16 %v8063
        %v8543 = vunpack.c.l.b16 %v8064
        %v8544 = vunpack.c.l.b16 %v8065
        %v8545 = vunpack.c.l.b16 %v8066
        %v8546 = vunpack.c.l.b16 %v8068
        %v8547 = vunpack.c.l.b16 %v8069
        %v8548 = vunpack.c.l.b16 %v8070
        %v8549 = vunpack.c.l.b16 %v8071
        %v8550 = vunpack.c.l.b16 %v8073
        %v8551 = vunpack.c.l.b16 %v8074
        %v8552 = vunpack.c.l.b16 %v8075
        %v8553 = vunpack.c.l.b16 %v8076
        %v8554 = vunpack.c.l.b16 %v8078
        %v8555 = vunpack.c.l.b16 %v8079
        %v8556 = vunpack.c.l.b16 %v8080
        %v8557 = vunpack.c.l.b16 %v8081
        %v8558 = vunpack.c.l.b16 %v8083
        %v8559 = vunpack.c.l.b16 %v8084
        %v8560 = vunpack.c.l.b16 %v8085
        %v8561 = vunpack.c.l.b16 %v8086
        %v8562 = vunpack.c.l.b16 %v8088
        %v8563 = vunpack.c.l.b16 %v8089
        %v8564 = vunpack.c.l.b16 %v8090
        %v8565 = vunpack.c.l.b16 %v8091
        %v8566 = vpack.c.b16 %v8535, %v8534
        %v8567 = vpack.c.b16 %v8537, %v8536
        %v8568 = vpack.c.b16 %v8539, %v8538
        %v8569 = vpack.c.b16 %v8541, %v8540
        %v8570 = vpack.c.b16 %v8543, %v8542
        %v8571 = vpack.c.b16 %v8545, %v8544
        %v8572 = vpack.c.b16 %v8547, %v8546
        %v8573 = vpack.c.b16 %v8549, %v8548
        %v8574 = vpack.c.b16 %v8551, %v8550
        %v8575 = vpack.c.b16 %v8553, %v8552
        %v8576 = vpack.c.b16 %v8555, %v8554
        %v8577 = vpack.c.b16 %v8557, %v8556
        %v8578 = vpack.c.b16 %v8559, %v8558
        %v8579 = vpack.c.b16 %v8561, %v8560
        %v8580 = vpack.c.b16 %v8563, %v8562
        %v8581 = vpack.c.b16 %v8565, %v8564
        %8582 = vrot.lane.b32.xlu0 %v8566, 9
        %v8583 = vpop.permute.xlu0 %8582
        %8584 = vrot.lane.b32.xlu0 %v8567, 9
        %v8585 = vpop.permute.xlu0 %8584
        %8586 = vrot.lane.b32.xlu0 %v8568, 9
        %v8587 = vpop.permute.xlu0 %8586
        %8588 = vrot.lane.b32.xlu0 %v8569, 9
        %v8589 = vpop.permute.xlu0 %8588
        %8590 = vrot.lane.b32.xlu0 %v8570, 9
        %v8591 = vpop.permute.xlu0 %8590
        %8592 = vrot.lane.b32.xlu0 %v8571, 9
        %v8593 = vpop.permute.xlu0 %8592
        %8594 = vrot.lane.b32.xlu0 %v8572, 9
        %v8595 = vpop.permute.xlu0 %8594
        %8596 = vrot.lane.b32.xlu0 %v8573, 9
        %v8597 = vpop.permute.xlu0 %8596
        %8598 = vrot.lane.b32.xlu0 %v8574, 9
        %v8599 = vpop.permute.xlu0 %8598
        %8600 = vrot.lane.b32.xlu0 %v8575, 9
        %v8601 = vpop.permute.xlu0 %8600
        %8602 = vrot.lane.b32.xlu0 %v8576, 9
        %v8603 = vpop.permute.xlu0 %8602
        %8604 = vrot.lane.b32.xlu0 %v8577, 9
        %v8605 = vpop.permute.xlu0 %8604
        %8606 = vrot.lane.b32.xlu0 %v8578, 9
        %v8607 = vpop.permute.xlu0 %8606
        %8608 = vrot.lane.b32.xlu0 %v8579, 9
        %v8609 = vpop.permute.xlu0 %8608
        %8610 = vrot.lane.b32.xlu0 %v8580, 9
        %v8611 = vpop.permute.xlu0 %8610
        %8612 = vrot.lane.b32.xlu0 %v8581, 9
        %v8613 = vpop.permute.xlu0 %8612
        %v8622 = vunpack.c.l.b16 %v8057
        %v8623 = vunpack.c.l.b16 %v8062
        %v8624 = vunpack.c.l.b16 %v8067
        %v8625 = vunpack.c.l.b16 %v8072
        %v8626 = vunpack.c.l.b16 %v8077
        %v8627 = vunpack.c.l.b16 %v8082
        %v8628 = vunpack.c.l.b16 %v8087
        %v8629 = vunpack.c.l.b16 %v8092
        %v8630 = vpack.c.b16 %v8622, %v8622
        %v8631 = vpack.c.b16 %v8623, %v8623
        %v8632 = vpack.c.b16 %v8624, %v8624
        %v8633 = vpack.c.b16 %v8625, %v8625
        %v8634 = vpack.c.b16 %v8626, %v8626
        %v8635 = vpack.c.b16 %v8627, %v8627
        %v8636 = vpack.c.b16 %v8628, %v8628
        %v8637 = vpack.c.b16 %v8629, %v8629
        %v8639 = vshrl.u32 %v8566, 16
        %v8641 = vshll.u32 %v8566, 16
        %v8643 = vrot.slane %v8641, 1
        %v8644 = vor.u32 %v8639, %v8643
        %v8646 = vshll.u32 %v8567, 16
        %v8648 = vrot.slane %v8646, 1
        %v8649 = vsel %vm2364, %v8644, %v8648
        %v8650 = vshrl.u32 %v8567, 16
        %v8652 = vor.u32 %v8650, %v8648
        %v8654 = vshll.u32 %v8630, 16
        %v8656 = vrot.slane %v8654, 1
        %v8657 = vsel %vm2364, %v8652, %v8656
        %v8659 = vshrl.u32 %v8568, 16
        %v8661 = vshll.u32 %v8568, 16
        %v8663 = vrot.slane %v8661, 1
        %v8664 = vor.u32 %v8659, %v8663
        %v8666 = vshll.u32 %v8569, 16
        %v8668 = vrot.slane %v8666, 1
        %v8669 = vsel %vm2364, %v8664, %v8668
        %v8670 = vshrl.u32 %v8569, 16
        %v8672 = vor.u32 %v8670, %v8668
        %v8674 = vshll.u32 %v8631, 16
        %v8676 = vrot.slane %v8674, 1
        %v8677 = vsel %vm2364, %v8672, %v8676
        %v8679 = vshrl.u32 %v8570, 16
        %v8681 = vshll.u32 %v8570, 16
        %v8683 = vrot.slane %v8681, 1
        %v8684 = vor.u32 %v8679, %v8683
        %v8686 = vshll.u32 %v8571, 16
        %v8688 = vrot.slane %v8686, 1
        %v8689 = vsel %vm2364, %v8684, %v8688
        %v8690 = vshrl.u32 %v8571, 16
        %v8692 = vor.u32 %v8690, %v8688
        %v8694 = vshll.u32 %v8632, 16
        %v8696 = vrot.slane %v8694, 1
        %v8697 = vsel %vm2364, %v8692, %v8696
        %v8699 = vshrl.u32 %v8572, 16
        %v8701 = vshll.u32 %v8572, 16
        %v8703 = vrot.slane %v8701, 1
        %v8704 = vor.u32 %v8699, %v8703
        %v8706 = vshll.u32 %v8573, 16
        %v8708 = vrot.slane %v8706, 1
        %v8709 = vsel %vm2364, %v8704, %v8708
        %v8710 = vshrl.u32 %v8573, 16
        %v8712 = vor.u32 %v8710, %v8708
        %v8714 = vshll.u32 %v8633, 16
        %v8716 = vrot.slane %v8714, 1
        %v8717 = vsel %vm2364, %v8712, %v8716
        %v8719 = vshrl.u32 %v8574, 16
        %v8721 = vshll.u32 %v8574, 16
        %v8723 = vrot.slane %v8721, 1
        %v8724 = vor.u32 %v8719, %v8723
        %v8726 = vshll.u32 %v8575, 16
        %v8728 = vrot.slane %v8726, 1
        %v8729 = vsel %vm2364, %v8724, %v8728
        %v8730 = vshrl.u32 %v8575, 16
        %v8732 = vor.u32 %v8730, %v8728
        %v8734 = vshll.u32 %v8634, 16
        %v8736 = vrot.slane %v8734, 1
        %v8737 = vsel %vm2364, %v8732, %v8736
        %v8739 = vshrl.u32 %v8576, 16
        %v8741 = vshll.u32 %v8576, 16
        %v8743 = vrot.slane %v8741, 1
        %v8744 = vor.u32 %v8739, %v8743
        %v8746 = vshll.u32 %v8577, 16
        %v8748 = vrot.slane %v8746, 1
        %v8749 = vsel %vm2364, %v8744, %v8748
        %v8750 = vshrl.u32 %v8577, 16
        %v8752 = vor.u32 %v8750, %v8748
        %v8754 = vshll.u32 %v8635, 16
        %v8756 = vrot.slane %v8754, 1
        %v8757 = vsel %vm2364, %v8752, %v8756
        %v8759 = vshrl.u32 %v8578, 16
        %v8761 = vshll.u32 %v8578, 16
        %v8763 = vrot.slane %v8761, 1
        %v8764 = vor.u32 %v8759, %v8763
        %v8766 = vshll.u32 %v8579, 16
        %v8768 = vrot.slane %v8766, 1
        %v8769 = vsel %vm2364, %v8764, %v8768
        %v8770 = vshrl.u32 %v8579, 16
        %v8772 = vor.u32 %v8770, %v8768
        %v8774 = vshll.u32 %v8636, 16
        %v8776 = vrot.slane %v8774, 1
        %v8777 = vsel %vm2364, %v8772, %v8776
        %v8779 = vshrl.u32 %v8580, 16
        %v8781 = vshll.u32 %v8580, 16
        %v8783 = vrot.slane %v8781, 1
        %v8784 = vor.u32 %v8779, %v8783
        %v8786 = vshll.u32 %v8581, 16
        %v8788 = vrot.slane %v8786, 1
        %v8789 = vsel %vm2364, %v8784, %v8788
        %v8790 = vshrl.u32 %v8581, 16
        %v8792 = vor.u32 %v8790, %v8788
        %v8794 = vshll.u32 %v8637, 16
        %v8796 = vrot.slane %v8794, 1
        %v8797 = vsel %vm2364, %v8792, %v8796
        %8798 = vrot.lane.b32.xlu0 %v8649, 12
        %v8799 = vpop.permute.xlu0 %8798
        %8800 = vrot.lane.b32.xlu0 %v8657, 12
        %v8801 = vpop.permute.xlu0 %8800
        %8802 = vrot.lane.b32.xlu0 %v8669, 12
        %v8803 = vpop.permute.xlu0 %8802
        %8804 = vrot.lane.b32.xlu0 %v8677, 12
        %v8805 = vpop.permute.xlu0 %8804
        %8806 = vrot.lane.b32.xlu0 %v8689, 12
        %v8807 = vpop.permute.xlu0 %8806
        %8808 = vrot.lane.b32.xlu0 %v8697, 12
        %v8809 = vpop.permute.xlu0 %8808
        %8810 = vrot.lane.b32.xlu0 %v8709, 12
        %v8811 = vpop.permute.xlu0 %8810
        %8812 = vrot.lane.b32.xlu0 %v8717, 12
        %v8813 = vpop.permute.xlu0 %8812
        %8814 = vrot.lane.b32.xlu0 %v8729, 12
        %v8815 = vpop.permute.xlu0 %8814
        %8816 = vrot.lane.b32.xlu0 %v8737, 12
        %v8817 = vpop.permute.xlu0 %8816
        %8818 = vrot.lane.b32.xlu0 %v8749, 12
        %v8819 = vpop.permute.xlu0 %8818
        %8820 = vrot.lane.b32.xlu0 %v8757, 12
        %v8821 = vpop.permute.xlu0 %8820
        %8822 = vrot.lane.b32.xlu0 %v8769, 12
        %v8823 = vpop.permute.xlu0 %8822
        %8824 = vrot.lane.b32.xlu0 %v8777, 12
        %v8825 = vpop.permute.xlu0 %8824
        %8826 = vrot.lane.b32.xlu0 %v8789, 12
        %v8827 = vpop.permute.xlu0 %8826
        %8828 = vrot.lane.b32.xlu0 %v8797, 12
        %v8829 = vpop.permute.xlu0 %8828
        %v8830 = vrot.slane %v8566, 1
        %v8831 = vrot.slane %v8567, 1
        %v8832 = vsel %vm2557, %v8830, %v8831
        %v8833 = vrot.slane %v8630, 1
        %v8834 = vsel %vm2557, %v8831, %v8833
        %v8835 = vrot.slane %v8568, 1
        %v8836 = vrot.slane %v8569, 1
        %v8837 = vsel %vm2557, %v8835, %v8836
        %v8838 = vrot.slane %v8631, 1
        %v8839 = vsel %vm2557, %v8836, %v8838
        %v8840 = vrot.slane %v8570, 1
        %v8841 = vrot.slane %v8571, 1
        %v8842 = vsel %vm2557, %v8840, %v8841
        %v8843 = vrot.slane %v8632, 1
        %v8844 = vsel %vm2557, %v8841, %v8843
        %v8845 = vrot.slane %v8572, 1
        %v8846 = vrot.slane %v8573, 1
        %v8847 = vsel %vm2557, %v8845, %v8846
        %v8848 = vrot.slane %v8633, 1
        %v8849 = vsel %vm2557, %v8846, %v8848
        %v8850 = vrot.slane %v8574, 1
        %v8851 = vrot.slane %v8575, 1
        %v8852 = vsel %vm2557, %v8850, %v8851
        %v8853 = vrot.slane %v8634, 1
        %v8854 = vsel %vm2557, %v8851, %v8853
        %v8855 = vrot.slane %v8576, 1
        %v8856 = vrot.slane %v8577, 1
        %v8857 = vsel %vm2557, %v8855, %v8856
        %v8858 = vrot.slane %v8635, 1
        %v8859 = vsel %vm2557, %v8856, %v8858
        %v8860 = vrot.slane %v8578, 1
        %v8861 = vrot.slane %v8579, 1
        %v8862 = vsel %vm2557, %v8860, %v8861
        %v8863 = vrot.slane %v8636, 1
        %v8864 = vsel %vm2557, %v8861, %v8863
        %v8865 = vrot.slane %v8580, 1
        %v8866 = vrot.slane %v8581, 1
        %v8867 = vsel %vm2557, %v8865, %v8866
        %v8868 = vrot.slane %v8637, 1
        %v8869 = vsel %vm2557, %v8866, %v8868
        %8870 = vrot.lane.b32.xlu0 %v8832, 15
        %v8871 = vpop.permute.xlu0 %8870
        %8872 = vrot.lane.b32.xlu0 %v8834, 15
        %v8873 = vpop.permute.xlu0 %8872
        %8874 = vrot.lane.b32.xlu0 %v8837, 15
        %v8875 = vpop.permute.xlu0 %8874
        %8876 = vrot.lane.b32.xlu0 %v8839, 15
        %v8877 = vpop.permute.xlu0 %8876
        %8878 = vrot.lane.b32.xlu0 %v8842, 15
        %v8879 = vpop.permute.xlu0 %8878
        %8880 = vrot.lane.b32.xlu0 %v8844, 15
        %v8881 = vpop.permute.xlu0 %8880
        %8882 = vrot.lane.b32.xlu0 %v8847, 15
        %v8883 = vpop.permute.xlu0 %8882
        %8884 = vrot.lane.b32.xlu0 %v8849, 15
        %v8885 = vpop.permute.xlu0 %8884
        %8886 = vrot.lane.b32.xlu0 %v8852, 15
        %v8887 = vpop.permute.xlu0 %8886
        %8888 = vrot.lane.b32.xlu0 %v8854, 15
        %v8889 = vpop.permute.xlu0 %8888
        %8890 = vrot.lane.b32.xlu0 %v8857, 15
        %v8891 = vpop.permute.xlu0 %8890
        %8892 = vrot.lane.b32.xlu0 %v8859, 15
        %v8893 = vpop.permute.xlu0 %8892
        %8894 = vrot.lane.b32.xlu0 %v8862, 15
        %v8895 = vpop.permute.xlu0 %8894
        %8896 = vrot.lane.b32.xlu0 %v8864, 15
        %v8897 = vpop.permute.xlu0 %8896
        %8898 = vrot.lane.b32.xlu0 %v8867, 15
        %v8899 = vpop.permute.xlu0 %8898
        %8900 = vrot.lane.b32.xlu0 %v8869, 15
        %v8901 = vpop.permute.xlu0 %8900
        %v8934 = vunpack.c.l.b16 %v8094
        %v8935 = vunpack.c.l.b16 %v8095
        %v8936 = vunpack.c.l.b16 %v8096
        %v8937 = vunpack.c.l.b16 %v8097
        %v8938 = vunpack.c.l.b16 %v8099
        %v8939 = vunpack.c.l.b16 %v8100
        %v8940 = vunpack.c.l.b16 %v8101
        %v8941 = vunpack.c.l.b16 %v8102
        %v8942 = vunpack.c.l.b16 %v8104
        %v8943 = vunpack.c.l.b16 %v8105
        %v8944 = vunpack.c.l.b16 %v8106
        %v8945 = vunpack.c.l.b16 %v8107
        %v8946 = vunpack.c.l.b16 %v8109
        %v8947 = vunpack.c.l.b16 %v8110
        %v8948 = vunpack.c.l.b16 %v8111
        %v8949 = vunpack.c.l.b16 %v8112
        %v8950 = vunpack.c.l.b16 %v8114
        %v8951 = vunpack.c.l.b16 %v8115
        %v8952 = vunpack.c.l.b16 %v8116
        %v8953 = vunpack.c.l.b16 %v8117
        %v8954 = vunpack.c.l.b16 %v8119
        %v8955 = vunpack.c.l.b16 %v8120
        %v8956 = vunpack.c.l.b16 %v8121
        %v8957 = vunpack.c.l.b16 %v8122
        %v8958 = vunpack.c.l.b16 %v8124
        %v8959 = vunpack.c.l.b16 %v8125
        %v8960 = vunpack.c.l.b16 %v8126
        %v8961 = vunpack.c.l.b16 %v8127
        %v8962 = vunpack.c.l.b16 %v8129
        %v8963 = vunpack.c.l.b16 %v8130
        %v8964 = vunpack.c.l.b16 %v8131
        %v8965 = vunpack.c.l.b16 %v8132
        %v8966 = vpack.c.b16 %v8935, %v8934
        %v8967 = vpack.c.b16 %v8937, %v8936
        %v8968 = vpack.c.b16 %v8939, %v8938
        %v8969 = vpack.c.b16 %v8941, %v8940
        %v8970 = vpack.c.b16 %v8943, %v8942
        %v8971 = vpack.c.b16 %v8945, %v8944
        %v8972 = vpack.c.b16 %v8947, %v8946
        %v8973 = vpack.c.b16 %v8949, %v8948
        %v8974 = vpack.c.b16 %v8951, %v8950
        %v8975 = vpack.c.b16 %v8953, %v8952
        %v8976 = vpack.c.b16 %v8955, %v8954
        %v8977 = vpack.c.b16 %v8957, %v8956
        %v8978 = vpack.c.b16 %v8959, %v8958
        %v8979 = vpack.c.b16 %v8961, %v8960
        %v8980 = vpack.c.b16 %v8963, %v8962
        %v8981 = vpack.c.b16 %v8965, %v8964
        %8982 = vrot.lane.b32.xlu0 %v8966, 18
        %v8983 = vpop.permute.xlu0 %8982
        %8984 = vrot.lane.b32.xlu0 %v8967, 18
        %v8985 = vpop.permute.xlu0 %8984
        %8986 = vrot.lane.b32.xlu0 %v8968, 18
        %v8987 = vpop.permute.xlu0 %8986
        %8988 = vrot.lane.b32.xlu0 %v8969, 18
        %v8989 = vpop.permute.xlu0 %8988
        %8990 = vrot.lane.b32.xlu0 %v8970, 18
        %v8991 = vpop.permute.xlu0 %8990
        %8992 = vrot.lane.b32.xlu0 %v8971, 18
        %v8993 = vpop.permute.xlu0 %8992
        %8994 = vrot.lane.b32.xlu0 %v8972, 18
        %v8995 = vpop.permute.xlu0 %8994
        %8996 = vrot.lane.b32.xlu0 %v8973, 18
        %v8997 = vpop.permute.xlu0 %8996
        %8998 = vrot.lane.b32.xlu0 %v8974, 18
        %v8999 = vpop.permute.xlu0 %8998
        %9000 = vrot.lane.b32.xlu0 %v8975, 18
        %v9001 = vpop.permute.xlu0 %9000
        %9002 = vrot.lane.b32.xlu0 %v8976, 18
        %v9003 = vpop.permute.xlu0 %9002
        %9004 = vrot.lane.b32.xlu0 %v8977, 18
        %v9005 = vpop.permute.xlu0 %9004
        %9006 = vrot.lane.b32.xlu0 %v8978, 18
        %v9007 = vpop.permute.xlu0 %9006
        %9008 = vrot.lane.b32.xlu0 %v8979, 18
        %v9009 = vpop.permute.xlu0 %9008
        %9010 = vrot.lane.b32.xlu0 %v8980, 18
        %v9011 = vpop.permute.xlu0 %9010
        %9012 = vrot.lane.b32.xlu0 %v8981, 18
        %v9013 = vpop.permute.xlu0 %9012
        %v9022 = vunpack.c.l.b16 %v8098
        %v9023 = vunpack.c.l.b16 %v8103
        %v9024 = vunpack.c.l.b16 %v8108
        %v9025 = vunpack.c.l.b16 %v8113
        %v9026 = vunpack.c.l.b16 %v8118
        %v9027 = vunpack.c.l.b16 %v8123
        %v9028 = vunpack.c.l.b16 %v8128
        %v9029 = vunpack.c.l.b16 %v8133
        %v9030 = vpack.c.b16 %v9022, %v9022
        %v9031 = vpack.c.b16 %v9023, %v9023
        %v9032 = vpack.c.b16 %v9024, %v9024
        %v9033 = vpack.c.b16 %v9025, %v9025
        %v9034 = vpack.c.b16 %v9026, %v9026
        %v9035 = vpack.c.b16 %v9027, %v9027
        %v9036 = vpack.c.b16 %v9028, %v9028
        %v9037 = vpack.c.b16 %v9029, %v9029
        %v9039 = vshrl.u32 %v8966, 16
        %v9041 = vshll.u32 %v8966, 16
        %v9043 = vrot.slane %v9041, 1
        %v9044 = vor.u32 %v9039, %v9043
        %v9046 = vshll.u32 %v8967, 16
        %v9048 = vrot.slane %v9046, 1
        %v9049 = vsel %vm2364, %v9044, %v9048
        %v9050 = vshrl.u32 %v8967, 16
        %v9052 = vor.u32 %v9050, %v9048
        %v9054 = vshll.u32 %v9030, 16
        %v9056 = vrot.slane %v9054, 1
        %v9057 = vsel %vm2364, %v9052, %v9056
        %v9059 = vshrl.u32 %v8968, 16
        %v9061 = vshll.u32 %v8968, 16
        %v9063 = vrot.slane %v9061, 1
        %v9064 = vor.u32 %v9059, %v9063
        %v9066 = vshll.u32 %v8969, 16
        %v9068 = vrot.slane %v9066, 1
        %v9069 = vsel %vm2364, %v9064, %v9068
        %v9070 = vshrl.u32 %v8969, 16
        %v9072 = vor.u32 %v9070, %v9068
        %v9074 = vshll.u32 %v9031, 16
        %v9076 = vrot.slane %v9074, 1
        %v9077 = vsel %vm2364, %v9072, %v9076
        %v9079 = vshrl.u32 %v8970, 16
        %v9081 = vshll.u32 %v8970, 16
        %v9083 = vrot.slane %v9081, 1
        %v9084 = vor.u32 %v9079, %v9083
        %v9086 = vshll.u32 %v8971, 16
        %v9088 = vrot.slane %v9086, 1
        %v9089 = vsel %vm2364, %v9084, %v9088
        %v9090 = vshrl.u32 %v8971, 16
        %v9092 = vor.u32 %v9090, %v9088
        %v9094 = vshll.u32 %v9032, 16
        %v9096 = vrot.slane %v9094, 1
        %v9097 = vsel %vm2364, %v9092, %v9096
        %v9099 = vshrl.u32 %v8972, 16
        %v9101 = vshll.u32 %v8972, 16
        %v9103 = vrot.slane %v9101, 1
        %v9104 = vor.u32 %v9099, %v9103
        %v9106 = vshll.u32 %v8973, 16
        %v9108 = vrot.slane %v9106, 1
        %v9109 = vsel %vm2364, %v9104, %v9108
        %v9110 = vshrl.u32 %v8973, 16
        %v9112 = vor.u32 %v9110, %v9108
        %v9114 = vshll.u32 %v9033, 16
        %v9116 = vrot.slane %v9114, 1
        %v9117 = vsel %vm2364, %v9112, %v9116
        %v9119 = vshrl.u32 %v8974, 16
        %v9121 = vshll.u32 %v8974, 16
        %v9123 = vrot.slane %v9121, 1
        %v9124 = vor.u32 %v9119, %v9123
        %v9126 = vshll.u32 %v8975, 16
        %v9128 = vrot.slane %v9126, 1
        %v9129 = vsel %vm2364, %v9124, %v9128
        %v9130 = vshrl.u32 %v8975, 16
        %v9132 = vor.u32 %v9130, %v9128
        %v9134 = vshll.u32 %v9034, 16
        %v9136 = vrot.slane %v9134, 1
        %v9137 = vsel %vm2364, %v9132, %v9136
        %v9139 = vshrl.u32 %v8976, 16
        %v9141 = vshll.u32 %v8976, 16
        %v9143 = vrot.slane %v9141, 1
        %v9144 = vor.u32 %v9139, %v9143
        %v9146 = vshll.u32 %v8977, 16
        %v9148 = vrot.slane %v9146, 1
        %v9149 = vsel %vm2364, %v9144, %v9148
        %v9150 = vshrl.u32 %v8977, 16
        %v9152 = vor.u32 %v9150, %v9148
        %v9154 = vshll.u32 %v9035, 16
        %v9156 = vrot.slane %v9154, 1
        %v9157 = vsel %vm2364, %v9152, %v9156
        %v9159 = vshrl.u32 %v8978, 16
        %v9161 = vshll.u32 %v8978, 16
        %v9163 = vrot.slane %v9161, 1
        %v9164 = vor.u32 %v9159, %v9163
        %v9166 = vshll.u32 %v8979, 16
        %v9168 = vrot.slane %v9166, 1
        %v9169 = vsel %vm2364, %v9164, %v9168
        %v9170 = vshrl.u32 %v8979, 16
        %v9172 = vor.u32 %v9170, %v9168
        %v9174 = vshll.u32 %v9036, 16
        %v9176 = vrot.slane %v9174, 1
        %v9177 = vsel %vm2364, %v9172, %v9176
        %v9179 = vshrl.u32 %v8980, 16
        %v9181 = vshll.u32 %v8980, 16
        %v9183 = vrot.slane %v9181, 1
        %v9184 = vor.u32 %v9179, %v9183
        %v9186 = vshll.u32 %v8981, 16
        %v9188 = vrot.slane %v9186, 1
        %v9189 = vsel %vm2364, %v9184, %v9188
        %v9190 = vshrl.u32 %v8981, 16
        %v9192 = vor.u32 %v9190, %v9188
        %v9194 = vshll.u32 %v9037, 16
        %v9196 = vrot.slane %v9194, 1
        %v9197 = vsel %vm2364, %v9192, %v9196
        %9198 = vrot.lane.b32.xlu0 %v9049, 21
        %v9199 = vpop.permute.xlu0 %9198
        %9200 = vrot.lane.b32.xlu0 %v9057, 21
        %v9201 = vpop.permute.xlu0 %9200
        %9202 = vrot.lane.b32.xlu0 %v9069, 21
        %v9203 = vpop.permute.xlu0 %9202
        %9204 = vrot.lane.b32.xlu0 %v9077, 21
        %v9205 = vpop.permute.xlu0 %9204
        %9206 = vrot.lane.b32.xlu0 %v9089, 21
        %v9207 = vpop.permute.xlu0 %9206
        %9208 = vrot.lane.b32.xlu0 %v9097, 21
        %v9209 = vpop.permute.xlu0 %9208
        %9210 = vrot.lane.b32.xlu0 %v9109, 21
        %v9211 = vpop.permute.xlu0 %9210
        %9212 = vrot.lane.b32.xlu0 %v9117, 21
        %v9213 = vpop.permute.xlu0 %9212
        %9214 = vrot.lane.b32.xlu0 %v9129, 21
        %v9215 = vpop.permute.xlu0 %9214
        %9216 = vrot.lane.b32.xlu0 %v9137, 21
        %v9217 = vpop.permute.xlu0 %9216
        %9218 = vrot.lane.b32.xlu0 %v9149, 21
        %v9219 = vpop.permute.xlu0 %9218
        %9220 = vrot.lane.b32.xlu0 %v9157, 21
        %v9221 = vpop.permute.xlu0 %9220
        %9222 = vrot.lane.b32.xlu0 %v9169, 21
        %v9223 = vpop.permute.xlu0 %9222
        %9224 = vrot.lane.b32.xlu0 %v9177, 21
        %v9225 = vpop.permute.xlu0 %9224
        %9226 = vrot.lane.b32.xlu0 %v9189, 21
        %v9227 = vpop.permute.xlu0 %9226
        %9228 = vrot.lane.b32.xlu0 %v9197, 21
        %v9229 = vpop.permute.xlu0 %9228
        %v9230 = vrot.slane %v8966, 1
        %v9231 = vrot.slane %v8967, 1
        %v9232 = vsel %vm2557, %v9230, %v9231
        %v9233 = vrot.slane %v9030, 1
        %v9234 = vsel %vm2557, %v9231, %v9233
        %v9235 = vrot.slane %v8968, 1
        %v9236 = vrot.slane %v8969, 1
        %v9237 = vsel %vm2557, %v9235, %v9236
        %v9238 = vrot.slane %v9031, 1
        %v9239 = vsel %vm2557, %v9236, %v9238
        %v9240 = vrot.slane %v8970, 1
        %v9241 = vrot.slane %v8971, 1
        %v9242 = vsel %vm2557, %v9240, %v9241
        %v9243 = vrot.slane %v9032, 1
        %v9244 = vsel %vm2557, %v9241, %v9243
        %v9245 = vrot.slane %v8972, 1
        %v9246 = vrot.slane %v8973, 1
        %v9247 = vsel %vm2557, %v9245, %v9246
        %v9248 = vrot.slane %v9033, 1
        %v9249 = vsel %vm2557, %v9246, %v9248
        %v9250 = vrot.slane %v8974, 1
        %v9251 = vrot.slane %v8975, 1
        %v9252 = vsel %vm2557, %v9250, %v9251
        %v9253 = vrot.slane %v9034, 1
        %v9254 = vsel %vm2557, %v9251, %v9253
        %v9255 = vrot.slane %v8976, 1
        %v9256 = vrot.slane %v8977, 1
        %v9257 = vsel %vm2557, %v9255, %v9256
        %v9258 = vrot.slane %v9035, 1
        %v9259 = vsel %vm2557, %v9256, %v9258
        %v9260 = vrot.slane %v8978, 1
        %v9261 = vrot.slane %v8979, 1
        %v9262 = vsel %vm2557, %v9260, %v9261
        %v9263 = vrot.slane %v9036, 1
        %v9264 = vsel %vm2557, %v9261, %v9263
        %v9265 = vrot.slane %v8980, 1
        %v9266 = vrot.slane %v8981, 1
        %v9267 = vsel %vm2557, %v9265, %v9266
        %v9268 = vrot.slane %v9037, 1
        %v9269 = vsel %vm2557, %v9266, %v9268
        %9270 = vrot.lane.b32.xlu0 %v9232, 24
        %v9271 = vpop.permute.xlu0 %9270
        %9272 = vrot.lane.b32.xlu0 %v9234, 24
        %v9273 = vpop.permute.xlu0 %9272
        %9274 = vrot.lane.b32.xlu0 %v9237, 24
        %v9275 = vpop.permute.xlu0 %9274
        %9276 = vrot.lane.b32.xlu0 %v9239, 24
        %v9277 = vpop.permute.xlu0 %9276
        %9278 = vrot.lane.b32.xlu0 %v9242, 24
        %v9279 = vpop.permute.xlu0 %9278
        %9280 = vrot.lane.b32.xlu0 %v9244, 24
        %v9281 = vpop.permute.xlu0 %9280
        %9282 = vrot.lane.b32.xlu0 %v9247, 24
        %v9283 = vpop.permute.xlu0 %9282
        %9284 = vrot.lane.b32.xlu0 %v9249, 24
        %v9285 = vpop.permute.xlu0 %9284
        %9286 = vrot.lane.b32.xlu0 %v9252, 24
        %v9287 = vpop.permute.xlu0 %9286
        %9288 = vrot.lane.b32.xlu0 %v9254, 24
        %v9289 = vpop.permute.xlu0 %9288
        %9290 = vrot.lane.b32.xlu0 %v9257, 24
        %v9291 = vpop.permute.xlu0 %9290
        %9292 = vrot.lane.b32.xlu0 %v9259, 24
        %v9293 = vpop.permute.xlu0 %9292
        %9294 = vrot.lane.b32.xlu0 %v9262, 24
        %v9295 = vpop.permute.xlu0 %9294
        %9296 = vrot.lane.b32.xlu0 %v9264, 24
        %v9297 = vpop.permute.xlu0 %9296
        %9298 = vrot.lane.b32.xlu0 %v9267, 24
        %v9299 = vpop.permute.xlu0 %9298
        %9300 = vrot.lane.b32.xlu0 %v9269, 24
        %v9301 = vpop.permute.xlu0 %9300
        %v9303 = vsel %vm3430, %v8198, %v8399
        %v9305 = vsel %vm3430, %v8199, %v8401
        %v9307 = vsel %vm3430, %v8200, %v8403
        %v9309 = vsel %vm3430, %v8201, %v8405
        %v9311 = vsel %vm3430, %v8202, %v8407
        %v9313 = vsel %vm3430, %v8203, %v8409
        %v9315 = vsel %vm3430, %v8204, %v8411
        %v9317 = vsel %vm3430, %v8205, %v8413
        %v9319 = vsel %vm3430, %v8206, %v8415
        %v9321 = vsel %vm3430, %v8207, %v8417
        %v9323 = vsel %vm3430, %v8208, %v8419
        %v9325 = vsel %vm3430, %v8209, %v8421
        %v9327 = vsel %vm3430, %v8210, %v8423
        %v9329 = vsel %vm3430, %v8211, %v8425
        %v9331 = vsel %vm3430, %v8212, %v8427
        %v9333 = vsel %vm3430, %v8213, %v8429
        %v9335 = vsel %vm3463, %v9303, %v8471
        %v9337 = vsel %vm3463, %v9305, %v8473
        %v9339 = vsel %vm3463, %v9307, %v8475
        %v9341 = vsel %vm3463, %v9309, %v8477
        %v9343 = vsel %vm3463, %v9311, %v8479
        %v9345 = vsel %vm3463, %v9313, %v8481
        %v9347 = vsel %vm3463, %v9315, %v8483
        %v9349 = vsel %vm3463, %v9317, %v8485
        %v9351 = vsel %vm3463, %v9319, %v8487
        %v9353 = vsel %vm3463, %v9321, %v8489
        %v9355 = vsel %vm3463, %v9323, %v8491
        %v9357 = vsel %vm3463, %v9325, %v8493
        %v9359 = vsel %vm3463, %v9327, %v8495
        %v9361 = vsel %vm3463, %v9329, %v8497
        %v9363 = vsel %vm3463, %v9331, %v8499
        %v9365 = vsel %vm3463, %v9333, %v8501
        %v9367 = vsel %vm3496, %v9335, %v8583
        %v9369 = vsel %vm3496, %v9337, %v8585
        %v9371 = vsel %vm3496, %v9339, %v8587
        %v9373 = vsel %vm3496, %v9341, %v8589
        %v9375 = vsel %vm3496, %v9343, %v8591
        %v9377 = vsel %vm3496, %v9345, %v8593
        %v9379 = vsel %vm3496, %v9347, %v8595
        %v9381 = vsel %vm3496, %v9349, %v8597
        %v9383 = vsel %vm3496, %v9351, %v8599
        %v9385 = vsel %vm3496, %v9353, %v8601
        %v9387 = vsel %vm3496, %v9355, %v8603
        %v9389 = vsel %vm3496, %v9357, %v8605
        %v9391 = vsel %vm3496, %v9359, %v8607
        %v9393 = vsel %vm3496, %v9361, %v8609
        %v9395 = vsel %vm3496, %v9363, %v8611
        %v9397 = vsel %vm3496, %v9365, %v8613
        %v9399 = vsel %vm3529, %v9367, %v8799
        %v9401 = vsel %vm3529, %v9369, %v8801
        %v9403 = vsel %vm3529, %v9371, %v8803
        %v9405 = vsel %vm3529, %v9373, %v8805
        %v9407 = vsel %vm3529, %v9375, %v8807
        %v9409 = vsel %vm3529, %v9377, %v8809
        %v9411 = vsel %vm3529, %v9379, %v8811
        %v9413 = vsel %vm3529, %v9381, %v8813
        %v9415 = vsel %vm3529, %v9383, %v8815
        %v9417 = vsel %vm3529, %v9385, %v8817
        %v9419 = vsel %vm3529, %v9387, %v8819
        %v9421 = vsel %vm3529, %v9389, %v8821
        %v9423 = vsel %vm3529, %v9391, %v8823
        %v9425 = vsel %vm3529, %v9393, %v8825
        %v9427 = vsel %vm3529, %v9395, %v8827
        %v9429 = vsel %vm3529, %v9397, %v8829
        %v9431 = vsel %vm3562, %v9399, %v8871
        %v9433 = vsel %vm3562, %v9401, %v8873
        %v9435 = vsel %vm3562, %v9403, %v8875
        %v9437 = vsel %vm3562, %v9405, %v8877
        %v9439 = vsel %vm3562, %v9407, %v8879
        %v9441 = vsel %vm3562, %v9409, %v8881
        %v9443 = vsel %vm3562, %v9411, %v8883
        %v9445 = vsel %vm3562, %v9413, %v8885
        %v9447 = vsel %vm3562, %v9415, %v8887
        %v9449 = vsel %vm3562, %v9417, %v8889
        %v9451 = vsel %vm3562, %v9419, %v8891
        %v9453 = vsel %vm3562, %v9421, %v8893
        %v9455 = vsel %vm3562, %v9423, %v8895
        %v9457 = vsel %vm3562, %v9425, %v8897
        %v9459 = vsel %vm3562, %v9427, %v8899
        %v9461 = vsel %vm3562, %v9429, %v8901
        %v9463 = vsel %vm3595, %v9431, %v8983
        %v9465 = vsel %vm3595, %v9433, %v8985
        %v9467 = vsel %vm3595, %v9435, %v8987
        %v9469 = vsel %vm3595, %v9437, %v8989
        %v9471 = vsel %vm3595, %v9439, %v8991
        %v9473 = vsel %vm3595, %v9441, %v8993
        %v9475 = vsel %vm3595, %v9443, %v8995
        %v9477 = vsel %vm3595, %v9445, %v8997
        %v9479 = vsel %vm3595, %v9447, %v8999
        %v9481 = vsel %vm3595, %v9449, %v9001
        %v9483 = vsel %vm3595, %v9451, %v9003
        %v9485 = vsel %vm3595, %v9453, %v9005
        %v9487 = vsel %vm3595, %v9455, %v9007
        %v9489 = vsel %vm3595, %v9457, %v9009
        %v9491 = vsel %vm3595, %v9459, %v9011
        %v9493 = vsel %vm3595, %v9461, %v9013
        %v9495 = vsel %vm3628, %v9463, %v9199
        %v9497 = vsel %vm3628, %v9465, %v9201
        %v9499 = vsel %vm3628, %v9467, %v9203
        %v9501 = vsel %vm3628, %v9469, %v9205
        %v9503 = vsel %vm3628, %v9471, %v9207
        %v9505 = vsel %vm3628, %v9473, %v9209
        %v9507 = vsel %vm3628, %v9475, %v9211
        %v9509 = vsel %vm3628, %v9477, %v9213
        %v9511 = vsel %vm3628, %v9479, %v9215
        %v9513 = vsel %vm3628, %v9481, %v9217
        %v9515 = vsel %vm3628, %v9483, %v9219
        %v9517 = vsel %vm3628, %v9485, %v9221
        %v9519 = vsel %vm3628, %v9487, %v9223
        %v9521 = vsel %vm3628, %v9489, %v9225
        %v9523 = vsel %vm3628, %v9491, %v9227
        %v9525 = vsel %vm3628, %v9493, %v9229
        %v9527 = vsel %vm3661, %v9495, %v9271
        %v9529 = vsel %vm3661, %v9497, %v9273
        %v9531 = vsel %vm3661, %v9499, %v9275
        %v9533 = vsel %vm3661, %v9501, %v9277
        %v9535 = vsel %vm3661, %v9503, %v9279
        %v9537 = vsel %vm3661, %v9505, %v9281
        %v9539 = vsel %vm3661, %v9507, %v9283
        %v9541 = vsel %vm3661, %v9509, %v9285
        %v9543 = vsel %vm3661, %v9511, %v9287
        %v9545 = vsel %vm3661, %v9513, %v9289
        %v9547 = vsel %vm3661, %v9515, %v9291
        %v9549 = vsel %vm3661, %v9517, %v9293
        %v9551 = vsel %vm3661, %v9519, %v9295
        %v9553 = vsel %vm3661, %v9521, %v9297
        %v9555 = vsel %vm3661, %v9523, %v9299
        %v9557 = vsel %vm3661, %v9525, %v9301
        %v9558 = vld [vmem:[%s210] sm:$0xf]
        %v9559 = vld [vmem:[%s210 + $0x4] sm:$0xf]
        %v9560 = vld [vmem:[%s210 + $0x8] sm:$0xf]
        %v9561 = vld [vmem:[%s210 + $0xc] sm:$0x3]
        %v9566 = vunpack.c.l.b16 %v9558
        %v9567 = vunpack.c.l.b16 %v9559
        %v9568 = vunpack.c.l.b16 %v9560
        %v9569 = vunpack.c.l.b16 %v9561
        %v9570 = vpack.c.b16 %v9567, %v9566
        %v9571 = vpack.c.b16 %v9569, %v9568
        %v9573 = vsel %vm3715, %v9527, 0
        %v9575 = vsel %vm3715, %v9529, 0
        %v9577 = vsel %vm3715, %v9531, 0
        %v9579 = vsel %vm3715, %v9533, 0
        %v9581 = vsel %vm3715, %v9535, 0
        %v9583 = vsel %vm3715, %v9537, 0
        %v9585 = vsel %vm3715, %v9539, 0
        %v9587 = vsel %vm3715, %v9541, 0
        %v9589 = vsel %vm3715, %v9543, 0
        %v9591 = vsel %vm3715, %v9545, 0
        %v9593 = vsel %vm3715, %v9547, 0
        %v9595 = vsel %vm3715, %v9549, 0
        %v9597 = vsel %vm3715, %v9551, 0
        %v9599 = vsel %vm3715, %v9553, 0
        %v9601 = vsel %vm3715, %v9555, 0
        %v9603 = vsel %vm3715, %v9557, 0
        %v9606 = vand.u32 %v9571, %v3751
        %9608 = vmatprep.subr.bf16.mxu0 0
        %9609 = vmatpush1.bf16.msra.mxu0 0
        %9610 = vmatprep.subr.bf16.mxu0 0
        %9611 = vmatpush1.bf16.msra.mxu0 0
        %9612 = vmatprep.subr.bf16.mxu0 0
        %9613 = vmatpush1.bf16.msra.mxu0 0
        %9614 = vmatprep.subr.bf16.mxu0 0
        %9615 = vmatpush1.bf16.msra.mxu0 0
        %9616 = vmatprep.subr.bf16.mxu0 0
        %9617 = vmatpush1.bf16.msra.mxu0 0
        %9618 = vmatprep.subr.bf16.mxu0 0
        %9619 = vmatpush1.bf16.msra.mxu0 0
        %9620 = vmatprep.subr.bf16.mxu0 0
        %9621 = vmatpush1.bf16.msra.mxu0 %v9606
        %9622 = vmatprep.subr.bf16.mxu0 0
        %9623 = vmatpush1.bf16.msra.mxu0 %v9570
        %9624 = vmatprep.subr.bf16.mxu0 0
        %9625 = vmatpush2.bf16.msra.mxu0 0
        %9626 = vmatprep.subr.bf16.mxu0 0
        %9627 = vmatpush2.bf16.msra.mxu0 0
        %9628 = vmatprep.subr.bf16.mxu0 0
        %9629 = vmatpush2.bf16.msra.mxu0 0
        %9630 = vmatprep.subr.bf16.mxu0 0
        %9631 = vmatpush2.bf16.msra.mxu0 0
        %9632 = vmatprep.subr.bf16.mxu0 0
        %9633 = vmatpush2.bf16.msra.mxu0 0
        %9634 = vmatprep.subr.bf16.mxu0 0
        %9635 = vmatpush2.bf16.msra.mxu0 0
        %9636 = vmatprep.subr.bf16.mxu0 0
        %9637 = vmatpush2.bf16.msra.mxu0 0
        %9638 = vmatprep.subr.bf16.mxu0 0
        %9639 = vmatpush2.bf16.msra.mxu0 0
        %9640 = vmatprep.mubr.bf16.mxu0 0
        %9641 = vmatmul.mubr.bf16.gmra.mxu0 %v9573
        %v9642 = vpop.f32.mrf.mxu0
        %v9643 = vadd.f32 %v3702, %v9642
        %v9644 = vpop.f32.mrf.mxu0
        %v9645 = vpop.f32.mrf.mxu0
        %v9646 = vadd.f32 %v3702, %v9645
        %v9647 = vpop.f32.mrf.mxu0
        %9648 = vmatprep.mubr.bf16.mxu0 0
        %9649 = vmatmul.mubr.bf16.gmra.mxu0 %v9575
        %v9650 = vpop.f32.mrf.mxu0
        %v9651 = vadd.f32 %v3702, %v9650
        %v9652 = vpop.f32.mrf.mxu0
        %v9653 = vpop.f32.mrf.mxu0
        %v9654 = vadd.f32 %v3702, %v9653
        %v9655 = vpop.f32.mrf.mxu0
        %9656 = vmatprep.mubr.bf16.mxu0 0
        %9657 = vmatmul.mubr.bf16.gmra.mxu0 %v9577
        %v9658 = vpop.f32.mrf.mxu0
        %v9659 = vadd.f32 %v3702, %v9658
        %v9660 = vpop.f32.mrf.mxu0
        %v9661 = vpop.f32.mrf.mxu0
        %v9662 = vadd.f32 %v3702, %v9661
        %v9663 = vpop.f32.mrf.mxu0
        %9664 = vmatprep.mubr.bf16.mxu0 0
        %9665 = vmatmul.mubr.bf16.gmra.mxu0 %v9579
        %v9666 = vpop.f32.mrf.mxu0
        %v9667 = vadd.f32 %v3702, %v9666
        %v9668 = vpop.f32.mrf.mxu0
        %v9669 = vpop.f32.mrf.mxu0
        %v9670 = vadd.f32 %v3702, %v9669
        %v9671 = vpop.f32.mrf.mxu0
        %9672 = vmatprep.mubr.bf16.mxu0 0
        %9673 = vmatmul.mubr.bf16.gmra.mxu0 %v9581
        %v9674 = vpop.f32.mrf.mxu0
        %v9675 = vadd.f32 %v3702, %v9674
        %v9676 = vpop.f32.mrf.mxu0
        %v9677 = vpop.f32.mrf.mxu0
        %v9678 = vadd.f32 %v3702, %v9677
        %v9679 = vpop.f32.mrf.mxu0
        %9680 = vmatprep.mubr.bf16.mxu0 0
        %9681 = vmatmul.mubr.bf16.gmra.mxu0 %v9583
        %v9682 = vpop.f32.mrf.mxu0
        %v9683 = vadd.f32 %v3702, %v9682
        %v9684 = vpop.f32.mrf.mxu0
        %v9685 = vpop.f32.mrf.mxu0
        %v9686 = vadd.f32 %v3702, %v9685
        %v9687 = vpop.f32.mrf.mxu0
        %9688 = vmatprep.mubr.bf16.mxu0 0
        %9689 = vmatmul.mubr.bf16.gmra.mxu0 %v9585
        %v9690 = vpop.f32.mrf.mxu0
        %v9691 = vadd.f32 %v3702, %v9690
        %v9692 = vpop.f32.mrf.mxu0
        %v9693 = vpop.f32.mrf.mxu0
        %v9694 = vadd.f32 %v3702, %v9693
        %v9695 = vpop.f32.mrf.mxu0
        %9696 = vmatprep.mubr.bf16.mxu0 0
        %9697 = vmatmul.mubr.bf16.gmra.mxu0 %v9587
        %v9698 = vpop.f32.mrf.mxu0
        %v9699 = vadd.f32 %v3702, %v9698
        %v9700 = vpop.f32.mrf.mxu0
        %v9701 = vpop.f32.mrf.mxu0
        %v9702 = vadd.f32 %v3702, %v9701
        %v9703 = vpop.f32.mrf.mxu0
        %9704 = vmatprep.mubr.bf16.mxu0 0
        %9705 = vmatmul.mubr.bf16.gmra.mxu0 %v9589
        %v9706 = vpop.f32.mrf.mxu0
        %v9707 = vadd.f32 %v3702, %v9706
        %v9708 = vpop.f32.mrf.mxu0
        %v9709 = vpop.f32.mrf.mxu0
        %v9710 = vadd.f32 %v3702, %v9709
        %v9711 = vpop.f32.mrf.mxu0
        %9712 = vmatprep.mubr.bf16.mxu0 0
        %9713 = vmatmul.mubr.bf16.gmra.mxu0 %v9591
        %v9714 = vpop.f32.mrf.mxu0
        %v9715 = vadd.f32 %v3702, %v9714
        %v9716 = vpop.f32.mrf.mxu0
        %v9717 = vpop.f32.mrf.mxu0
        %v9718 = vadd.f32 %v3702, %v9717
        %v9719 = vpop.f32.mrf.mxu0
        %9720 = vmatprep.mubr.bf16.mxu0 0
        %9721 = vmatmul.mubr.bf16.gmra.mxu0 %v9593
        %v9722 = vpop.f32.mrf.mxu0
        %v9723 = vadd.f32 %v3702, %v9722
        %v9724 = vpop.f32.mrf.mxu0
        %v9725 = vpop.f32.mrf.mxu0
        %v9726 = vadd.f32 %v3702, %v9725
        %v9727 = vpop.f32.mrf.mxu0
        %9728 = vmatprep.mubr.bf16.mxu0 0
        %9729 = vmatmul.mubr.bf16.gmra.mxu0 %v9595
        %v9730 = vpop.f32.mrf.mxu0
        %v9731 = vadd.f32 %v3702, %v9730
        %v9732 = vpop.f32.mrf.mxu0
        %v9733 = vpop.f32.mrf.mxu0
        %v9734 = vadd.f32 %v3702, %v9733
        %v9735 = vpop.f32.mrf.mxu0
        %9736 = vmatprep.mubr.bf16.mxu0 0
        %9737 = vmatmul.mubr.bf16.gmra.mxu0 %v9597
        %v9738 = vpop.f32.mrf.mxu0
        %v9739 = vadd.f32 %v3702, %v9738
        %v9740 = vpop.f32.mrf.mxu0
        %v9741 = vpop.f32.mrf.mxu0
        %v9742 = vadd.f32 %v3702, %v9741
        %v9743 = vpop.f32.mrf.mxu0
        %9744 = vmatprep.mubr.bf16.mxu0 0
        %9745 = vmatmul.mubr.bf16.gmra.mxu0 %v9599
        %v9746 = vpop.f32.mrf.mxu0
        %v9747 = vadd.f32 %v3702, %v9746
        %v9748 = vpop.f32.mrf.mxu0
        %v9749 = vpop.f32.mrf.mxu0
        %v9750 = vadd.f32 %v3702, %v9749
        %v9751 = vpop.f32.mrf.mxu0
        %9752 = vmatprep.mubr.bf16.mxu0 0
        %9753 = vmatmul.mubr.bf16.gmra.mxu0 %v9601
        %v9754 = vpop.f32.mrf.mxu0
        %v9755 = vadd.f32 %v3702, %v9754
        %v9756 = vpop.f32.mrf.mxu0
        %v9757 = vpop.f32.mrf.mxu0
        %v9758 = vadd.f32 %v3702, %v9757
        %v9759 = vpop.f32.mrf.mxu0
        %9760 = vmatprep.mubr.bf16.mxu0 0
        %9761 = vmatmul.mubr.bf16.gmra.mxu0 %v9603
        %v9762 = vpop.f32.mrf.mxu0
        %v9763 = vadd.f32 %v3702, %v9762
        %v9764 = vpop.f32.mrf.mxu0
        %v9765 = vpop.f32.mrf.mxu0
        %v9766 = vadd.f32 %v3702, %v9765
        %v9767 = vpop.f32.mrf.mxu0
        %9768 = vdwg.mxu0
        %v9769 = vmax.f32 %v9643, 0.0
        %v9770 = vmax.f32 %v9646, 0.0
        %v9771 = vmax.f32 %v9651, 0.0
        %v9772 = vmax.f32 %v9654, 0.0
        %v9773 = vmax.f32 %v9659, 0.0
        %v9774 = vmax.f32 %v9662, 0.0
        %v9775 = vmax.f32 %v9667, 0.0
        %v9776 = vmax.f32 %v9670, 0.0
        %v9777 = vmax.f32 %v9675, 0.0
        %v9778 = vmax.f32 %v9678, 0.0
        %v9779 = vmax.f32 %v9683, 0.0
        %v9780 = vmax.f32 %v9686, 0.0
        %v9781 = vmax.f32 %v9691, 0.0
        %v9782 = vmax.f32 %v9694, 0.0
        %v9783 = vmax.f32 %v9699, 0.0
        %v9784 = vmax.f32 %v9702, 0.0
        %v9785 = vmax.f32 %v9707, 0.0
        %v9786 = vmax.f32 %v9710, 0.0
        %v9787 = vmax.f32 %v9715, 0.0
        %v9788 = vmax.f32 %v9718, 0.0
        %v9789 = vmax.f32 %v9723, 0.0
        %v9790 = vmax.f32 %v9726, 0.0
        %v9791 = vmax.f32 %v9731, 0.0
        %v9792 = vmax.f32 %v9734, 0.0
        %v9793 = vmax.f32 %v9739, 0.0
        %v9794 = vmax.f32 %v9742, 0.0
        %v9795 = vmax.f32 %v9747, 0.0
        %v9796 = vmax.f32 %v9750, 0.0
        %v9797 = vmax.f32 %v9755, 0.0
        %v9798 = vmax.f32 %v9758, 0.0
        %v9799 = vmax.f32 %v9763, 0.0
        %v9800 = vmax.f32 %v9766, 0.0
        %v9801 = vpack.c.bf16 %v9770, %v9769
        %v9802 = vpack.c.bf16 %v9772, %v9771
        %v9803 = vpack.c.bf16 %v9774, %v9773
        %v9804 = vpack.c.bf16 %v9776, %v9775
        %v9805 = vpack.c.bf16 %v9778, %v9777
        %v9806 = vpack.c.bf16 %v9780, %v9779
        %v9807 = vpack.c.bf16 %v9782, %v9781
        %v9808 = vpack.c.bf16 %v9784, %v9783
        %v9809 = vpack.c.bf16 %v9786, %v9785
        %v9810 = vpack.c.bf16 %v9788, %v9787
        %v9811 = vpack.c.bf16 %v9790, %v9789
        %v9812 = vpack.c.bf16 %v9792, %v9791
        %v9813 = vpack.c.bf16 %v9794, %v9793
        %v9814 = vpack.c.bf16 %v9796, %v9795
        %v9815 = vpack.c.bf16 %v9798, %v9797
        %v9816 = vpack.c.bf16 %v9800, %v9799
        %v9833 = vunpack.c.l.b16 %v9801
        %v9834 = vunpack.c.h.b16 %v9801
        %v9835 = vunpack.c.l.b16 %v9802
        %v9836 = vunpack.c.h.b16 %v9802
        %v9837 = vunpack.c.l.b16 %v9803
        %v9838 = vunpack.c.h.b16 %v9803
        %v9839 = vunpack.c.l.b16 %v9804
        %v9840 = vunpack.c.h.b16 %v9804
        %v9841 = vunpack.c.l.b16 %v9805
        %v9842 = vunpack.c.h.b16 %v9805
        %v9843 = vunpack.c.l.b16 %v9806
        %v9844 = vunpack.c.h.b16 %v9806
        %v9845 = vunpack.c.l.b16 %v9807
        %v9846 = vunpack.c.h.b16 %v9807
        %v9847 = vunpack.c.l.b16 %v9808
        %v9848 = vunpack.c.h.b16 %v9808
        %v9849 = vunpack.c.l.b16 %v9809
        %v9850 = vunpack.c.h.b16 %v9809
        %v9851 = vunpack.c.l.b16 %v9810
        %v9852 = vunpack.c.h.b16 %v9810
        %v9853 = vunpack.c.l.b16 %v9811
        %v9854 = vunpack.c.h.b16 %v9811
        %v9855 = vunpack.c.l.b16 %v9812
        %v9856 = vunpack.c.h.b16 %v9812
        %v9857 = vunpack.c.l.b16 %v9813
        %v9858 = vunpack.c.h.b16 %v9813
        %v9859 = vunpack.c.l.b16 %v9814
        %v9860 = vunpack.c.h.b16 %v9814
        %v9861 = vunpack.c.l.b16 %v9815
        %v9862 = vunpack.c.h.b16 %v9815
        %v9863 = vunpack.c.l.b16 %v9816
        %v9864 = vunpack.c.h.b16 %v9816
        %v9865 = vpack.c.b16 %v9833, %v9833
        %v9866 = vpack.c.b16 %v9834, %v9834
        %v9867 = vpack.c.b16 %v9835, %v9835
        %v9868 = vpack.c.b16 %v9836, %v9836
        %v9869 = vpack.c.b16 %v9837, %v9837
        %v9870 = vpack.c.b16 %v9838, %v9838
        %v9871 = vpack.c.b16 %v9839, %v9839
        %v9872 = vpack.c.b16 %v9840, %v9840
        %v9873 = vpack.c.b16 %v9841, %v9841
        %v9874 = vpack.c.b16 %v9842, %v9842
        %v9875 = vpack.c.b16 %v9843, %v9843
        %v9876 = vpack.c.b16 %v9844, %v9844
        %v9877 = vpack.c.b16 %v9845, %v9845
        %v9878 = vpack.c.b16 %v9846, %v9846
        %v9879 = vpack.c.b16 %v9847, %v9847
        %v9880 = vpack.c.b16 %v9848, %v9848
        %v9881 = vpack.c.b16 %v9849, %v9849
        %v9882 = vpack.c.b16 %v9850, %v9850
        %v9883 = vpack.c.b16 %v9851, %v9851
        %v9884 = vpack.c.b16 %v9852, %v9852
        %v9885 = vpack.c.b16 %v9853, %v9853
        %v9886 = vpack.c.b16 %v9854, %v9854
        %v9887 = vpack.c.b16 %v9855, %v9855
        %v9888 = vpack.c.b16 %v9856, %v9856
        %v9889 = vpack.c.b16 %v9857, %v9857
        %v9890 = vpack.c.b16 %v9858, %v9858
        %v9891 = vpack.c.b16 %v9859, %v9859
        %v9892 = vpack.c.b16 %v9860, %v9860
        %v9893 = vpack.c.b16 %v9861, %v9861
        %v9894 = vpack.c.b16 %v9862, %v9862
        %v9895 = vpack.c.b16 %v9863, %v9863
        %v9896 = vpack.c.b16 %v9864, %v9864
        %s9929 = scalar_lea.vmem %s201, 384 [#allocation3]
        %9930 = vst.msk [vmem:[%s9929] sm:$0xf] %vm4076, %v9865
        %9931 = vst.msk [vmem:[%s9929 + $0x4] sm:$0xf] %vm4076, %v9866
        %9932 = vst.msk [vmem:[%s9929 + $0x8] sm:$0xf] %vm4076, %v9867
        %9933 = vst.msk [vmem:[%s9929 + $0xc] sm:$0xf] %vm4076, %v9868
        %9934 = vst.msk [vmem:[%s9929 + $0x10] sm:$0xf] %vm4076, %v9869
        %9935 = vst.msk [vmem:[%s9929 + $0x14] sm:$0xf] %vm4076, %v9870
        %9936 = vst.msk [vmem:[%s9929 + $0x18] sm:$0xf] %vm4076, %v9871
        %9937 = vst.msk [vmem:[%s9929 + $0x1c] sm:$0xf] %vm4076, %v9872
        %9938 = vst.msk [vmem:[%s9929 + $0x20] sm:$0xf] %vm4076, %v9873
        %9939 = vst.msk [vmem:[%s9929 + $0x24] sm:$0xf] %vm4076, %v9874
        %9940 = vst.msk [vmem:[%s9929 + $0x28] sm:$0xf] %vm4076, %v9875
        %9941 = vst.msk [vmem:[%s9929 + $0x2c] sm:$0xf] %vm4076, %v9876
        %9942 = vst.msk [vmem:[%s9929 + $0x30] sm:$0xf] %vm4076, %v9877
        %9943 = vst.msk [vmem:[%s9929 + $0x34] sm:$0xf] %vm4076, %v9878
        %9944 = vst.msk [vmem:[%s9929 + $0x38] sm:$0xf] %vm4076, %v9879
        %9945 = vst.msk [vmem:[%s9929 + $0x3c] sm:$0xf] %vm4076, %v9880
        %9946 = vst.msk [vmem:[%s9929 + $0x40] sm:$0xf] %vm4076, %v9881
        %9947 = vst.msk [vmem:[%s9929 + $0x44] sm:$0xf] %vm4076, %v9882
        %9948 = vst.msk [vmem:[%s9929 + $0x48] sm:$0xf] %vm4076, %v9883
        %9949 = vst.msk [vmem:[%s9929 + $0x4c] sm:$0xf] %vm4076, %v9884
        %9950 = vst.msk [vmem:[%s9929 + $0x50] sm:$0xf] %vm4076, %v9885
        %9951 = vst.msk [vmem:[%s9929 + $0x54] sm:$0xf] %vm4076, %v9886
        %9952 = vst.msk [vmem:[%s9929 + $0x58] sm:$0xf] %vm4076, %v9887
        %9953 = vst.msk [vmem:[%s9929 + $0x5c] sm:$0xf] %vm4076, %v9888
        %9954 = vst.msk [vmem:[%s9929 + $0x60] sm:$0xf] %vm4076, %v9889
        %9955 = vst.msk [vmem:[%s9929 + $0x64] sm:$0xf] %vm4076, %v9890
        %9956 = vst.msk [vmem:[%s9929 + $0x68] sm:$0xf] %vm4076, %v9891
        %9957 = vst.msk [vmem:[%s9929 + $0x6c] sm:$0xf] %vm4076, %v9892
        %9958 = vst.msk [vmem:[%s9929 + $0x70] sm:$0xf] %vm4076, %v9893
        %9959 = vst.msk [vmem:[%s9929 + $0x74] sm:$0xf] %vm4076, %v9894
        %9960 = vst.msk [vmem:[%s9929 + $0x78] sm:$0xf] %vm4076, %v9895
        %9961 = vst.msk [vmem:[%s9929 + $0x7c] sm:$0xf] %vm4076, %v9896
        %s9962 = sand.u32 %s117, 1
        %s9963 = scalar_lea.sflag [#allocation4], %s9962
        %s9964 = sand.u32 %s117, 1
        %s9965 = smul.addr %s9964, 512
        %s9966 = scalar_lea.vmem [#allocation3], %s9965
        // Predicated region
        $region33: #{tpu_custom_call.1} parent=31 // pred_check
          %p9967 = pneg %p127
        $region34: #{tpu_custom_call.1} parent=31 // pred_check_branch
          %9969 = sbr.rel (%p9967) target = $region36
        $region35: #{tpu_custom_call.1} parent=31 // pred_region
          %s9971 = ssub.s32 8192, 8192
          %9972 = vsyncadd %s9963, %s9971
          %s9973 = smul.addr %s21, 128
          %s9974 = sadd.s32 %s22, %s9973
          %s9975 = smul.addr %s9974, 64
          %s9976 = scalar_lea.hbm %s3, %s9975
          %s9977 = sshll.u32 %s9966, 4
          %s9978 = int_to_ptr.vmem [resolvable:$true] %s9977
          %9983 = dma.vmem_to_hbm [thread:$0]  %s9978, 8192, %s9976, %s9963, 64, 64, 4
        $region36: #{tpu_custom_call.1} parent=31 // pred_fallthru
          _
      $region32: #{tpu_custom_call.1} parent=5 // pred_fallthru
        _
      %p9984 = scmp.le.s32.totalorder 2, %s12
      // Predicated region
      $region37: #{tpu_custom_call.1} parent=5 // pred_check
        %p9985 = pneg %p9984
      $region38: #{tpu_custom_call.1} parent=5 // pred_check_branch
        %9987 = sbr.rel (%p9985) target = $region40
      $region39: #{tpu_custom_call.1} parent=5 // pred_region
        %s9988 = ssub.s32 %s12, 2
        // Predicated region
        $region41: #{tpu_custom_call.1} parent=39 // pred_check
          %p9989 = pneg %p133
        $region42: #{tpu_custom_call.1} parent=39 // pred_check_branch
          %9991 = sbr.rel (%p9989) target = $region44
        $region43: #{tpu_custom_call.1} parent=39 // pred_region
          %s9992 = sand.u32 %s118, 1
          %s9993 = scalar_lea.sflag [#allocation4], %s9992
          %s9994 = sand.u32 %s118, 1
          %s9995 = smul.addr %s9994, 512
          %s9996 = scalar_lea.vmem [#allocation3], %s9995
          %9997 = dma.done %s9993, 8192
        $region44: #{tpu_custom_call.1} parent=39 // pred_fallthru
          _
      $region40: #{tpu_custom_call.1} parent=5 // pred_fallthru
        _
    $region6: #{tpu_custom_call.1} parent=1 // loop_footer
      %s16 = sadd.s32 1, %s12
    $region7: #{tpu_custom_call.1} parent=1 // loop_footer_branch
      %11 = sbr.rel target = $region3
    $region8: #{tpu_custom_call.1} parent=1 // loop_exit
      _
    %9998 = vsyncpa [#allocation4], 1
    %s9999 = scalar_lea.sflag [#allocation4], 1
    %10000 = vsyncpa %s9999, 1

</llo_original>
